<compile_context>
chip_gen: v7x
topology: tpu7x:2x2x1
jax: 0.10.0
libtpu: 0.0.40
codegen_flags: <defaults>
</compile_context>

<pallas_src>
import functools
import numpy as np

import jax
import jax.numpy as jnp
from jax.experimental import pallas as pl
from jax.experimental.pallas import tpu as pltpu


def _round_up(v, m):
    return (v + m - 1) // m * m


# -----------------------------------------------------------------------------
# Fused Block2D kernel: conv1+bn1+relu -> conv2+bn2 -> shortcut -> add -> relu
# One batch element per grid step; everything stays in VMEM.
# -----------------------------------------------------------------------------
def _block2d_kernel(*refs, stride, ho, wo, cin, coutp, has_proj):
    """Ref layout (all lane-dense; coutp is a multiple of 128):

    x_ref   : (s*s, Hq, Wq, cin)   f32  phase-decomposed zero-padded input
    w1_ref  : (9, cin, coutp)      bf16 conv1 weights, one (cin,coutp) per tap
    sc1/sh1 : (1, coutp)           f32  folded BN1 scale / shift
    w2_ref  : (9, coutp, coutp)    bf16 conv2 weights per tap
    sc2/sh2 : (1, coutp)           f32  folded BN2 scale / shift
    (proj)    wsc_ref (cin, coutp) bf16, scs/shs (1, coutp) f32
    out_ref : (ho*wo, coutp)       f32  flat lane-dense output slab
    tpad_ref: (ho+2, wo+2, coutp)  bf16 VMEM scratch = zero-bordered conv1 out
    """
    if has_proj:
        (x_ref, w1_ref, sc1_ref, sh1_ref, w2_ref, sc2_ref, sh2_ref,
         wsc_ref, scs_ref, shs_ref, out_ref, tpad_ref) = refs
    else:
        (x_ref, w1_ref, sc1_ref, sh1_ref, w2_ref, sc2_ref, sh2_ref,
         out_ref, tpad_ref) = refs

    m = ho * wo

    # ---- conv1 (3x3, stride s): in-kernel tap gather, f32 accumulation ------
    acc = jnp.zeros((m, coutp), jnp.float32)
    for ih in range(3):
        for iw in range(3):
            ph, dh = ih % stride, ih // stride
            pw, dw = iw % stride, iw // stride
            patch = x_ref[ph * stride + pw, pl.ds(dh, ho), pl.ds(dw, wo), :]
            patch = patch.reshape(m, cin).astype(jnp.bfloat16)
            acc = acc + jnp.dot(patch, w1_ref[ih * 3 + iw],
                                preferred_element_type=jnp.float32)
    t1 = jnp.maximum(acc * sc1_ref[...] + sh1_ref[...], 0.0)

    # Stage the conv1 result (bf16) into a zero-bordered VMEM scratch so that
    # conv2's "same" padding becomes plain static slices below.
    tpad_ref[...] = jnp.zeros((ho + 2, wo + 2, coutp), jnp.bfloat16)
    tpad_ref[pl.ds(1, ho), pl.ds(1, wo), :] = (
        t1.reshape(ho, wo, coutp).astype(jnp.bfloat16))

    # ---- conv2 (3x3, stride 1) + bn2 ----------------------------------------
    acc = jnp.zeros((m, coutp), jnp.float32)
    for ih in range(3):
        for iw in range(3):
            patch = tpad_ref[pl.ds(ih, ho), pl.ds(iw, wo), :].reshape(m, coutp)
            acc = acc + jnp.dot(patch, w2_ref[ih * 3 + iw],
                                preferred_element_type=jnp.float32)
    y = acc * sc2_ref[...] + sh2_ref[...]

    # ---- shortcut: both cases read x at padded position (s*ho+1, s*wo+1),
    # i.e. phase (1%s, 1%s) at offset (1//s, 1//s). ---------------------------
    sc_patch = x_ref[(1 % stride) * stride + (1 % stride),
                     pl.ds(1 // stride, ho), pl.ds(1 // stride, wo), :]
    if has_proj:
        proj = jnp.dot(sc_patch.reshape(m, cin).astype(jnp.bfloat16),
                       wsc_ref[...], preferred_element_type=jnp.float32)
        y = y + (proj * scs_ref[...] + shs_ref[...])
    else:
        # Channels were pre-padded to coutp in the wrapper: lane-dense f32 add.
        y = y + sc_patch.reshape(m, coutp)

    out_ref[...] = jnp.maximum(y, 0.0)


# -----------------------------------------------------------------------------
# Wrapper: one pallas_call per Block2D
# -----------------------------------------------------------------------------
def block2d(x, params, stride):
    """x: (N, H, W, Cin) f32 NHWC -> (N, Ho, Wo, Cout) f32 NHWC."""
    n, h, w, cin = x.shape
    cout = params["w1"].shape[-1]
    coutp = _round_up(cout, 128)       # lane-dense stores + full MXU N-dim
    has_proj = "wsc" in params
    kh = kw = 3

    ho = (h - 1) // stride + 1
    wo = (w - 1) // stride + 1
    assert (ho * wo) % 8 == 0, (
        "TODO(synk): pad flattened spatial dim to a multiple of 8")

    # Identity shortcut adds x directly: pad its channels up front so the
    # in-kernel residual add is lane-dense (identity implies cin == cout).
    if not has_proj:
        assert stride == 1 and cin == cout
        x = jnp.pad(x, ((0, 0), (0, 0), (0, 0), (0, coutp - cin)))
    cin_k = x.shape[-1]

    # Phase-decomposed zero-padded input (~1x bytes; replaces the 9x im2col
    # slab). Each stride-phase is a contiguous plane the kernel slices per tap.
    hq = ho + (kh - 1) // stride
    wq = wo + (kw - 1) // stride
    xp = jnp.pad(x, ((0, 0),
                     (1, stride * hq - h - 1),
                     (1, stride * wq - w - 1),
                     (0, 0)))
    phases = [xp[:, ph::stride, pw::stride, :]
              for ph in range(stride) for pw in range(stride)]
    x_ph = jnp.stack(phases, axis=1).reshape(n * stride * stride, hq, wq, cin_k)

    # Weights / folded-BN params, zero-padded to the lane-dense channel counts.
    def pad_last(a, to):
        return jnp.pad(a, [(0, 0)] * (a.ndim - 1) + [(0, to - a.shape[-1])])

    w1r = params["w1"].reshape(kh * kw, cin, cout)
    w1r = jnp.pad(w1r, ((0, 0), (0, cin_k - cin), (0, coutp - cout)))
    w1r = w1r.astype(jnp.bfloat16)
    w2r = params["w2"].reshape(kh * kw, cout, cout)
    w2r = jnp.pad(w2r, ((0, 0), (0, coutp - cout), (0, coutp - cout)))
    w2r = w2r.astype(jnp.bfloat16)
    sc1, sh1 = [pad_last(p, coutp) for p in params["bn1"]]
    sc2, sh2 = [pad_last(p, coutp) for p in params["bn2"]]

    args = [x_ph, w1r, sc1, sh1, w2r, sc2, sh2]
    in_specs = [
        pl.BlockSpec((stride * stride, hq, wq, cin_k), lambda b: (b, 0, 0, 0)),
        pl.BlockSpec((kh * kw, cin_k, coutp), lambda b: (0, 0, 0)),
        pl.BlockSpec((1, coutp), lambda b: (0, 0)),
        pl.BlockSpec((1, coutp), lambda b: (0, 0)),
        pl.BlockSpec((kh * kw, coutp, coutp), lambda b: (0, 0, 0)),
        pl.BlockSpec((1, coutp), lambda b: (0, 0)),
        pl.BlockSpec((1, coutp), lambda b: (0, 0)),
    ]
    if has_proj:
        wscr = jnp.pad(params["wsc"].reshape(cin, cout),
                       ((0, 0), (0, coutp - cout))).astype(jnp.bfloat16)
        scs, shs = [pad_last(p, coutp) for p in params["bnsc"]]
        args += [wscr, scs, shs]
        in_specs += [
            pl.BlockSpec((cin_k, coutp), lambda b: (0, 0)),
            pl.BlockSpec((1, coutp), lambda b: (0, 0)),
            pl.BlockSpec((1, coutp), lambda b: (0, 0)),
        ]

    # Footprint-driven VMEM limit (double-buffered I/O + scratch), capped so the
    # kernel stays safely within v7x's 64 MiB per-TC VMEM; v5e/v6e have 128 MiB.
    per_step_in = (stride * stride * hq * wq * cin_k * 4
                   + sum(int(a.size) * a.dtype.itemsize for a in args[1:]))
    per_step_out = ho * wo * coutp * 4
    scratch_bytes = (ho + 2) * (wo + 2) * coutp * 2
    footprint = 2 * (per_step_in + per_step_out) + scratch_bytes
    assert footprint < 40 * 1024 * 1024, (
        "TODO(synk): spatial / K-axis tiling needed for large feature maps")
    vmem_limit = int(min(max(2 * footprint, 16 * 1024 * 1024),
                         40 * 1024 * 1024))

    kernel = functools.partial(
        _block2d_kernel, stride=stride, ho=ho, wo=wo,
        cin=cin_k, coutp=coutp, has_proj=has_proj)
    out = pl.pallas_call(
        kernel,
        out_shape=jax.ShapeDtypeStruct((n * ho * wo, coutp), jnp.float32),
        grid=(n,),
        in_specs=in_specs,
        out_specs=pl.BlockSpec((ho * wo, coutp), lambda b: (b, 0)),
        scratch_shapes=[pltpu.VMEM((ho + 2, wo + 2, coutp), jnp.bfloat16)],
        compiler_params=pltpu.CompilerParams(
            dimension_semantics=("parallel",),
            vmem_limit_bytes=vmem_limit),
    )(*args)
    return out.reshape(n, ho, wo, coutp)[..., :cout]


# -----------------------------------------------------------------------------
# Params (deterministic synthetic init) and pure-JAX reference
# -----------------------------------------------------------------------------
def fold_bn(gamma, beta, mean, var, eps=1e-5):
    scale = gamma / jnp.sqrt(var + eps)
    shift = beta - mean * scale
    return scale[None, :].astype(jnp.float32), shift[None, :].astype(jnp.float32)


def init_block_params(key, cin, cout, stride):
    keys = iter(jax.random.split(key, 16))

    def conv_w(ci, co, k):
        fan_in = ci * k * k
        return jax.random.normal(next(keys), (k, k, ci, co),
                                 jnp.float32) / np.sqrt(fan_in)

    def bn(c):
        gamma = jax.random.uniform(next(keys), (c,), minval=0.8, maxval=1.2)
        beta = 0.05 * jax.random.normal(next(keys), (c,))
        mean = 0.05 * jax.random.normal(next(keys), (c,))
        var = jax.random.uniform(next(keys), (c,), minval=0.8, maxval=1.2)
        return gamma, beta, mean, var

    params = {"w1": conv_w(cin, cout, 3), "bn1": fold_bn(*bn(cout)),
              "w2": conv_w(cout, cout, 3), "bn2": fold_bn(*bn(cout))}
    if stride != 1 or cin != cout:
        params["wsc"] = conv_w(cin, cout, 1)
        params["bnsc"] = fold_bn(*bn(cout))
    return params


def _conv_ref(x, w, stride):
    kh = w.shape[0]
    pad = (kh - 1) // 2
    return jax.lax.conv_general_dilated(
        x.astype(jnp.bfloat16), w.astype(jnp.bfloat16),
        window_strides=(stride, stride),
        padding=[(pad, pad), (pad, pad)],
        dimension_numbers=("NHWC", "HWIO", "NHWC"),
        preferred_element_type=jnp.float32)


def block2d_ref(x, params, stride):
    t = _conv_ref(x, params["w1"], stride)
    t = jnp.maximum(t * params["bn1"][0] + params["bn1"][1], 0.0)
    y = _conv_ref(t, params["w2"], 1)
    y = y * params["bn2"][0] + params["bn2"][1]
    if "wsc" in params:
        s = _conv_ref(x, params["wsc"], stride)
        s = s * params["bnsc"][0] + params["bnsc"][1]
    else:
        s = x
    return jnp.maximum(y + s, 0.0)


# -----------------------------------------------------------------------------
# Main
# -----------------------------------------------------------------------------
if __name__ == "__main__":
    key = jax.random.PRNGKey(0)
    k_x, k_p1, k_p2 = jax.random.split(key, 3)

    # Block2D(32, 64, stride=2) on a (2, 32, 16, 16) NCHW input (projected
    # shortcut), followed by Block2D(64, 64, stride=1) (identity shortcut).
    n, cin, h, w_sp = 2, 32, 16, 16
    x_nchw = jax.random.normal(k_x, (n, cin, h, w_sp), jnp.float32)
    params1 = init_block_params(k_p1, cin, 64, 2)
    params2 = init_block_params(k_p2, 64, 64, 1)

    @jax.jit
    def fwd(x):
        xh = jnp.transpose(x, (0, 2, 3, 1))          # NCHW -> NHWC once at entry
        y = block2d(xh, params1, 2)
        y = block2d(y, params2, 1)
        return jnp.transpose(y, (0, 3, 1, 2))        # back to NCHW like PyTorch

    out = fwd(x_nchw)
    jax.block_until_ready(out)

    @jax.jit
    def ref(x):
        xh = jnp.transpose(x, (0, 2, 3, 1))
        y = block2d_ref(xh, params1, 2)
        y = block2d_ref(y, params2, 1)
        return jnp.transpose(y, (0, 3, 1, 2))

    expected = ref(x_nchw)
    assert out.shape == (n, 64, 8, 8), out.shape
    assert bool(jnp.all(jnp.isfinite(out)))
    err = float(jnp.max(jnp.abs(out - expected)))
    assert err < 5e-2, f"max abs err {err}"
    print("KERNEL_OK")
</pallas_src>

<mosaic_0001>
module attributes {stable_mosaic.version = 11 : i64} {
  func.func @_block2d_kernel(%arg0: i32, %arg1: memref<4x9x9x32xf32, #tpu.memory_space<vmem>>, %arg2: memref<9x32x128xbf16, #tpu.memory_space<vmem>>, %arg3: memref<1x128xf32, #tpu.memory_space<vmem>>, %arg4: memref<1x128xf32, #tpu.memory_space<vmem>>, %arg5: memref<9x128x128xbf16, #tpu.memory_space<vmem>>, %arg6: memref<1x128xf32, #tpu.memory_space<vmem>>, %arg7: memref<1x128xf32, #tpu.memory_space<vmem>>, %arg8: memref<32x128xbf16, #tpu.memory_space<vmem>>, %arg9: memref<1x128xf32, #tpu.memory_space<vmem>>, %arg10: memref<1x128xf32, #tpu.memory_space<vmem>>, %arg11: memref<64x128xf32, #tpu.memory_space<vmem>>, %arg12: memref<10x10x128xbf16, #tpu.memory_space<vmem>>) attributes {dimension_semantics = [#tpu.dimension_semantics<parallel>], iteration_bounds = array<i64: 2>, scalar_prefetch = 0 : i64, scratch_operands = 1 : i64, tpu.core_type = #tpu.core_type<tc>, window_params = [{transform_indices = @transform_0, window_bounds = array<i64: 4, 9, 9, 32>}, {pipeline_mode = #tpu.pipeline_mode<synchronous>, transform_indices = @transform_1, window_bounds = array<i64: 9, 32, 128>}, {pipeline_mode = #tpu.pipeline_mode<synchronous>, transform_indices = @transform_2, window_bounds = array<i64: 1, 128>}, {pipeline_mode = #tpu.pipeline_mode<synchronous>, transform_indices = @transform_3, window_bounds = array<i64: 1, 128>}, {pipeline_mode = #tpu.pipeline_mode<synchronous>, transform_indices = @transform_4, window_bounds = array<i64: 9, 128, 128>}, {pipeline_mode = #tpu.pipeline_mode<synchronous>, transform_indices = @transform_5, window_bounds = array<i64: 1, 128>}, {pipeline_mode = #tpu.pipeline_mode<synchronous>, transform_indices = @transform_6, window_bounds = array<i64: 1, 128>}, {pipeline_mode = #tpu.pipeline_mode<synchronous>, transform_indices = @transform_7, window_bounds = array<i64: 32, 128>}, {pipeline_mode = #tpu.pipeline_mode<synchronous>, transform_indices = @transform_8, window_bounds = array<i64: 1, 128>}, {pipeline_mode = #tpu.pipeline_mode<synchronous>, transform_indices = @transform_9, window_bounds = array<i64: 1, 128>}, {transform_indices = @transform_10, window_bounds = array<i64: 64, 128>}]} {
    %cst = arith.constant 0.000000e+00 : f32
    %0 = vector.broadcast %cst : f32 to vector<64x128xf32>
    %c0 = arith.constant 0 : index
    %c0_0 = arith.constant 0 : index
    %c0_1 = arith.constant 0 : index
    %c0_2 = arith.constant 0 : index
    %1 = vector.load %arg1[%c0, %c0_0, %c0_1, %c0_2] : memref<4x9x9x32xf32, #tpu.memory_space<vmem>>, vector<1x8x8x32xf32>
    %2 = vector.shape_cast %1 : vector<1x8x8x32xf32> to vector<8x8x32xf32>
    %3 = vector.shape_cast %2 : vector<8x8x32xf32> to vector<64x32xf32>
    %4 = arith.truncf %3 : vector<64x32xf32> to vector<64x32xbf16>
    %c0_3 = arith.constant 0 : index
    %c0_4 = arith.constant 0 : index
    %c0_5 = arith.constant 0 : index
    %5 = vector.load %arg2[%c0_3, %c0_4, %c0_5] : memref<9x32x128xbf16, #tpu.memory_space<vmem>>, vector<1x32x128xbf16>
    %6 = vector.shape_cast %5 : vector<1x32x128xbf16> to vector<32x128xbf16>
    %cst_6 = arith.constant dense<0.000000e+00> : vector<64x128xf32>
    %7 = tpu.matmul %4, %6, %cst_6 {dimension_numbers = #tpu.dot_dimension_numbers<[1], [0], [0], [1], [0, 0, 1, 1], [], []>} : vector<64x32xbf16>, vector<32x128xbf16>, vector<64x128xf32> -> vector<64x128xf32>
    %8 = arith.addf %0, %7 : vector<64x128xf32>
    %c1 = arith.constant 1 : index
    %c0_7 = arith.constant 0 : index
    %c0_8 = arith.constant 0 : index
    %c0_9 = arith.constant 0 : index
    %9 = vector.load %arg1[%c1, %c0_7, %c0_8, %c0_9] : memref<4x9x9x32xf32, #tpu.memory_space<vmem>>, vector<1x8x8x32xf32>
    %10 = vector.shape_cast %9 : vector<1x8x8x32xf32> to vector<8x8x32xf32>
    %11 = vector.shape_cast %10 : vector<8x8x32xf32> to vector<64x32xf32>
    %12 = arith.truncf %11 : vector<64x32xf32> to vector<64x32xbf16>
    %c1_10 = arith.constant 1 : index
    %c0_11 = arith.constant 0 : index
    %c0_12 = arith.constant 0 : index
    %13 = vector.load %arg2[%c1_10, %c0_11, %c0_12] : memref<9x32x128xbf16, #tpu.memory_space<vmem>>, vector<1x32x128xbf16>
    %14 = vector.shape_cast %13 : vector<1x32x128xbf16> to vector<32x128xbf16>
    %cst_13 = arith.constant dense<0.000000e+00> : vector<64x128xf32>
    %15 = tpu.matmul %12, %14, %cst_13 {dimension_numbers = #tpu.dot_dimension_numbers<[1], [0], [0], [1], [0, 0, 1, 1], [], []>} : vector<64x32xbf16>, vector<32x128xbf16>, vector<64x128xf32> -> vector<64x128xf32>
    %16 = arith.addf %8, %15 : vector<64x128xf32>
    %c0_14 = arith.constant 0 : index
    %c0_15 = arith.constant 0 : index
    %c1_16 = arith.constant 1 : index
    %c0_17 = arith.constant 0 : index
    %17 = vector.load %arg1[%c0_14, %c0_15, %c1_16, %c0_17] : memref<4x9x9x32xf32, #tpu.memory_space<vmem>>, vector<1x8x8x32xf32>
    %18 = vector.shape_cast %17 : vector<1x8x8x32xf32> to vector<8x8x32xf32>
    %19 = vector.shape_cast %18 : vector<8x8x32xf32> to vector<64x32xf32>
    %20 = arith.truncf %19 : vector<64x32xf32> to vector<64x32xbf16>
    %c2 = arith.constant 2 : index
    %c0_18 = arith.constant 0 : index
    %c0_19 = arith.constant 0 : index
    %21 = vector.load %arg2[%c2, %c0_18, %c0_19] : memref<9x32x128xbf16, #tpu.memory_space<vmem>>, vector<1x32x128xbf16>
    %22 = vector.shape_cast %21 : vector<1x32x128xbf16> to vector<32x128xbf16>
    %cst_20 = arith.constant dense<0.000000e+00> : vector<64x128xf32>
    %23 = tpu.matmul %20, %22, %cst_20 {dimension_numbers = #tpu.dot_dimension_numbers<[1], [0], [0], [1], [0, 0, 1, 1], [], []>} : vector<64x32xbf16>, vector<32x128xbf16>, vector<64x128xf32> -> vector<64x128xf32>
    %24 = arith.addf %16, %23 : vector<64x128xf32>
    %c2_21 = arith.constant 2 : index
    %c0_22 = arith.constant 0 : index
    %c0_23 = arith.constant 0 : index
    %c0_24 = arith.constant 0 : index
    %25 = vector.load %arg1[%c2_21, %c0_22, %c0_23, %c0_24] : memref<4x9x9x32xf32, #tpu.memory_space<vmem>>, vector<1x8x8x32xf32>
    %26 = vector.shape_cast %25 : vector<1x8x8x32xf32> to vector<8x8x32xf32>
    %27 = vector.shape_cast %26 : vector<8x8x32xf32> to vector<64x32xf32>
    %28 = arith.truncf %27 : vector<64x32xf32> to vector<64x32xbf16>
    %c3 = arith.constant 3 : index
    %c0_25 = arith.constant 0 : index
    %c0_26 = arith.constant 0 : index
    %29 = vector.load %arg2[%c3, %c0_25, %c0_26] : memref<9x32x128xbf16, #tpu.memory_space<vmem>>, vector<1x32x128xbf16>
    %30 = vector.shape_cast %29 : vector<1x32x128xbf16> to vector<32x128xbf16>
    %cst_27 = arith.constant dense<0.000000e+00> : vector<64x128xf32>
    %31 = tpu.matmul %28, %30, %cst_27 {dimension_numbers = #tpu.dot_dimension_numbers<[1], [0], [0], [1], [0, 0, 1, 1], [], []>} : vector<64x32xbf16>, vector<32x128xbf16>, vector<64x128xf32> -> vector<64x128xf32>
    %32 = arith.addf %24, %31 : vector<64x128xf32>
    %c3_28 = arith.constant 3 : index
    %c0_29 = arith.constant 0 : index
    %c0_30 = arith.constant 0 : index
    %c0_31 = arith.constant 0 : index
    %33 = vector.load %arg1[%c3_28, %c0_29, %c0_30, %c0_31] : memref<4x9x9x32xf32, #tpu.memory_space<vmem>>, vector<1x8x8x32xf32>
    %34 = vector.shape_cast %33 : vector<1x8x8x32xf32> to vector<8x8x32xf32>
    %35 = vector.shape_cast %34 : vector<8x8x32xf32> to vector<64x32xf32>
    %36 = arith.truncf %35 : vector<64x32xf32> to vector<64x32xbf16>
    %c4 = arith.constant 4 : index
    %c0_32 = arith.constant 0 : index
    %c0_33 = arith.constant 0 : index
    %37 = vector.load %arg2[%c4, %c0_32, %c0_33] : memref<9x32x128xbf16, #tpu.memory_space<vmem>>, vector<1x32x128xbf16>
    %38 = vector.shape_cast %37 : vector<1x32x128xbf16> to vector<32x128xbf16>
    %cst_34 = arith.constant dense<0.000000e+00> : vector<64x128xf32>
    %39 = tpu.matmul %36, %38, %cst_34 {dimension_numbers = #tpu.dot_dimension_numbers<[1], [0], [0], [1], [0, 0, 1, 1], [], []>} : vector<64x32xbf16>, vector<32x128xbf16>, vector<64x128xf32> -> vector<64x128xf32>
    %40 = arith.addf %32, %39 : vector<64x128xf32>
    %c2_35 = arith.constant 2 : index
    %c0_36 = arith.constant 0 : index
    %c1_37 = arith.constant 1 : index
    %c0_38 = arith.constant 0 : index
    %41 = vector.load %arg1[%c2_35, %c0_36, %c1_37, %c0_38] : memref<4x9x9x32xf32, #tpu.memory_space<vmem>>, vector<1x8x8x32xf32>
    %42 = vector.shape_cast %41 : vector<1x8x8x32xf32> to vector<8x8x32xf32>
    %43 = vector.shape_cast %42 : vector<8x8x32xf32> to vector<64x32xf32>
    %44 = arith.truncf %43 : vector<64x32xf32> to vector<64x32xbf16>
    %c5 = arith.constant 5 : index
    %c0_39 = arith.constant 0 : index
    %c0_40 = arith.constant 0 : index
    %45 = vector.load %arg2[%c5, %c0_39, %c0_40] : memref<9x32x128xbf16, #tpu.memory_space<vmem>>, vector<1x32x128xbf16>
    %46 = vector.shape_cast %45 : vector<1x32x128xbf16> to vector<32x128xbf16>
    %cst_41 = arith.constant dense<0.000000e+00> : vector<64x128xf32>
    %47 = tpu.matmul %44, %46, %cst_41 {dimension_numbers = #tpu.dot_dimension_numbers<[1], [0], [0], [1], [0, 0, 1, 1], [], []>} : vector<64x32xbf16>, vector<32x128xbf16>, vector<64x128xf32> -> vector<64x128xf32>
    %48 = arith.addf %40, %47 : vector<64x128xf32>
    %c0_42 = arith.constant 0 : index
    %c1_43 = arith.constant 1 : index
    %c0_44 = arith.constant 0 : index
    %c0_45 = arith.constant 0 : index
    %49 = vector.load %arg1[%c0_42, %c1_43, %c0_44, %c0_45] : memref<4x9x9x32xf32, #tpu.memory_space<vmem>>, vector<1x8x8x32xf32>
    %50 = vector.shape_cast %49 : vector<1x8x8x32xf32> to vector<8x8x32xf32>
    %51 = vector.shape_cast %50 : vector<8x8x32xf32> to vector<64x32xf32>
    %52 = arith.truncf %51 : vector<64x32xf32> to vector<64x32xbf16>
    %c6 = arith.constant 6 : index
    %c0_46 = arith.constant 0 : index
    %c0_47 = arith.constant 0 : index
    %53 = vector.load %arg2[%c6, %c0_46, %c0_47] : memref<9x32x128xbf16, #tpu.memory_space<vmem>>, vector<1x32x128xbf16>
    %54 = vector.shape_cast %53 : vector<1x32x128xbf16> to vector<32x128xbf16>
    %cst_48 = arith.constant dense<0.000000e+00> : vector<64x128xf32>
    %55 = tpu.matmul %52, %54, %cst_48 {dimension_numbers = #tpu.dot_dimension_numbers<[1], [0], [0], [1], [0, 0, 1, 1], [], []>} : vector<64x32xbf16>, vector<32x128xbf16>, vector<64x128xf32> -> vector<64x128xf32>
    %56 = arith.addf %48, %55 : vector<64x128xf32>
    %c1_49 = arith.constant 1 : index
    %c1_50 = arith.constant 1 : index
    %c0_51 = arith.constant 0 : index
    %c0_52 = arith.constant 0 : index
    %57 = vector.load %arg1[%c1_49, %c1_50, %c0_51, %c0_52] : memref<4x9x9x32xf32, #tpu.memory_space<vmem>>, vector<1x8x8x32xf32>
    %58 = vector.shape_cast %57 : vector<1x8x8x32xf32> to vector<8x8x32xf32>
    %59 = vector.shape_cast %58 : vector<8x8x32xf32> to vector<64x32xf32>
    %60 = arith.truncf %59 : vector<64x32xf32> to vector<64x32xbf16>
    %c7 = arith.constant 7 : index
    %c0_53 = arith.constant 0 : index
    %c0_54 = arith.constant 0 : index
    %61 = vector.load %arg2[%c7, %c0_53, %c0_54] : memref<9x32x128xbf16, #tpu.memory_space<vmem>>, vector<1x32x128xbf16>
    %62 = vector.shape_cast %61 : vector<1x32x128xbf16> to vector<32x128xbf16>
    %cst_55 = arith.constant dense<0.000000e+00> : vector<64x128xf32>
    %63 = tpu.matmul %60, %62, %cst_55 {dimension_numbers = #tpu.dot_dimension_numbers<[1], [0], [0], [1], [0, 0, 1, 1], [], []>} : vector<64x32xbf16>, vector<32x128xbf16>, vector<64x128xf32> -> vector<64x128xf32>
    %64 = arith.addf %56, %63 : vector<64x128xf32>
    %c0_56 = arith.constant 0 : index
    %c1_57 = arith.constant 1 : index
    %c1_58 = arith.constant 1 : index
    %c0_59 = arith.constant 0 : index
    %65 = vector.load %arg1[%c0_56, %c1_57, %c1_58, %c0_59] : memref<4x9x9x32xf32, #tpu.memory_space<vmem>>, vector<1x8x8x32xf32>
    %66 = vector.shape_cast %65 : vector<1x8x8x32xf32> to vector<8x8x32xf32>
    %67 = vector.shape_cast %66 : vector<8x8x32xf32> to vector<64x32xf32>
    %68 = arith.truncf %67 : vector<64x32xf32> to vector<64x32xbf16>
    %c8 = arith.constant 8 : index
    %c0_60 = arith.constant 0 : index
    %c0_61 = arith.constant 0 : index
    %69 = vector.load %arg2[%c8, %c0_60, %c0_61] : memref<9x32x128xbf16, #tpu.memory_space<vmem>>, vector<1x32x128xbf16>
    %70 = vector.shape_cast %69 : vector<1x32x128xbf16> to vector<32x128xbf16>
    %cst_62 = arith.constant dense<0.000000e+00> : vector<64x128xf32>
    %71 = tpu.matmul %68, %70, %cst_62 {dimension_numbers = #tpu.dot_dimension_numbers<[1], [0], [0], [1], [0, 0, 1, 1], [], []>} : vector<64x32xbf16>, vector<32x128xbf16>, vector<64x128xf32> -> vector<64x128xf32>
    %72 = arith.addf %64, %71 : vector<64x128xf32>
    %c0_63 = arith.constant 0 : index
    %c0_64 = arith.constant 0 : index
    %73 = vector.load %arg3[%c0_63, %c0_64] : memref<1x128xf32, #tpu.memory_space<vmem>>, vector<1x128xf32>
    %74 = vector.broadcast %73 : vector<1x128xf32> to vector<64x128xf32>
    %75 = arith.mulf %72, %74 : vector<64x128xf32>
    %c0_65 = arith.constant 0 : index
    %c0_66 = arith.constant 0 : index
    %76 = vector.load %arg4[%c0_65, %c0_66] : memref<1x128xf32, #tpu.memory_space<vmem>>, vector<1x128xf32>
    %77 = vector.broadcast %76 : vector<1x128xf32> to vector<64x128xf32>
    %78 = arith.addf %75, %77 : vector<64x128xf32>
    %cst_67 = arith.constant 0.000000e+00 : f32
    %79 = vector.broadcast %cst_67 : f32 to vector<64x128xf32>
    %80 = arith.maximumf %78, %79 : vector<64x128xf32>
    %cst_68 = arith.constant 0.000000e+00 : bf16
    %81 = vector.broadcast %cst_68 : bf16 to vector<10x10x128xbf16>
    %c0_69 = arith.constant 0 : index
    %c0_70 = arith.constant 0 : index
    %c0_71 = arith.constant 0 : index
    %82 = vector.load %arg12[%c0_69, %c0_70, %c0_71] : memref<10x10x128xbf16, #tpu.memory_space<vmem>>, vector<10x10x128xbf16>
    tpu.vector_store %arg12[%c0_69, %c0_70, %c0_71], %81 {strides = array<i32>} : memref<10x10x128xbf16, #tpu.memory_space<vmem>>, vector<10x10x128xbf16>,
    %83 = vector.shape_cast %80 : vector<64x128xf32> to vector<8x8x128xf32>
    %84 = arith.truncf %83 : vector<8x8x128xf32> to vector<8x8x128xbf16>
    %c1_72 = arith.constant 1 : index
    %c1_73 = arith.constant 1 : index
    %c0_74 = arith.constant 0 : index
    %85 = vector.load %arg12[%c1_72, %c1_73, %c0_74] : memref<10x10x128xbf16, #tpu.memory_space<vmem>>, vector<8x8x128xbf16>
    tpu.vector_store %arg12[%c1_72, %c1_73, %c0_74], %84 {strides = array<i32>} : memref<10x10x128xbf16, #tpu.memory_space<vmem>>, vector<8x8x128xbf16>,
    %cst_75 = arith.constant 0.000000e+00 : f32
    %86 = vector.broadcast %cst_75 : f32 to vector<64x128xf32>
    %c0_76 = arith.constant 0 : index
    %c0_77 = arith.constant 0 : index
    %c0_78 = arith.constant 0 : index
    %87 = vector.load %arg12[%c0_76, %c0_77, %c0_78] : memref<10x10x128xbf16, #tpu.memory_space<vmem>>, vector<8x8x128xbf16>
    %88 = vector.shape_cast %87 : vector<8x8x128xbf16> to vector<64x128xbf16>
    %c0_79 = arith.constant 0 : index
    %c0_80 = arith.constant 0 : index
    %c0_81 = arith.constant 0 : index
    %89 = vector.load %arg5[%c0_79, %c0_80, %c0_81] : memref<9x128x128xbf16, #tpu.memory_space<vmem>>, vector<1x128x128xbf16>
    %90 = vector.shape_cast %89 : vector<1x128x128xbf16> to vector<128x128xbf16>
    %cst_82 = arith.constant dense<0.000000e+00> : vector<64x128xf32>
    %91 = tpu.matmul %88, %90, %cst_82 {dimension_numbers = #tpu.dot_dimension_numbers<[1], [0], [0], [1], [0, 0, 1, 1], [], []>} : vector<64x128xbf16>, vector<128x128xbf16>, vector<64x128xf32> -> vector<64x128xf32>
    %92 = arith.addf %86, %91 : vector<64x128xf32>
    %c0_83 = arith.constant 0 : index
    %c1_84 = arith.constant 1 : index
    %c0_85 = arith.constant 0 : index
    %93 = vector.load %arg12[%c0_83, %c1_84, %c0_85] : memref<10x10x128xbf16, #tpu.memory_space<vmem>>, vector<8x8x128xbf16>
    %94 = vector.shape_cast %93 : vector<8x8x128xbf16> to vector<64x128xbf16>
    %c1_86 = arith.constant 1 : index
    %c0_87 = arith.constant 0 : index
    %c0_88 = arith.constant 0 : index
    %95 = vector.load %arg5[%c1_86, %c0_87, %c0_88] : memref<9x128x128xbf16, #tpu.memory_space<vmem>>, vector<1x128x128xbf16>
    %96 = vector.shape_cast %95 : vector<1x128x128xbf16> to vector<128x128xbf16>
    %cst_89 = arith.constant dense<0.000000e+00> : vector<64x128xf32>
    %97 = tpu.matmul %94, %96, %cst_89 {dimension_numbers = #tpu.dot_dimension_numbers<[1], [0], [0], [1], [0, 0, 1, 1], [], []>} : vector<64x128xbf16>, vector<128x128xbf16>, vector<64x128xf32> -> vector<64x128xf32>
    %98 = arith.addf %92, %97 : vector<64x128xf32>
    %c0_90 = arith.constant 0 : index
    %c2_91 = arith.constant 2 : index
    %c0_92 = arith.constant 0 : index
    %99 = vector.load %arg12[%c0_90, %c2_91, %c0_92] : memref<10x10x128xbf16, #tpu.memory_space<vmem>>, vector<8x8x128xbf16>
    %100 = vector.shape_cast %99 : vector<8x8x128xbf16> to vector<64x128xbf16>
    %c2_93 = arith.constant 2 : index
    %c0_94 = arith.constant 0 : index
    %c0_95 = arith.constant 0 : index
    %101 = vector.load %arg5[%c2_93, %c0_94, %c0_95] : memref<9x128x128xbf16, #tpu.memory_space<vmem>>, vector<1x128x128xbf16>
    %102 = vector.shape_cast %101 : vector<1x128x128xbf16> to vector<128x128xbf16>
    %cst_96 = arith.constant dense<0.000000e+00> : vector<64x128xf32>
    %103 = tpu.matmul %100, %102, %cst_96 {dimension_numbers = #tpu.dot_dimension_numbers<[1], [0], [0], [1], [0, 0, 1, 1], [], []>} : vector<64x128xbf16>, vector<128x128xbf16>, vector<64x128xf32> -> vector<64x128xf32>
    %104 = arith.addf %98, %103 : vector<64x128xf32>
    %c1_97 = arith.constant 1 : index
    %c0_98 = arith.constant 0 : index
    %c0_99 = arith.constant 0 : index
    %105 = vector.load %arg12[%c1_97, %c0_98, %c0_99] : memref<10x10x128xbf16, #tpu.memory_space<vmem>>, vector<8x8x128xbf16>
    %106 = vector.shape_cast %105 : vector<8x8x128xbf16> to vector<64x128xbf16>
    %c3_100 = arith.constant 3 : index
    %c0_101 = arith.constant 0 : index
    %c0_102 = arith.constant 0 : index
    %107 = vector.load %arg5[%c3_100, %c0_101, %c0_102] : memref<9x128x128xbf16, #tpu.memory_space<vmem>>, vector<1x128x128xbf16>
    %108 = vector.shape_cast %107 : vector<1x128x128xbf16> to vector<128x128xbf16>
    %cst_103 = arith.constant dense<0.000000e+00> : vector<64x128xf32>
    %109 = tpu.matmul %106, %108, %cst_103 {dimension_numbers = #tpu.dot_dimension_numbers<[1], [0], [0], [1], [0, 0, 1, 1], [], []>} : vector<64x128xbf16>, vector<128x128xbf16>, vector<64x128xf32> -> vector<64x128xf32>
    %110 = arith.addf %104, %109 : vector<64x128xf32>
    %c1_104 = arith.constant 1 : index
    %c1_105 = arith.constant 1 : index
    %c0_106 = arith.constant 0 : index
    %111 = vector.load %arg12[%c1_104, %c1_105, %c0_106] : memref<10x10x128xbf16, #tpu.memory_space<vmem>>, vector<8x8x128xbf16>
    %112 = vector.shape_cast %111 : vector<8x8x128xbf16> to vector<64x128xbf16>
    %c4_107 = arith.constant 4 : index
    %c0_108 = arith.constant 0 : index
    %c0_109 = arith.constant 0 : index
    %113 = vector.load %arg5[%c4_107, %c0_108, %c0_109] : memref<9x128x128xbf16, #tpu.memory_space<vmem>>, vector<1x128x128xbf16>
    %114 = vector.shape_cast %113 : vector<1x128x128xbf16> to vector<128x128xbf16>
    %cst_110 = arith.constant dense<0.000000e+00> : vector<64x128xf32>
    %115 = tpu.matmul %112, %114, %cst_110 {dimension_numbers = #tpu.dot_dimension_numbers<[1], [0], [0], [1], [0, 0, 1, 1], [], []>} : vector<64x128xbf16>, vector<128x128xbf16>, vector<64x128xf32> -> vector<64x128xf32>
    %116 = arith.addf %110, %115 : vector<64x128xf32>
    %c1_111 = arith.constant 1 : index
    %c2_112 = arith.constant 2 : index
    %c0_113 = arith.constant 0 : index
    %117 = vector.load %arg12[%c1_111, %c2_112, %c0_113] : memref<10x10x128xbf16, #tpu.memory_space<vmem>>, vector<8x8x128xbf16>
    %118 = vector.shape_cast %117 : vector<8x8x128xbf16> to vector<64x128xbf16>
    %c5_114 = arith.constant 5 : index
    %c0_115 = arith.constant 0 : index
    %c0_116 = arith.constant 0 : index
    %119 = vector.load %arg5[%c5_114, %c0_115, %c0_116] : memref<9x128x128xbf16, #tpu.memory_space<vmem>>, vector<1x128x128xbf16>
    %120 = vector.shape_cast %119 : vector<1x128x128xbf16> to vector<128x128xbf16>
    %cst_117 = arith.constant dense<0.000000e+00> : vector<64x128xf32>
    %121 = tpu.matmul %118, %120, %cst_117 {dimension_numbers = #tpu.dot_dimension_numbers<[1], [0], [0], [1], [0, 0, 1, 1], [], []>} : vector<64x128xbf16>, vector<128x128xbf16>, vector<64x128xf32> -> vector<64x128xf32>
    %122 = arith.addf %116, %121 : vector<64x128xf32>
    %c2_118 = arith.constant 2 : index
    %c0_119 = arith.constant 0 : index
    %c0_120 = arith.constant 0 : index
    %123 = vector.load %arg12[%c2_118, %c0_119, %c0_120] : memref<10x10x128xbf16, #tpu.memory_space<vmem>>, vector<8x8x128xbf16>
    %124 = vector.shape_cast %123 : vector<8x8x128xbf16> to vector<64x128xbf16>
    %c6_121 = arith.constant 6 : index
    %c0_122 = arith.constant 0 : index
    %c0_123 = arith.constant 0 : index
    %125 = vector.load %arg5[%c6_121, %c0_122, %c0_123] : memref<9x128x128xbf16, #tpu.memory_space<vmem>>, vector<1x128x128xbf16>
    %126 = vector.shape_cast %125 : vector<1x128x128xbf16> to vector<128x128xbf16>
    %cst_124 = arith.constant dense<0.000000e+00> : vector<64x128xf32>
    %127 = tpu.matmul %124, %126, %cst_124 {dimension_numbers = #tpu.dot_dimension_numbers<[1], [0], [0], [1], [0, 0, 1, 1], [], []>} : vector<64x128xbf16>, vector<128x128xbf16>, vector<64x128xf32> -> vector<64x128xf32>
    %128 = arith.addf %122, %127 : vector<64x128xf32>
    %c2_125 = arith.constant 2 : index
    %c1_126 = arith.constant 1 : index
    %c0_127 = arith.constant 0 : index
    %129 = vector.load %arg12[%c2_125, %c1_126, %c0_127] : memref<10x10x128xbf16, #tpu.memory_space<vmem>>, vector<8x8x128xbf16>
    %130 = vector.shape_cast %129 : vector<8x8x128xbf16> to vector<64x128xbf16>
    %c7_128 = arith.constant 7 : index
    %c0_129 = arith.constant 0 : index
    %c0_130 = arith.constant 0 : index
    %131 = vector.load %arg5[%c7_128, %c0_129, %c0_130] : memref<9x128x128xbf16, #tpu.memory_space<vmem>>, vector<1x128x128xbf16>
    %132 = vector.shape_cast %131 : vector<1x128x128xbf16> to vector<128x128xbf16>
    %cst_131 = arith.constant dense<0.000000e+00> : vector<64x128xf32>
    %133 = tpu.matmul %130, %132, %cst_131 {dimension_numbers = #tpu.dot_dimension_numbers<[1], [0], [0], [1], [0, 0, 1, 1], [], []>} : vector<64x128xbf16>, vector<128x128xbf16>, vector<64x128xf32> -> vector<64x128xf32>
    %134 = arith.addf %128, %133 : vector<64x128xf32>
    %c2_132 = arith.constant 2 : index
    %c2_133 = arith.constant 2 : index
    %c0_134 = arith.constant 0 : index
    %135 = vector.load %arg12[%c2_132, %c2_133, %c0_134] : memref<10x10x128xbf16, #tpu.memory_space<vmem>>, vector<8x8x128xbf16>
    %136 = vector.shape_cast %135 : vector<8x8x128xbf16> to vector<64x128xbf16>
    %c8_135 = arith.constant 8 : index
    %c0_136 = arith.constant 0 : index
    %c0_137 = arith.constant 0 : index
    %137 = vector.load %arg5[%c8_135, %c0_136, %c0_137] : memref<9x128x128xbf16, #tpu.memory_space<vmem>>, vector<1x128x128xbf16>
    %138 = vector.shape_cast %137 : vector<1x128x128xbf16> to vector<128x128xbf16>
    %cst_138 = arith.constant dense<0.000000e+00> : vector<64x128xf32>
    %139 = tpu.matmul %136, %138, %cst_138 {dimension_numbers = #tpu.dot_dimension_numbers<[1], [0], [0], [1], [0, 0, 1, 1], [], []>} : vector<64x128xbf16>, vector<128x128xbf16>, vector<64x128xf32> -> vector<64x128xf32>
    %140 = arith.addf %134, %139 : vector<64x128xf32>
    %c0_139 = arith.constant 0 : index
    %c0_140 = arith.constant 0 : index
    %141 = vector.load %arg6[%c0_139, %c0_140] : memref<1x128xf32, #tpu.memory_space<vmem>>, vector<1x128xf32>
    %142 = vector.broadcast %141 : vector<1x128xf32> to vector<64x128xf32>
    %143 = arith.mulf %140, %142 : vector<64x128xf32>
    %c0_141 = arith.constant 0 : index
    %c0_142 = arith.constant 0 : index
    %144 = vector.load %arg7[%c0_141, %c0_142] : memref<1x128xf32, #tpu.memory_space<vmem>>, vector<1x128xf32>
    %145 = vector.broadcast %144 : vector<1x128xf32> to vector<64x128xf32>
    %146 = arith.addf %143, %145 : vector<64x128xf32>
    %c3_143 = arith.constant 3 : index
    %c0_144 = arith.constant 0 : index
    %c0_145 = arith.constant 0 : index
    %c0_146 = arith.constant 0 : index
    %147 = vector.load %arg1[%c3_143, %c0_144, %c0_145, %c0_146] : memref<4x9x9x32xf32, #tpu.memory_space<vmem>>, vector<1x8x8x32xf32>
    %148 = vector.shape_cast %147 : vector<1x8x8x32xf32> to vector<8x8x32xf32>
    %149 = vector.shape_cast %148 : vector<8x8x32xf32> to vector<64x32xf32>
    %150 = arith.truncf %149 : vector<64x32xf32> to vector<64x32xbf16>
    %c0_147 = arith.constant 0 : index
    %c0_148 = arith.constant 0 : index
    %151 = vector.load %arg8[%c0_147, %c0_148] : memref<32x128xbf16, #tpu.memory_space<vmem>>, vector<32x128xbf16>
    %cst_149 = arith.constant dense<0.000000e+00> : vector<64x128xf32>
    %152 = tpu.matmul %150, %151, %cst_149 {dimension_numbers = #tpu.dot_dimension_numbers<[1], [0], [0], [1], [0, 0, 1, 1], [], []>} : vector<64x32xbf16>, vector<32x128xbf16>, vector<64x128xf32> -> vector<64x128xf32>
    %c0_150 = arith.constant 0 : index
    %c0_151 = arith.constant 0 : index
    %153 = vector.load %arg9[%c0_150, %c0_151] : memref<1x128xf32, #tpu.memory_space<vmem>>, vector<1x128xf32>
    %154 = vector.broadcast %153 : vector<1x128xf32> to vector<64x128xf32>
    %155 = arith.mulf %152, %154 : vector<64x128xf32>
    %c0_152 = arith.constant 0 : index
    %c0_153 = arith.constant 0 : index
    %156 = vector.load %arg10[%c0_152, %c0_153] : memref<1x128xf32, #tpu.memory_space<vmem>>, vector<1x128xf32>
    %157 = vector.broadcast %156 : vector<1x128xf32> to vector<64x128xf32>
    %158 = arith.addf %155, %157 : vector<64x128xf32>
    %159 = arith.addf %146, %158 : vector<64x128xf32>
    %cst_154 = arith.constant 0.000000e+00 : f32
    %160 = vector.broadcast %cst_154 : f32 to vector<64x128xf32>
    %161 = arith.maximumf %159, %160 : vector<64x128xf32>
    %c0_155 = arith.constant 0 : index
    %c0_156 = arith.constant 0 : index
    %162 = vector.load %arg11[%c0_155, %c0_156] : memref<64x128xf32, #tpu.memory_space<vmem>>, vector<64x128xf32>
    tpu.vector_store %arg11[%c0_155, %c0_156], %161 {strides = array<i32>} : memref<64x128xf32, #tpu.memory_space<vmem>>, vector<64x128xf32>,
    return
  }
  func.func @transform_0(%arg0: i32) -> (i32, i32, i32, i32) {
    %c0_i32 = arith.constant 0 : i32
    %c0_i32_0 = arith.constant 0 : i32
    %c0_i32_1 = arith.constant 0 : i32
    %c0_i32_2 = arith.constant 0 : i32
    return %arg0, %c0_i32, %c0_i32_0, %c0_i32_1 : i32, i32, i32, i32
  }
  func.func @transform_1(%arg0: i32) -> (i32, i32, i32) {
    %c0_i32 = arith.constant 0 : i32
    %c0_i32_0 = arith.constant 0 : i32
    %c0_i32_1 = arith.constant 0 : i32
    %c0_i32_2 = arith.constant 0 : i32
    return %c0_i32, %c0_i32_0, %c0_i32_1 : i32, i32, i32
  }
  func.func @transform_2(%arg0: i32) -> (i32, i32) {
    %c0_i32 = arith.constant 0 : i32
    %c0_i32_0 = arith.constant 0 : i32
    %c0_i32_1 = arith.constant 0 : i32
    return %c0_i32, %c0_i32_0 : i32, i32
  }
  func.func @transform_3(%arg0: i32) -> (i32, i32) {
    %c0_i32 = arith.constant 0 : i32
    %c0_i32_0 = arith.constant 0 : i32
    %c0_i32_1 = arith.constant 0 : i32
    return %c0_i32, %c0_i32_0 : i32, i32
  }
  func.func @transform_4(%arg0: i32) -> (i32, i32, i32) {
    %c0_i32 = arith.constant 0 : i32
    %c0_i32_0 = arith.constant 0 : i32
    %c0_i32_1 = arith.constant 0 : i32
    %c0_i32_2 = arith.constant 0 : i32
    return %c0_i32, %c0_i32_0, %c0_i32_1 : i32, i32, i32
  }
  func.func @transform_5(%arg0: i32) -> (i32, i32) {
    %c0_i32 = arith.constant 0 : i32
    %c0_i32_0 = arith.constant 0 : i32
    %c0_i32_1 = arith.constant 0 : i32
    return %c0_i32, %c0_i32_0 : i32, i32
  }
  func.func @transform_6(%arg0: i32) -> (i32, i32) {
    %c0_i32 = arith.constant 0 : i32
    %c0_i32_0 = arith.constant 0 : i32
    %c0_i32_1 = arith.constant 0 : i32
    return %c0_i32, %c0_i32_0 : i32, i32
  }
  func.func @transform_7(%arg0: i32) -> (i32, i32) {
    %c0_i32 = arith.constant 0 : i32
    %c0_i32_0 = arith.constant 0 : i32
    %c0_i32_1 = arith.constant 0 : i32
    return %c0_i32, %c0_i32_0 : i32, i32
  }
  func.func @transform_8(%arg0: i32) -> (i32, i32) {
    %c0_i32 = arith.constant 0 : i32
    %c0_i32_0 = arith.constant 0 : i32
    %c0_i32_1 = arith.constant 0 : i32
    return %c0_i32, %c0_i32_0 : i32, i32
  }
  func.func @transform_9(%arg0: i32) -> (i32, i32) {
    %c0_i32 = arith.constant 0 : i32
    %c0_i32_0 = arith.constant 0 : i32
    %c0_i32_1 = arith.constant 0 : i32
    return %c0_i32, %c0_i32_0 : i32, i32
  }
  func.func @transform_10(%arg0: i32) -> (i32, i32) {
    %c0_i32 = arith.constant 0 : i32
    %c0_i32_0 = arith.constant 0 : i32
    return %arg0, %c0_i32 : i32, i32
  }
}

module attributes {stable_mosaic.version = 11 : i64} {
  func.func @_block2d_kernel(%arg0: i32, %arg1: memref<1x10x10x128xf32, #tpu.memory_space<vmem>>, %arg2: memref<9x128x128xbf16, #tpu.memory_space<vmem>>, %arg3: memref<1x128xf32, #tpu.memory_space<vmem>>, %arg4: memref<1x128xf32, #tpu.memory_space<vmem>>, %arg5: memref<9x128x128xbf16, #tpu.memory_space<vmem>>, %arg6: memref<1x128xf32, #tpu.memory_space<vmem>>, %arg7: memref<1x128xf32, #tpu.memory_space<vmem>>, %arg8: memref<64x128xf32, #tpu.memory_space<vmem>>, %arg9: memref<10x10x128xbf16, #tpu.memory_space<vmem>>) attributes {dimension_semantics = [#tpu.dimension_semantics<parallel>], iteration_bounds = array<i64: 2>, scalar_prefetch = 0 : i64, scratch_operands = 1 : i64, tpu.core_type = #tpu.core_type<tc>, window_params = [{transform_indices = @transform_0, window_bounds = array<i64: 1, 10, 10, 128>}, {pipeline_mode = #tpu.pipeline_mode<synchronous>, transform_indices = @transform_1, window_bounds = array<i64: 9, 128, 128>}, {pipeline_mode = #tpu.pipeline_mode<synchronous>, transform_indices = @transform_2, window_bounds = array<i64: 1, 128>}, {pipeline_mode = #tpu.pipeline_mode<synchronous>, transform_indices = @transform_3, window_bounds = array<i64: 1, 128>}, {pipeline_mode = #tpu.pipeline_mode<synchronous>, transform_indices = @transform_4, window_bounds = array<i64: 9, 128, 128>}, {pipeline_mode = #tpu.pipeline_mode<synchronous>, transform_indices = @transform_5, window_bounds = array<i64: 1, 128>}, {pipeline_mode = #tpu.pipeline_mode<synchronous>, transform_indices = @transform_6, window_bounds = array<i64: 1, 128>}, {transform_indices = @transform_7, window_bounds = array<i64: 64, 128>}]} {
    %cst = arith.constant 0.000000e+00 : f32
    %0 = vector.broadcast %cst : f32 to vector<64x128xf32>
    %c0 = arith.constant 0 : index
    %c0_0 = arith.constant 0 : index
    %c0_1 = arith.constant 0 : index
    %c0_2 = arith.constant 0 : index
    %1 = vector.load %arg1[%c0, %c0_0, %c0_1, %c0_2] : memref<1x10x10x128xf32, #tpu.memory_space<vmem>>, vector<1x8x8x128xf32>
    %2 = vector.shape_cast %1 : vector<1x8x8x128xf32> to vector<8x8x128xf32>
    %3 = vector.shape_cast %2 : vector<8x8x128xf32> to vector<64x128xf32>
    %4 = arith.truncf %3 : vector<64x128xf32> to vector<64x128xbf16>
    %c0_3 = arith.constant 0 : index
    %c0_4 = arith.constant 0 : index
    %c0_5 = arith.constant 0 : index
    %5 = vector.load %arg2[%c0_3, %c0_4, %c0_5] : memref<9x128x128xbf16, #tpu.memory_space<vmem>>, vector<1x128x128xbf16>
    %6 = vector.shape_cast %5 : vector<1x128x128xbf16> to vector<128x128xbf16>
    %cst_6 = arith.constant dense<0.000000e+00> : vector<64x128xf32>
    %7 = tpu.matmul %4, %6, %cst_6 {dimension_numbers = #tpu.dot_dimension_numbers<[1], [0], [0], [1], [0, 0, 1, 1], [], []>} : vector<64x128xbf16>, vector<128x128xbf16>, vector<64x128xf32> -> vector<64x128xf32>
    %8 = arith.addf %0, %7 : vector<64x128xf32>
    %c0_7 = arith.constant 0 : index
    %c0_8 = arith.constant 0 : index
    %c1 = arith.constant 1 : index
    %c0_9 = arith.constant 0 : index
    %9 = vector.load %arg1[%c0_7, %c0_8, %c1, %c0_9] : memref<1x10x10x128xf32, #tpu.memory_space<vmem>>, vector<1x8x8x128xf32>
    %10 = vector.shape_cast %9 : vector<1x8x8x128xf32> to vector<8x8x128xf32>
    %11 = vector.shape_cast %10 : vector<8x8x128xf32> to vector<64x128xf32>
    %12 = arith.truncf %11 : vector<64x128xf32> to vector<64x128xbf16>
    %c1_10 = arith.constant 1 : index
    %c0_11 = arith.constant 0 : index
    %c0_12 = arith.constant 0 : index
    %13 = vector.load %arg2[%c1_10, %c0_11, %c0_12] : memref<9x128x128xbf16, #tpu.memory_space<vmem>>, vector<1x128x128xbf16>
    %14 = vector.shape_cast %13 : vector<1x128x128xbf16> to vector<128x128xbf16>
    %cst_13 = arith.constant dense<0.000000e+00> : vector<64x128xf32>
    %15 = tpu.matmul %12, %14, %cst_13 {dimension_numbers = #tpu.dot_dimension_numbers<[1], [0], [0], [1], [0, 0, 1, 1], [], []>} : vector<64x128xbf16>, vector<128x128xbf16>, vector<64x128xf32> -> vector<64x128xf32>
    %16 = arith.addf %8, %15 : vector<64x128xf32>
    %c0_14 = arith.constant 0 : index
    %c0_15 = arith.constant 0 : index
    %c2 = arith.constant 2 : index
    %c0_16 = arith.constant 0 : index
    %17 = vector.load %arg1[%c0_14, %c0_15, %c2, %c0_16] : memref<1x10x10x128xf32, #tpu.memory_space<vmem>>, vector<1x8x8x128xf32>
    %18 = vector.shape_cast %17 : vector<1x8x8x128xf32> to vector<8x8x128xf32>
    %19 = vector.shape_cast %18 : vector<8x8x128xf32> to vector<64x128xf32>
    %20 = arith.truncf %19 : vector<64x128xf32> to vector<64x128xbf16>
    %c2_17 = arith.constant 2 : index
    %c0_18 = arith.constant 0 : index
    %c0_19 = arith.constant 0 : index
    %21 = vector.load %arg2[%c2_17, %c0_18, %c0_19] : memref<9x128x128xbf16, #tpu.memory_space<vmem>>, vector<1x128x128xbf16>
    %22 = vector.shape_cast %21 : vector<1x128x128xbf16> to vector<128x128xbf16>
    %cst_20 = arith.constant dense<0.000000e+00> : vector<64x128xf32>
    %23 = tpu.matmul %20, %22, %cst_20 {dimension_numbers = #tpu.dot_dimension_numbers<[1], [0], [0], [1], [0, 0, 1, 1], [], []>} : vector<64x128xbf16>, vector<128x128xbf16>, vector<64x128xf32> -> vector<64x128xf32>
    %24 = arith.addf %16, %23 : vector<64x128xf32>
    %c0_21 = arith.constant 0 : index
    %c1_22 = arith.constant 1 : index
    %c0_23 = arith.constant 0 : index
    %c0_24 = arith.constant 0 : index
    %25 = vector.load %arg1[%c0_21, %c1_22, %c0_23, %c0_24] : memref<1x10x10x128xf32, #tpu.memory_space<vmem>>, vector<1x8x8x128xf32>
    %26 = vector.shape_cast %25 : vector<1x8x8x128xf32> to vector<8x8x128xf32>
    %27 = vector.shape_cast %26 : vector<8x8x128xf32> to vector<64x128xf32>
    %28 = arith.truncf %27 : vector<64x128xf32> to vector<64x128xbf16>
    %c3 = arith.constant 3 : index
    %c0_25 = arith.constant 0 : index
    %c0_26 = arith.constant 0 : index
    %29 = vector.load %arg2[%c3, %c0_25, %c0_26] : memref<9x128x128xbf16, #tpu.memory_space<vmem>>, vector<1x128x128xbf16>
    %30 = vector.shape_cast %29 : vector<1x128x128xbf16> to vector<128x128xbf16>
    %cst_27 = arith.constant dense<0.000000e+00> : vector<64x128xf32>
    %31 = tpu.matmul %28, %30, %cst_27 {dimension_numbers = #tpu.dot_dimension_numbers<[1], [0], [0], [1], [0, 0, 1, 1], [], []>} : vector<64x128xbf16>, vector<128x128xbf16>, vector<64x128xf32> -> vector<64x128xf32>
    %32 = arith.addf %24, %31 : vector<64x128xf32>
    %c0_28 = arith.constant 0 : index
    %c1_29 = arith.constant 1 : index
    %c1_30 = arith.constant 1 : index
    %c0_31 = arith.constant 0 : index
    %33 = vector.load %arg1[%c0_28, %c1_29, %c1_30, %c0_31] : memref<1x10x10x128xf32, #tpu.memory_space<vmem>>, vector<1x8x8x128xf32>
    %34 = vector.shape_cast %33 : vector<1x8x8x128xf32> to vector<8x8x128xf32>
    %35 = vector.shape_cast %34 : vector<8x8x128xf32> to vector<64x128xf32>
    %36 = arith.truncf %35 : vector<64x128xf32> to vector<64x128xbf16>
    %c4 = arith.constant 4 : index
    %c0_32 = arith.constant 0 : index
    %c0_33 = arith.constant 0 : index
    %37 = vector.load %arg2[%c4, %c0_32, %c0_33] : memref<9x128x128xbf16, #tpu.memory_space<vmem>>, vector<1x128x128xbf16>
    %38 = vector.shape_cast %37 : vector<1x128x128xbf16> to vector<128x128xbf16>
    %cst_34 = arith.constant dense<0.000000e+00> : vector<64x128xf32>
    %39 = tpu.matmul %36, %38, %cst_34 {dimension_numbers = #tpu.dot_dimension_numbers<[1], [0], [0], [1], [0, 0, 1, 1], [], []>} : vector<64x128xbf16>, vector<128x128xbf16>, vector<64x128xf32> -> vector<64x128xf32>
    %40 = arith.addf %32, %39 : vector<64x128xf32>
    %c0_35 = arith.constant 0 : index
    %c1_36 = arith.constant 1 : index
    %c2_37 = arith.constant 2 : index
    %c0_38 = arith.constant 0 : index
    %41 = vector.load %arg1[%c0_35, %c1_36, %c2_37, %c0_38] : memref<1x10x10x128xf32, #tpu.memory_space<vmem>>, vector<1x8x8x128xf32>
    %42 = vector.shape_cast %41 : vector<1x8x8x128xf32> to vector<8x8x128xf32>
    %43 = vector.shape_cast %42 : vector<8x8x128xf32> to vector<64x128xf32>
    %44 = arith.truncf %43 : vector<64x128xf32> to vector<64x128xbf16>
    %c5 = arith.constant 5 : index
    %c0_39 = arith.constant 0 : index
    %c0_40 = arith.constant 0 : index
    %45 = vector.load %arg2[%c5, %c0_39, %c0_40] : memref<9x128x128xbf16, #tpu.memory_space<vmem>>, vector<1x128x128xbf16>
    %46 = vector.shape_cast %45 : vector<1x128x128xbf16> to vector<128x128xbf16>
    %cst_41 = arith.constant dense<0.000000e+00> : vector<64x128xf32>
    %47 = tpu.matmul %44, %46, %cst_41 {dimension_numbers = #tpu.dot_dimension_numbers<[1], [0], [0], [1], [0, 0, 1, 1], [], []>} : vector<64x128xbf16>, vector<128x128xbf16>, vector<64x128xf32> -> vector<64x128xf32>
    %48 = arith.addf %40, %47 : vector<64x128xf32>
    %c0_42 = arith.constant 0 : index
    %c2_43 = arith.constant 2 : index
    %c0_44 = arith.constant 0 : index
    %c0_45 = arith.constant 0 : index
    %49 = vector.load %arg1[%c0_42, %c2_43, %c0_44, %c0_45] : memref<1x10x10x128xf32, #tpu.memory_space<vmem>>, vector<1x8x8x128xf32>
    %50 = vector.shape_cast %49 : vector<1x8x8x128xf32> to vector<8x8x128xf32>
    %51 = vector.shape_cast %50 : vector<8x8x128xf32> to vector<64x128xf32>
    %52 = arith.truncf %51 : vector<64x128xf32> to vector<64x128xbf16>
    %c6 = arith.constant 6 : index
    %c0_46 = arith.constant 0 : index
    %c0_47 = arith.constant 0 : index
    %53 = vector.load %arg2[%c6, %c0_46, %c0_47] : memref<9x128x128xbf16, #tpu.memory_space<vmem>>, vector<1x128x128xbf16>
    %54 = vector.shape_cast %53 : vector<1x128x128xbf16> to vector<128x128xbf16>
    %cst_48 = arith.constant dense<0.000000e+00> : vector<64x128xf32>
    %55 = tpu.matmul %52, %54, %cst_48 {dimension_numbers = #tpu.dot_dimension_numbers<[1], [0], [0], [1], [0, 0, 1, 1], [], []>} : vector<64x128xbf16>, vector<128x128xbf16>, vector<64x128xf32> -> vector<64x128xf32>
    %56 = arith.addf %48, %55 : vector<64x128xf32>
    %c0_49 = arith.constant 0 : index
    %c2_50 = arith.constant 2 : index
    %c1_51 = arith.constant 1 : index
    %c0_52 = arith.constant 0 : index
    %57 = vector.load %arg1[%c0_49, %c2_50, %c1_51, %c0_52] : memref<1x10x10x128xf32, #tpu.memory_space<vmem>>, vector<1x8x8x128xf32>
    %58 = vector.shape_cast %57 : vector<1x8x8x128xf32> to vector<8x8x128xf32>
    %59 = vector.shape_cast %58 : vector<8x8x128xf32> to vector<64x128xf32>
    %60 = arith.truncf %59 : vector<64x128xf32> to vector<64x128xbf16>
    %c7 = arith.constant 7 : index
    %c0_53 = arith.constant 0 : index
    %c0_54 = arith.constant 0 : index
    %61 = vector.load %arg2[%c7, %c0_53, %c0_54] : memref<9x128x128xbf16, #tpu.memory_space<vmem>>, vector<1x128x128xbf16>
    %62 = vector.shape_cast %61 : vector<1x128x128xbf16> to vector<128x128xbf16>
    %cst_55 = arith.constant dense<0.000000e+00> : vector<64x128xf32>
    %63 = tpu.matmul %60, %62, %cst_55 {dimension_numbers = #tpu.dot_dimension_numbers<[1], [0], [0], [1], [0, 0, 1, 1], [], []>} : vector<64x128xbf16>, vector<128x128xbf16>, vector<64x128xf32> -> vector<64x128xf32>
    %64 = arith.addf %56, %63 : vector<64x128xf32>
    %c0_56 = arith.constant 0 : index
    %c2_57 = arith.constant 2 : index
    %c2_58 = arith.constant 2 : index
    %c0_59 = arith.constant 0 : index
    %65 = vector.load %arg1[%c0_56, %c2_57, %c2_58, %c0_59] : memref<1x10x10x128xf32, #tpu.memory_space<vmem>>, vector<1x8x8x128xf32>
    %66 = vector.shape_cast %65 : vector<1x8x8x128xf32> to vector<8x8x128xf32>
    %67 = vector.shape_cast %66 : vector<8x8x128xf32> to vector<64x128xf32>
    %68 = arith.truncf %67 : vector<64x128xf32> to vector<64x128xbf16>
    %c8 = arith.constant 8 : index
    %c0_60 = arith.constant 0 : index
    %c0_61 = arith.constant 0 : index
    %69 = vector.load %arg2[%c8, %c0_60, %c0_61] : memref<9x128x128xbf16, #tpu.memory_space<vmem>>, vector<1x128x128xbf16>
    %70 = vector.shape_cast %69 : vector<1x128x128xbf16> to vector<128x128xbf16>
    %cst_62 = arith.constant dense<0.000000e+00> : vector<64x128xf32>
    %71 = tpu.matmul %68, %70, %cst_62 {dimension_numbers = #tpu.dot_dimension_numbers<[1], [0], [0], [1], [0, 0, 1, 1], [], []>} : vector<64x128xbf16>, vector<128x128xbf16>, vector<64x128xf32> -> vector<64x128xf32>
    %72 = arith.addf %64, %71 : vector<64x128xf32>
    %c0_63 = arith.constant 0 : index
    %c0_64 = arith.constant 0 : index
    %73 = vector.load %arg3[%c0_63, %c0_64] : memref<1x128xf32, #tpu.memory_space<vmem>>, vector<1x128xf32>
    %74 = vector.broadcast %73 : vector<1x128xf32> to vector<64x128xf32>
    %75 = arith.mulf %72, %74 : vector<64x128xf32>
    %c0_65 = arith.constant 0 : index
    %c0_66 = arith.constant 0 : index
    %76 = vector.load %arg4[%c0_65, %c0_66] : memref<1x128xf32, #tpu.memory_space<vmem>>, vector<1x128xf32>
    %77 = vector.broadcast %76 : vector<1x128xf32> to vector<64x128xf32>
    %78 = arith.addf %75, %77 : vector<64x128xf32>
    %cst_67 = arith.constant 0.000000e+00 : f32
    %79 = vector.broadcast %cst_67 : f32 to vector<64x128xf32>
    %80 = arith.maximumf %78, %79 : vector<64x128xf32>
    %cst_68 = arith.constant 0.000000e+00 : bf16
    %81 = vector.broadcast %cst_68 : bf16 to vector<10x10x128xbf16>
    %c0_69 = arith.constant 0 : index
    %c0_70 = arith.constant 0 : index
    %c0_71 = arith.constant 0 : index
    %82 = vector.load %arg9[%c0_69, %c0_70, %c0_71] : memref<10x10x128xbf16, #tpu.memory_space<vmem>>, vector<10x10x128xbf16>
    tpu.vector_store %arg9[%c0_69, %c0_70, %c0_71], %81 {strides = array<i32>} : memref<10x10x128xbf16, #tpu.memory_space<vmem>>, vector<10x10x128xbf16>,
    %83 = vector.shape_cast %80 : vector<64x128xf32> to vector<8x8x128xf32>
    %84 = arith.truncf %83 : vector<8x8x128xf32> to vector<8x8x128xbf16>
    %c1_72 = arith.constant 1 : index
    %c1_73 = arith.constant 1 : index
    %c0_74 = arith.constant 0 : index
    %85 = vector.load %arg9[%c1_72, %c1_73, %c0_74] : memref<10x10x128xbf16, #tpu.memory_space<vmem>>, vector<8x8x128xbf16>
    tpu.vector_store %arg9[%c1_72, %c1_73, %c0_74], %84 {strides = array<i32>} : memref<10x10x128xbf16, #tpu.memory_space<vmem>>, vector<8x8x128xbf16>,
    %cst_75 = arith.constant 0.000000e+00 : f32
    %86 = vector.broadcast %cst_75 : f32 to vector<64x128xf32>
    %c0_76 = arith.constant 0 : index
    %c0_77 = arith.constant 0 : index
    %c0_78 = arith.constant 0 : index
    %87 = vector.load %arg9[%c0_76, %c0_77, %c0_78] : memref<10x10x128xbf16, #tpu.memory_space<vmem>>, vector<8x8x128xbf16>
    %88 = vector.shape_cast %87 : vector<8x8x128xbf16> to vector<64x128xbf16>
    %c0_79 = arith.constant 0 : index
    %c0_80 = arith.constant 0 : index
    %c0_81 = arith.constant 0 : index
    %89 = vector.load %arg5[%c0_79, %c0_80, %c0_81] : memref<9x128x128xbf16, #tpu.memory_space<vmem>>, vector<1x128x128xbf16>
    %90 = vector.shape_cast %89 : vector<1x128x128xbf16> to vector<128x128xbf16>
    %cst_82 = arith.constant dense<0.000000e+00> : vector<64x128xf32>
    %91 = tpu.matmul %88, %90, %cst_82 {dimension_numbers = #tpu.dot_dimension_numbers<[1], [0], [0], [1], [0, 0, 1, 1], [], []>} : vector<64x128xbf16>, vector<128x128xbf16>, vector<64x128xf32> -> vector<64x128xf32>
    %92 = arith.addf %86, %91 : vector<64x128xf32>
    %c0_83 = arith.constant 0 : index
    %c1_84 = arith.constant 1 : index
    %c0_85 = arith.constant 0 : index
    %93 = vector.load %arg9[%c0_83, %c1_84, %c0_85] : memref<10x10x128xbf16, #tpu.memory_space<vmem>>, vector<8x8x128xbf16>
    %94 = vector.shape_cast %93 : vector<8x8x128xbf16> to vector<64x128xbf16>
    %c1_86 = arith.constant 1 : index
    %c0_87 = arith.constant 0 : index
    %c0_88 = arith.constant 0 : index
    %95 = vector.load %arg5[%c1_86, %c0_87, %c0_88] : memref<9x128x128xbf16, #tpu.memory_space<vmem>>, vector<1x128x128xbf16>
    %96 = vector.shape_cast %95 : vector<1x128x128xbf16> to vector<128x128xbf16>
    %cst_89 = arith.constant dense<0.000000e+00> : vector<64x128xf32>
    %97 = tpu.matmul %94, %96, %cst_89 {dimension_numbers = #tpu.dot_dimension_numbers<[1], [0], [0], [1], [0, 0, 1, 1], [], []>} : vector<64x128xbf16>, vector<128x128xbf16>, vector<64x128xf32> -> vector<64x128xf32>
    %98 = arith.addf %92, %97 : vector<64x128xf32>
    %c0_90 = arith.constant 0 : index
    %c2_91 = arith.constant 2 : index
    %c0_92 = arith.constant 0 : index
    %99 = vector.load %arg9[%c0_90, %c2_91, %c0_92] : memref<10x10x128xbf16, #tpu.memory_space<vmem>>, vector<8x8x128xbf16>
    %100 = vector.shape_cast %99 : vector<8x8x128xbf16> to vector<64x128xbf16>
    %c2_93 = arith.constant 2 : index
    %c0_94 = arith.constant 0 : index
    %c0_95 = arith.constant 0 : index
    %101 = vector.load %arg5[%c2_93, %c0_94, %c0_95] : memref<9x128x128xbf16, #tpu.memory_space<vmem>>, vector<1x128x128xbf16>
    %102 = vector.shape_cast %101 : vector<1x128x128xbf16> to vector<128x128xbf16>
    %cst_96 = arith.constant dense<0.000000e+00> : vector<64x128xf32>
    %103 = tpu.matmul %100, %102, %cst_96 {dimension_numbers = #tpu.dot_dimension_numbers<[1], [0], [0], [1], [0, 0, 1, 1], [], []>} : vector<64x128xbf16>, vector<128x128xbf16>, vector<64x128xf32> -> vector<64x128xf32>
    %104 = arith.addf %98, %103 : vector<64x128xf32>
    %c1_97 = arith.constant 1 : index
    %c0_98 = arith.constant 0 : index
    %c0_99 = arith.constant 0 : index
    %105 = vector.load %arg9[%c1_97, %c0_98, %c0_99] : memref<10x10x128xbf16, #tpu.memory_space<vmem>>, vector<8x8x128xbf16>
    %106 = vector.shape_cast %105 : vector<8x8x128xbf16> to vector<64x128xbf16>
    %c3_100 = arith.constant 3 : index
    %c0_101 = arith.constant 0 : index
    %c0_102 = arith.constant 0 : index
    %107 = vector.load %arg5[%c3_100, %c0_101, %c0_102] : memref<9x128x128xbf16, #tpu.memory_space<vmem>>, vector<1x128x128xbf16>
    %108 = vector.shape_cast %107 : vector<1x128x128xbf16> to vector<128x128xbf16>
    %cst_103 = arith.constant dense<0.000000e+00> : vector<64x128xf32>
    %109 = tpu.matmul %106, %108, %cst_103 {dimension_numbers = #tpu.dot_dimension_numbers<[1], [0], [0], [1], [0, 0, 1, 1], [], []>} : vector<64x128xbf16>, vector<128x128xbf16>, vector<64x128xf32> -> vector<64x128xf32>
    %110 = arith.addf %104, %109 : vector<64x128xf32>
    %c1_104 = arith.constant 1 : index
    %c1_105 = arith.constant 1 : index
    %c0_106 = arith.constant 0 : index
    %111 = vector.load %arg9[%c1_104, %c1_105, %c0_106] : memref<10x10x128xbf16, #tpu.memory_space<vmem>>, vector<8x8x128xbf16>
    %112 = vector.shape_cast %111 : vector<8x8x128xbf16> to vector<64x128xbf16>
    %c4_107 = arith.constant 4 : index
    %c0_108 = arith.constant 0 : index
    %c0_109 = arith.constant 0 : index
    %113 = vector.load %arg5[%c4_107, %c0_108, %c0_109] : memref<9x128x128xbf16, #tpu.memory_space<vmem>>, vector<1x128x128xbf16>
    %114 = vector.shape_cast %113 : vector<1x128x128xbf16> to vector<128x128xbf16>
    %cst_110 = arith.constant dense<0.000000e+00> : vector<64x128xf32>
    %115 = tpu.matmul %112, %114, %cst_110 {dimension_numbers = #tpu.dot_dimension_numbers<[1], [0], [0], [1], [0, 0, 1, 1], [], []>} : vector<64x128xbf16>, vector<128x128xbf16>, vector<64x128xf32> -> vector<64x128xf32>
    %116 = arith.addf %110, %115 : vector<64x128xf32>
    %c1_111 = arith.constant 1 : index
    %c2_112 = arith.constant 2 : index
    %c0_113 = arith.constant 0 : index
    %117 = vector.load %arg9[%c1_111, %c2_112, %c0_113] : memref<10x10x128xbf16, #tpu.memory_space<vmem>>, vector<8x8x128xbf16>
    %118 = vector.shape_cast %117 : vector<8x8x128xbf16> to vector<64x128xbf16>
    %c5_114 = arith.constant 5 : index
    %c0_115 = arith.constant 0 : index
    %c0_116 = arith.constant 0 : index
    %119 = vector.load %arg5[%c5_114, %c0_115, %c0_116] : memref<9x128x128xbf16, #tpu.memory_space<vmem>>, vector<1x128x128xbf16>
    %120 = vector.shape_cast %119 : vector<1x128x128xbf16> to vector<128x128xbf16>
    %cst_117 = arith.constant dense<0.000000e+00> : vector<64x128xf32>
    %121 = tpu.matmul %118, %120, %cst_117 {dimension_numbers = #tpu.dot_dimension_numbers<[1], [0], [0], [1], [0, 0, 1, 1], [], []>} : vector<64x128xbf16>, vector<128x128xbf16>, vector<64x128xf32> -> vector<64x128xf32>
    %122 = arith.addf %116, %121 : vector<64x128xf32>
    %c2_118 = arith.constant 2 : index
    %c0_119 = arith.constant 0 : index
    %c0_120 = arith.constant 0 : index
    %123 = vector.load %arg9[%c2_118, %c0_119, %c0_120] : memref<10x10x128xbf16, #tpu.memory_space<vmem>>, vector<8x8x128xbf16>
    %124 = vector.shape_cast %123 : vector<8x8x128xbf16> to vector<64x128xbf16>
    %c6_121 = arith.constant 6 : index
    %c0_122 = arith.constant 0 : index
    %c0_123 = arith.constant 0 : index
    %125 = vector.load %arg5[%c6_121, %c0_122, %c0_123] : memref<9x128x128xbf16, #tpu.memory_space<vmem>>, vector<1x128x128xbf16>
    %126 = vector.shape_cast %125 : vector<1x128x128xbf16> to vector<128x128xbf16>
    %cst_124 = arith.constant dense<0.000000e+00> : vector<64x128xf32>
    %127 = tpu.matmul %124, %126, %cst_124 {dimension_numbers = #tpu.dot_dimension_numbers<[1], [0], [0], [1], [0, 0, 1, 1], [], []>} : vector<64x128xbf16>, vector<128x128xbf16>, vector<64x128xf32> -> vector<64x128xf32>
    %128 = arith.addf %122, %127 : vector<64x128xf32>
    %c2_125 = arith.constant 2 : index
    %c1_126 = arith.constant 1 : index
    %c0_127 = arith.constant 0 : index
    %129 = vector.load %arg9[%c2_125, %c1_126, %c0_127] : memref<10x10x128xbf16, #tpu.memory_space<vmem>>, vector<8x8x128xbf16>
    %130 = vector.shape_cast %129 : vector<8x8x128xbf16> to vector<64x128xbf16>
    %c7_128 = arith.constant 7 : index
    %c0_129 = arith.constant 0 : index
    %c0_130 = arith.constant 0 : index
    %131 = vector.load %arg5[%c7_128, %c0_129, %c0_130] : memref<9x128x128xbf16, #tpu.memory_space<vmem>>, vector<1x128x128xbf16>
    %132 = vector.shape_cast %131 : vector<1x128x128xbf16> to vector<128x128xbf16>
    %cst_131 = arith.constant dense<0.000000e+00> : vector<64x128xf32>
    %133 = tpu.matmul %130, %132, %cst_131 {dimension_numbers = #tpu.dot_dimension_numbers<[1], [0], [0], [1], [0, 0, 1, 1], [], []>} : vector<64x128xbf16>, vector<128x128xbf16>, vector<64x128xf32> -> vector<64x128xf32>
    %134 = arith.addf %128, %133 : vector<64x128xf32>
    %c2_132 = arith.constant 2 : index
    %c2_133 = arith.constant 2 : index
    %c0_134 = arith.constant 0 : index
    %135 = vector.load %arg9[%c2_132, %c2_133, %c0_134] : memref<10x10x128xbf16, #tpu.memory_space<vmem>>, vector<8x8x128xbf16>
    %136 = vector.shape_cast %135 : vector<8x8x128xbf16> to vector<64x128xbf16>
    %c8_135 = arith.constant 8 : index
    %c0_136 = arith.constant 0 : index
    %c0_137 = arith.constant 0 : index
    %137 = vector.load %arg5[%c8_135, %c0_136, %c0_137] : memref<9x128x128xbf16, #tpu.memory_space<vmem>>, vector<1x128x128xbf16>
    %138 = vector.shape_cast %137 : vector<1x128x128xbf16> to vector<128x128xbf16>
    %cst_138 = arith.constant dense<0.000000e+00> : vector<64x128xf32>
    %139 = tpu.matmul %136, %138, %cst_138 {dimension_numbers = #tpu.dot_dimension_numbers<[1], [0], [0], [1], [0, 0, 1, 1], [], []>} : vector<64x128xbf16>, vector<128x128xbf16>, vector<64x128xf32> -> vector<64x128xf32>
    %140 = arith.addf %134, %139 : vector<64x128xf32>
    %c0_139 = arith.constant 0 : index
    %c0_140 = arith.constant 0 : index
    %141 = vector.load %arg6[%c0_139, %c0_140] : memref<1x128xf32, #tpu.memory_space<vmem>>, vector<1x128xf32>
    %142 = vector.broadcast %141 : vector<1x128xf32> to vector<64x128xf32>
    %143 = arith.mulf %140, %142 : vector<64x128xf32>
    %c0_141 = arith.constant 0 : index
    %c0_142 = arith.constant 0 : index
    %144 = vector.load %arg7[%c0_141, %c0_142] : memref<1x128xf32, #tpu.memory_space<vmem>>, vector<1x128xf32>
    %145 = vector.broadcast %144 : vector<1x128xf32> to vector<64x128xf32>
    %146 = arith.addf %143, %145 : vector<64x128xf32>
    %c0_143 = arith.constant 0 : index
    %c1_144 = arith.constant 1 : index
    %c1_145 = arith.constant 1 : index
    %c0_146 = arith.constant 0 : index
    %147 = vector.load %arg1[%c0_143, %c1_144, %c1_145, %c0_146] : memref<1x10x10x128xf32, #tpu.memory_space<vmem>>, vector<1x8x8x128xf32>
    %148 = vector.shape_cast %147 : vector<1x8x8x128xf32> to vector<8x8x128xf32>
    %149 = vector.shape_cast %148 : vector<8x8x128xf32> to vector<64x128xf32>
    %150 = arith.addf %146, %149 : vector<64x128xf32>
    %cst_147 = arith.constant 0.000000e+00 : f32
    %151 = vector.broadcast %cst_147 : f32 to vector<64x128xf32>
    %152 = arith.maximumf %150, %151 : vector<64x128xf32>
    %c0_148 = arith.constant 0 : index
    %c0_149 = arith.constant 0 : index
    %153 = vector.load %arg8[%c0_148, %c0_149] : memref<64x128xf32, #tpu.memory_space<vmem>>, vector<64x128xf32>
    tpu.vector_store %arg8[%c0_148, %c0_149], %152 {strides = array<i32>} : memref<64x128xf32, #tpu.memory_space<vmem>>, vector<64x128xf32>,
    return
  }
  func.func @transform_0(%arg0: i32) -> (i32, i32, i32, i32) {
    %c0_i32 = arith.constant 0 : i32
    %c0_i32_0 = arith.constant 0 : i32
    %c0_i32_1 = arith.constant 0 : i32
    %c0_i32_2 = arith.constant 0 : i32
    return %arg0, %c0_i32, %c0_i32_0, %c0_i32_1 : i32, i32, i32, i32
  }
  func.func @transform_1(%arg0: i32) -> (i32, i32, i32) {
    %c0_i32 = arith.constant 0 : i32
    %c0_i32_0 = arith.constant 0 : i32
    %c0_i32_1 = arith.constant 0 : i32
    %c0_i32_2 = arith.constant 0 : i32
    return %c0_i32, %c0_i32_0, %c0_i32_1 : i32, i32, i32
  }
  func.func @transform_2(%arg0: i32) -> (i32, i32) {
    %c0_i32 = arith.constant 0 : i32
    %c0_i32_0 = arith.constant 0 : i32
    %c0_i32_1 = arith.constant 0 : i32
    return %c0_i32, %c0_i32_0 : i32, i32
  }
  func.func @transform_3(%arg0: i32) -> (i32, i32) {
    %c0_i32 = arith.constant 0 : i32
    %c0_i32_0 = arith.constant 0 : i32
    %c0_i32_1 = arith.constant 0 : i32
    return %c0_i32, %c0_i32_0 : i32, i32
  }
  func.func @transform_4(%arg0: i32) -> (i32, i32, i32) {
    %c0_i32 = arith.constant 0 : i32
    %c0_i32_0 = arith.constant 0 : i32
    %c0_i32_1 = arith.constant 0 : i32
    %c0_i32_2 = arith.constant 0 : i32
    return %c0_i32, %c0_i32_0, %c0_i32_1 : i32, i32, i32
  }
  func.func @transform_5(%arg0: i32) -> (i32, i32) {
    %c0_i32 = arith.constant 0 : i32
    %c0_i32_0 = arith.constant 0 : i32
    %c0_i32_1 = arith.constant 0 : i32
    return %c0_i32, %c0_i32_0 : i32, i32
  }
  func.func @transform_6(%arg0: i32) -> (i32, i32) {
    %c0_i32 = arith.constant 0 : i32
    %c0_i32_0 = arith.constant 0 : i32
    %c0_i32_1 = arith.constant 0 : i32
    return %c0_i32, %c0_i32_0 : i32, i32
  }
  func.func @transform_7(%arg0: i32) -> (i32, i32) {
    %c0_i32 = arith.constant 0 : i32
    %c0_i32_0 = arith.constant 0 : i32
    return %arg0, %c0_i32 : i32, i32
  }
}

</mosaic_0001>

<llo_original>
// kernel: fwd.2
$region0: #{fwd.2}
  #allocation0 [shape = 'u32[]', space=smem, size = 0x4, offset = 0x4, fixed_abs, tag = 'smem constant byte address 0x4 - core index']
  #allocation1 [shape = 'u32[144,128]{1,0:T(1,128)}', space=vmem, size = 0x12000, scoped, tag = 'internal scratch']
  #allocation2 [shape = 'bf16[10,10,128]{2,1,0:T(8,128)(2,1)}', space=vmem, size = 0xa000, scoped, tag = 'scratch operand']
  %s0 = inlined_call_operand.vmem [shape: f32[8,9,9,32], index: 0, kind: input, shape index: {}]
  %s1 = inlined_call_operand.vmem [shape: bf16[9,32,128], index: 1, kind: input, shape index: {}]
  %s2 = inlined_call_operand.vmem [shape: f32[1,128], index: 2, kind: input, shape index: {}]
  %s3 = inlined_call_operand.vmem [shape: f32[1,128], index: 3, kind: input, shape index: {}]
  %s4 = inlined_call_operand.vmem [shape: bf16[9,128,128], index: 4, kind: input, shape index: {}]
  %s5 = inlined_call_operand.vmem [shape: f32[1,128], index: 5, kind: input, shape index: {}]
  %s6 = inlined_call_operand.vmem [shape: f32[1,128], index: 6, kind: input, shape index: {}]
  %s7 = inlined_call_operand.vmem [shape: bf16[32,128], index: 7, kind: input, shape index: {}]
  %s8 = inlined_call_operand.vmem [shape: f32[1,128], index: 8, kind: input, shape index: {}]
  %s9 = inlined_call_operand.vmem [shape: f32[1,128], index: 9, kind: input, shape index: {}]
  %s10 = inlined_call_operand.vmem [shape: f32[128,128], index: 10, kind: output, shape index: {}]
  %s11 = sld [smem:[#allocation0]]
  $region73: #{fwd.2} parent=0
    _
  %s13 = ssub.s32 1, %s11
  %s14 = scalar_select 0, %s13, %s11
  loop: start=0, step=1, limit=4
  $region2: #{fwd.2} parent=0 // loop_pre_header
    _
  $region3: #{fwd.2} parent=0 // loop_header
    %s16 = sphi 0, %s20
    %p17 = scmp.ge.s32.totalorder %s16, 4
    %s26 = sphi 0, %s28
    %s29 = sphi 0, %s26
    %s30 = sphi 0, %s29
    %s46 = sphi 0, %s30
    %s50 = sphi 0, %s50
    %s52 = sphi 0, %s50
    %s53 = sphi 0, %s52
    %s67 = sphi 0, %s53
    %s71 = sphi 0, %s71
    %s73 = sphi 0, %s71
    %s74 = sphi 0, %s73
    %s88 = sphi 0, %s74
    %s92 = sphi 0, %s92
    %s94 = sphi 0, %s92
    %s95 = sphi 0, %s94
    %s109 = sphi 0, %s95
    %s113 = sphi 0, %s113
    %s115 = sphi 0, %s113
    %s116 = sphi 0, %s115
    %s130 = sphi 0, %s116
    %s134 = sphi 0, %s134
    %s136 = sphi 0, %s134
    %s137 = sphi 0, %s136
    %s151 = sphi 0, %s137
    %s155 = sphi 0, %s155
    %s157 = sphi 0, %s155
    %s158 = sphi 0, %s157
    %s172 = sphi 0, %s158
    %s176 = sphi 0, %s176
    %s178 = sphi 0, %s176
    %s179 = sphi 0, %s178
    %s193 = sphi 0, %s179
    %s197 = sphi 0, %s197
    %s199 = sphi 0, %s197
    %s200 = sphi 0, %s199
    %s214 = sphi 0, %s200
    %s218 = sphi 0, %s218
    %s220 = sphi 0, %s218
    %s221 = sphi 0, %s220
    %s235 = sphi 0, %s221
    %s241 = sphi 0, %s243
    %s244 = sphi 0, %s241
    %s245 = sphi 0, %s244
    %s261 = sphi 0, %s245
  $region4: #{fwd.2} parent=0 // loop_header_branch
    %19 = sbr.rel (%p17) target = $region8
  $region5: #{fwd.2} parent=0 // loop_body
    %s21 = ssub.s32 %s16, 1
    %s22 = ssub.s32 %s16, 2
    %s23 = sadd.s32 %s16, 1
    %s24 = ssub.s32 %s16, %s23
    %p25 = scmp.eq.s32.totalorder %s24, 0
    %s27 = sadd.s32 %s26, 1
    %s28 = scalar_select %p25, %s26, %s27
    %p31 = pneg %p25
    %p32 = scmp.eq.s32.totalorder %s16, 1
    %p33 = por %p31, %p32
    %p34 = scmp.ne.s32.totalorder %s26, %s29
    %p35 = scmp.eq.s32.totalorder %s16, 0
    %p36 = por %p34, %p35
    %p37 = scmp.ne.s32.totalorder %s26, %s29
    %p38 = scmp.eq.s32.totalorder %s21, 1
    %p39 = por %p37, %p38
    %p40 = scmp.ne.s32.totalorder %s29, %s30
    %p41 = scmp.eq.s32.totalorder %s21, 0
    %p42 = por %p40, %p41
    %p43 = scmp.ne.s32.totalorder %s29, %s30
    %p44 = scmp.eq.s32.totalorder %s22, 1
    %p45 = por %p43, %p44
    %p47 = scmp.ne.s32.totalorder %s30, %s46
    %p48 = scmp.eq.s32.totalorder %s22, 0
    %p49 = por %p47, %p48
    %s51 = sadd.s32 %s50, 1
    %p54 = scmp.eq.s32.totalorder %s16, 1
    %p55 = scmp.ne.s32.totalorder %s50, %s52
    %p56 = scmp.eq.s32.totalorder %s16, 0
    %p57 = por %p55, %p56
    %p58 = scmp.ne.s32.totalorder %s50, %s52
    %p59 = scmp.eq.s32.totalorder %s21, 1
    %p60 = por %p58, %p59
    %p61 = scmp.ne.s32.totalorder %s52, %s53
    %p62 = scmp.eq.s32.totalorder %s21, 0
    %p63 = por %p61, %p62
    %p64 = scmp.ne.s32.totalorder %s52, %s53
    %p65 = scmp.eq.s32.totalorder %s22, 1
    %p66 = por %p64, %p65
    %p68 = scmp.ne.s32.totalorder %s53, %s67
    %p69 = scmp.eq.s32.totalorder %s22, 0
    %p70 = por %p68, %p69
    %s72 = sadd.s32 %s71, 1
    %p75 = scmp.eq.s32.totalorder %s16, 1
    %p76 = scmp.ne.s32.totalorder %s71, %s73
    %p77 = scmp.eq.s32.totalorder %s16, 0
    %p78 = por %p76, %p77
    %p79 = scmp.ne.s32.totalorder %s71, %s73
    %p80 = scmp.eq.s32.totalorder %s21, 1
    %p81 = por %p79, %p80
    %p82 = scmp.ne.s32.totalorder %s73, %s74
    %p83 = scmp.eq.s32.totalorder %s21, 0
    %p84 = por %p82, %p83
    %p85 = scmp.ne.s32.totalorder %s73, %s74
    %p86 = scmp.eq.s32.totalorder %s22, 1
    %p87 = por %p85, %p86
    %p89 = scmp.ne.s32.totalorder %s74, %s88
    %p90 = scmp.eq.s32.totalorder %s22, 0
    %p91 = por %p89, %p90
    %s93 = sadd.s32 %s92, 1
    %p96 = scmp.eq.s32.totalorder %s16, 1
    %p97 = scmp.ne.s32.totalorder %s92, %s94
    %p98 = scmp.eq.s32.totalorder %s16, 0
    %p99 = por %p97, %p98
    %p100 = scmp.ne.s32.totalorder %s92, %s94
    %p101 = scmp.eq.s32.totalorder %s21, 1
    %p102 = por %p100, %p101
    %p103 = scmp.ne.s32.totalorder %s94, %s95
    %p104 = scmp.eq.s32.totalorder %s21, 0
    %p105 = por %p103, %p104
    %p106 = scmp.ne.s32.totalorder %s94, %s95
    %p107 = scmp.eq.s32.totalorder %s22, 1
    %p108 = por %p106, %p107
    %p110 = scmp.ne.s32.totalorder %s95, %s109
    %p111 = scmp.eq.s32.totalorder %s22, 0
    %p112 = por %p110, %p111
    %s114 = sadd.s32 %s113, 1
    %p117 = scmp.eq.s32.totalorder %s16, 1
    %p118 = scmp.ne.s32.totalorder %s113, %s115
    %p119 = scmp.eq.s32.totalorder %s16, 0
    %p120 = por %p118, %p119
    %p121 = scmp.ne.s32.totalorder %s113, %s115
    %p122 = scmp.eq.s32.totalorder %s21, 1
    %p123 = por %p121, %p122
    %p124 = scmp.ne.s32.totalorder %s115, %s116
    %p125 = scmp.eq.s32.totalorder %s21, 0
    %p126 = por %p124, %p125
    %p127 = scmp.ne.s32.totalorder %s115, %s116
    %p128 = scmp.eq.s32.totalorder %s22, 1
    %p129 = por %p127, %p128
    %p131 = scmp.ne.s32.totalorder %s116, %s130
    %p132 = scmp.eq.s32.totalorder %s22, 0
    %p133 = por %p131, %p132
    %s135 = sadd.s32 %s134, 1
    %p138 = scmp.eq.s32.totalorder %s16, 1
    %p139 = scmp.ne.s32.totalorder %s134, %s136
    %p140 = scmp.eq.s32.totalorder %s16, 0
    %p141 = por %p139, %p140
    %p142 = scmp.ne.s32.totalorder %s134, %s136
    %p143 = scmp.eq.s32.totalorder %s21, 1
    %p144 = por %p142, %p143
    %p145 = scmp.ne.s32.totalorder %s136, %s137
    %p146 = scmp.eq.s32.totalorder %s21, 0
    %p147 = por %p145, %p146
    %p148 = scmp.ne.s32.totalorder %s136, %s137
    %p149 = scmp.eq.s32.totalorder %s22, 1
    %p150 = por %p148, %p149
    %p152 = scmp.ne.s32.totalorder %s137, %s151
    %p153 = scmp.eq.s32.totalorder %s22, 0
    %p154 = por %p152, %p153
    %s156 = sadd.s32 %s155, 1
    %p159 = scmp.eq.s32.totalorder %s16, 1
    %p160 = scmp.ne.s32.totalorder %s155, %s157
    %p161 = scmp.eq.s32.totalorder %s16, 0
    %p162 = por %p160, %p161
    %p163 = scmp.ne.s32.totalorder %s155, %s157
    %p164 = scmp.eq.s32.totalorder %s21, 1
    %p165 = por %p163, %p164
    %p166 = scmp.ne.s32.totalorder %s157, %s158
    %p167 = scmp.eq.s32.totalorder %s21, 0
    %p168 = por %p166, %p167
    %p169 = scmp.ne.s32.totalorder %s157, %s158
    %p170 = scmp.eq.s32.totalorder %s22, 1
    %p171 = por %p169, %p170
    %p173 = scmp.ne.s32.totalorder %s158, %s172
    %p174 = scmp.eq.s32.totalorder %s22, 0
    %p175 = por %p173, %p174
    %s177 = sadd.s32 %s176, 1
    %p180 = scmp.eq.s32.totalorder %s16, 1
    %p181 = scmp.ne.s32.totalorder %s176, %s178
    %p182 = scmp.eq.s32.totalorder %s16, 0
    %p183 = por %p181, %p182
    %p184 = scmp.ne.s32.totalorder %s176, %s178
    %p185 = scmp.eq.s32.totalorder %s21, 1
    %p186 = por %p184, %p185
    %p187 = scmp.ne.s32.totalorder %s178, %s179
    %p188 = scmp.eq.s32.totalorder %s21, 0
    %p189 = por %p187, %p188
    %p190 = scmp.ne.s32.totalorder %s178, %s179
    %p191 = scmp.eq.s32.totalorder %s22, 1
    %p192 = por %p190, %p191
    %p194 = scmp.ne.s32.totalorder %s179, %s193
    %p195 = scmp.eq.s32.totalorder %s22, 0
    %p196 = por %p194, %p195
    %s198 = sadd.s32 %s197, 1
    %p201 = scmp.eq.s32.totalorder %s16, 1
    %p202 = scmp.ne.s32.totalorder %s197, %s199
    %p203 = scmp.eq.s32.totalorder %s16, 0
    %p204 = por %p202, %p203
    %p205 = scmp.ne.s32.totalorder %s197, %s199
    %p206 = scmp.eq.s32.totalorder %s21, 1
    %p207 = por %p205, %p206
    %p208 = scmp.ne.s32.totalorder %s199, %s200
    %p209 = scmp.eq.s32.totalorder %s21, 0
    %p210 = por %p208, %p209
    %p211 = scmp.ne.s32.totalorder %s199, %s200
    %p212 = scmp.eq.s32.totalorder %s22, 1
    %p213 = por %p211, %p212
    %p215 = scmp.ne.s32.totalorder %s200, %s214
    %p216 = scmp.eq.s32.totalorder %s22, 0
    %p217 = por %p215, %p216
    %s219 = sadd.s32 %s218, 1
    %p222 = scmp.eq.s32.totalorder %s16, 1
    %p223 = scmp.ne.s32.totalorder %s218, %s220
    %p224 = scmp.eq.s32.totalorder %s16, 0
    %p225 = por %p223, %p224
    %p226 = scmp.ne.s32.totalorder %s218, %s220
    %p227 = scmp.eq.s32.totalorder %s21, 1
    %p228 = por %p226, %p227
    %p229 = scmp.ne.s32.totalorder %s220, %s221
    %p230 = scmp.eq.s32.totalorder %s21, 0
    %p231 = por %p229, %p230
    %p232 = scmp.ne.s32.totalorder %s220, %s221
    %p233 = scmp.eq.s32.totalorder %s22, 1
    %p234 = por %p232, %p233
    %p236 = scmp.ne.s32.totalorder %s221, %s235
    %p237 = scmp.eq.s32.totalorder %s22, 0
    %p238 = por %p236, %p237
    %s239 = ssub.s32 %s16, %s23
    %p240 = scmp.eq.s32.totalorder %s239, 0
    %s242 = sadd.s32 %s241, 1
    %s243 = scalar_select %p240, %s241, %s242
    %p246 = pneg %p240
    %p247 = scmp.eq.s32.totalorder %s16, 1
    %p248 = por %p246, %p247
    %p249 = scmp.ne.s32.totalorder %s241, %s244
    %p250 = scmp.eq.s32.totalorder %s16, 0
    %p251 = por %p249, %p250
    %p252 = scmp.ne.s32.totalorder %s241, %s244
    %p253 = scmp.eq.s32.totalorder %s21, 1
    %p254 = por %p252, %p253
    %p255 = scmp.ne.s32.totalorder %s244, %s245
    %p256 = scmp.eq.s32.totalorder %s21, 0
    %p257 = por %p255, %p256
    %p258 = scmp.ne.s32.totalorder %s244, %s245
    %p259 = scmp.eq.s32.totalorder %s22, 1
    %p260 = por %p258, %p259
    %p262 = scmp.ne.s32.totalorder %s245, %s261
    %p263 = scmp.eq.s32.totalorder %s22, 0
    %p264 = por %p262, %p263
    %p265 = scmp.le.s32.totalorder 1, %s16
    %p266 = scmp.lt.s32.totalorder %s16, 3
    %p267 = pnand %p265, %p266
    %p268 = pneg %p267
    // Predicated region
    $region9: #{fwd.2} parent=5 // pred_check
      _
    $region10: #{fwd.2} parent=5 // pred_check_branch
      %270 = sbr.rel (%p267) target = $region12
    $region11: #{fwd.2} parent=5 // pred_region
      %s271 = ssub.s32 %s16, 1
      // Predicated region
      $region13: #{fwd.2} parent=11 // pred_check
        %p272 = pneg %p63
      $region14: #{fwd.2} parent=11 // pred_check_branch
        %274 = sbr.rel (%p272) target = $region16
      $region15: #{fwd.2} parent=11 // pred_region
        _
      $region16: #{fwd.2} parent=11 // pred_fallthru
        _
      // Predicated region
      $region17: #{fwd.2} parent=11 // pred_check
        %p275 = pneg %p84
      $region18: #{fwd.2} parent=11 // pred_check_branch
        %277 = sbr.rel (%p275) target = $region20
      $region19: #{fwd.2} parent=11 // pred_region
        _
      $region20: #{fwd.2} parent=11 // pred_fallthru
        _
      // Predicated region
      $region21: #{fwd.2} parent=11 // pred_check
        %p278 = pneg %p105
      $region22: #{fwd.2} parent=11 // pred_check_branch
        %280 = sbr.rel (%p278) target = $region24
      $region23: #{fwd.2} parent=11 // pred_region
        _
      $region24: #{fwd.2} parent=11 // pred_fallthru
        _
      // Predicated region
      $region25: #{fwd.2} parent=11 // pred_check
        %p281 = pneg %p126
      $region26: #{fwd.2} parent=11 // pred_check_branch
        %283 = sbr.rel (%p281) target = $region28
      $region27: #{fwd.2} parent=11 // pred_region
        _
      $region28: #{fwd.2} parent=11 // pred_fallthru
        _
      // Predicated region
      $region29: #{fwd.2} parent=11 // pred_check
        %p284 = pneg %p147
      $region30: #{fwd.2} parent=11 // pred_check_branch
        %286 = sbr.rel (%p284) target = $region32
      $region31: #{fwd.2} parent=11 // pred_region
        _
      $region32: #{fwd.2} parent=11 // pred_fallthru
        _
      // Predicated region
      $region33: #{fwd.2} parent=11 // pred_check
        %p287 = pneg %p168
      $region34: #{fwd.2} parent=11 // pred_check_branch
        %289 = sbr.rel (%p287) target = $region36
      $region35: #{fwd.2} parent=11 // pred_region
        _
      $region36: #{fwd.2} parent=11 // pred_fallthru
        _
      // Predicated region
      $region37: #{fwd.2} parent=11 // pred_check
        %p290 = pneg %p189
      $region38: #{fwd.2} parent=11 // pred_check_branch
        %292 = sbr.rel (%p290) target = $region40
      $region39: #{fwd.2} parent=11 // pred_region
        _
      $region40: #{fwd.2} parent=11 // pred_fallthru
        _
      // Predicated region
      $region41: #{fwd.2} parent=11 // pred_check
        %p293 = pneg %p210
      $region42: #{fwd.2} parent=11 // pred_check_branch
        %295 = sbr.rel (%p293) target = $region44
      $region43: #{fwd.2} parent=11 // pred_region
        _
      $region44: #{fwd.2} parent=11 // pred_fallthru
        _
      // Predicated region
      $region45: #{fwd.2} parent=11 // pred_check
        %p296 = pneg %p231
      $region46: #{fwd.2} parent=11 // pred_check_branch
        %298 = sbr.rel (%p296) target = $region48
      $region47: #{fwd.2} parent=11 // pred_region
        _
      $region48: #{fwd.2} parent=11 // pred_fallthru
        _
    $region12: #{fwd.2} parent=5 // pred_fallthru
      _
    %p299 = scmp.lt.s32.totalorder %s16, 2
    // Predicated region
    $region49: #{fwd.2} parent=5 // pred_check
      %p300 = pneg %p299
    $region50: #{fwd.2} parent=5 // pred_check_branch
      %302 = sbr.rel (%p300) target = $region52
    $region51: #{fwd.2} parent=5 // pred_region
      // Predicated region
      $region53: #{fwd.2} parent=51 // pred_check
        %p303 = pneg %p36
      $region54: #{fwd.2} parent=51 // pred_check_branch
        %305 = sbr.rel (%p303) target = $region56
      $region55: #{fwd.2} parent=51 // pred_region
        %s306 = smul.u32 4, %s16
        %p307 = scmp.lt.s32.totalorder %s306, 7
        %s308 = scalar_select %p307, %s306, 7
        %s309 = smul.addr %s308, 18
        %s310 = smul.addr %s309, 8
        %s311 = scalar_lea.vmem %s0, %s310
        %s312 = smul.u32 4, %s16
      $region56: #{fwd.2} parent=51 // pred_fallthru
        _
    $region52: #{fwd.2} parent=5 // pred_fallthru
      _
    %p313 = scmp.le.s32.totalorder 1, %s16
    %p314 = scmp.lt.s32.totalorder %s16, 3
    %p315 = pnand %p313, %p314
    %p316 = pneg %p315
    // Predicated region
    $region57: #{fwd.2} parent=5 // pred_check
      _
    $region58: #{fwd.2} parent=5 // pred_check_branch
      %318 = sbr.rel (%p315) target = $region60
    $region59: #{fwd.2} parent=5 // pred_region
      %s319 = ssub.s32 %s16, 1
      %s320 = smul.u32 4, %s21
      %p321 = scmp.lt.s32.totalorder %s320, 7
      %s322 = scalar_select %p321, %s320, 7
      %s323 = smul.addr %s322, 18
      %s324 = smul.addr %s323, 8
      %s325 = scalar_lea.vmem %s0, %s324
      %p326 = pneg %p42
      %p327 = pneg %p39
      %p328 = pneg %p63
      %p329 = pneg %p60
      %p330 = pneg %p84
      %p331 = pneg %p81
      %p332 = pneg %p105
      %p333 = pneg %p102
      %p334 = pneg %p126
      %p335 = pneg %p123
      %p336 = pneg %p147
      %p337 = pneg %p144
      %p338 = pneg %p168
      %p339 = pneg %p165
      %p340 = pneg %p189
      %p341 = pneg %p186
      %p342 = pneg %p210
      %p343 = pneg %p207
      %p344 = pneg %p231
      %p345 = pneg %p228
      %p346 = pneg %p257
      %p347 = pneg %p254
      %s348 = smul.u32 8, %s21
      %p349 = scmp.lt.s32.totalorder %s348, 15
      %s350 = scalar_select %p349, %s348, 15
      %s351 = smul.addr %s350, 8
      %s352 = scalar_lea.vmem %s10, %s351
      %s353 = smul.u32 4, %s21
      %p354 = scmp.lt.s32.totalorder %s353, 7
      %s355 = scalar_select %p354, %s353, 7
      %s356 = smul.addr %s355, 18
      %s357 = smul.addr %s356, 8
      %s358 = scalar_lea.vmem %s0, %s357
      %s359 = smul.u32 4, %s21
      %s360 = smul.u32 8, %s21
      %p361 = scmp.lt.s32.totalorder %s360, 15
      %s362 = scalar_select %p361, %s360, 15
      %s363 = smul.addr %s362, 8
      %s364 = scalar_lea.vmem %s10, %s363
      %s365 = smul.u32 8, %s21
      %v367 = vld [vmem:[%s358] sm:$0xff]
      %v368 = vld [vmem:[%s358 + $0x10] sm:$0xff]
      %v369 = vld [vmem:[%s358 + $0x20] sm:$0xff]
      %v370 = vld [vmem:[%s358 + $0x30] sm:$0xff]
      %v371 = vld [vmem:[%s358 + $0x40] sm:$0xff]
      %v372 = vld [vmem:[%s358 + $0x50] sm:$0xff]
      %v373 = vld [vmem:[%s358 + $0x60] sm:$0xff]
      %v374 = vld [vmem:[%s358 + $0x70] sm:$0xff]
      %v375 = vpack.c.bf16 %v368, %v367
      %v376 = vpack.c.bf16 %v370, %v369
      %v377 = vpack.c.bf16 %v372, %v371
      %v378 = vpack.c.bf16 %v374, %v373
      %v379 = vld [vmem:[%s1] sm:$0xf]
      %v380 = vld [vmem:[%s1 + $0x4] sm:$0xf]
      %v381 = vld [vmem:[%s1 + $0x8] sm:$0xf]
      %v382 = vld [vmem:[%s1 + $0xc] sm:$0xf]
      %s383 = scalar_lea.vmem %s358, 144
      %v384 = vld [vmem:[%s383] sm:$0xff]
      %v385 = vld [vmem:[%s383 + $0x10] sm:$0xff]
      %v386 = vld [vmem:[%s383 + $0x20] sm:$0xff]
      %v387 = vld [vmem:[%s383 + $0x30] sm:$0xff]
      %v388 = vld [vmem:[%s383 + $0x40] sm:$0xff]
      %v389 = vld [vmem:[%s383 + $0x50] sm:$0xff]
      %v390 = vld [vmem:[%s383 + $0x60] sm:$0xff]
      %v391 = vld [vmem:[%s383 + $0x70] sm:$0xff]
      %v392 = vpack.c.bf16 %v385, %v384
      %v393 = vpack.c.bf16 %v387, %v386
      %v394 = vpack.c.bf16 %v389, %v388
      %v395 = vpack.c.bf16 %v391, %v390
      %s396 = scalar_lea.vmem %s1, 16
      %v397 = vld [vmem:[%s396] sm:$0xf]
      %v398 = vld [vmem:[%s396 + $0x4] sm:$0xf]
      %v399 = vld [vmem:[%s396 + $0x8] sm:$0xf]
      %v400 = vld [vmem:[%s396 + $0xc] sm:$0xf]
      %v405 = vunpack.c.l.b16 %v397
      %v406 = vunpack.c.l.b16 %v398
      %v407 = vunpack.c.l.b16 %v399
      %v408 = vunpack.c.l.b16 %v400
      %v409 = vpack.c.b16 %v406, %v405
      %v410 = vpack.c.b16 %v408, %v407
      %vm413 = vcmask 261120
      %v415 = vsel %vm413, %v392, 0
      %v418 = vsel %vm413, %v393, 0
      %v421 = vsel %vm413, %v394, 0
      %v424 = vsel %vm413, %v395, 0
      %426 = vmatprep.subr.bf16.mxu0 0
      %427 = vmatpush1.bf16.msra.mxu0 %v409
      %428 = vmatprep.subr.bf16.mxu0 0
      %429 = vmatpush1.bf16.msra.mxu0 %v410
      %430 = vmatprep.subr.bf16.mxu0 0
      %431 = vmatpush1.bf16.msra.mxu0 0
      %432 = vmatprep.subr.bf16.mxu0 0
      %433 = vmatpush1.bf16.msra.mxu0 0
      %434 = vmatprep.subr.bf16.mxu0 0
      %435 = vmatpush1.bf16.msra.mxu0 0
      %436 = vmatprep.subr.bf16.mxu0 0
      %437 = vmatpush1.bf16.msra.mxu0 0
      %438 = vmatprep.subr.bf16.mxu0 0
      %439 = vmatpush1.bf16.msra.mxu0 0
      %440 = vmatprep.subr.bf16.mxu0 0
      %441 = vmatpush1.bf16.msra.mxu0 0
      %442 = vmatprep.subr.bf16.mxu0 0
      %443 = vmatpush1.bf16.msra.mxu0 0
      %444 = vmatprep.subr.bf16.mxu0 0
      %445 = vmatpush1.bf16.msra.mxu0 0
      %446 = vmatprep.subr.bf16.mxu0 0
      %447 = vmatpush1.bf16.msra.mxu0 0
      %448 = vmatprep.subr.bf16.mxu0 0
      %449 = vmatpush1.bf16.msra.mxu0 0
      %450 = vmatprep.subr.bf16.mxu0 0
      %451 = vmatpush1.bf16.msra.mxu0 0
      %452 = vmatprep.subr.bf16.mxu0 0
      %453 = vmatpush1.bf16.msra.mxu0 0
      %454 = vmatprep.subr.bf16.mxu0 0
      %455 = vmatpush1.bf16.msra.mxu0 0
      %456 = vmatprep.subr.bf16.mxu0 0
      %457 = vmatpush1.bf16.msra.mxu0 0
      %458 = vmatprep.mubr.bf16.mxu0 0
      %459 = vmatmul.mubr.bf16.gmra.mrb[0].mxu0 %v415
      %v460 = vpop.f32.mrb[0].mxu0
      %v461 = vadd.f32 0.0, %v460
      %v462 = vpop.f32.mrb[0].mxu0
      %v463 = vpop.f32.mrb[0].mxu0
      %v464 = vadd.f32 0.0, %v463
      %v465 = vpop.f32.mrb[0].mxu0
      %466 = vmatprep.mubr.bf16.mxu0 0
      %467 = vmatmul.mubr.bf16.gmra.mrb[0].mxu0 %v418
      %v468 = vpop.f32.mrb[0].mxu0
      %v469 = vadd.f32 0.0, %v468
      %v470 = vpop.f32.mrb[0].mxu0
      %v471 = vpop.f32.mrb[0].mxu0
      %v472 = vadd.f32 0.0, %v471
      %v473 = vpop.f32.mrb[0].mxu0
      %474 = vmatprep.mubr.bf16.mxu0 0
      %475 = vmatmul.mubr.bf16.gmra.mrb[0].mxu0 %v421
      %v476 = vpop.f32.mrb[0].mxu0
      %v477 = vadd.f32 0.0, %v476
      %v478 = vpop.f32.mrb[0].mxu0
      %v479 = vpop.f32.mrb[0].mxu0
      %v480 = vadd.f32 0.0, %v479
      %v481 = vpop.f32.mrb[0].mxu0
      %482 = vmatprep.mubr.bf16.mxu0 0
      %483 = vmatmul.mubr.bf16.gmra.mrb[0].mxu0 %v424
      %v484 = vpop.f32.mrb[0].mxu0
      %v485 = vadd.f32 0.0, %v484
      %v486 = vpop.f32.mrb[0].mxu0
      %v487 = vpop.f32.mrb[0].mxu0
      %v488 = vadd.f32 0.0, %v487
      %v489 = vpop.f32.mrb[0].mxu0
      %490 = vdwg.mxu0
      %v495 = vunpack.c.l.b16 %v379
      %v496 = vunpack.c.l.b16 %v380
      %v497 = vunpack.c.l.b16 %v381
      %v498 = vunpack.c.l.b16 %v382
      %v499 = vpack.c.b16 %v496, %v495
      %v500 = vpack.c.b16 %v498, %v497
      %v504 = vsel %vm413, %v375, 0
      %v507 = vsel %vm413, %v376, 0
      %v510 = vsel %vm413, %v377, 0
      %v513 = vsel %vm413, %v378, 0
      %515 = vmatprep.subr.bf16.mxu0 0
      %516 = vmatpush1.bf16.msra.mxu0 %v499
      %517 = vmatprep.subr.bf16.mxu0 0
      %518 = vmatpush1.bf16.msra.mxu0 %v500
      %519 = vmatprep.subr.bf16.mxu0 0
      %520 = vmatpush1.bf16.msra.mxu0 0
      %521 = vmatprep.subr.bf16.mxu0 0
      %522 = vmatpush1.bf16.msra.mxu0 0
      %523 = vmatprep.subr.bf16.mxu0 0
      %524 = vmatpush1.bf16.msra.mxu0 0
      %525 = vmatprep.subr.bf16.mxu0 0
      %526 = vmatpush1.bf16.msra.mxu0 0
      %527 = vmatprep.subr.bf16.mxu0 0
      %528 = vmatpush1.bf16.msra.mxu0 0
      %529 = vmatprep.subr.bf16.mxu0 0
      %530 = vmatpush1.bf16.msra.mxu0 0
      %531 = vmatprep.subr.bf16.mxu0 0
      %532 = vmatpush1.bf16.msra.mxu0 0
      %533 = vmatprep.subr.bf16.mxu0 0
      %534 = vmatpush1.bf16.msra.mxu0 0
      %535 = vmatprep.subr.bf16.mxu0 0
      %536 = vmatpush1.bf16.msra.mxu0 0
      %537 = vmatprep.subr.bf16.mxu0 0
      %538 = vmatpush1.bf16.msra.mxu0 0
      %539 = vmatprep.subr.bf16.mxu0 0
      %540 = vmatpush1.bf16.msra.mxu0 0
      %541 = vmatprep.subr.bf16.mxu0 0
      %542 = vmatpush1.bf16.msra.mxu0 0
      %543 = vmatprep.subr.bf16.mxu0 0
      %544 = vmatpush1.bf16.msra.mxu0 0
      %545 = vmatprep.subr.bf16.mxu0 0
      %546 = vmatpush1.bf16.msra.mxu0 0
      %547 = vmatprep.mubr.bf16.mxu0 0
      %548 = vmatmul.mubr.bf16.gmra.mrb[0].mxu0 %v504
      %v549 = vpop.f32.mrb[0].mxu0
      %v550 = vadd.f32 %v461, %v549
      %v551 = vpop.f32.mrb[0].mxu0
      %v552 = vpop.f32.mrb[0].mxu0
      %v553 = vadd.f32 %v464, %v552
      %v554 = vpop.f32.mrb[0].mxu0
      %555 = vmatprep.mubr.bf16.mxu0 0
      %556 = vmatmul.mubr.bf16.gmra.mrb[0].mxu0 %v507
      %v557 = vpop.f32.mrb[0].mxu0
      %v558 = vadd.f32 %v469, %v557
      %v559 = vpop.f32.mrb[0].mxu0
      %v560 = vpop.f32.mrb[0].mxu0
      %v561 = vadd.f32 %v472, %v560
      %v562 = vpop.f32.mrb[0].mxu0
      %563 = vmatprep.mubr.bf16.mxu0 0
      %564 = vmatmul.mubr.bf16.gmra.mrb[0].mxu0 %v510
      %v565 = vpop.f32.mrb[0].mxu0
      %v566 = vadd.f32 %v477, %v565
      %v567 = vpop.f32.mrb[0].mxu0
      %v568 = vpop.f32.mrb[0].mxu0
      %v569 = vadd.f32 %v480, %v568
      %v570 = vpop.f32.mrb[0].mxu0
      %571 = vmatprep.mubr.bf16.mxu0 0
      %572 = vmatmul.mubr.bf16.gmra.mrb[0].mxu0 %v513
      %v573 = vpop.f32.mrb[0].mxu0
      %v574 = vadd.f32 %v485, %v573
      %v575 = vpop.f32.mrb[0].mxu0
      %v576 = vpop.f32.mrb[0].mxu0
      %v577 = vadd.f32 %v488, %v576
      %v578 = vpop.f32.mrb[0].mxu0
      %579 = vdwg.mxu0
      %v580 = vld [vmem:[%s358 + $0x1] sm:$0xff]
      %v581 = vld [vmem:[%s358 + $0x11] sm:$0xff]
      %v582 = vld [vmem:[%s358 + $0x21] sm:$0xff]
      %v583 = vld [vmem:[%s358 + $0x31] sm:$0xff]
      %v584 = vld [vmem:[%s358 + $0x41] sm:$0xff]
      %v585 = vld [vmem:[%s358 + $0x51] sm:$0xff]
      %v586 = vld [vmem:[%s358 + $0x61] sm:$0xff]
      %v587 = vld [vmem:[%s358 + $0x71] sm:$0xff]
      %v588 = vpack.c.bf16 %v581, %v580
      %v589 = vpack.c.bf16 %v583, %v582
      %v590 = vpack.c.bf16 %v585, %v584
      %v591 = vpack.c.bf16 %v587, %v586
      %s592 = scalar_lea.vmem %s1, 32
      %v593 = vld [vmem:[%s592] sm:$0xf]
      %v594 = vld [vmem:[%s592 + $0x4] sm:$0xf]
      %v595 = vld [vmem:[%s592 + $0x8] sm:$0xf]
      %v596 = vld [vmem:[%s592 + $0xc] sm:$0xf]
      %v601 = vunpack.c.l.b16 %v593
      %v602 = vunpack.c.l.b16 %v594
      %v603 = vunpack.c.l.b16 %v595
      %v604 = vunpack.c.l.b16 %v596
      %v605 = vpack.c.b16 %v602, %v601
      %v606 = vpack.c.b16 %v604, %v603
      %v610 = vsel %vm413, %v588, 0
      %v613 = vsel %vm413, %v589, 0
      %v616 = vsel %vm413, %v590, 0
      %v619 = vsel %vm413, %v591, 0
      %621 = vmatprep.subr.bf16.mxu0 0
      %622 = vmatpush1.bf16.msra.mxu0 %v605
      %623 = vmatprep.subr.bf16.mxu0 0
      %624 = vmatpush1.bf16.msra.mxu0 %v606
      %625 = vmatprep.subr.bf16.mxu0 0
      %626 = vmatpush1.bf16.msra.mxu0 0
      %627 = vmatprep.subr.bf16.mxu0 0
      %628 = vmatpush1.bf16.msra.mxu0 0
      %629 = vmatprep.subr.bf16.mxu0 0
      %630 = vmatpush1.bf16.msra.mxu0 0
      %631 = vmatprep.subr.bf16.mxu0 0
      %632 = vmatpush1.bf16.msra.mxu0 0
      %633 = vmatprep.subr.bf16.mxu0 0
      %634 = vmatpush1.bf16.msra.mxu0 0
      %635 = vmatprep.subr.bf16.mxu0 0
      %636 = vmatpush1.bf16.msra.mxu0 0
      %637 = vmatprep.subr.bf16.mxu0 0
      %638 = vmatpush1.bf16.msra.mxu0 0
      %639 = vmatprep.subr.bf16.mxu0 0
      %640 = vmatpush1.bf16.msra.mxu0 0
      %641 = vmatprep.subr.bf16.mxu0 0
      %642 = vmatpush1.bf16.msra.mxu0 0
      %643 = vmatprep.subr.bf16.mxu0 0
      %644 = vmatpush1.bf16.msra.mxu0 0
      %645 = vmatprep.subr.bf16.mxu0 0
      %646 = vmatpush1.bf16.msra.mxu0 0
      %647 = vmatprep.subr.bf16.mxu0 0
      %648 = vmatpush1.bf16.msra.mxu0 0
      %649 = vmatprep.subr.bf16.mxu0 0
      %650 = vmatpush1.bf16.msra.mxu0 0
      %651 = vmatprep.subr.bf16.mxu0 0
      %652 = vmatpush1.bf16.msra.mxu0 0
      %653 = vmatprep.mubr.bf16.mxu0 0
      %654 = vmatmul.mubr.bf16.gmra.mrb[0].mxu0 %v610
      %v655 = vpop.f32.mrb[0].mxu0
      %v656 = vadd.f32 0.0, %v655
      %v657 = vpop.f32.mrb[0].mxu0
      %v658 = vpop.f32.mrb[0].mxu0
      %v659 = vadd.f32 0.0, %v658
      %v660 = vpop.f32.mrb[0].mxu0
      %661 = vmatprep.mubr.bf16.mxu0 0
      %662 = vmatmul.mubr.bf16.gmra.mrb[0].mxu0 %v613
      %v663 = vpop.f32.mrb[0].mxu0
      %v664 = vadd.f32 0.0, %v663
      %v665 = vpop.f32.mrb[0].mxu0
      %v666 = vpop.f32.mrb[0].mxu0
      %v667 = vadd.f32 0.0, %v666
      %v668 = vpop.f32.mrb[0].mxu0
      %669 = vmatprep.mubr.bf16.mxu0 0
      %670 = vmatmul.mubr.bf16.gmra.mrb[0].mxu0 %v616
      %v671 = vpop.f32.mrb[0].mxu0
      %v672 = vadd.f32 0.0, %v671
      %v673 = vpop.f32.mrb[0].mxu0
      %v674 = vpop.f32.mrb[0].mxu0
      %v675 = vadd.f32 0.0, %v674
      %v676 = vpop.f32.mrb[0].mxu0
      %677 = vmatprep.mubr.bf16.mxu0 0
      %678 = vmatmul.mubr.bf16.gmra.mrb[0].mxu0 %v619
      %v679 = vpop.f32.mrb[0].mxu0
      %v680 = vadd.f32 0.0, %v679
      %v681 = vpop.f32.mrb[0].mxu0
      %v682 = vpop.f32.mrb[0].mxu0
      %v683 = vadd.f32 0.0, %v682
      %v684 = vpop.f32.mrb[0].mxu0
      %685 = vdwg.mxu0
      %v686 = vadd.f32 %v550, %v656
      %v687 = vadd.f32 %v553, %v659
      %v688 = vadd.f32 %v558, %v664
      %v689 = vadd.f32 %v561, %v667
      %v690 = vadd.f32 %v566, %v672
      %v691 = vadd.f32 %v569, %v675
      %v692 = vadd.f32 %v574, %v680
      %v693 = vadd.f32 %v577, %v683
      %s694 = scalar_lea.vmem %s358, 288
      %v695 = vld [vmem:[%s694] sm:$0xff]
      %v696 = vld [vmem:[%s694 + $0x10] sm:$0xff]
      %v697 = vld [vmem:[%s694 + $0x20] sm:$0xff]
      %v698 = vld [vmem:[%s694 + $0x30] sm:$0xff]
      %v699 = vld [vmem:[%s694 + $0x40] sm:$0xff]
      %v700 = vld [vmem:[%s694 + $0x50] sm:$0xff]
      %v701 = vld [vmem:[%s694 + $0x60] sm:$0xff]
      %v702 = vld [vmem:[%s694 + $0x70] sm:$0xff]
      %v703 = vpack.c.bf16 %v696, %v695
      %v704 = vpack.c.bf16 %v698, %v697
      %v705 = vpack.c.bf16 %v700, %v699
      %v706 = vpack.c.bf16 %v702, %v701
      %s707 = scalar_lea.vmem %s1, 48
      %v708 = vld [vmem:[%s707] sm:$0xf]
      %v709 = vld [vmem:[%s707 + $0x4] sm:$0xf]
      %v710 = vld [vmem:[%s707 + $0x8] sm:$0xf]
      %v711 = vld [vmem:[%s707 + $0xc] sm:$0xf]
      %v716 = vunpack.c.l.b16 %v708
      %v717 = vunpack.c.l.b16 %v709
      %v718 = vunpack.c.l.b16 %v710
      %v719 = vunpack.c.l.b16 %v711
      %v720 = vpack.c.b16 %v717, %v716
      %v721 = vpack.c.b16 %v719, %v718
      %v725 = vsel %vm413, %v703, 0
      %v728 = vsel %vm413, %v704, 0
      %v731 = vsel %vm413, %v705, 0
      %v734 = vsel %vm413, %v706, 0
      %736 = vmatprep.subr.bf16.mxu0 0
      %737 = vmatpush1.bf16.msra.mxu0 %v720
      %738 = vmatprep.subr.bf16.mxu0 0
      %739 = vmatpush1.bf16.msra.mxu0 %v721
      %740 = vmatprep.subr.bf16.mxu0 0
      %741 = vmatpush1.bf16.msra.mxu0 0
      %742 = vmatprep.subr.bf16.mxu0 0
      %743 = vmatpush1.bf16.msra.mxu0 0
      %744 = vmatprep.subr.bf16.mxu0 0
      %745 = vmatpush1.bf16.msra.mxu0 0
      %746 = vmatprep.subr.bf16.mxu0 0
      %747 = vmatpush1.bf16.msra.mxu0 0
      %748 = vmatprep.subr.bf16.mxu0 0
      %749 = vmatpush1.bf16.msra.mxu0 0
      %750 = vmatprep.subr.bf16.mxu0 0
      %751 = vmatpush1.bf16.msra.mxu0 0
      %752 = vmatprep.subr.bf16.mxu0 0
      %753 = vmatpush1.bf16.msra.mxu0 0
      %754 = vmatprep.subr.bf16.mxu0 0
      %755 = vmatpush1.bf16.msra.mxu0 0
      %756 = vmatprep.subr.bf16.mxu0 0
      %757 = vmatpush1.bf16.msra.mxu0 0
      %758 = vmatprep.subr.bf16.mxu0 0
      %759 = vmatpush1.bf16.msra.mxu0 0
      %760 = vmatprep.subr.bf16.mxu0 0
      %761 = vmatpush1.bf16.msra.mxu0 0
      %762 = vmatprep.subr.bf16.mxu0 0
      %763 = vmatpush1.bf16.msra.mxu0 0
      %764 = vmatprep.subr.bf16.mxu0 0
      %765 = vmatpush1.bf16.msra.mxu0 0
      %766 = vmatprep.subr.bf16.mxu0 0
      %767 = vmatpush1.bf16.msra.mxu0 0
      %768 = vmatprep.mubr.bf16.mxu0 0
      %769 = vmatmul.mubr.bf16.gmra.mrb[0].mxu0 %v725
      %v770 = vpop.f32.mrb[0].mxu0
      %v771 = vadd.f32 0.0, %v770
      %v772 = vpop.f32.mrb[0].mxu0
      %v773 = vpop.f32.mrb[0].mxu0
      %v774 = vadd.f32 0.0, %v773
      %v775 = vpop.f32.mrb[0].mxu0
      %776 = vmatprep.mubr.bf16.mxu0 0
      %777 = vmatmul.mubr.bf16.gmra.mrb[0].mxu0 %v728
      %v778 = vpop.f32.mrb[0].mxu0
      %v779 = vadd.f32 0.0, %v778
      %v780 = vpop.f32.mrb[0].mxu0
      %v781 = vpop.f32.mrb[0].mxu0
      %v782 = vadd.f32 0.0, %v781
      %v783 = vpop.f32.mrb[0].mxu0
      %784 = vmatprep.mubr.bf16.mxu0 0
      %785 = vmatmul.mubr.bf16.gmra.mrb[0].mxu0 %v731
      %v786 = vpop.f32.mrb[0].mxu0
      %v787 = vadd.f32 0.0, %v786
      %v788 = vpop.f32.mrb[0].mxu0
      %v789 = vpop.f32.mrb[0].mxu0
      %v790 = vadd.f32 0.0, %v789
      %v791 = vpop.f32.mrb[0].mxu0
      %792 = vmatprep.mubr.bf16.mxu0 0
      %793 = vmatmul.mubr.bf16.gmra.mrb[0].mxu0 %v734
      %v794 = vpop.f32.mrb[0].mxu0
      %v795 = vadd.f32 0.0, %v794
      %v796 = vpop.f32.mrb[0].mxu0
      %v797 = vpop.f32.mrb[0].mxu0
      %v798 = vadd.f32 0.0, %v797
      %v799 = vpop.f32.mrb[0].mxu0
      %800 = vdwg.mxu0
      %v801 = vadd.f32 %v686, %v771
      %v802 = vadd.f32 %v687, %v774
      %v803 = vadd.f32 %v688, %v779
      %v804 = vadd.f32 %v689, %v782
      %v805 = vadd.f32 %v690, %v787
      %v806 = vadd.f32 %v691, %v790
      %v807 = vadd.f32 %v692, %v795
      %v808 = vadd.f32 %v693, %v798
      %s809 = scalar_lea.vmem %s358, 432
      %v810 = vld [vmem:[%s809] sm:$0xff]
      %v811 = vld [vmem:[%s809 + $0x10] sm:$0xff]
      %v812 = vld [vmem:[%s809 + $0x20] sm:$0xff]
      %v813 = vld [vmem:[%s809 + $0x30] sm:$0xff]
      %v814 = vld [vmem:[%s809 + $0x40] sm:$0xff]
      %v815 = vld [vmem:[%s809 + $0x50] sm:$0xff]
      %v816 = vld [vmem:[%s809 + $0x60] sm:$0xff]
      %v817 = vld [vmem:[%s809 + $0x70] sm:$0xff]
      %v818 = vpack.c.bf16 %v811, %v810
      %v819 = vpack.c.bf16 %v813, %v812
      %v820 = vpack.c.bf16 %v815, %v814
      %v821 = vpack.c.bf16 %v817, %v816
      %s822 = scalar_lea.vmem %s1, 64
      %v823 = vld [vmem:[%s822] sm:$0xf]
      %v824 = vld [vmem:[%s822 + $0x4] sm:$0xf]
      %v825 = vld [vmem:[%s822 + $0x8] sm:$0xf]
      %v826 = vld [vmem:[%s822 + $0xc] sm:$0xf]
      %v831 = vunpack.c.l.b16 %v823
      %v832 = vunpack.c.l.b16 %v824
      %v833 = vunpack.c.l.b16 %v825
      %v834 = vunpack.c.l.b16 %v826
      %v835 = vpack.c.b16 %v832, %v831
      %v836 = vpack.c.b16 %v834, %v833
      %v840 = vsel %vm413, %v818, 0
      %v843 = vsel %vm413, %v819, 0
      %v846 = vsel %vm413, %v820, 0
      %v849 = vsel %vm413, %v821, 0
      %851 = vmatprep.subr.bf16.mxu0 0
      %852 = vmatpush1.bf16.msra.mxu0 %v835
      %853 = vmatprep.subr.bf16.mxu0 0
      %854 = vmatpush1.bf16.msra.mxu0 %v836
      %855 = vmatprep.subr.bf16.mxu0 0
      %856 = vmatpush1.bf16.msra.mxu0 0
      %857 = vmatprep.subr.bf16.mxu0 0
      %858 = vmatpush1.bf16.msra.mxu0 0
      %859 = vmatprep.subr.bf16.mxu0 0
      %860 = vmatpush1.bf16.msra.mxu0 0
      %861 = vmatprep.subr.bf16.mxu0 0
      %862 = vmatpush1.bf16.msra.mxu0 0
      %863 = vmatprep.subr.bf16.mxu0 0
      %864 = vmatpush1.bf16.msra.mxu0 0
      %865 = vmatprep.subr.bf16.mxu0 0
      %866 = vmatpush1.bf16.msra.mxu0 0
      %867 = vmatprep.subr.bf16.mxu0 0
      %868 = vmatpush1.bf16.msra.mxu0 0
      %869 = vmatprep.subr.bf16.mxu0 0
      %870 = vmatpush1.bf16.msra.mxu0 0
      %871 = vmatprep.subr.bf16.mxu0 0
      %872 = vmatpush1.bf16.msra.mxu0 0
      %873 = vmatprep.subr.bf16.mxu0 0
      %874 = vmatpush1.bf16.msra.mxu0 0
      %875 = vmatprep.subr.bf16.mxu0 0
      %876 = vmatpush1.bf16.msra.mxu0 0
      %877 = vmatprep.subr.bf16.mxu0 0
      %878 = vmatpush1.bf16.msra.mxu0 0
      %879 = vmatprep.subr.bf16.mxu0 0
      %880 = vmatpush1.bf16.msra.mxu0 0
      %881 = vmatprep.subr.bf16.mxu0 0
      %882 = vmatpush1.bf16.msra.mxu0 0
      %883 = vmatprep.mubr.bf16.mxu0 0
      %884 = vmatmul.mubr.bf16.gmra.mrb[0].mxu0 %v840
      %v885 = vpop.f32.mrb[0].mxu0
      %v886 = vadd.f32 0.0, %v885
      %v887 = vpop.f32.mrb[0].mxu0
      %v888 = vpop.f32.mrb[0].mxu0
      %v889 = vadd.f32 0.0, %v888
      %v890 = vpop.f32.mrb[0].mxu0
      %891 = vmatprep.mubr.bf16.mxu0 0
      %892 = vmatmul.mubr.bf16.gmra.mrb[0].mxu0 %v843
      %v893 = vpop.f32.mrb[0].mxu0
      %v894 = vadd.f32 0.0, %v893
      %v895 = vpop.f32.mrb[0].mxu0
      %v896 = vpop.f32.mrb[0].mxu0
      %v897 = vadd.f32 0.0, %v896
      %v898 = vpop.f32.mrb[0].mxu0
      %899 = vmatprep.mubr.bf16.mxu0 0
      %900 = vmatmul.mubr.bf16.gmra.mrb[0].mxu0 %v846
      %v901 = vpop.f32.mrb[0].mxu0
      %v902 = vadd.f32 0.0, %v901
      %v903 = vpop.f32.mrb[0].mxu0
      %v904 = vpop.f32.mrb[0].mxu0
      %v905 = vadd.f32 0.0, %v904
      %v906 = vpop.f32.mrb[0].mxu0
      %907 = vmatprep.mubr.bf16.mxu0 0
      %908 = vmatmul.mubr.bf16.gmra.mrb[0].mxu0 %v849
      %v909 = vpop.f32.mrb[0].mxu0
      %v910 = vadd.f32 0.0, %v909
      %v911 = vpop.f32.mrb[0].mxu0
      %v912 = vpop.f32.mrb[0].mxu0
      %v913 = vadd.f32 0.0, %v912
      %v914 = vpop.f32.mrb[0].mxu0
      %915 = vdwg.mxu0
      %v916 = vadd.f32 %v801, %v886
      %v917 = vadd.f32 %v802, %v889
      %v918 = vadd.f32 %v803, %v894
      %v919 = vadd.f32 %v804, %v897
      %v920 = vadd.f32 %v805, %v902
      %v921 = vadd.f32 %v806, %v905
      %v922 = vadd.f32 %v807, %v910
      %v923 = vadd.f32 %v808, %v913
      %v924 = vld [vmem:[%s694 + $0x1] sm:$0xff]
      %v925 = vld [vmem:[%s694 + $0x11] sm:$0xff]
      %v926 = vld [vmem:[%s694 + $0x21] sm:$0xff]
      %v927 = vld [vmem:[%s694 + $0x31] sm:$0xff]
      %v928 = vld [vmem:[%s694 + $0x41] sm:$0xff]
      %v929 = vld [vmem:[%s694 + $0x51] sm:$0xff]
      %v930 = vld [vmem:[%s694 + $0x61] sm:$0xff]
      %v931 = vld [vmem:[%s694 + $0x71] sm:$0xff]
      %v932 = vpack.c.bf16 %v925, %v924
      %v933 = vpack.c.bf16 %v927, %v926
      %v934 = vpack.c.bf16 %v929, %v928
      %v935 = vpack.c.bf16 %v931, %v930
      %s936 = scalar_lea.vmem %s1, 80
      %v937 = vld [vmem:[%s936] sm:$0xf]
      %v938 = vld [vmem:[%s936 + $0x4] sm:$0xf]
      %v939 = vld [vmem:[%s936 + $0x8] sm:$0xf]
      %v940 = vld [vmem:[%s936 + $0xc] sm:$0xf]
      %v945 = vunpack.c.l.b16 %v937
      %v946 = vunpack.c.l.b16 %v938
      %v947 = vunpack.c.l.b16 %v939
      %v948 = vunpack.c.l.b16 %v940
      %v949 = vpack.c.b16 %v946, %v945
      %v950 = vpack.c.b16 %v948, %v947
      %v954 = vsel %vm413, %v932, 0
      %v957 = vsel %vm413, %v933, 0
      %v960 = vsel %vm413, %v934, 0
      %v963 = vsel %vm413, %v935, 0
      %965 = vmatprep.subr.bf16.mxu0 0
      %966 = vmatpush1.bf16.msra.mxu0 %v949
      %967 = vmatprep.subr.bf16.mxu0 0
      %968 = vmatpush1.bf16.msra.mxu0 %v950
      %969 = vmatprep.subr.bf16.mxu0 0
      %970 = vmatpush1.bf16.msra.mxu0 0
      %971 = vmatprep.subr.bf16.mxu0 0
      %972 = vmatpush1.bf16.msra.mxu0 0
      %973 = vmatprep.subr.bf16.mxu0 0
      %974 = vmatpush1.bf16.msra.mxu0 0
      %975 = vmatprep.subr.bf16.mxu0 0
      %976 = vmatpush1.bf16.msra.mxu0 0
      %977 = vmatprep.subr.bf16.mxu0 0
      %978 = vmatpush1.bf16.msra.mxu0 0
      %979 = vmatprep.subr.bf16.mxu0 0
      %980 = vmatpush1.bf16.msra.mxu0 0
      %981 = vmatprep.subr.bf16.mxu0 0
      %982 = vmatpush1.bf16.msra.mxu0 0
      %983 = vmatprep.subr.bf16.mxu0 0
      %984 = vmatpush1.bf16.msra.mxu0 0
      %985 = vmatprep.subr.bf16.mxu0 0
      %986 = vmatpush1.bf16.msra.mxu0 0
      %987 = vmatprep.subr.bf16.mxu0 0
      %988 = vmatpush1.bf16.msra.mxu0 0
      %989 = vmatprep.subr.bf16.mxu0 0
      %990 = vmatpush1.bf16.msra.mxu0 0
      %991 = vmatprep.subr.bf16.mxu0 0
      %992 = vmatpush1.bf16.msra.mxu0 0
      %993 = vmatprep.subr.bf16.mxu0 0
      %994 = vmatpush1.bf16.msra.mxu0 0
      %995 = vmatprep.subr.bf16.mxu0 0
      %996 = vmatpush1.bf16.msra.mxu0 0
      %997 = vmatprep.mubr.bf16.mxu0 0
      %998 = vmatmul.mubr.bf16.gmra.mrb[0].mxu0 %v954
      %v999 = vpop.f32.mrb[0].mxu0
      %v1000 = vadd.f32 0.0, %v999
      %v1001 = vpop.f32.mrb[0].mxu0
      %v1002 = vpop.f32.mrb[0].mxu0
      %v1003 = vadd.f32 0.0, %v1002
      %v1004 = vpop.f32.mrb[0].mxu0
      %1005 = vmatprep.mubr.bf16.mxu0 0
      %1006 = vmatmul.mubr.bf16.gmra.mrb[0].mxu0 %v957
      %v1007 = vpop.f32.mrb[0].mxu0
      %v1008 = vadd.f32 0.0, %v1007
      %v1009 = vpop.f32.mrb[0].mxu0
      %v1010 = vpop.f32.mrb[0].mxu0
      %v1011 = vadd.f32 0.0, %v1010
      %v1012 = vpop.f32.mrb[0].mxu0
      %1013 = vmatprep.mubr.bf16.mxu0 0
      %1014 = vmatmul.mubr.bf16.gmra.mrb[0].mxu0 %v960
      %v1015 = vpop.f32.mrb[0].mxu0
      %v1016 = vadd.f32 0.0, %v1015
      %v1017 = vpop.f32.mrb[0].mxu0
      %v1018 = vpop.f32.mrb[0].mxu0
      %v1019 = vadd.f32 0.0, %v1018
      %v1020 = vpop.f32.mrb[0].mxu0
      %1021 = vmatprep.mubr.bf16.mxu0 0
      %1022 = vmatmul.mubr.bf16.gmra.mrb[0].mxu0 %v963
      %v1023 = vpop.f32.mrb[0].mxu0
      %v1024 = vadd.f32 0.0, %v1023
      %v1025 = vpop.f32.mrb[0].mxu0
      %v1026 = vpop.f32.mrb[0].mxu0
      %v1027 = vadd.f32 0.0, %v1026
      %v1028 = vpop.f32.mrb[0].mxu0
      %1029 = vdwg.mxu0
      %v1030 = vadd.f32 %v916, %v1000
      %v1031 = vadd.f32 %v917, %v1003
      %v1032 = vadd.f32 %v918, %v1008
      %v1033 = vadd.f32 %v919, %v1011
      %v1034 = vadd.f32 %v920, %v1016
      %v1035 = vadd.f32 %v921, %v1019
      %v1036 = vadd.f32 %v922, %v1024
      %v1037 = vadd.f32 %v923, %v1027
      %s1038 = scalar_lea.vmem %s358, 16
      %v1039 = vld [vmem:[%s1038] sm:$0xff]
      %v1040 = vld [vmem:[%s1038 + $0x10] sm:$0xff]
      %v1041 = vld [vmem:[%s1038 + $0x20] sm:$0xff]
      %v1042 = vld [vmem:[%s1038 + $0x30] sm:$0xff]
      %v1043 = vld [vmem:[%s1038 + $0x40] sm:$0xff]
      %v1044 = vld [vmem:[%s1038 + $0x50] sm:$0xff]
      %v1045 = vld [vmem:[%s1038 + $0x60] sm:$0xff]
      %v1046 = vld [vmem:[%s1038 + $0x70] sm:$0xff]
      %v1047 = vpack.c.bf16 %v1040, %v1039
      %v1048 = vpack.c.bf16 %v1042, %v1041
      %v1049 = vpack.c.bf16 %v1044, %v1043
      %v1050 = vpack.c.bf16 %v1046, %v1045
      %s1051 = scalar_lea.vmem %s1, 96
      %v1052 = vld [vmem:[%s1051] sm:$0xf]
      %v1053 = vld [vmem:[%s1051 + $0x4] sm:$0xf]
      %v1054 = vld [vmem:[%s1051 + $0x8] sm:$0xf]
      %v1055 = vld [vmem:[%s1051 + $0xc] sm:$0xf]
      %v1060 = vunpack.c.l.b16 %v1052
      %v1061 = vunpack.c.l.b16 %v1053
      %v1062 = vunpack.c.l.b16 %v1054
      %v1063 = vunpack.c.l.b16 %v1055
      %v1064 = vpack.c.b16 %v1061, %v1060
      %v1065 = vpack.c.b16 %v1063, %v1062
      %v1069 = vsel %vm413, %v1047, 0
      %v1072 = vsel %vm413, %v1048, 0
      %v1075 = vsel %vm413, %v1049, 0
      %v1078 = vsel %vm413, %v1050, 0
      %1080 = vmatprep.subr.bf16.mxu0 0
      %1081 = vmatpush1.bf16.msra.mxu0 %v1064
      %1082 = vmatprep.subr.bf16.mxu0 0
      %1083 = vmatpush1.bf16.msra.mxu0 %v1065
      %1084 = vmatprep.subr.bf16.mxu0 0
      %1085 = vmatpush1.bf16.msra.mxu0 0
      %1086 = vmatprep.subr.bf16.mxu0 0
      %1087 = vmatpush1.bf16.msra.mxu0 0
      %1088 = vmatprep.subr.bf16.mxu0 0
      %1089 = vmatpush1.bf16.msra.mxu0 0
      %1090 = vmatprep.subr.bf16.mxu0 0
      %1091 = vmatpush1.bf16.msra.mxu0 0
      %1092 = vmatprep.subr.bf16.mxu0 0
      %1093 = vmatpush1.bf16.msra.mxu0 0
      %1094 = vmatprep.subr.bf16.mxu0 0
      %1095 = vmatpush1.bf16.msra.mxu0 0
      %1096 = vmatprep.subr.bf16.mxu0 0
      %1097 = vmatpush1.bf16.msra.mxu0 0
      %1098 = vmatprep.subr.bf16.mxu0 0
      %1099 = vmatpush1.bf16.msra.mxu0 0
      %1100 = vmatprep.subr.bf16.mxu0 0
      %1101 = vmatpush1.bf16.msra.mxu0 0
      %1102 = vmatprep.subr.bf16.mxu0 0
      %1103 = vmatpush1.bf16.msra.mxu0 0
      %1104 = vmatprep.subr.bf16.mxu0 0
      %1105 = vmatpush1.bf16.msra.mxu0 0
      %1106 = vmatprep.subr.bf16.mxu0 0
      %1107 = vmatpush1.bf16.msra.mxu0 0
      %1108 = vmatprep.subr.bf16.mxu0 0
      %1109 = vmatpush1.bf16.msra.mxu0 0
      %1110 = vmatprep.subr.bf16.mxu0 0
      %1111 = vmatpush1.bf16.msra.mxu0 0
      %1112 = vmatprep.mubr.bf16.mxu0 0
      %1113 = vmatmul.mubr.bf16.gmra.mrb[0].mxu0 %v1069
      %v1114 = vpop.f32.mrb[0].mxu0
      %v1115 = vadd.f32 0.0, %v1114
      %v1116 = vpop.f32.mrb[0].mxu0
      %v1117 = vpop.f32.mrb[0].mxu0
      %v1118 = vadd.f32 0.0, %v1117
      %v1119 = vpop.f32.mrb[0].mxu0
      %1120 = vmatprep.mubr.bf16.mxu0 0
      %1121 = vmatmul.mubr.bf16.gmra.mrb[0].mxu0 %v1072
      %v1122 = vpop.f32.mrb[0].mxu0
      %v1123 = vadd.f32 0.0, %v1122
      %v1124 = vpop.f32.mrb[0].mxu0
      %v1125 = vpop.f32.mrb[0].mxu0
      %v1126 = vadd.f32 0.0, %v1125
      %v1127 = vpop.f32.mrb[0].mxu0
      %1128 = vmatprep.mubr.bf16.mxu0 0
      %1129 = vmatmul.mubr.bf16.gmra.mrb[0].mxu0 %v1075
      %v1130 = vpop.f32.mrb[0].mxu0
      %v1131 = vadd.f32 0.0, %v1130
      %v1132 = vpop.f32.mrb[0].mxu0
      %v1133 = vpop.f32.mrb[0].mxu0
      %v1134 = vadd.f32 0.0, %v1133
      %v1135 = vpop.f32.mrb[0].mxu0
      %1136 = vmatprep.mubr.bf16.mxu0 0
      %1137 = vmatmul.mubr.bf16.gmra.mrb[0].mxu0 %v1078
      %v1138 = vpop.f32.mrb[0].mxu0
      %v1139 = vadd.f32 0.0, %v1138
      %v1140 = vpop.f32.mrb[0].mxu0
      %v1141 = vpop.f32.mrb[0].mxu0
      %v1142 = vadd.f32 0.0, %v1141
      %v1143 = vpop.f32.mrb[0].mxu0
      %1144 = vdwg.mxu0
      %v1145 = vadd.f32 %v1030, %v1115
      %v1146 = vadd.f32 %v1031, %v1118
      %v1147 = vadd.f32 %v1032, %v1123
      %v1148 = vadd.f32 %v1033, %v1126
      %v1149 = vadd.f32 %v1034, %v1131
      %v1150 = vadd.f32 %v1035, %v1134
      %v1151 = vadd.f32 %v1036, %v1139
      %v1152 = vadd.f32 %v1037, %v1142
      %s1153 = scalar_lea.vmem %s358, 160
      %v1154 = vld [vmem:[%s1153] sm:$0xff]
      %v1155 = vld [vmem:[%s1153 + $0x10] sm:$0xff]
      %v1156 = vld [vmem:[%s1153 + $0x20] sm:$0xff]
      %v1157 = vld [vmem:[%s1153 + $0x30] sm:$0xff]
      %v1158 = vld [vmem:[%s1153 + $0x40] sm:$0xff]
      %v1159 = vld [vmem:[%s1153 + $0x50] sm:$0xff]
      %v1160 = vld [vmem:[%s1153 + $0x60] sm:$0xff]
      %v1161 = vld [vmem:[%s1153 + $0x70] sm:$0xff]
      %v1162 = vpack.c.bf16 %v1155, %v1154
      %v1163 = vpack.c.bf16 %v1157, %v1156
      %v1164 = vpack.c.bf16 %v1159, %v1158
      %v1165 = vpack.c.bf16 %v1161, %v1160
      %s1166 = scalar_lea.vmem %s1, 112
      %v1167 = vld [vmem:[%s1166] sm:$0xf]
      %v1168 = vld [vmem:[%s1166 + $0x4] sm:$0xf]
      %v1169 = vld [vmem:[%s1166 + $0x8] sm:$0xf]
      %v1170 = vld [vmem:[%s1166 + $0xc] sm:$0xf]
      %v1175 = vunpack.c.l.b16 %v1167
      %v1176 = vunpack.c.l.b16 %v1168
      %v1177 = vunpack.c.l.b16 %v1169
      %v1178 = vunpack.c.l.b16 %v1170
      %v1179 = vpack.c.b16 %v1176, %v1175
      %v1180 = vpack.c.b16 %v1178, %v1177
      %v1184 = vsel %vm413, %v1162, 0
      %v1187 = vsel %vm413, %v1163, 0
      %v1190 = vsel %vm413, %v1164, 0
      %v1193 = vsel %vm413, %v1165, 0
      %1195 = vmatprep.subr.bf16.mxu0 0
      %1196 = vmatpush1.bf16.msra.mxu0 %v1179
      %1197 = vmatprep.subr.bf16.mxu0 0
      %1198 = vmatpush1.bf16.msra.mxu0 %v1180
      %1199 = vmatprep.subr.bf16.mxu0 0
      %1200 = vmatpush1.bf16.msra.mxu0 0
      %1201 = vmatprep.subr.bf16.mxu0 0
      %1202 = vmatpush1.bf16.msra.mxu0 0
      %1203 = vmatprep.subr.bf16.mxu0 0
      %1204 = vmatpush1.bf16.msra.mxu0 0
      %1205 = vmatprep.subr.bf16.mxu0 0
      %1206 = vmatpush1.bf16.msra.mxu0 0
      %1207 = vmatprep.subr.bf16.mxu0 0
      %1208 = vmatpush1.bf16.msra.mxu0 0
      %1209 = vmatprep.subr.bf16.mxu0 0
      %1210 = vmatpush1.bf16.msra.mxu0 0
      %1211 = vmatprep.subr.bf16.mxu0 0
      %1212 = vmatpush1.bf16.msra.mxu0 0
      %1213 = vmatprep.subr.bf16.mxu0 0
      %1214 = vmatpush1.bf16.msra.mxu0 0
      %1215 = vmatprep.subr.bf16.mxu0 0
      %1216 = vmatpush1.bf16.msra.mxu0 0
      %1217 = vmatprep.subr.bf16.mxu0 0
      %1218 = vmatpush1.bf16.msra.mxu0 0
      %1219 = vmatprep.subr.bf16.mxu0 0
      %1220 = vmatpush1.bf16.msra.mxu0 0
      %1221 = vmatprep.subr.bf16.mxu0 0
      %1222 = vmatpush1.bf16.msra.mxu0 0
      %1223 = vmatprep.subr.bf16.mxu0 0
      %1224 = vmatpush1.bf16.msra.mxu0 0
      %1225 = vmatprep.subr.bf16.mxu0 0
      %1226 = vmatpush1.bf16.msra.mxu0 0
      %1227 = vmatprep.mubr.bf16.mxu0 0
      %1228 = vmatmul.mubr.bf16.gmra.mrb[0].mxu0 %v1184
      %v1229 = vpop.f32.mrb[0].mxu0
      %v1230 = vadd.f32 0.0, %v1229
      %v1231 = vpop.f32.mrb[0].mxu0
      %v1232 = vpop.f32.mrb[0].mxu0
      %v1233 = vadd.f32 0.0, %v1232
      %v1234 = vpop.f32.mrb[0].mxu0
      %1235 = vmatprep.mubr.bf16.mxu0 0
      %1236 = vmatmul.mubr.bf16.gmra.mrb[0].mxu0 %v1187
      %v1237 = vpop.f32.mrb[0].mxu0
      %v1238 = vadd.f32 0.0, %v1237
      %v1239 = vpop.f32.mrb[0].mxu0
      %v1240 = vpop.f32.mrb[0].mxu0
      %v1241 = vadd.f32 0.0, %v1240
      %v1242 = vpop.f32.mrb[0].mxu0
      %1243 = vmatprep.mubr.bf16.mxu0 0
      %1244 = vmatmul.mubr.bf16.gmra.mrb[0].mxu0 %v1190
      %v1245 = vpop.f32.mrb[0].mxu0
      %v1246 = vadd.f32 0.0, %v1245
      %v1247 = vpop.f32.mrb[0].mxu0
      %v1248 = vpop.f32.mrb[0].mxu0
      %v1249 = vadd.f32 0.0, %v1248
      %v1250 = vpop.f32.mrb[0].mxu0
      %1251 = vmatprep.mubr.bf16.mxu0 0
      %1252 = vmatmul.mubr.bf16.gmra.mrb[0].mxu0 %v1193
      %v1253 = vpop.f32.mrb[0].mxu0
      %v1254 = vadd.f32 0.0, %v1253
      %v1255 = vpop.f32.mrb[0].mxu0
      %v1256 = vpop.f32.mrb[0].mxu0
      %v1257 = vadd.f32 0.0, %v1256
      %v1258 = vpop.f32.mrb[0].mxu0
      %1259 = vdwg.mxu0
      %v1260 = vadd.f32 %v1145, %v1230
      %v1261 = vadd.f32 %v1146, %v1233
      %v1262 = vadd.f32 %v1147, %v1238
      %v1263 = vadd.f32 %v1148, %v1241
      %v1264 = vadd.f32 %v1149, %v1246
      %v1265 = vadd.f32 %v1150, %v1249
      %v1266 = vadd.f32 %v1151, %v1254
      %v1267 = vadd.f32 %v1152, %v1257
      %v1268 = vld [vmem:[%s1038 + $0x1] sm:$0xff]
      %v1269 = vld [vmem:[%s1038 + $0x11] sm:$0xff]
      %v1270 = vld [vmem:[%s1038 + $0x21] sm:$0xff]
      %v1271 = vld [vmem:[%s1038 + $0x31] sm:$0xff]
      %v1272 = vld [vmem:[%s1038 + $0x41] sm:$0xff]
      %v1273 = vld [vmem:[%s1038 + $0x51] sm:$0xff]
      %v1274 = vld [vmem:[%s1038 + $0x61] sm:$0xff]
      %v1275 = vld [vmem:[%s1038 + $0x71] sm:$0xff]
      %v1276 = vpack.c.bf16 %v1269, %v1268
      %v1277 = vpack.c.bf16 %v1271, %v1270
      %v1278 = vpack.c.bf16 %v1273, %v1272
      %v1279 = vpack.c.bf16 %v1275, %v1274
      %s1280 = scalar_lea.vmem %s1, 128
      %v1281 = vld [vmem:[%s1280] sm:$0xf]
      %v1282 = vld [vmem:[%s1280 + $0x4] sm:$0xf]
      %v1283 = vld [vmem:[%s1280 + $0x8] sm:$0xf]
      %v1284 = vld [vmem:[%s1280 + $0xc] sm:$0xf]
      %v1289 = vunpack.c.l.b16 %v1281
      %v1290 = vunpack.c.l.b16 %v1282
      %v1291 = vunpack.c.l.b16 %v1283
      %v1292 = vunpack.c.l.b16 %v1284
      %v1293 = vpack.c.b16 %v1290, %v1289
      %v1294 = vpack.c.b16 %v1292, %v1291
      %v1298 = vsel %vm413, %v1276, 0
      %v1301 = vsel %vm413, %v1277, 0
      %v1304 = vsel %vm413, %v1278, 0
      %v1307 = vsel %vm413, %v1279, 0
      %1309 = vmatprep.subr.bf16.mxu0 0
      %1310 = vmatpush1.bf16.msra.mxu0 %v1293
      %1311 = vmatprep.subr.bf16.mxu0 0
      %1312 = vmatpush1.bf16.msra.mxu0 %v1294
      %1313 = vmatprep.subr.bf16.mxu0 0
      %1314 = vmatpush1.bf16.msra.mxu0 0
      %1315 = vmatprep.subr.bf16.mxu0 0
      %1316 = vmatpush1.bf16.msra.mxu0 0
      %1317 = vmatprep.subr.bf16.mxu0 0
      %1318 = vmatpush1.bf16.msra.mxu0 0
      %1319 = vmatprep.subr.bf16.mxu0 0
      %1320 = vmatpush1.bf16.msra.mxu0 0
      %1321 = vmatprep.subr.bf16.mxu0 0
      %1322 = vmatpush1.bf16.msra.mxu0 0
      %1323 = vmatprep.subr.bf16.mxu0 0
      %1324 = vmatpush1.bf16.msra.mxu0 0
      %1325 = vmatprep.subr.bf16.mxu0 0
      %1326 = vmatpush1.bf16.msra.mxu0 0
      %1327 = vmatprep.subr.bf16.mxu0 0
      %1328 = vmatpush1.bf16.msra.mxu0 0
      %1329 = vmatprep.subr.bf16.mxu0 0
      %1330 = vmatpush1.bf16.msra.mxu0 0
      %1331 = vmatprep.subr.bf16.mxu0 0
      %1332 = vmatpush1.bf16.msra.mxu0 0
      %1333 = vmatprep.subr.bf16.mxu0 0
      %1334 = vmatpush1.bf16.msra.mxu0 0
      %1335 = vmatprep.subr.bf16.mxu0 0
      %1336 = vmatpush1.bf16.msra.mxu0 0
      %1337 = vmatprep.subr.bf16.mxu0 0
      %1338 = vmatpush1.bf16.msra.mxu0 0
      %1339 = vmatprep.subr.bf16.mxu0 0
      %1340 = vmatpush1.bf16.msra.mxu0 0
      %1341 = vmatprep.mubr.bf16.mxu0 0
      %1342 = vmatmul.mubr.bf16.gmra.mrb[0].mxu0 %v1298
      %v1343 = vpop.f32.mrb[0].mxu0
      %v1344 = vadd.f32 0.0, %v1343
      %v1345 = vpop.f32.mrb[0].mxu0
      %v1346 = vpop.f32.mrb[0].mxu0
      %v1347 = vadd.f32 0.0, %v1346
      %v1348 = vpop.f32.mrb[0].mxu0
      %1349 = vmatprep.mubr.bf16.mxu0 0
      %1350 = vmatmul.mubr.bf16.gmra.mrb[0].mxu0 %v1301
      %v1351 = vpop.f32.mrb[0].mxu0
      %v1352 = vadd.f32 0.0, %v1351
      %v1353 = vpop.f32.mrb[0].mxu0
      %v1354 = vpop.f32.mrb[0].mxu0
      %v1355 = vadd.f32 0.0, %v1354
      %v1356 = vpop.f32.mrb[0].mxu0
      %1357 = vmatprep.mubr.bf16.mxu0 0
      %1358 = vmatmul.mubr.bf16.gmra.mrb[0].mxu0 %v1304
      %v1359 = vpop.f32.mrb[0].mxu0
      %v1360 = vadd.f32 0.0, %v1359
      %v1361 = vpop.f32.mrb[0].mxu0
      %v1362 = vpop.f32.mrb[0].mxu0
      %v1363 = vadd.f32 0.0, %v1362
      %v1364 = vpop.f32.mrb[0].mxu0
      %1365 = vmatprep.mubr.bf16.mxu0 0
      %1366 = vmatmul.mubr.bf16.gmra.mrb[0].mxu0 %v1307
      %v1367 = vpop.f32.mrb[0].mxu0
      %v1368 = vadd.f32 0.0, %v1367
      %v1369 = vpop.f32.mrb[0].mxu0
      %v1370 = vpop.f32.mrb[0].mxu0
      %v1371 = vadd.f32 0.0, %v1370
      %v1372 = vpop.f32.mrb[0].mxu0
      %1373 = vdwg.mxu0
      %v1374 = vadd.f32 %v1260, %v1344
      %v1375 = vadd.f32 %v1261, %v1347
      %v1376 = vadd.f32 %v1262, %v1352
      %v1377 = vadd.f32 %v1263, %v1355
      %v1378 = vadd.f32 %v1264, %v1360
      %v1379 = vadd.f32 %v1265, %v1363
      %v1380 = vadd.f32 %v1266, %v1368
      %v1381 = vadd.f32 %v1267, %v1371
      %v1382 = vld [vmem:[%s2] sm:$0x1]
      %v1384 = vlaneseq
      %v1385 = vshrl.u32 %v1384, 7
      %v1386 = vsub.s32 0, %v1385
      %v1387 = vrot.slane %v1382, %v1386
      %v1389 = vmul.f32 %v1374, %v1387
      %v1390 = vmul.f32 %v1375, %v1387
      %v1391 = vmul.f32 %v1376, %v1387
      %v1392 = vmul.f32 %v1377, %v1387
      %v1393 = vmul.f32 %v1378, %v1387
      %v1394 = vmul.f32 %v1379, %v1387
      %v1395 = vmul.f32 %v1380, %v1387
      %v1396 = vmul.f32 %v1381, %v1387
      %v1397 = vld [vmem:[%s3] sm:$0x1]
      %v1399 = vlaneseq
      %v1400 = vshrl.u32 %v1399, 7
      %v1401 = vsub.s32 0, %v1400
      %v1402 = vrot.slane %v1397, %v1401
      %v1404 = vadd.f32 %v1389, %v1402
      %v1405 = vadd.f32 %v1390, %v1402
      %v1406 = vadd.f32 %v1391, %v1402
      %v1407 = vadd.f32 %v1392, %v1402
      %v1408 = vadd.f32 %v1393, %v1402
      %v1409 = vadd.f32 %v1394, %v1402
      %v1410 = vadd.f32 %v1395, %v1402
      %v1411 = vadd.f32 %v1396, %v1402
      %v1412 = vmax.f32 %v1404, 0.0
      %v1413 = vmax.f32 %v1405, 0.0
      %v1414 = vmax.f32 %v1406, 0.0
      %v1415 = vmax.f32 %v1407, 0.0
      %v1416 = vmax.f32 %v1408, 0.0
      %v1417 = vmax.f32 %v1409, 0.0
      %v1418 = vmax.f32 %v1410, 0.0
      %v1419 = vmax.f32 %v1411, 0.0
      %1420 = vst [vmem:[#allocation2] sm:$0xf] 0
      %1421 = vst [vmem:[#allocation2 + $0x4] sm:$0x1] 0
      %1422 = vst [vmem:[#allocation2 + $0x8] sm:$0xf] 0
      %1423 = vst [vmem:[#allocation2 + $0xc] sm:$0x1] 0
      %1424 = vst [vmem:[#allocation2 + $0x10] sm:$0xf] 0
      %1425 = vst [vmem:[#allocation2 + $0x14] sm:$0x1] 0
      %1426 = vst [vmem:[#allocation2 + $0x18] sm:$0xf] 0
      %1427 = vst [vmem:[#allocation2 + $0x1c] sm:$0x1] 0
      %1428 = vst [vmem:[#allocation2 + $0x20] sm:$0xf] 0
      %1429 = vst [vmem:[#allocation2 + $0x24] sm:$0x1] 0
      %1430 = vst [vmem:[#allocation2 + $0x28] sm:$0xf] 0
      %1431 = vst [vmem:[#allocation2 + $0x2c] sm:$0x1] 0
      %1432 = vst [vmem:[#allocation2 + $0x30] sm:$0xf] 0
      %1433 = vst [vmem:[#allocation2 + $0x34] sm:$0x1] 0
      %1434 = vst [vmem:[#allocation2 + $0x38] sm:$0xf] 0
      %1435 = vst [vmem:[#allocation2 + $0x3c] sm:$0x1] 0
      %1436 = vst [vmem:[#allocation2 + $0x40] sm:$0xf] 0
      %1437 = vst [vmem:[#allocation2 + $0x44] sm:$0x1] 0
      %1438 = vst [vmem:[#allocation2 + $0x48] sm:$0xf] 0
      %1439 = vst [vmem:[#allocation2 + $0x4c] sm:$0x1] 0
      %v1440 = vpack.c.bf16 %v1412, %v1412
      %v1441 = vpack.c.bf16 %v1413, %v1413
      %v1442 = vpack.c.bf16 %v1414, %v1414
      %v1443 = vpack.c.bf16 %v1415, %v1415
      %v1444 = vpack.c.bf16 %v1416, %v1416
      %v1445 = vpack.c.bf16 %v1417, %v1417
      %v1446 = vpack.c.bf16 %v1418, %v1418
      %v1447 = vpack.c.bf16 %v1419, %v1419
      %v1456 = vunpack.c.l.b16 %v1440
      %v1457 = vunpack.c.l.b16 %v1441
      %v1458 = vunpack.c.l.b16 %v1442
      %v1459 = vunpack.c.l.b16 %v1443
      %v1460 = vunpack.c.l.b16 %v1444
      %v1461 = vunpack.c.l.b16 %v1445
      %v1462 = vunpack.c.l.b16 %v1446
      %v1463 = vunpack.c.l.b16 %v1447
      %v1464 = vpack.c.b16 %v1456, %v1456
      %v1465 = vpack.c.b16 %v1457, %v1457
      %v1466 = vpack.c.b16 %v1458, %v1458
      %v1467 = vpack.c.b16 %v1459, %v1459
      %v1468 = vpack.c.b16 %v1460, %v1460
      %v1469 = vpack.c.b16 %v1461, %v1461
      %v1470 = vpack.c.b16 %v1462, %v1462
      %v1471 = vpack.c.b16 %v1463, %v1463
      %v1473 = vshrl.u32 %v1464, 16
      %v1475 = vrot.slane %v1473, 7
      %v1476 = vshll.u32 %v1464, 16
      %v1478 = vor.u32 %v1475, %v1476
      %v1479 = vrot.slane %v1475, 4
      %v1481 = vshrl.u32 %v1465, 16
      %v1483 = vrot.slane %v1481, 7
      %v1484 = vshll.u32 %v1465, 16
      %v1486 = vor.u32 %v1483, %v1484
      %v1487 = vrot.slane %v1483, 4
      %v1489 = vshrl.u32 %v1466, 16
      %v1491 = vrot.slane %v1489, 7
      %v1492 = vshll.u32 %v1466, 16
      %v1494 = vor.u32 %v1491, %v1492
      %v1495 = vrot.slane %v1491, 4
      %v1497 = vshrl.u32 %v1467, 16
      %v1499 = vrot.slane %v1497, 7
      %v1500 = vshll.u32 %v1467, 16
      %v1502 = vor.u32 %v1499, %v1500
      %v1503 = vrot.slane %v1499, 4
      %v1505 = vshrl.u32 %v1468, 16
      %v1507 = vrot.slane %v1505, 7
      %v1508 = vshll.u32 %v1468, 16
      %v1510 = vor.u32 %v1507, %v1508
      %v1511 = vrot.slane %v1507, 4
      %v1513 = vshrl.u32 %v1469, 16
      %v1515 = vrot.slane %v1513, 7
      %v1516 = vshll.u32 %v1469, 16
      %v1518 = vor.u32 %v1515, %v1516
      %v1519 = vrot.slane %v1515, 4
      %v1521 = vshrl.u32 %v1470, 16
      %v1523 = vrot.slane %v1521, 7
      %v1524 = vshll.u32 %v1470, 16
      %v1526 = vor.u32 %v1523, %v1524
      %v1527 = vrot.slane %v1523, 4
      %v1529 = vshrl.u32 %v1471, 16
      %v1531 = vrot.slane %v1529, 7
      %v1532 = vshll.u32 %v1471, 16
      %v1534 = vor.u32 %v1531, %v1532
      %v1535 = vrot.slane %v1531, 4
      %s1552 = scalar_lea.vmem [#allocation2], 8
      %vm1553 = vcmask 1043456
      %vm1554 = vsmask.f32 7938
      %vm1555 = vmand %vm1553, %vm1554
      %v1556 = vld [vmem:[%s1552] sm:$0xf]
      %v1557 = vsel %vm1555, %v1478, %v1556
      %1558 = vst [vmem:[%s1552] sm:$0xf] %v1557
      %vm1559 = vcmask 1040384
      %vm1560 = vsmask.f32 256
      %vm1561 = vmand %vm1559, %vm1560
      %v1562 = vld [vmem:[%s1552 + $0x4] sm:$0x1]
      %v1563 = vsel %vm1561, %v1479, %v1562
      %1564 = vst [vmem:[%s1552 + $0x4] sm:$0x1] %v1563
      %v1565 = vld [vmem:[%s1552 + $0x8] sm:$0xf]
      %v1566 = vsel %vm1555, %v1486, %v1565
      %1567 = vst [vmem:[%s1552 + $0x8] sm:$0xf] %v1566
      %v1568 = vld [vmem:[%s1552 + $0xc] sm:$0x1]
      %v1569 = vsel %vm1561, %v1487, %v1568
      %1570 = vst [vmem:[%s1552 + $0xc] sm:$0x1] %v1569
      %v1571 = vld [vmem:[%s1552 + $0x10] sm:$0xf]
      %v1572 = vsel %vm1555, %v1494, %v1571
      %1573 = vst [vmem:[%s1552 + $0x10] sm:$0xf] %v1572
      %v1574 = vld [vmem:[%s1552 + $0x14] sm:$0x1]
      %v1575 = vsel %vm1561, %v1495, %v1574
      %1576 = vst [vmem:[%s1552 + $0x14] sm:$0x1] %v1575
      %v1577 = vld [vmem:[%s1552 + $0x18] sm:$0xf]
      %v1578 = vsel %vm1555, %v1502, %v1577
      %1579 = vst [vmem:[%s1552 + $0x18] sm:$0xf] %v1578
      %v1580 = vld [vmem:[%s1552 + $0x1c] sm:$0x1]
      %v1581 = vsel %vm1561, %v1503, %v1580
      %1582 = vst [vmem:[%s1552 + $0x1c] sm:$0x1] %v1581
      %v1583 = vld [vmem:[%s1552 + $0x20] sm:$0xf]
      %v1584 = vsel %vm1555, %v1510, %v1583
      %1585 = vst [vmem:[%s1552 + $0x20] sm:$0xf] %v1584
      %v1586 = vld [vmem:[%s1552 + $0x24] sm:$0x1]
      %v1587 = vsel %vm1561, %v1511, %v1586
      %1588 = vst [vmem:[%s1552 + $0x24] sm:$0x1] %v1587
      %v1589 = vld [vmem:[%s1552 + $0x28] sm:$0xf]
      %v1590 = vsel %vm1555, %v1518, %v1589
      %1591 = vst [vmem:[%s1552 + $0x28] sm:$0xf] %v1590
      %v1592 = vld [vmem:[%s1552 + $0x2c] sm:$0x1]
      %v1593 = vsel %vm1561, %v1519, %v1592
      %1594 = vst [vmem:[%s1552 + $0x2c] sm:$0x1] %v1593
      %v1595 = vld [vmem:[%s1552 + $0x30] sm:$0xf]
      %v1596 = vsel %vm1555, %v1526, %v1595
      %1597 = vst [vmem:[%s1552 + $0x30] sm:$0xf] %v1596
      %v1598 = vld [vmem:[%s1552 + $0x34] sm:$0x1]
      %v1599 = vsel %vm1561, %v1527, %v1598
      %1600 = vst [vmem:[%s1552 + $0x34] sm:$0x1] %v1599
      %v1601 = vld [vmem:[%s1552 + $0x38] sm:$0xf]
      %v1602 = vsel %vm1555, %v1534, %v1601
      %1603 = vst [vmem:[%s1552 + $0x38] sm:$0xf] %v1602
      %v1604 = vld [vmem:[%s1552 + $0x3c] sm:$0x1]
      %v1605 = vsel %vm1561, %v1535, %v1604
      %1606 = vst [vmem:[%s1552 + $0x3c] sm:$0x1] %v1605
      %v1607 = vld [vmem:[#allocation2] sm:$0xf]
      %v1608 = vld [vmem:[#allocation2 + $0x8] sm:$0xf]
      %v1609 = vld [vmem:[#allocation2 + $0x10] sm:$0xf]
      %v1610 = vld [vmem:[#allocation2 + $0x18] sm:$0xf]
      %v1611 = vld [vmem:[#allocation2 + $0x20] sm:$0xf]
      %v1612 = vld [vmem:[#allocation2 + $0x28] sm:$0xf]
      %v1613 = vld [vmem:[#allocation2 + $0x30] sm:$0xf]
      %v1614 = vld [vmem:[#allocation2 + $0x38] sm:$0xf]
      %v1615 = vld [vmem:[%s4] sm:$0xf]
      %v1616 = vld [vmem:[%s4 + $0x4] sm:$0xf]
      %v1617 = vld [vmem:[%s4 + $0x8] sm:$0xf]
      %v1618 = vld [vmem:[%s4 + $0xc] sm:$0xf]
      %v1619 = vld [vmem:[%s4 + $0x10] sm:$0xf]
      %v1620 = vld [vmem:[%s4 + $0x14] sm:$0xf]
      %v1621 = vld [vmem:[%s4 + $0x18] sm:$0xf]
      %v1622 = vld [vmem:[%s4 + $0x1c] sm:$0xf]
      %v1623 = vld [vmem:[%s4 + $0x20] sm:$0xf]
      %v1624 = vld [vmem:[%s4 + $0x24] sm:$0xf]
      %v1625 = vld [vmem:[%s4 + $0x28] sm:$0xf]
      %v1626 = vld [vmem:[%s4 + $0x2c] sm:$0xf]
      %v1627 = vld [vmem:[%s4 + $0x30] sm:$0xf]
      %v1628 = vld [vmem:[%s4 + $0x34] sm:$0xf]
      %v1629 = vld [vmem:[%s4 + $0x38] sm:$0xf]
      %v1630 = vld [vmem:[%s4 + $0x3c] sm:$0xf]
      %v1631 = vld [vmem:[#allocation2 + $0x4] sm:$0x1]
      %v1632 = vld [vmem:[#allocation2 + $0xc] sm:$0x1]
      %v1633 = vld [vmem:[#allocation2 + $0x14] sm:$0x1]
      %v1634 = vld [vmem:[#allocation2 + $0x1c] sm:$0x1]
      %v1635 = vld [vmem:[#allocation2 + $0x24] sm:$0x1]
      %v1636 = vld [vmem:[#allocation2 + $0x2c] sm:$0x1]
      %v1637 = vld [vmem:[#allocation2 + $0x34] sm:$0x1]
      %v1638 = vld [vmem:[#allocation2 + $0x3c] sm:$0x1]
      %vm1639 = vsmask.f32 3328
      %vm1640 = vsmask.f32 7440
      %vm1641 = vmor %vm1639, %vm1640
      %v1643 = vshrl.u32 %v1607, 16
      %v1645 = vrot.slane %v1643, 4
      %v1646 = vshll.u32 %v1607, 16
      %v1648 = vrot.slane %v1646, 5
      %v1649 = vor.u32 %v1645, %v1648
      %v1650 = vrot.slane %v1649, 4
      %v1652 = vshll.u32 %v1631, 16
      %v1654 = vrot.slane %v1652, 5
      %v1655 = vsel %vm1641, %v1650, %v1654
      %v1657 = vshrl.u32 %v1608, 16
      %v1659 = vrot.slane %v1657, 4
      %v1660 = vshll.u32 %v1608, 16
      %v1662 = vrot.slane %v1660, 5
      %v1663 = vor.u32 %v1659, %v1662
      %v1664 = vrot.slane %v1663, 4
      %v1666 = vshll.u32 %v1632, 16
      %v1668 = vrot.slane %v1666, 5
      %v1669 = vsel %vm1641, %v1664, %v1668
      %v1671 = vshrl.u32 %v1609, 16
      %v1673 = vrot.slane %v1671, 4
      %v1674 = vshll.u32 %v1609, 16
      %v1676 = vrot.slane %v1674, 5
      %v1677 = vor.u32 %v1673, %v1676
      %v1678 = vrot.slane %v1677, 4
      %v1680 = vshll.u32 %v1633, 16
      %v1682 = vrot.slane %v1680, 5
      %v1683 = vsel %vm1641, %v1678, %v1682
      %v1685 = vshrl.u32 %v1610, 16
      %v1687 = vrot.slane %v1685, 4
      %v1688 = vshll.u32 %v1610, 16
      %v1690 = vrot.slane %v1688, 5
      %v1691 = vor.u32 %v1687, %v1690
      %v1692 = vrot.slane %v1691, 4
      %v1694 = vshll.u32 %v1634, 16
      %v1696 = vrot.slane %v1694, 5
      %v1697 = vsel %vm1641, %v1692, %v1696
      %v1699 = vshrl.u32 %v1611, 16
      %v1701 = vrot.slane %v1699, 4
      %v1702 = vshll.u32 %v1611, 16
      %v1704 = vrot.slane %v1702, 5
      %v1705 = vor.u32 %v1701, %v1704
      %v1706 = vrot.slane %v1705, 4
      %v1708 = vshll.u32 %v1635, 16
      %v1710 = vrot.slane %v1708, 5
      %v1711 = vsel %vm1641, %v1706, %v1710
      %v1713 = vshrl.u32 %v1612, 16
      %v1715 = vrot.slane %v1713, 4
      %v1716 = vshll.u32 %v1612, 16
      %v1718 = vrot.slane %v1716, 5
      %v1719 = vor.u32 %v1715, %v1718
      %v1720 = vrot.slane %v1719, 4
      %v1722 = vshll.u32 %v1636, 16
      %v1724 = vrot.slane %v1722, 5
      %v1725 = vsel %vm1641, %v1720, %v1724
      %v1727 = vshrl.u32 %v1613, 16
      %v1729 = vrot.slane %v1727, 4
      %v1730 = vshll.u32 %v1613, 16
      %v1732 = vrot.slane %v1730, 5
      %v1733 = vor.u32 %v1729, %v1732
      %v1734 = vrot.slane %v1733, 4
      %v1736 = vshll.u32 %v1637, 16
      %v1738 = vrot.slane %v1736, 5
      %v1739 = vsel %vm1641, %v1734, %v1738
      %v1741 = vshrl.u32 %v1614, 16
      %v1743 = vrot.slane %v1741, 4
      %v1744 = vshll.u32 %v1614, 16
      %v1746 = vrot.slane %v1744, 5
      %v1747 = vor.u32 %v1743, %v1746
      %v1748 = vrot.slane %v1747, 4
      %v1750 = vshll.u32 %v1638, 16
      %v1752 = vrot.slane %v1750, 5
      %v1753 = vsel %vm1641, %v1748, %v1752
      %s1754 = scalar_lea.vmem %s4, 64
      %v1755 = vld [vmem:[%s1754] sm:$0xf]
      %v1756 = vld [vmem:[%s1754 + $0x4] sm:$0xf]
      %v1757 = vld [vmem:[%s1754 + $0x8] sm:$0xf]
      %v1758 = vld [vmem:[%s1754 + $0xc] sm:$0xf]
      %v1759 = vld [vmem:[%s1754 + $0x10] sm:$0xf]
      %v1760 = vld [vmem:[%s1754 + $0x14] sm:$0xf]
      %v1761 = vld [vmem:[%s1754 + $0x18] sm:$0xf]
      %v1762 = vld [vmem:[%s1754 + $0x1c] sm:$0xf]
      %v1763 = vld [vmem:[%s1754 + $0x20] sm:$0xf]
      %v1764 = vld [vmem:[%s1754 + $0x24] sm:$0xf]
      %v1765 = vld [vmem:[%s1754 + $0x28] sm:$0xf]
      %v1766 = vld [vmem:[%s1754 + $0x2c] sm:$0xf]
      %v1767 = vld [vmem:[%s1754 + $0x30] sm:$0xf]
      %v1768 = vld [vmem:[%s1754 + $0x34] sm:$0xf]
      %v1769 = vld [vmem:[%s1754 + $0x38] sm:$0xf]
      %v1770 = vld [vmem:[%s1754 + $0x3c] sm:$0xf]
      %v1771 = vunpack.c.l.b16 %v1655
      %v1772 = vunpack.c.l.b16 %v1669
      %v1773 = vunpack.c.l.b16 %v1683
      %v1774 = vunpack.c.l.b16 %v1697
      %v1775 = vunpack.c.l.b16 %v1711
      %v1776 = vunpack.c.l.b16 %v1725
      %v1777 = vunpack.c.l.b16 %v1739
      %v1778 = vunpack.c.l.b16 %v1753
      %v1779 = vpack.c.b16 %v1772, %v1771
      %v1780 = vpack.c.b16 %v1774, %v1773
      %v1781 = vpack.c.b16 %v1776, %v1775
      %v1782 = vpack.c.b16 %v1778, %v1777
      %v1803 = vunpack.c.l.b16 %v1755
      %v1804 = vunpack.c.l.b16 %v1756
      %v1805 = vunpack.c.l.b16 %v1757
      %v1806 = vunpack.c.l.b16 %v1758
      %v1807 = vunpack.c.l.b16 %v1759
      %v1808 = vunpack.c.l.b16 %v1760
      %v1809 = vunpack.c.l.b16 %v1761
      %v1810 = vunpack.c.l.b16 %v1762
      %v1811 = vunpack.c.l.b16 %v1763
      %v1812 = vunpack.c.l.b16 %v1764
      %v1813 = vunpack.c.l.b16 %v1765
      %v1814 = vunpack.c.l.b16 %v1766
      %v1815 = vunpack.c.l.b16 %v1767
      %v1816 = vunpack.c.l.b16 %v1768
      %v1817 = vunpack.c.l.b16 %v1769
      %v1818 = vunpack.c.l.b16 %v1770
      %v1819 = vpack.c.b16 %v1804, %v1803
      %v1820 = vpack.c.b16 %v1806, %v1805
      %v1821 = vpack.c.b16 %v1808, %v1807
      %v1822 = vpack.c.b16 %v1810, %v1809
      %v1823 = vpack.c.b16 %v1812, %v1811
      %v1824 = vpack.c.b16 %v1814, %v1813
      %v1825 = vpack.c.b16 %v1816, %v1815
      %v1826 = vpack.c.b16 %v1818, %v1817
      %1835 = vmatprep.subr.bf16.mxu0 0
      %1836 = vmatpush1.bf16.msra.mxu0 %v1819
      %1837 = vmatprep.subr.bf16.mxu0 0
      %1838 = vmatpush1.bf16.msra.mxu0 %v1820
      %1839 = vmatprep.subr.bf16.mxu0 0
      %1840 = vmatpush1.bf16.msra.mxu0 %v1821
      %1841 = vmatprep.subr.bf16.mxu0 0
      %1842 = vmatpush1.bf16.msra.mxu0 %v1822
      %1843 = vmatprep.subr.bf16.mxu0 0
      %1844 = vmatpush1.bf16.msra.mxu0 %v1823
      %1845 = vmatprep.subr.bf16.mxu0 0
      %1846 = vmatpush1.bf16.msra.mxu0 %v1824
      %1847 = vmatprep.subr.bf16.mxu0 0
      %1848 = vmatpush1.bf16.msra.mxu0 %v1825
      %1849 = vmatprep.subr.bf16.mxu0 0
      %1850 = vmatpush1.bf16.msra.mxu0 %v1826
      %1851 = vmatprep.subr.bf16.mxu0 0
      %1852 = vmatpush1.bf16.msra.mxu0 0
      %1853 = vmatprep.subr.bf16.mxu0 0
      %1854 = vmatpush1.bf16.msra.mxu0 0
      %1855 = vmatprep.subr.bf16.mxu0 0
      %1856 = vmatpush1.bf16.msra.mxu0 0
      %1857 = vmatprep.subr.bf16.mxu0 0
      %1858 = vmatpush1.bf16.msra.mxu0 0
      %1859 = vmatprep.subr.bf16.mxu0 0
      %1860 = vmatpush1.bf16.msra.mxu0 0
      %1861 = vmatprep.subr.bf16.mxu0 0
      %1862 = vmatpush1.bf16.msra.mxu0 0
      %1863 = vmatprep.subr.bf16.mxu0 0
      %1864 = vmatpush1.bf16.msra.mxu0 0
      %1865 = vmatprep.subr.bf16.mxu0 0
      %1866 = vmatpush1.bf16.msra.mxu0 0
      %1867 = vmatprep.mubr.bf16.mxu0 0
      %1868 = vmatmul.mubr.bf16.gmra.mrb[0].mxu0 %v1779
      %v1869 = vpop.f32.mrb[0].mxu0
      %v1870 = vadd.f32 0.0, %v1869
      %v1871 = vpop.f32.mrb[0].mxu0
      %v1872 = vpop.f32.mrb[0].mxu0
      %v1873 = vadd.f32 0.0, %v1872
      %v1874 = vpop.f32.mrb[0].mxu0
      %1875 = vmatprep.mubr.bf16.mxu0 0
      %1876 = vmatmul.mubr.bf16.gmra.mrb[0].mxu0 %v1780
      %v1877 = vpop.f32.mrb[0].mxu0
      %v1878 = vadd.f32 0.0, %v1877
      %v1879 = vpop.f32.mrb[0].mxu0
      %v1880 = vpop.f32.mrb[0].mxu0
      %v1881 = vadd.f32 0.0, %v1880
      %v1882 = vpop.f32.mrb[0].mxu0
      %1883 = vmatprep.mubr.bf16.mxu0 0
      %1884 = vmatmul.mubr.bf16.gmra.mrb[0].mxu0 %v1781
      %v1885 = vpop.f32.mrb[0].mxu0
      %v1886 = vadd.f32 0.0, %v1885
      %v1887 = vpop.f32.mrb[0].mxu0
      %v1888 = vpop.f32.mrb[0].mxu0
      %v1889 = vadd.f32 0.0, %v1888
      %v1890 = vpop.f32.mrb[0].mxu0
      %1891 = vmatprep.mubr.bf16.mxu0 0
      %1892 = vmatmul.mubr.bf16.gmra.mrb[0].mxu0 %v1782
      %v1893 = vpop.f32.mrb[0].mxu0
      %v1894 = vadd.f32 0.0, %v1893
      %v1895 = vpop.f32.mrb[0].mxu0
      %v1896 = vpop.f32.mrb[0].mxu0
      %v1897 = vadd.f32 0.0, %v1896
      %v1898 = vpop.f32.mrb[0].mxu0
      %1899 = vdwg.mxu0
      %v1908 = vunpack.c.l.b16 %v1607
      %v1909 = vunpack.c.l.b16 %v1608
      %v1910 = vunpack.c.l.b16 %v1609
      %v1911 = vunpack.c.l.b16 %v1610
      %v1912 = vunpack.c.l.b16 %v1611
      %v1913 = vunpack.c.l.b16 %v1612
      %v1914 = vunpack.c.l.b16 %v1613
      %v1915 = vunpack.c.l.b16 %v1614
      %v1916 = vpack.c.b16 %v1909, %v1908
      %v1917 = vpack.c.b16 %v1911, %v1910
      %v1918 = vpack.c.b16 %v1913, %v1912
      %v1919 = vpack.c.b16 %v1915, %v1914
      %v1940 = vunpack.c.l.b16 %v1615
      %v1941 = vunpack.c.l.b16 %v1616
      %v1942 = vunpack.c.l.b16 %v1617
      %v1943 = vunpack.c.l.b16 %v1618
      %v1944 = vunpack.c.l.b16 %v1619
      %v1945 = vunpack.c.l.b16 %v1620
      %v1946 = vunpack.c.l.b16 %v1621
      %v1947 = vunpack.c.l.b16 %v1622
      %v1948 = vunpack.c.l.b16 %v1623
      %v1949 = vunpack.c.l.b16 %v1624
      %v1950 = vunpack.c.l.b16 %v1625
      %v1951 = vunpack.c.l.b16 %v1626
      %v1952 = vunpack.c.l.b16 %v1627
      %v1953 = vunpack.c.l.b16 %v1628
      %v1954 = vunpack.c.l.b16 %v1629
      %v1955 = vunpack.c.l.b16 %v1630
      %v1956 = vpack.c.b16 %v1941, %v1940
      %v1957 = vpack.c.b16 %v1943, %v1942
      %v1958 = vpack.c.b16 %v1945, %v1944
      %v1959 = vpack.c.b16 %v1947, %v1946
      %v1960 = vpack.c.b16 %v1949, %v1948
      %v1961 = vpack.c.b16 %v1951, %v1950
      %v1962 = vpack.c.b16 %v1953, %v1952
      %v1963 = vpack.c.b16 %v1955, %v1954
      %1972 = vmatprep.subr.bf16.mxu0 0
      %1973 = vmatpush1.bf16.msra.mxu0 %v1956
      %1974 = vmatprep.subr.bf16.mxu0 0
      %1975 = vmatpush1.bf16.msra.mxu0 %v1957
      %1976 = vmatprep.subr.bf16.mxu0 0
      %1977 = vmatpush1.bf16.msra.mxu0 %v1958
      %1978 = vmatprep.subr.bf16.mxu0 0
      %1979 = vmatpush1.bf16.msra.mxu0 %v1959
      %1980 = vmatprep.subr.bf16.mxu0 0
      %1981 = vmatpush1.bf16.msra.mxu0 %v1960
      %1982 = vmatprep.subr.bf16.mxu0 0
      %1983 = vmatpush1.bf16.msra.mxu0 %v1961
      %1984 = vmatprep.subr.bf16.mxu0 0
      %1985 = vmatpush1.bf16.msra.mxu0 %v1962
      %1986 = vmatprep.subr.bf16.mxu0 0
      %1987 = vmatpush1.bf16.msra.mxu0 %v1963
      %1988 = vmatprep.subr.bf16.mxu0 0
      %1989 = vmatpush1.bf16.msra.mxu0 0
      %1990 = vmatprep.subr.bf16.mxu0 0
      %1991 = vmatpush1.bf16.msra.mxu0 0
      %1992 = vmatprep.subr.bf16.mxu0 0
      %1993 = vmatpush1.bf16.msra.mxu0 0
      %1994 = vmatprep.subr.bf16.mxu0 0
      %1995 = vmatpush1.bf16.msra.mxu0 0
      %1996 = vmatprep.subr.bf16.mxu0 0
      %1997 = vmatpush1.bf16.msra.mxu0 0
      %1998 = vmatprep.subr.bf16.mxu0 0
      %1999 = vmatpush1.bf16.msra.mxu0 0
      %2000 = vmatprep.subr.bf16.mxu0 0
      %2001 = vmatpush1.bf16.msra.mxu0 0
      %2002 = vmatprep.subr.bf16.mxu0 0
      %2003 = vmatpush1.bf16.msra.mxu0 0
      %2004 = vmatprep.mubr.bf16.mxu0 0
      %2005 = vmatmul.mubr.bf16.gmra.mrb[0].mxu0 %v1916
      %v2006 = vpop.f32.mrb[0].mxu0
      %v2007 = vadd.f32 %v1870, %v2006
      %v2008 = vpop.f32.mrb[0].mxu0
      %v2009 = vpop.f32.mrb[0].mxu0
      %v2010 = vadd.f32 %v1873, %v2009
      %v2011 = vpop.f32.mrb[0].mxu0
      %2012 = vmatprep.mubr.bf16.mxu0 0
      %2013 = vmatmul.mubr.bf16.gmra.mrb[0].mxu0 %v1917
      %v2014 = vpop.f32.mrb[0].mxu0
      %v2015 = vadd.f32 %v1878, %v2014
      %v2016 = vpop.f32.mrb[0].mxu0
      %v2017 = vpop.f32.mrb[0].mxu0
      %v2018 = vadd.f32 %v1881, %v2017
      %v2019 = vpop.f32.mrb[0].mxu0
      %2020 = vmatprep.mubr.bf16.mxu0 0
      %2021 = vmatmul.mubr.bf16.gmra.mrb[0].mxu0 %v1918
      %v2022 = vpop.f32.mrb[0].mxu0
      %v2023 = vadd.f32 %v1886, %v2022
      %v2024 = vpop.f32.mrb[0].mxu0
      %v2025 = vpop.f32.mrb[0].mxu0
      %v2026 = vadd.f32 %v1889, %v2025
      %v2027 = vpop.f32.mrb[0].mxu0
      %2028 = vmatprep.mubr.bf16.mxu0 0
      %2029 = vmatmul.mubr.bf16.gmra.mrb[0].mxu0 %v1919
      %v2030 = vpop.f32.mrb[0].mxu0
      %v2031 = vadd.f32 %v1894, %v2030
      %v2032 = vpop.f32.mrb[0].mxu0
      %v2033 = vpop.f32.mrb[0].mxu0
      %v2034 = vadd.f32 %v1897, %v2033
      %v2035 = vpop.f32.mrb[0].mxu0
      %2036 = vdwg.mxu0
      %v2037 = vld [vmem:[#allocation2] sm:$0xe]
      %v2038 = vld [vmem:[#allocation2 + $0x8] sm:$0xe]
      %v2039 = vld [vmem:[#allocation2 + $0x10] sm:$0xe]
      %v2040 = vld [vmem:[#allocation2 + $0x18] sm:$0xe]
      %v2041 = vld [vmem:[#allocation2 + $0x20] sm:$0xe]
      %v2042 = vld [vmem:[#allocation2 + $0x28] sm:$0xe]
      %v2043 = vld [vmem:[#allocation2 + $0x30] sm:$0xe]
      %v2044 = vld [vmem:[#allocation2 + $0x38] sm:$0xe]
      %vm2061 = vcmask 1042432
      %vm2062 = vcmask 1046532
      %vm2063 = vmor %vm2061, %vm2062
      %v2064 = vrot.slane %v2037, 5
      %v2065 = vrot.slane %v2064, 4
      %v2066 = vrot.slane %v1631, 5
      %v2067 = vsel %vm2063, %v2065, %v2066
      %v2068 = vrot.slane %v2038, 5
      %v2069 = vrot.slane %v2068, 4
      %v2070 = vrot.slane %v1632, 5
      %v2071 = vsel %vm2063, %v2069, %v2070
      %v2072 = vrot.slane %v2039, 5
      %v2073 = vrot.slane %v2072, 4
      %v2074 = vrot.slane %v1633, 5
      %v2075 = vsel %vm2063, %v2073, %v2074
      %v2076 = vrot.slane %v2040, 5
      %v2077 = vrot.slane %v2076, 4
      %v2078 = vrot.slane %v1634, 5
      %v2079 = vsel %vm2063, %v2077, %v2078
      %v2080 = vrot.slane %v2041, 5
      %v2081 = vrot.slane %v2080, 4
      %v2082 = vrot.slane %v1635, 5
      %v2083 = vsel %vm2063, %v2081, %v2082
      %v2084 = vrot.slane %v2042, 5
      %v2085 = vrot.slane %v2084, 4
      %v2086 = vrot.slane %v1636, 5
      %v2087 = vsel %vm2063, %v2085, %v2086
      %v2088 = vrot.slane %v2043, 5
      %v2089 = vrot.slane %v2088, 4
      %v2090 = vrot.slane %v1637, 5
      %v2091 = vsel %vm2063, %v2089, %v2090
      %v2092 = vrot.slane %v2044, 5
      %v2093 = vrot.slane %v2092, 4
      %v2094 = vrot.slane %v1638, 5
      %v2095 = vsel %vm2063, %v2093, %v2094
      %s2096 = scalar_lea.vmem %s4, 128
      %v2097 = vld [vmem:[%s2096] sm:$0xf]
      %v2098 = vld [vmem:[%s2096 + $0x4] sm:$0xf]
      %v2099 = vld [vmem:[%s2096 + $0x8] sm:$0xf]
      %v2100 = vld [vmem:[%s2096 + $0xc] sm:$0xf]
      %v2101 = vld [vmem:[%s2096 + $0x10] sm:$0xf]
      %v2102 = vld [vmem:[%s2096 + $0x14] sm:$0xf]
      %v2103 = vld [vmem:[%s2096 + $0x18] sm:$0xf]
      %v2104 = vld [vmem:[%s2096 + $0x1c] sm:$0xf]
      %v2105 = vld [vmem:[%s2096 + $0x20] sm:$0xf]
      %v2106 = vld [vmem:[%s2096 + $0x24] sm:$0xf]
      %v2107 = vld [vmem:[%s2096 + $0x28] sm:$0xf]
      %v2108 = vld [vmem:[%s2096 + $0x2c] sm:$0xf]
      %v2109 = vld [vmem:[%s2096 + $0x30] sm:$0xf]
      %v2110 = vld [vmem:[%s2096 + $0x34] sm:$0xf]
      %v2111 = vld [vmem:[%s2096 + $0x38] sm:$0xf]
      %v2112 = vld [vmem:[%s2096 + $0x3c] sm:$0xf]
      %v2113 = vunpack.c.l.b16 %v2067
      %v2114 = vunpack.c.l.b16 %v2071
      %v2115 = vunpack.c.l.b16 %v2075
      %v2116 = vunpack.c.l.b16 %v2079
      %v2117 = vunpack.c.l.b16 %v2083
      %v2118 = vunpack.c.l.b16 %v2087
      %v2119 = vunpack.c.l.b16 %v2091
      %v2120 = vunpack.c.l.b16 %v2095
      %v2121 = vpack.c.b16 %v2114, %v2113
      %v2122 = vpack.c.b16 %v2116, %v2115
      %v2123 = vpack.c.b16 %v2118, %v2117
      %v2124 = vpack.c.b16 %v2120, %v2119
      %v2145 = vunpack.c.l.b16 %v2097
      %v2146 = vunpack.c.l.b16 %v2098
      %v2147 = vunpack.c.l.b16 %v2099
      %v2148 = vunpack.c.l.b16 %v2100
      %v2149 = vunpack.c.l.b16 %v2101
      %v2150 = vunpack.c.l.b16 %v2102
      %v2151 = vunpack.c.l.b16 %v2103
      %v2152 = vunpack.c.l.b16 %v2104
      %v2153 = vunpack.c.l.b16 %v2105
      %v2154 = vunpack.c.l.b16 %v2106
      %v2155 = vunpack.c.l.b16 %v2107
      %v2156 = vunpack.c.l.b16 %v2108
      %v2157 = vunpack.c.l.b16 %v2109
      %v2158 = vunpack.c.l.b16 %v2110
      %v2159 = vunpack.c.l.b16 %v2111
      %v2160 = vunpack.c.l.b16 %v2112
      %v2161 = vpack.c.b16 %v2146, %v2145
      %v2162 = vpack.c.b16 %v2148, %v2147
      %v2163 = vpack.c.b16 %v2150, %v2149
      %v2164 = vpack.c.b16 %v2152, %v2151
      %v2165 = vpack.c.b16 %v2154, %v2153
      %v2166 = vpack.c.b16 %v2156, %v2155
      %v2167 = vpack.c.b16 %v2158, %v2157
      %v2168 = vpack.c.b16 %v2160, %v2159
      %2177 = vmatprep.subr.bf16.mxu0 0
      %2178 = vmatpush1.bf16.msra.mxu0 %v2161
      %2179 = vmatprep.subr.bf16.mxu0 0
      %2180 = vmatpush1.bf16.msra.mxu0 %v2162
      %2181 = vmatprep.subr.bf16.mxu0 0
      %2182 = vmatpush1.bf16.msra.mxu0 %v2163
      %2183 = vmatprep.subr.bf16.mxu0 0
      %2184 = vmatpush1.bf16.msra.mxu0 %v2164
      %2185 = vmatprep.subr.bf16.mxu0 0
      %2186 = vmatpush1.bf16.msra.mxu0 %v2165
      %2187 = vmatprep.subr.bf16.mxu0 0
      %2188 = vmatpush1.bf16.msra.mxu0 %v2166
      %2189 = vmatprep.subr.bf16.mxu0 0
      %2190 = vmatpush1.bf16.msra.mxu0 %v2167
      %2191 = vmatprep.subr.bf16.mxu0 0
      %2192 = vmatpush1.bf16.msra.mxu0 %v2168
      %2193 = vmatprep.subr.bf16.mxu0 0
      %2194 = vmatpush1.bf16.msra.mxu0 0
      %2195 = vmatprep.subr.bf16.mxu0 0
      %2196 = vmatpush1.bf16.msra.mxu0 0
      %2197 = vmatprep.subr.bf16.mxu0 0
      %2198 = vmatpush1.bf16.msra.mxu0 0
      %2199 = vmatprep.subr.bf16.mxu0 0
      %2200 = vmatpush1.bf16.msra.mxu0 0
      %2201 = vmatprep.subr.bf16.mxu0 0
      %2202 = vmatpush1.bf16.msra.mxu0 0
      %2203 = vmatprep.subr.bf16.mxu0 0
      %2204 = vmatpush1.bf16.msra.mxu0 0
      %2205 = vmatprep.subr.bf16.mxu0 0
      %2206 = vmatpush1.bf16.msra.mxu0 0
      %2207 = vmatprep.subr.bf16.mxu0 0
      %2208 = vmatpush1.bf16.msra.mxu0 0
      %2209 = vmatprep.mubr.bf16.mxu0 0
      %2210 = vmatmul.mubr.bf16.gmra.mrb[0].mxu0 %v2121
      %v2211 = vpop.f32.mrb[0].mxu0
      %v2212 = vadd.f32 0.0, %v2211
      %v2213 = vpop.f32.mrb[0].mxu0
      %v2214 = vpop.f32.mrb[0].mxu0
      %v2215 = vadd.f32 0.0, %v2214
      %v2216 = vpop.f32.mrb[0].mxu0
      %2217 = vmatprep.mubr.bf16.mxu0 0
      %2218 = vmatmul.mubr.bf16.gmra.mrb[0].mxu0 %v2122
      %v2219 = vpop.f32.mrb[0].mxu0
      %v2220 = vadd.f32 0.0, %v2219
      %v2221 = vpop.f32.mrb[0].mxu0
      %v2222 = vpop.f32.mrb[0].mxu0
      %v2223 = vadd.f32 0.0, %v2222
      %v2224 = vpop.f32.mrb[0].mxu0
      %2225 = vmatprep.mubr.bf16.mxu0 0
      %2226 = vmatmul.mubr.bf16.gmra.mrb[0].mxu0 %v2123
      %v2227 = vpop.f32.mrb[0].mxu0
      %v2228 = vadd.f32 0.0, %v2227
      %v2229 = vpop.f32.mrb[0].mxu0
      %v2230 = vpop.f32.mrb[0].mxu0
      %v2231 = vadd.f32 0.0, %v2230
      %v2232 = vpop.f32.mrb[0].mxu0
      %2233 = vmatprep.mubr.bf16.mxu0 0
      %2234 = vmatmul.mubr.bf16.gmra.mrb[0].mxu0 %v2124
      %v2235 = vpop.f32.mrb[0].mxu0
      %v2236 = vadd.f32 0.0, %v2235
      %v2237 = vpop.f32.mrb[0].mxu0
      %v2238 = vpop.f32.mrb[0].mxu0
      %v2239 = vadd.f32 0.0, %v2238
      %v2240 = vpop.f32.mrb[0].mxu0
      %2241 = vdwg.mxu0
      %v2242 = vadd.f32 %v2007, %v2212
      %v2243 = vadd.f32 %v2010, %v2215
      %v2244 = vadd.f32 %v2015, %v2220
      %v2245 = vadd.f32 %v2018, %v2223
      %v2246 = vadd.f32 %v2023, %v2228
      %v2247 = vadd.f32 %v2026, %v2231
      %v2248 = vadd.f32 %v2031, %v2236
      %v2249 = vadd.f32 %v2034, %v2239
      %v2250 = vld [vmem:[%s1552] sm:$0xf]
      %v2251 = vld [vmem:[%s1552 + $0x8] sm:$0xf]
      %v2252 = vld [vmem:[%s1552 + $0x10] sm:$0xf]
      %v2253 = vld [vmem:[%s1552 + $0x18] sm:$0xf]
      %v2254 = vld [vmem:[%s1552 + $0x20] sm:$0xf]
      %v2255 = vld [vmem:[%s1552 + $0x28] sm:$0xf]
      %v2256 = vld [vmem:[%s1552 + $0x30] sm:$0xf]
      %v2257 = vld [vmem:[%s1552 + $0x38] sm:$0xf]
      %s2258 = scalar_lea.vmem %s4, 192
      %v2259 = vld [vmem:[%s2258] sm:$0xf]
      %v2260 = vld [vmem:[%s2258 + $0x4] sm:$0xf]
      %v2261 = vld [vmem:[%s2258 + $0x8] sm:$0xf]
      %v2262 = vld [vmem:[%s2258 + $0xc] sm:$0xf]
      %v2263 = vld [vmem:[%s2258 + $0x10] sm:$0xf]
      %v2264 = vld [vmem:[%s2258 + $0x14] sm:$0xf]
      %v2265 = vld [vmem:[%s2258 + $0x18] sm:$0xf]
      %v2266 = vld [vmem:[%s2258 + $0x1c] sm:$0xf]
      %v2267 = vld [vmem:[%s2258 + $0x20] sm:$0xf]
      %v2268 = vld [vmem:[%s2258 + $0x24] sm:$0xf]
      %v2269 = vld [vmem:[%s2258 + $0x28] sm:$0xf]
      %v2270 = vld [vmem:[%s2258 + $0x2c] sm:$0xf]
      %v2271 = vld [vmem:[%s2258 + $0x30] sm:$0xf]
      %v2272 = vld [vmem:[%s2258 + $0x34] sm:$0xf]
      %v2273 = vld [vmem:[%s2258 + $0x38] sm:$0xf]
      %v2274 = vld [vmem:[%s2258 + $0x3c] sm:$0xf]
      %v2283 = vunpack.c.l.b16 %v2250
      %v2284 = vunpack.c.l.b16 %v2251
      %v2285 = vunpack.c.l.b16 %v2252
      %v2286 = vunpack.c.l.b16 %v2253
      %v2287 = vunpack.c.l.b16 %v2254
      %v2288 = vunpack.c.l.b16 %v2255
      %v2289 = vunpack.c.l.b16 %v2256
      %v2290 = vunpack.c.l.b16 %v2257
      %v2291 = vpack.c.b16 %v2284, %v2283
      %v2292 = vpack.c.b16 %v2286, %v2285
      %v2293 = vpack.c.b16 %v2288, %v2287
      %v2294 = vpack.c.b16 %v2290, %v2289
      %v2315 = vunpack.c.l.b16 %v2259
      %v2316 = vunpack.c.l.b16 %v2260
      %v2317 = vunpack.c.l.b16 %v2261
      %v2318 = vunpack.c.l.b16 %v2262
      %v2319 = vunpack.c.l.b16 %v2263
      %v2320 = vunpack.c.l.b16 %v2264
      %v2321 = vunpack.c.l.b16 %v2265
      %v2322 = vunpack.c.l.b16 %v2266
      %v2323 = vunpack.c.l.b16 %v2267
      %v2324 = vunpack.c.l.b16 %v2268
      %v2325 = vunpack.c.l.b16 %v2269
      %v2326 = vunpack.c.l.b16 %v2270
      %v2327 = vunpack.c.l.b16 %v2271
      %v2328 = vunpack.c.l.b16 %v2272
      %v2329 = vunpack.c.l.b16 %v2273
      %v2330 = vunpack.c.l.b16 %v2274
      %v2331 = vpack.c.b16 %v2316, %v2315
      %v2332 = vpack.c.b16 %v2318, %v2317
      %v2333 = vpack.c.b16 %v2320, %v2319
      %v2334 = vpack.c.b16 %v2322, %v2321
      %v2335 = vpack.c.b16 %v2324, %v2323
      %v2336 = vpack.c.b16 %v2326, %v2325
      %v2337 = vpack.c.b16 %v2328, %v2327
      %v2338 = vpack.c.b16 %v2330, %v2329
      %2347 = vmatprep.subr.bf16.mxu0 0
      %2348 = vmatpush1.bf16.msra.mxu0 %v2331
      %2349 = vmatprep.subr.bf16.mxu0 0
      %2350 = vmatpush1.bf16.msra.mxu0 %v2332
      %2351 = vmatprep.subr.bf16.mxu0 0
      %2352 = vmatpush1.bf16.msra.mxu0 %v2333
      %2353 = vmatprep.subr.bf16.mxu0 0
      %2354 = vmatpush1.bf16.msra.mxu0 %v2334
      %2355 = vmatprep.subr.bf16.mxu0 0
      %2356 = vmatpush1.bf16.msra.mxu0 %v2335
      %2357 = vmatprep.subr.bf16.mxu0 0
      %2358 = vmatpush1.bf16.msra.mxu0 %v2336
      %2359 = vmatprep.subr.bf16.mxu0 0
      %2360 = vmatpush1.bf16.msra.mxu0 %v2337
      %2361 = vmatprep.subr.bf16.mxu0 0
      %2362 = vmatpush1.bf16.msra.mxu0 %v2338
      %2363 = vmatprep.subr.bf16.mxu0 0
      %2364 = vmatpush1.bf16.msra.mxu0 0
      %2365 = vmatprep.subr.bf16.mxu0 0
      %2366 = vmatpush1.bf16.msra.mxu0 0
      %2367 = vmatprep.subr.bf16.mxu0 0
      %2368 = vmatpush1.bf16.msra.mxu0 0
      %2369 = vmatprep.subr.bf16.mxu0 0
      %2370 = vmatpush1.bf16.msra.mxu0 0
      %2371 = vmatprep.subr.bf16.mxu0 0
      %2372 = vmatpush1.bf16.msra.mxu0 0
      %2373 = vmatprep.subr.bf16.mxu0 0
      %2374 = vmatpush1.bf16.msra.mxu0 0
      %2375 = vmatprep.subr.bf16.mxu0 0
      %2376 = vmatpush1.bf16.msra.mxu0 0
      %2377 = vmatprep.subr.bf16.mxu0 0
      %2378 = vmatpush1.bf16.msra.mxu0 0
      %2379 = vmatprep.mubr.bf16.mxu0 0
      %2380 = vmatmul.mubr.bf16.gmra.mrb[0].mxu0 %v2291
      %v2381 = vpop.f32.mrb[0].mxu0
      %v2382 = vadd.f32 0.0, %v2381
      %v2383 = vpop.f32.mrb[0].mxu0
      %v2384 = vpop.f32.mrb[0].mxu0
      %v2385 = vadd.f32 0.0, %v2384
      %v2386 = vpop.f32.mrb[0].mxu0
      %2387 = vmatprep.mubr.bf16.mxu0 0
      %2388 = vmatmul.mubr.bf16.gmra.mrb[0].mxu0 %v2292
      %v2389 = vpop.f32.mrb[0].mxu0
      %v2390 = vadd.f32 0.0, %v2389
      %v2391 = vpop.f32.mrb[0].mxu0
      %v2392 = vpop.f32.mrb[0].mxu0
      %v2393 = vadd.f32 0.0, %v2392
      %v2394 = vpop.f32.mrb[0].mxu0
      %2395 = vmatprep.mubr.bf16.mxu0 0
      %2396 = vmatmul.mubr.bf16.gmra.mrb[0].mxu0 %v2293
      %v2397 = vpop.f32.mrb[0].mxu0
      %v2398 = vadd.f32 0.0, %v2397
      %v2399 = vpop.f32.mrb[0].mxu0
      %v2400 = vpop.f32.mrb[0].mxu0
      %v2401 = vadd.f32 0.0, %v2400
      %v2402 = vpop.f32.mrb[0].mxu0
      %2403 = vmatprep.mubr.bf16.mxu0 0
      %2404 = vmatmul.mubr.bf16.gmra.mrb[0].mxu0 %v2294
      %v2405 = vpop.f32.mrb[0].mxu0
      %v2406 = vadd.f32 0.0, %v2405
      %v2407 = vpop.f32.mrb[0].mxu0
      %v2408 = vpop.f32.mrb[0].mxu0
      %v2409 = vadd.f32 0.0, %v2408
      %v2410 = vpop.f32.mrb[0].mxu0
      %2411 = vdwg.mxu0
      %v2412 = vadd.f32 %v2242, %v2382
      %v2413 = vadd.f32 %v2243, %v2385
      %v2414 = vadd.f32 %v2244, %v2390
      %v2415 = vadd.f32 %v2245, %v2393
      %v2416 = vadd.f32 %v2246, %v2398
      %v2417 = vadd.f32 %v2247, %v2401
      %v2418 = vadd.f32 %v2248, %v2406
      %v2419 = vadd.f32 %v2249, %v2409
      %v2420 = vld [vmem:[%s1552] sm:$0xf]
      %v2421 = vld [vmem:[%s1552 + $0x4] sm:$0x1]
      %v2422 = vld [vmem:[%s1552 + $0x8] sm:$0xf]
      %v2423 = vld [vmem:[%s1552 + $0xc] sm:$0x1]
      %v2424 = vld [vmem:[%s1552 + $0x10] sm:$0xf]
      %v2425 = vld [vmem:[%s1552 + $0x14] sm:$0x1]
      %v2426 = vld [vmem:[%s1552 + $0x18] sm:$0xf]
      %v2427 = vld [vmem:[%s1552 + $0x1c] sm:$0x1]
      %v2428 = vld [vmem:[%s1552 + $0x20] sm:$0xf]
      %v2429 = vld [vmem:[%s1552 + $0x24] sm:$0x1]
      %v2430 = vld [vmem:[%s1552 + $0x28] sm:$0xf]
      %v2431 = vld [vmem:[%s1552 + $0x2c] sm:$0x1]
      %v2432 = vld [vmem:[%s1552 + $0x30] sm:$0xf]
      %v2433 = vld [vmem:[%s1552 + $0x34] sm:$0x1]
      %v2434 = vld [vmem:[%s1552 + $0x38] sm:$0xf]
      %v2435 = vld [vmem:[%s1552 + $0x3c] sm:$0x1]
      %v2437 = vshrl.u32 %v2420, 16
      %v2439 = vrot.slane %v2437, 4
      %v2440 = vshll.u32 %v2420, 16
      %v2442 = vrot.slane %v2440, 5
      %v2443 = vor.u32 %v2439, %v2442
      %v2444 = vrot.slane %v2443, 4
      %v2446 = vshll.u32 %v2421, 16
      %v2448 = vrot.slane %v2446, 5
      %v2449 = vsel %vm1641, %v2444, %v2448
      %v2451 = vshrl.u32 %v2422, 16
      %v2453 = vrot.slane %v2451, 4
      %v2454 = vshll.u32 %v2422, 16
      %v2456 = vrot.slane %v2454, 5
      %v2457 = vor.u32 %v2453, %v2456
      %v2458 = vrot.slane %v2457, 4
      %v2460 = vshll.u32 %v2423, 16
      %v2462 = vrot.slane %v2460, 5
      %v2463 = vsel %vm1641, %v2458, %v2462
      %v2465 = vshrl.u32 %v2424, 16
      %v2467 = vrot.slane %v2465, 4
      %v2468 = vshll.u32 %v2424, 16
      %v2470 = vrot.slane %v2468, 5
      %v2471 = vor.u32 %v2467, %v2470
      %v2472 = vrot.slane %v2471, 4
      %v2474 = vshll.u32 %v2425, 16
      %v2476 = vrot.slane %v2474, 5
      %v2477 = vsel %vm1641, %v2472, %v2476
      %v2479 = vshrl.u32 %v2426, 16
      %v2481 = vrot.slane %v2479, 4
      %v2482 = vshll.u32 %v2426, 16
      %v2484 = vrot.slane %v2482, 5
      %v2485 = vor.u32 %v2481, %v2484
      %v2486 = vrot.slane %v2485, 4
      %v2488 = vshll.u32 %v2427, 16
      %v2490 = vrot.slane %v2488, 5
      %v2491 = vsel %vm1641, %v2486, %v2490
      %v2493 = vshrl.u32 %v2428, 16
      %v2495 = vrot.slane %v2493, 4
      %v2496 = vshll.u32 %v2428, 16
      %v2498 = vrot.slane %v2496, 5
      %v2499 = vor.u32 %v2495, %v2498
      %v2500 = vrot.slane %v2499, 4
      %v2502 = vshll.u32 %v2429, 16
      %v2504 = vrot.slane %v2502, 5
      %v2505 = vsel %vm1641, %v2500, %v2504
      %v2507 = vshrl.u32 %v2430, 16
      %v2509 = vrot.slane %v2507, 4
      %v2510 = vshll.u32 %v2430, 16
      %v2512 = vrot.slane %v2510, 5
      %v2513 = vor.u32 %v2509, %v2512
      %v2514 = vrot.slane %v2513, 4
      %v2516 = vshll.u32 %v2431, 16
      %v2518 = vrot.slane %v2516, 5
      %v2519 = vsel %vm1641, %v2514, %v2518
      %v2521 = vshrl.u32 %v2432, 16
      %v2523 = vrot.slane %v2521, 4
      %v2524 = vshll.u32 %v2432, 16
      %v2526 = vrot.slane %v2524, 5
      %v2527 = vor.u32 %v2523, %v2526
      %v2528 = vrot.slane %v2527, 4
      %v2530 = vshll.u32 %v2433, 16
      %v2532 = vrot.slane %v2530, 5
      %v2533 = vsel %vm1641, %v2528, %v2532
      %v2535 = vshrl.u32 %v2434, 16
      %v2537 = vrot.slane %v2535, 4
      %v2538 = vshll.u32 %v2434, 16
      %v2540 = vrot.slane %v2538, 5
      %v2541 = vor.u32 %v2537, %v2540
      %v2542 = vrot.slane %v2541, 4
      %v2544 = vshll.u32 %v2435, 16
      %v2546 = vrot.slane %v2544, 5
      %v2547 = vsel %vm1641, %v2542, %v2546
      %s2548 = scalar_lea.vmem %s4, 256
      %v2549 = vld [vmem:[%s2548] sm:$0xf]
      %v2550 = vld [vmem:[%s2548 + $0x4] sm:$0xf]
      %v2551 = vld [vmem:[%s2548 + $0x8] sm:$0xf]
      %v2552 = vld [vmem:[%s2548 + $0xc] sm:$0xf]
      %v2553 = vld [vmem:[%s2548 + $0x10] sm:$0xf]
      %v2554 = vld [vmem:[%s2548 + $0x14] sm:$0xf]
      %v2555 = vld [vmem:[%s2548 + $0x18] sm:$0xf]
      %v2556 = vld [vmem:[%s2548 + $0x1c] sm:$0xf]
      %v2557 = vld [vmem:[%s2548 + $0x20] sm:$0xf]
      %v2558 = vld [vmem:[%s2548 + $0x24] sm:$0xf]
      %v2559 = vld [vmem:[%s2548 + $0x28] sm:$0xf]
      %v2560 = vld [vmem:[%s2548 + $0x2c] sm:$0xf]
      %v2561 = vld [vmem:[%s2548 + $0x30] sm:$0xf]
      %v2562 = vld [vmem:[%s2548 + $0x34] sm:$0xf]
      %v2563 = vld [vmem:[%s2548 + $0x38] sm:$0xf]
      %v2564 = vld [vmem:[%s2548 + $0x3c] sm:$0xf]
      %v2565 = vunpack.c.l.b16 %v2449
      %v2566 = vunpack.c.l.b16 %v2463
      %v2567 = vunpack.c.l.b16 %v2477
      %v2568 = vunpack.c.l.b16 %v2491
      %v2569 = vunpack.c.l.b16 %v2505
      %v2570 = vunpack.c.l.b16 %v2519
      %v2571 = vunpack.c.l.b16 %v2533
      %v2572 = vunpack.c.l.b16 %v2547
      %v2573 = vpack.c.b16 %v2566, %v2565
      %v2574 = vpack.c.b16 %v2568, %v2567
      %v2575 = vpack.c.b16 %v2570, %v2569
      %v2576 = vpack.c.b16 %v2572, %v2571
      %v2597 = vunpack.c.l.b16 %v2549
      %v2598 = vunpack.c.l.b16 %v2550
      %v2599 = vunpack.c.l.b16 %v2551
      %v2600 = vunpack.c.l.b16 %v2552
      %v2601 = vunpack.c.l.b16 %v2553
      %v2602 = vunpack.c.l.b16 %v2554
      %v2603 = vunpack.c.l.b16 %v2555
      %v2604 = vunpack.c.l.b16 %v2556
      %v2605 = vunpack.c.l.b16 %v2557
      %v2606 = vunpack.c.l.b16 %v2558
      %v2607 = vunpack.c.l.b16 %v2559
      %v2608 = vunpack.c.l.b16 %v2560
      %v2609 = vunpack.c.l.b16 %v2561
      %v2610 = vunpack.c.l.b16 %v2562
      %v2611 = vunpack.c.l.b16 %v2563
      %v2612 = vunpack.c.l.b16 %v2564
      %v2613 = vpack.c.b16 %v2598, %v2597
      %v2614 = vpack.c.b16 %v2600, %v2599
      %v2615 = vpack.c.b16 %v2602, %v2601
      %v2616 = vpack.c.b16 %v2604, %v2603
      %v2617 = vpack.c.b16 %v2606, %v2605
      %v2618 = vpack.c.b16 %v2608, %v2607
      %v2619 = vpack.c.b16 %v2610, %v2609
      %v2620 = vpack.c.b16 %v2612, %v2611
      %2629 = vmatprep.subr.bf16.mxu0 0
      %2630 = vmatpush1.bf16.msra.mxu0 %v2613
      %2631 = vmatprep.subr.bf16.mxu0 0
      %2632 = vmatpush1.bf16.msra.mxu0 %v2614
      %2633 = vmatprep.subr.bf16.mxu0 0
      %2634 = vmatpush1.bf16.msra.mxu0 %v2615
      %2635 = vmatprep.subr.bf16.mxu0 0
      %2636 = vmatpush1.bf16.msra.mxu0 %v2616
      %2637 = vmatprep.subr.bf16.mxu0 0
      %2638 = vmatpush1.bf16.msra.mxu0 %v2617
      %2639 = vmatprep.subr.bf16.mxu0 0
      %2640 = vmatpush1.bf16.msra.mxu0 %v2618
      %2641 = vmatprep.subr.bf16.mxu0 0
      %2642 = vmatpush1.bf16.msra.mxu0 %v2619
      %2643 = vmatprep.subr.bf16.mxu0 0
      %2644 = vmatpush1.bf16.msra.mxu0 %v2620
      %2645 = vmatprep.subr.bf16.mxu0 0
      %2646 = vmatpush1.bf16.msra.mxu0 0
      %2647 = vmatprep.subr.bf16.mxu0 0
      %2648 = vmatpush1.bf16.msra.mxu0 0
      %2649 = vmatprep.subr.bf16.mxu0 0
      %2650 = vmatpush1.bf16.msra.mxu0 0
      %2651 = vmatprep.subr.bf16.mxu0 0
      %2652 = vmatpush1.bf16.msra.mxu0 0
      %2653 = vmatprep.subr.bf16.mxu0 0
      %2654 = vmatpush1.bf16.msra.mxu0 0
      %2655 = vmatprep.subr.bf16.mxu0 0
      %2656 = vmatpush1.bf16.msra.mxu0 0
      %2657 = vmatprep.subr.bf16.mxu0 0
      %2658 = vmatpush1.bf16.msra.mxu0 0
      %2659 = vmatprep.subr.bf16.mxu0 0
      %2660 = vmatpush1.bf16.msra.mxu0 0
      %2661 = vmatprep.mubr.bf16.mxu0 0
      %2662 = vmatmul.mubr.bf16.gmra.mrb[0].mxu0 %v2573
      %v2663 = vpop.f32.mrb[0].mxu0
      %v2664 = vadd.f32 0.0, %v2663
      %v2665 = vpop.f32.mrb[0].mxu0
      %v2666 = vpop.f32.mrb[0].mxu0
      %v2667 = vadd.f32 0.0, %v2666
      %v2668 = vpop.f32.mrb[0].mxu0
      %2669 = vmatprep.mubr.bf16.mxu0 0
      %2670 = vmatmul.mubr.bf16.gmra.mrb[0].mxu0 %v2574
      %v2671 = vpop.f32.mrb[0].mxu0
      %v2672 = vadd.f32 0.0, %v2671
      %v2673 = vpop.f32.mrb[0].mxu0
      %v2674 = vpop.f32.mrb[0].mxu0
      %v2675 = vadd.f32 0.0, %v2674
      %v2676 = vpop.f32.mrb[0].mxu0
      %2677 = vmatprep.mubr.bf16.mxu0 0
      %2678 = vmatmul.mubr.bf16.gmra.mrb[0].mxu0 %v2575
      %v2679 = vpop.f32.mrb[0].mxu0
      %v2680 = vadd.f32 0.0, %v2679
      %v2681 = vpop.f32.mrb[0].mxu0
      %v2682 = vpop.f32.mrb[0].mxu0
      %v2683 = vadd.f32 0.0, %v2682
      %v2684 = vpop.f32.mrb[0].mxu0
      %2685 = vmatprep.mubr.bf16.mxu0 0
      %2686 = vmatmul.mubr.bf16.gmra.mrb[0].mxu0 %v2576
      %v2687 = vpop.f32.mrb[0].mxu0
      %v2688 = vadd.f32 0.0, %v2687
      %v2689 = vpop.f32.mrb[0].mxu0
      %v2690 = vpop.f32.mrb[0].mxu0
      %v2691 = vadd.f32 0.0, %v2690
      %v2692 = vpop.f32.mrb[0].mxu0
      %2693 = vdwg.mxu0
      %v2694 = vadd.f32 %v2412, %v2664
      %v2695 = vadd.f32 %v2413, %v2667
      %v2696 = vadd.f32 %v2414, %v2672
      %v2697 = vadd.f32 %v2415, %v2675
      %v2698 = vadd.f32 %v2416, %v2680
      %v2699 = vadd.f32 %v2417, %v2683
      %v2700 = vadd.f32 %v2418, %v2688
      %v2701 = vadd.f32 %v2419, %v2691
      %v2702 = vld [vmem:[%s1552] sm:$0xe]
      %v2703 = vld [vmem:[%s1552 + $0x8] sm:$0xe]
      %v2704 = vld [vmem:[%s1552 + $0x10] sm:$0xe]
      %v2705 = vld [vmem:[%s1552 + $0x18] sm:$0xe]
      %v2706 = vld [vmem:[%s1552 + $0x20] sm:$0xe]
      %v2707 = vld [vmem:[%s1552 + $0x28] sm:$0xe]
      %v2708 = vld [vmem:[%s1552 + $0x30] sm:$0xe]
      %v2709 = vld [vmem:[%s1552 + $0x38] sm:$0xe]
      %v2726 = vrot.slane %v2702, 5
      %v2727 = vrot.slane %v2726, 4
      %v2728 = vrot.slane %v2421, 5
      %v2729 = vsel %vm2063, %v2727, %v2728
      %v2730 = vrot.slane %v2703, 5
      %v2731 = vrot.slane %v2730, 4
      %v2732 = vrot.slane %v2423, 5
      %v2733 = vsel %vm2063, %v2731, %v2732
      %v2734 = vrot.slane %v2704, 5
      %v2735 = vrot.slane %v2734, 4
      %v2736 = vrot.slane %v2425, 5
      %v2737 = vsel %vm2063, %v2735, %v2736
      %v2738 = vrot.slane %v2705, 5
      %v2739 = vrot.slane %v2738, 4
      %v2740 = vrot.slane %v2427, 5
      %v2741 = vsel %vm2063, %v2739, %v2740
      %v2742 = vrot.slane %v2706, 5
      %v2743 = vrot.slane %v2742, 4
      %v2744 = vrot.slane %v2429, 5
      %v2745 = vsel %vm2063, %v2743, %v2744
      %v2746 = vrot.slane %v2707, 5
      %v2747 = vrot.slane %v2746, 4
      %v2748 = vrot.slane %v2431, 5
      %v2749 = vsel %vm2063, %v2747, %v2748
      %v2750 = vrot.slane %v2708, 5
      %v2751 = vrot.slane %v2750, 4
      %v2752 = vrot.slane %v2433, 5
      %v2753 = vsel %vm2063, %v2751, %v2752
      %v2754 = vrot.slane %v2709, 5
      %v2755 = vrot.slane %v2754, 4
      %v2756 = vrot.slane %v2435, 5
      %v2757 = vsel %vm2063, %v2755, %v2756
      %s2758 = scalar_lea.vmem %s4, 320
      %v2759 = vld [vmem:[%s2758] sm:$0xf]
      %v2760 = vld [vmem:[%s2758 + $0x4] sm:$0xf]
      %v2761 = vld [vmem:[%s2758 + $0x8] sm:$0xf]
      %v2762 = vld [vmem:[%s2758 + $0xc] sm:$0xf]
      %v2763 = vld [vmem:[%s2758 + $0x10] sm:$0xf]
      %v2764 = vld [vmem:[%s2758 + $0x14] sm:$0xf]
      %v2765 = vld [vmem:[%s2758 + $0x18] sm:$0xf]
      %v2766 = vld [vmem:[%s2758 + $0x1c] sm:$0xf]
      %v2767 = vld [vmem:[%s2758 + $0x20] sm:$0xf]
      %v2768 = vld [vmem:[%s2758 + $0x24] sm:$0xf]
      %v2769 = vld [vmem:[%s2758 + $0x28] sm:$0xf]
      %v2770 = vld [vmem:[%s2758 + $0x2c] sm:$0xf]
      %v2771 = vld [vmem:[%s2758 + $0x30] sm:$0xf]
      %v2772 = vld [vmem:[%s2758 + $0x34] sm:$0xf]
      %v2773 = vld [vmem:[%s2758 + $0x38] sm:$0xf]
      %v2774 = vld [vmem:[%s2758 + $0x3c] sm:$0xf]
      %v2775 = vunpack.c.l.b16 %v2729
      %v2776 = vunpack.c.l.b16 %v2733
      %v2777 = vunpack.c.l.b16 %v2737
      %v2778 = vunpack.c.l.b16 %v2741
      %v2779 = vunpack.c.l.b16 %v2745
      %v2780 = vunpack.c.l.b16 %v2749
      %v2781 = vunpack.c.l.b16 %v2753
      %v2782 = vunpack.c.l.b16 %v2757
      %v2783 = vpack.c.b16 %v2776, %v2775
      %v2784 = vpack.c.b16 %v2778, %v2777
      %v2785 = vpack.c.b16 %v2780, %v2779
      %v2786 = vpack.c.b16 %v2782, %v2781
      %v2807 = vunpack.c.l.b16 %v2759
      %v2808 = vunpack.c.l.b16 %v2760
      %v2809 = vunpack.c.l.b16 %v2761
      %v2810 = vunpack.c.l.b16 %v2762
      %v2811 = vunpack.c.l.b16 %v2763
      %v2812 = vunpack.c.l.b16 %v2764
      %v2813 = vunpack.c.l.b16 %v2765
      %v2814 = vunpack.c.l.b16 %v2766
      %v2815 = vunpack.c.l.b16 %v2767
      %v2816 = vunpack.c.l.b16 %v2768
      %v2817 = vunpack.c.l.b16 %v2769
      %v2818 = vunpack.c.l.b16 %v2770
      %v2819 = vunpack.c.l.b16 %v2771
      %v2820 = vunpack.c.l.b16 %v2772
      %v2821 = vunpack.c.l.b16 %v2773
      %v2822 = vunpack.c.l.b16 %v2774
      %v2823 = vpack.c.b16 %v2808, %v2807
      %v2824 = vpack.c.b16 %v2810, %v2809
      %v2825 = vpack.c.b16 %v2812, %v2811
      %v2826 = vpack.c.b16 %v2814, %v2813
      %v2827 = vpack.c.b16 %v2816, %v2815
      %v2828 = vpack.c.b16 %v2818, %v2817
      %v2829 = vpack.c.b16 %v2820, %v2819
      %v2830 = vpack.c.b16 %v2822, %v2821
      %2839 = vmatprep.subr.bf16.mxu0 0
      %2840 = vmatpush1.bf16.msra.mxu0 %v2823
      %2841 = vmatprep.subr.bf16.mxu0 0
      %2842 = vmatpush1.bf16.msra.mxu0 %v2824
      %2843 = vmatprep.subr.bf16.mxu0 0
      %2844 = vmatpush1.bf16.msra.mxu0 %v2825
      %2845 = vmatprep.subr.bf16.mxu0 0
      %2846 = vmatpush1.bf16.msra.mxu0 %v2826
      %2847 = vmatprep.subr.bf16.mxu0 0
      %2848 = vmatpush1.bf16.msra.mxu0 %v2827
      %2849 = vmatprep.subr.bf16.mxu0 0
      %2850 = vmatpush1.bf16.msra.mxu0 %v2828
      %2851 = vmatprep.subr.bf16.mxu0 0
      %2852 = vmatpush1.bf16.msra.mxu0 %v2829
      %2853 = vmatprep.subr.bf16.mxu0 0
      %2854 = vmatpush1.bf16.msra.mxu0 %v2830
      %2855 = vmatprep.subr.bf16.mxu0 0
      %2856 = vmatpush1.bf16.msra.mxu0 0
      %2857 = vmatprep.subr.bf16.mxu0 0
      %2858 = vmatpush1.bf16.msra.mxu0 0
      %2859 = vmatprep.subr.bf16.mxu0 0
      %2860 = vmatpush1.bf16.msra.mxu0 0
      %2861 = vmatprep.subr.bf16.mxu0 0
      %2862 = vmatpush1.bf16.msra.mxu0 0
      %2863 = vmatprep.subr.bf16.mxu0 0
      %2864 = vmatpush1.bf16.msra.mxu0 0
      %2865 = vmatprep.subr.bf16.mxu0 0
      %2866 = vmatpush1.bf16.msra.mxu0 0
      %2867 = vmatprep.subr.bf16.mxu0 0
      %2868 = vmatpush1.bf16.msra.mxu0 0
      %2869 = vmatprep.subr.bf16.mxu0 0
      %2870 = vmatpush1.bf16.msra.mxu0 0
      %2871 = vmatprep.mubr.bf16.mxu0 0
      %2872 = vmatmul.mubr.bf16.gmra.mrb[0].mxu0 %v2783
      %v2873 = vpop.f32.mrb[0].mxu0
      %v2874 = vadd.f32 0.0, %v2873
      %v2875 = vpop.f32.mrb[0].mxu0
      %v2876 = vpop.f32.mrb[0].mxu0
      %v2877 = vadd.f32 0.0, %v2876
      %v2878 = vpop.f32.mrb[0].mxu0
      %2879 = vmatprep.mubr.bf16.mxu0 0
      %2880 = vmatmul.mubr.bf16.gmra.mrb[0].mxu0 %v2784
      %v2881 = vpop.f32.mrb[0].mxu0
      %v2882 = vadd.f32 0.0, %v2881
      %v2883 = vpop.f32.mrb[0].mxu0
      %v2884 = vpop.f32.mrb[0].mxu0
      %v2885 = vadd.f32 0.0, %v2884
      %v2886 = vpop.f32.mrb[0].mxu0
      %2887 = vmatprep.mubr.bf16.mxu0 0
      %2888 = vmatmul.mubr.bf16.gmra.mrb[0].mxu0 %v2785
      %v2889 = vpop.f32.mrb[0].mxu0
      %v2890 = vadd.f32 0.0, %v2889
      %v2891 = vpop.f32.mrb[0].mxu0
      %v2892 = vpop.f32.mrb[0].mxu0
      %v2893 = vadd.f32 0.0, %v2892
      %v2894 = vpop.f32.mrb[0].mxu0
      %2895 = vmatprep.mubr.bf16.mxu0 0
      %2896 = vmatmul.mubr.bf16.gmra.mrb[0].mxu0 %v2786
      %v2897 = vpop.f32.mrb[0].mxu0
      %v2898 = vadd.f32 0.0, %v2897
      %v2899 = vpop.f32.mrb[0].mxu0
      %v2900 = vpop.f32.mrb[0].mxu0
      %v2901 = vadd.f32 0.0, %v2900
      %v2902 = vpop.f32.mrb[0].mxu0
      %2903 = vdwg.mxu0
      %v2904 = vadd.f32 %v2694, %v2874
      %v2905 = vadd.f32 %v2695, %v2877
      %v2906 = vadd.f32 %v2696, %v2882
      %v2907 = vadd.f32 %v2697, %v2885
      %v2908 = vadd.f32 %v2698, %v2890
      %v2909 = vadd.f32 %v2699, %v2893
      %v2910 = vadd.f32 %v2700, %v2898
      %v2911 = vadd.f32 %v2701, %v2901
      %s2912 = scalar_lea.vmem [#allocation2], 16
      %v2913 = vld [vmem:[%s2912] sm:$0xf]
      %v2914 = vld [vmem:[%s2912 + $0x8] sm:$0xf]
      %v2915 = vld [vmem:[%s2912 + $0x10] sm:$0xf]
      %v2916 = vld [vmem:[%s2912 + $0x18] sm:$0xf]
      %v2917 = vld [vmem:[%s2912 + $0x20] sm:$0xf]
      %v2918 = vld [vmem:[%s2912 + $0x28] sm:$0xf]
      %v2919 = vld [vmem:[%s2912 + $0x30] sm:$0xf]
      %v2920 = vld [vmem:[%s2912 + $0x38] sm:$0xf]
      %s2921 = scalar_lea.vmem %s4, 384
      %v2922 = vld [vmem:[%s2921] sm:$0xf]
      %v2923 = vld [vmem:[%s2921 + $0x4] sm:$0xf]
      %v2924 = vld [vmem:[%s2921 + $0x8] sm:$0xf]
      %v2925 = vld [vmem:[%s2921 + $0xc] sm:$0xf]
      %v2926 = vld [vmem:[%s2921 + $0x10] sm:$0xf]
      %v2927 = vld [vmem:[%s2921 + $0x14] sm:$0xf]
      %v2928 = vld [vmem:[%s2921 + $0x18] sm:$0xf]
      %v2929 = vld [vmem:[%s2921 + $0x1c] sm:$0xf]
      %v2930 = vld [vmem:[%s2921 + $0x20] sm:$0xf]
      %v2931 = vld [vmem:[%s2921 + $0x24] sm:$0xf]
      %v2932 = vld [vmem:[%s2921 + $0x28] sm:$0xf]
      %v2933 = vld [vmem:[%s2921 + $0x2c] sm:$0xf]
      %v2934 = vld [vmem:[%s2921 + $0x30] sm:$0xf]
      %v2935 = vld [vmem:[%s2921 + $0x34] sm:$0xf]
      %v2936 = vld [vmem:[%s2921 + $0x38] sm:$0xf]
      %v2937 = vld [vmem:[%s2921 + $0x3c] sm:$0xf]
      %v2946 = vunpack.c.l.b16 %v2913
      %v2947 = vunpack.c.l.b16 %v2914
      %v2948 = vunpack.c.l.b16 %v2915
      %v2949 = vunpack.c.l.b16 %v2916
      %v2950 = vunpack.c.l.b16 %v2917
      %v2951 = vunpack.c.l.b16 %v2918
      %v2952 = vunpack.c.l.b16 %v2919
      %v2953 = vunpack.c.l.b16 %v2920
      %v2954 = vpack.c.b16 %v2947, %v2946
      %v2955 = vpack.c.b16 %v2949, %v2948
      %v2956 = vpack.c.b16 %v2951, %v2950
      %v2957 = vpack.c.b16 %v2953, %v2952
      %v2978 = vunpack.c.l.b16 %v2922
      %v2979 = vunpack.c.l.b16 %v2923
      %v2980 = vunpack.c.l.b16 %v2924
      %v2981 = vunpack.c.l.b16 %v2925
      %v2982 = vunpack.c.l.b16 %v2926
      %v2983 = vunpack.c.l.b16 %v2927
      %v2984 = vunpack.c.l.b16 %v2928
      %v2985 = vunpack.c.l.b16 %v2929
      %v2986 = vunpack.c.l.b16 %v2930
      %v2987 = vunpack.c.l.b16 %v2931
      %v2988 = vunpack.c.l.b16 %v2932
      %v2989 = vunpack.c.l.b16 %v2933
      %v2990 = vunpack.c.l.b16 %v2934
      %v2991 = vunpack.c.l.b16 %v2935
      %v2992 = vunpack.c.l.b16 %v2936
      %v2993 = vunpack.c.l.b16 %v2937
      %v2994 = vpack.c.b16 %v2979, %v2978
      %v2995 = vpack.c.b16 %v2981, %v2980
      %v2996 = vpack.c.b16 %v2983, %v2982
      %v2997 = vpack.c.b16 %v2985, %v2984
      %v2998 = vpack.c.b16 %v2987, %v2986
      %v2999 = vpack.c.b16 %v2989, %v2988
      %v3000 = vpack.c.b16 %v2991, %v2990
      %v3001 = vpack.c.b16 %v2993, %v2992
      %3010 = vmatprep.subr.bf16.mxu0 0
      %3011 = vmatpush1.bf16.msra.mxu0 %v2994
      %3012 = vmatprep.subr.bf16.mxu0 0
      %3013 = vmatpush1.bf16.msra.mxu0 %v2995
      %3014 = vmatprep.subr.bf16.mxu0 0
      %3015 = vmatpush1.bf16.msra.mxu0 %v2996
      %3016 = vmatprep.subr.bf16.mxu0 0
      %3017 = vmatpush1.bf16.msra.mxu0 %v2997
      %3018 = vmatprep.subr.bf16.mxu0 0
      %3019 = vmatpush1.bf16.msra.mxu0 %v2998
      %3020 = vmatprep.subr.bf16.mxu0 0
      %3021 = vmatpush1.bf16.msra.mxu0 %v2999
      %3022 = vmatprep.subr.bf16.mxu0 0
      %3023 = vmatpush1.bf16.msra.mxu0 %v3000
      %3024 = vmatprep.subr.bf16.mxu0 0
      %3025 = vmatpush1.bf16.msra.mxu0 %v3001
      %3026 = vmatprep.subr.bf16.mxu0 0
      %3027 = vmatpush1.bf16.msra.mxu0 0
      %3028 = vmatprep.subr.bf16.mxu0 0
      %3029 = vmatpush1.bf16.msra.mxu0 0
      %3030 = vmatprep.subr.bf16.mxu0 0
      %3031 = vmatpush1.bf16.msra.mxu0 0
      %3032 = vmatprep.subr.bf16.mxu0 0
      %3033 = vmatpush1.bf16.msra.mxu0 0
      %3034 = vmatprep.subr.bf16.mxu0 0
      %3035 = vmatpush1.bf16.msra.mxu0 0
      %3036 = vmatprep.subr.bf16.mxu0 0
      %3037 = vmatpush1.bf16.msra.mxu0 0
      %3038 = vmatprep.subr.bf16.mxu0 0
      %3039 = vmatpush1.bf16.msra.mxu0 0
      %3040 = vmatprep.subr.bf16.mxu0 0
      %3041 = vmatpush1.bf16.msra.mxu0 0
      %3042 = vmatprep.mubr.bf16.mxu0 0
      %3043 = vmatmul.mubr.bf16.gmra.mrb[0].mxu0 %v2954
      %v3044 = vpop.f32.mrb[0].mxu0
      %v3045 = vadd.f32 0.0, %v3044
      %v3046 = vpop.f32.mrb[0].mxu0
      %v3047 = vpop.f32.mrb[0].mxu0
      %v3048 = vadd.f32 0.0, %v3047
      %v3049 = vpop.f32.mrb[0].mxu0
      %3050 = vmatprep.mubr.bf16.mxu0 0
      %3051 = vmatmul.mubr.bf16.gmra.mrb[0].mxu0 %v2955
      %v3052 = vpop.f32.mrb[0].mxu0
      %v3053 = vadd.f32 0.0, %v3052
      %v3054 = vpop.f32.mrb[0].mxu0
      %v3055 = vpop.f32.mrb[0].mxu0
      %v3056 = vadd.f32 0.0, %v3055
      %v3057 = vpop.f32.mrb[0].mxu0
      %3058 = vmatprep.mubr.bf16.mxu0 0
      %3059 = vmatmul.mubr.bf16.gmra.mrb[0].mxu0 %v2956
      %v3060 = vpop.f32.mrb[0].mxu0
      %v3061 = vadd.f32 0.0, %v3060
      %v3062 = vpop.f32.mrb[0].mxu0
      %v3063 = vpop.f32.mrb[0].mxu0
      %v3064 = vadd.f32 0.0, %v3063
      %v3065 = vpop.f32.mrb[0].mxu0
      %3066 = vmatprep.mubr.bf16.mxu0 0
      %3067 = vmatmul.mubr.bf16.gmra.mrb[0].mxu0 %v2957
      %v3068 = vpop.f32.mrb[0].mxu0
      %v3069 = vadd.f32 0.0, %v3068
      %v3070 = vpop.f32.mrb[0].mxu0
      %v3071 = vpop.f32.mrb[0].mxu0
      %v3072 = vadd.f32 0.0, %v3071
      %v3073 = vpop.f32.mrb[0].mxu0
      %3074 = vdwg.mxu0
      %v3075 = vadd.f32 %v2904, %v3045
      %v3076 = vadd.f32 %v2905, %v3048
      %v3077 = vadd.f32 %v2906, %v3053
      %v3078 = vadd.f32 %v2907, %v3056
      %v3079 = vadd.f32 %v2908, %v3061
      %v3080 = vadd.f32 %v2909, %v3064
      %v3081 = vadd.f32 %v2910, %v3069
      %v3082 = vadd.f32 %v2911, %v3072
      %v3083 = vld [vmem:[%s2912] sm:$0xf]
      %v3084 = vld [vmem:[%s2912 + $0x4] sm:$0x1]
      %v3085 = vld [vmem:[%s2912 + $0x8] sm:$0xf]
      %v3086 = vld [vmem:[%s2912 + $0xc] sm:$0x1]
      %v3087 = vld [vmem:[%s2912 + $0x10] sm:$0xf]
      %v3088 = vld [vmem:[%s2912 + $0x14] sm:$0x1]
      %v3089 = vld [vmem:[%s2912 + $0x18] sm:$0xf]
      %v3090 = vld [vmem:[%s2912 + $0x1c] sm:$0x1]
      %v3091 = vld [vmem:[%s2912 + $0x20] sm:$0xf]
      %v3092 = vld [vmem:[%s2912 + $0x24] sm:$0x1]
      %v3093 = vld [vmem:[%s2912 + $0x28] sm:$0xf]
      %v3094 = vld [vmem:[%s2912 + $0x2c] sm:$0x1]
      %v3095 = vld [vmem:[%s2912 + $0x30] sm:$0xf]
      %v3096 = vld [vmem:[%s2912 + $0x34] sm:$0x1]
      %v3097 = vld [vmem:[%s2912 + $0x38] sm:$0xf]
      %v3098 = vld [vmem:[%s2912 + $0x3c] sm:$0x1]
      %v3100 = vshrl.u32 %v3083, 16
      %v3102 = vrot.slane %v3100, 4
      %v3103 = vshll.u32 %v3083, 16
      %v3105 = vrot.slane %v3103, 5
      %v3106 = vor.u32 %v3102, %v3105
      %v3107 = vrot.slane %v3106, 4
      %v3109 = vshll.u32 %v3084, 16
      %v3111 = vrot.slane %v3109, 5
      %v3112 = vsel %vm1641, %v3107, %v3111
      %v3114 = vshrl.u32 %v3085, 16
      %v3116 = vrot.slane %v3114, 4
      %v3117 = vshll.u32 %v3085, 16
      %v3119 = vrot.slane %v3117, 5
      %v3120 = vor.u32 %v3116, %v3119
      %v3121 = vrot.slane %v3120, 4
      %v3123 = vshll.u32 %v3086, 16
      %v3125 = vrot.slane %v3123, 5
      %v3126 = vsel %vm1641, %v3121, %v3125
      %v3128 = vshrl.u32 %v3087, 16
      %v3130 = vrot.slane %v3128, 4
      %v3131 = vshll.u32 %v3087, 16
      %v3133 = vrot.slane %v3131, 5
      %v3134 = vor.u32 %v3130, %v3133
      %v3135 = vrot.slane %v3134, 4
      %v3137 = vshll.u32 %v3088, 16
      %v3139 = vrot.slane %v3137, 5
      %v3140 = vsel %vm1641, %v3135, %v3139
      %v3142 = vshrl.u32 %v3089, 16
      %v3144 = vrot.slane %v3142, 4
      %v3145 = vshll.u32 %v3089, 16
      %v3147 = vrot.slane %v3145, 5
      %v3148 = vor.u32 %v3144, %v3147
      %v3149 = vrot.slane %v3148, 4
      %v3151 = vshll.u32 %v3090, 16
      %v3153 = vrot.slane %v3151, 5
      %v3154 = vsel %vm1641, %v3149, %v3153
      %v3156 = vshrl.u32 %v3091, 16
      %v3158 = vrot.slane %v3156, 4
      %v3159 = vshll.u32 %v3091, 16
      %v3161 = vrot.slane %v3159, 5
      %v3162 = vor.u32 %v3158, %v3161
      %v3163 = vrot.slane %v3162, 4
      %v3165 = vshll.u32 %v3092, 16
      %v3167 = vrot.slane %v3165, 5
      %v3168 = vsel %vm1641, %v3163, %v3167
      %v3170 = vshrl.u32 %v3093, 16
      %v3172 = vrot.slane %v3170, 4
      %v3173 = vshll.u32 %v3093, 16
      %v3175 = vrot.slane %v3173, 5
      %v3176 = vor.u32 %v3172, %v3175
      %v3177 = vrot.slane %v3176, 4
      %v3179 = vshll.u32 %v3094, 16
      %v3181 = vrot.slane %v3179, 5
      %v3182 = vsel %vm1641, %v3177, %v3181
      %v3184 = vshrl.u32 %v3095, 16
      %v3186 = vrot.slane %v3184, 4
      %v3187 = vshll.u32 %v3095, 16
      %v3189 = vrot.slane %v3187, 5
      %v3190 = vor.u32 %v3186, %v3189
      %v3191 = vrot.slane %v3190, 4
      %v3193 = vshll.u32 %v3096, 16
      %v3195 = vrot.slane %v3193, 5
      %v3196 = vsel %vm1641, %v3191, %v3195
      %v3198 = vshrl.u32 %v3097, 16
      %v3200 = vrot.slane %v3198, 4
      %v3201 = vshll.u32 %v3097, 16
      %v3203 = vrot.slane %v3201, 5
      %v3204 = vor.u32 %v3200, %v3203
      %v3205 = vrot.slane %v3204, 4
      %v3207 = vshll.u32 %v3098, 16
      %v3209 = vrot.slane %v3207, 5
      %v3210 = vsel %vm1641, %v3205, %v3209
      %s3211 = scalar_lea.vmem %s4, 448
      %v3212 = vld [vmem:[%s3211] sm:$0xf]
      %v3213 = vld [vmem:[%s3211 + $0x4] sm:$0xf]
      %v3214 = vld [vmem:[%s3211 + $0x8] sm:$0xf]
      %v3215 = vld [vmem:[%s3211 + $0xc] sm:$0xf]
      %v3216 = vld [vmem:[%s3211 + $0x10] sm:$0xf]
      %v3217 = vld [vmem:[%s3211 + $0x14] sm:$0xf]
      %v3218 = vld [vmem:[%s3211 + $0x18] sm:$0xf]
      %v3219 = vld [vmem:[%s3211 + $0x1c] sm:$0xf]
      %v3220 = vld [vmem:[%s3211 + $0x20] sm:$0xf]
      %v3221 = vld [vmem:[%s3211 + $0x24] sm:$0xf]
      %v3222 = vld [vmem:[%s3211 + $0x28] sm:$0xf]
      %v3223 = vld [vmem:[%s3211 + $0x2c] sm:$0xf]
      %v3224 = vld [vmem:[%s3211 + $0x30] sm:$0xf]
      %v3225 = vld [vmem:[%s3211 + $0x34] sm:$0xf]
      %v3226 = vld [vmem:[%s3211 + $0x38] sm:$0xf]
      %v3227 = vld [vmem:[%s3211 + $0x3c] sm:$0xf]
      %v3228 = vunpack.c.l.b16 %v3112
      %v3229 = vunpack.c.l.b16 %v3126
      %v3230 = vunpack.c.l.b16 %v3140
      %v3231 = vunpack.c.l.b16 %v3154
      %v3232 = vunpack.c.l.b16 %v3168
      %v3233 = vunpack.c.l.b16 %v3182
      %v3234 = vunpack.c.l.b16 %v3196
      %v3235 = vunpack.c.l.b16 %v3210
      %v3236 = vpack.c.b16 %v3229, %v3228
      %v3237 = vpack.c.b16 %v3231, %v3230
      %v3238 = vpack.c.b16 %v3233, %v3232
      %v3239 = vpack.c.b16 %v3235, %v3234
      %v3260 = vunpack.c.l.b16 %v3212
      %v3261 = vunpack.c.l.b16 %v3213
      %v3262 = vunpack.c.l.b16 %v3214
      %v3263 = vunpack.c.l.b16 %v3215
      %v3264 = vunpack.c.l.b16 %v3216
      %v3265 = vunpack.c.l.b16 %v3217
      %v3266 = vunpack.c.l.b16 %v3218
      %v3267 = vunpack.c.l.b16 %v3219
      %v3268 = vunpack.c.l.b16 %v3220
      %v3269 = vunpack.c.l.b16 %v3221
      %v3270 = vunpack.c.l.b16 %v3222
      %v3271 = vunpack.c.l.b16 %v3223
      %v3272 = vunpack.c.l.b16 %v3224
      %v3273 = vunpack.c.l.b16 %v3225
      %v3274 = vunpack.c.l.b16 %v3226
      %v3275 = vunpack.c.l.b16 %v3227
      %v3276 = vpack.c.b16 %v3261, %v3260
      %v3277 = vpack.c.b16 %v3263, %v3262
      %v3278 = vpack.c.b16 %v3265, %v3264
      %v3279 = vpack.c.b16 %v3267, %v3266
      %v3280 = vpack.c.b16 %v3269, %v3268
      %v3281 = vpack.c.b16 %v3271, %v3270
      %v3282 = vpack.c.b16 %v3273, %v3272
      %v3283 = vpack.c.b16 %v3275, %v3274
      %3292 = vmatprep.subr.bf16.mxu0 0
      %3293 = vmatpush1.bf16.msra.mxu0 %v3276
      %3294 = vmatprep.subr.bf16.mxu0 0
      %3295 = vmatpush1.bf16.msra.mxu0 %v3277
      %3296 = vmatprep.subr.bf16.mxu0 0
      %3297 = vmatpush1.bf16.msra.mxu0 %v3278
      %3298 = vmatprep.subr.bf16.mxu0 0
      %3299 = vmatpush1.bf16.msra.mxu0 %v3279
      %3300 = vmatprep.subr.bf16.mxu0 0
      %3301 = vmatpush1.bf16.msra.mxu0 %v3280
      %3302 = vmatprep.subr.bf16.mxu0 0
      %3303 = vmatpush1.bf16.msra.mxu0 %v3281
      %3304 = vmatprep.subr.bf16.mxu0 0
      %3305 = vmatpush1.bf16.msra.mxu0 %v3282
      %3306 = vmatprep.subr.bf16.mxu0 0
      %3307 = vmatpush1.bf16.msra.mxu0 %v3283
      %3308 = vmatprep.subr.bf16.mxu0 0
      %3309 = vmatpush1.bf16.msra.mxu0 0
      %3310 = vmatprep.subr.bf16.mxu0 0
      %3311 = vmatpush1.bf16.msra.mxu0 0
      %3312 = vmatprep.subr.bf16.mxu0 0
      %3313 = vmatpush1.bf16.msra.mxu0 0
      %3314 = vmatprep.subr.bf16.mxu0 0
      %3315 = vmatpush1.bf16.msra.mxu0 0
      %3316 = vmatprep.subr.bf16.mxu0 0
      %3317 = vmatpush1.bf16.msra.mxu0 0
      %3318 = vmatprep.subr.bf16.mxu0 0
      %3319 = vmatpush1.bf16.msra.mxu0 0
      %3320 = vmatprep.subr.bf16.mxu0 0
      %3321 = vmatpush1.bf16.msra.mxu0 0
      %3322 = vmatprep.subr.bf16.mxu0 0
      %3323 = vmatpush1.bf16.msra.mxu0 0
      %3324 = vmatprep.mubr.bf16.mxu0 0
      %3325 = vmatmul.mubr.bf16.gmra.mrb[0].mxu0 %v3236
      %v3326 = vpop.f32.mrb[0].mxu0
      %v3327 = vadd.f32 0.0, %v3326
      %v3328 = vpop.f32.mrb[0].mxu0
      %v3329 = vpop.f32.mrb[0].mxu0
      %v3330 = vadd.f32 0.0, %v3329
      %v3331 = vpop.f32.mrb[0].mxu0
      %3332 = vmatprep.mubr.bf16.mxu0 0
      %3333 = vmatmul.mubr.bf16.gmra.mrb[0].mxu0 %v3237
      %v3334 = vpop.f32.mrb[0].mxu0
      %v3335 = vadd.f32 0.0, %v3334
      %v3336 = vpop.f32.mrb[0].mxu0
      %v3337 = vpop.f32.mrb[0].mxu0
      %v3338 = vadd.f32 0.0, %v3337
      %v3339 = vpop.f32.mrb[0].mxu0
      %3340 = vmatprep.mubr.bf16.mxu0 0
      %3341 = vmatmul.mubr.bf16.gmra.mrb[0].mxu0 %v3238
      %v3342 = vpop.f32.mrb[0].mxu0
      %v3343 = vadd.f32 0.0, %v3342
      %v3344 = vpop.f32.mrb[0].mxu0
      %v3345 = vpop.f32.mrb[0].mxu0
      %v3346 = vadd.f32 0.0, %v3345
      %v3347 = vpop.f32.mrb[0].mxu0
      %3348 = vmatprep.mubr.bf16.mxu0 0
      %3349 = vmatmul.mubr.bf16.gmra.mrb[0].mxu0 %v3239
      %v3350 = vpop.f32.mrb[0].mxu0
      %v3351 = vadd.f32 0.0, %v3350
      %v3352 = vpop.f32.mrb[0].mxu0
      %v3353 = vpop.f32.mrb[0].mxu0
      %v3354 = vadd.f32 0.0, %v3353
      %v3355 = vpop.f32.mrb[0].mxu0
      %3356 = vdwg.mxu0
      %v3357 = vadd.f32 %v3075, %v3327
      %v3358 = vadd.f32 %v3076, %v3330
      %v3359 = vadd.f32 %v3077, %v3335
      %v3360 = vadd.f32 %v3078, %v3338
      %v3361 = vadd.f32 %v3079, %v3343
      %v3362 = vadd.f32 %v3080, %v3346
      %v3363 = vadd.f32 %v3081, %v3351
      %v3364 = vadd.f32 %v3082, %v3354
      %v3365 = vld [vmem:[%s2912] sm:$0xe]
      %v3366 = vld [vmem:[%s2912 + $0x8] sm:$0xe]
      %v3367 = vld [vmem:[%s2912 + $0x10] sm:$0xe]
      %v3368 = vld [vmem:[%s2912 + $0x18] sm:$0xe]
      %v3369 = vld [vmem:[%s2912 + $0x20] sm:$0xe]
      %v3370 = vld [vmem:[%s2912 + $0x28] sm:$0xe]
      %v3371 = vld [vmem:[%s2912 + $0x30] sm:$0xe]
      %v3372 = vld [vmem:[%s2912 + $0x38] sm:$0xe]
      %v3389 = vrot.slane %v3365, 5
      %v3390 = vrot.slane %v3389, 4
      %v3391 = vrot.slane %v3084, 5
      %v3392 = vsel %vm2063, %v3390, %v3391
      %v3393 = vrot.slane %v3366, 5
      %v3394 = vrot.slane %v3393, 4
      %v3395 = vrot.slane %v3086, 5
      %v3396 = vsel %vm2063, %v3394, %v3395
      %v3397 = vrot.slane %v3367, 5
      %v3398 = vrot.slane %v3397, 4
      %v3399 = vrot.slane %v3088, 5
      %v3400 = vsel %vm2063, %v3398, %v3399
      %v3401 = vrot.slane %v3368, 5
      %v3402 = vrot.slane %v3401, 4
      %v3403 = vrot.slane %v3090, 5
      %v3404 = vsel %vm2063, %v3402, %v3403
      %v3405 = vrot.slane %v3369, 5
      %v3406 = vrot.slane %v3405, 4
      %v3407 = vrot.slane %v3092, 5
      %v3408 = vsel %vm2063, %v3406, %v3407
      %v3409 = vrot.slane %v3370, 5
      %v3410 = vrot.slane %v3409, 4
      %v3411 = vrot.slane %v3094, 5
      %v3412 = vsel %vm2063, %v3410, %v3411
      %v3413 = vrot.slane %v3371, 5
      %v3414 = vrot.slane %v3413, 4
      %v3415 = vrot.slane %v3096, 5
      %v3416 = vsel %vm2063, %v3414, %v3415
      %v3417 = vrot.slane %v3372, 5
      %v3418 = vrot.slane %v3417, 4
      %v3419 = vrot.slane %v3098, 5
      %v3420 = vsel %vm2063, %v3418, %v3419
      %s3421 = scalar_lea.vmem %s4, 512
      %v3422 = vld [vmem:[%s3421] sm:$0xf]
      %v3423 = vld [vmem:[%s3421 + $0x4] sm:$0xf]
      %v3424 = vld [vmem:[%s3421 + $0x8] sm:$0xf]
      %v3425 = vld [vmem:[%s3421 + $0xc] sm:$0xf]
      %v3426 = vld [vmem:[%s3421 + $0x10] sm:$0xf]
      %v3427 = vld [vmem:[%s3421 + $0x14] sm:$0xf]
      %v3428 = vld [vmem:[%s3421 + $0x18] sm:$0xf]
      %v3429 = vld [vmem:[%s3421 + $0x1c] sm:$0xf]
      %v3430 = vld [vmem:[%s3421 + $0x20] sm:$0xf]
      %v3431 = vld [vmem:[%s3421 + $0x24] sm:$0xf]
      %v3432 = vld [vmem:[%s3421 + $0x28] sm:$0xf]
      %v3433 = vld [vmem:[%s3421 + $0x2c] sm:$0xf]
      %v3434 = vld [vmem:[%s3421 + $0x30] sm:$0xf]
      %v3435 = vld [vmem:[%s3421 + $0x34] sm:$0xf]
      %v3436 = vld [vmem:[%s3421 + $0x38] sm:$0xf]
      %v3437 = vld [vmem:[%s3421 + $0x3c] sm:$0xf]
      %v3438 = vunpack.c.l.b16 %v3392
      %v3439 = vunpack.c.l.b16 %v3396
      %v3440 = vunpack.c.l.b16 %v3400
      %v3441 = vunpack.c.l.b16 %v3404
      %v3442 = vunpack.c.l.b16 %v3408
      %v3443 = vunpack.c.l.b16 %v3412
      %v3444 = vunpack.c.l.b16 %v3416
      %v3445 = vunpack.c.l.b16 %v3420
      %v3446 = vpack.c.b16 %v3439, %v3438
      %v3447 = vpack.c.b16 %v3441, %v3440
      %v3448 = vpack.c.b16 %v3443, %v3442
      %v3449 = vpack.c.b16 %v3445, %v3444
      %v3470 = vunpack.c.l.b16 %v3422
      %v3471 = vunpack.c.l.b16 %v3423
      %v3472 = vunpack.c.l.b16 %v3424
      %v3473 = vunpack.c.l.b16 %v3425
      %v3474 = vunpack.c.l.b16 %v3426
      %v3475 = vunpack.c.l.b16 %v3427
      %v3476 = vunpack.c.l.b16 %v3428
      %v3477 = vunpack.c.l.b16 %v3429
      %v3478 = vunpack.c.l.b16 %v3430
      %v3479 = vunpack.c.l.b16 %v3431
      %v3480 = vunpack.c.l.b16 %v3432
      %v3481 = vunpack.c.l.b16 %v3433
      %v3482 = vunpack.c.l.b16 %v3434
      %v3483 = vunpack.c.l.b16 %v3435
      %v3484 = vunpack.c.l.b16 %v3436
      %v3485 = vunpack.c.l.b16 %v3437
      %v3486 = vpack.c.b16 %v3471, %v3470
      %v3487 = vpack.c.b16 %v3473, %v3472
      %v3488 = vpack.c.b16 %v3475, %v3474
      %v3489 = vpack.c.b16 %v3477, %v3476
      %v3490 = vpack.c.b16 %v3479, %v3478
      %v3491 = vpack.c.b16 %v3481, %v3480
      %v3492 = vpack.c.b16 %v3483, %v3482
      %v3493 = vpack.c.b16 %v3485, %v3484
      %3502 = vmatprep.subr.bf16.mxu0 0
      %3503 = vmatpush1.bf16.msra.mxu0 %v3486
      %3504 = vmatprep.subr.bf16.mxu0 0
      %3505 = vmatpush1.bf16.msra.mxu0 %v3487
      %3506 = vmatprep.subr.bf16.mxu0 0
      %3507 = vmatpush1.bf16.msra.mxu0 %v3488
      %3508 = vmatprep.subr.bf16.mxu0 0
      %3509 = vmatpush1.bf16.msra.mxu0 %v3489
      %3510 = vmatprep.subr.bf16.mxu0 0
      %3511 = vmatpush1.bf16.msra.mxu0 %v3490
      %3512 = vmatprep.subr.bf16.mxu0 0
      %3513 = vmatpush1.bf16.msra.mxu0 %v3491
      %3514 = vmatprep.subr.bf16.mxu0 0
      %3515 = vmatpush1.bf16.msra.mxu0 %v3492
      %3516 = vmatprep.subr.bf16.mxu0 0
      %3517 = vmatpush1.bf16.msra.mxu0 %v3493
      %3518 = vmatprep.subr.bf16.mxu0 0
      %3519 = vmatpush1.bf16.msra.mxu0 0
      %3520 = vmatprep.subr.bf16.mxu0 0
      %3521 = vmatpush1.bf16.msra.mxu0 0
      %3522 = vmatprep.subr.bf16.mxu0 0
      %3523 = vmatpush1.bf16.msra.mxu0 0
      %3524 = vmatprep.subr.bf16.mxu0 0
      %3525 = vmatpush1.bf16.msra.mxu0 0
      %3526 = vmatprep.subr.bf16.mxu0 0
      %3527 = vmatpush1.bf16.msra.mxu0 0
      %3528 = vmatprep.subr.bf16.mxu0 0
      %3529 = vmatpush1.bf16.msra.mxu0 0
      %3530 = vmatprep.subr.bf16.mxu0 0
      %3531 = vmatpush1.bf16.msra.mxu0 0
      %3532 = vmatprep.subr.bf16.mxu0 0
      %3533 = vmatpush1.bf16.msra.mxu0 0
      %3534 = vmatprep.mubr.bf16.mxu0 0
      %3535 = vmatmul.mubr.bf16.gmra.mrb[0].mxu0 %v3446
      %v3536 = vpop.f32.mrb[0].mxu0
      %v3537 = vadd.f32 0.0, %v3536
      %v3538 = vpop.f32.mrb[0].mxu0
      %v3539 = vpop.f32.mrb[0].mxu0
      %v3540 = vadd.f32 0.0, %v3539
      %v3541 = vpop.f32.mrb[0].mxu0
      %3542 = vmatprep.mubr.bf16.mxu0 0
      %3543 = vmatmul.mubr.bf16.gmra.mrb[0].mxu0 %v3447
      %v3544 = vpop.f32.mrb[0].mxu0
      %v3545 = vadd.f32 0.0, %v3544
      %v3546 = vpop.f32.mrb[0].mxu0
      %v3547 = vpop.f32.mrb[0].mxu0
      %v3548 = vadd.f32 0.0, %v3547
      %v3549 = vpop.f32.mrb[0].mxu0
      %3550 = vmatprep.mubr.bf16.mxu0 0
      %3551 = vmatmul.mubr.bf16.gmra.mrb[0].mxu0 %v3448
      %v3552 = vpop.f32.mrb[0].mxu0
      %v3553 = vadd.f32 0.0, %v3552
      %v3554 = vpop.f32.mrb[0].mxu0
      %v3555 = vpop.f32.mrb[0].mxu0
      %v3556 = vadd.f32 0.0, %v3555
      %v3557 = vpop.f32.mrb[0].mxu0
      %3558 = vmatprep.mubr.bf16.mxu0 0
      %3559 = vmatmul.mubr.bf16.gmra.mrb[0].mxu0 %v3449
      %v3560 = vpop.f32.mrb[0].mxu0
      %v3561 = vadd.f32 0.0, %v3560
      %v3562 = vpop.f32.mrb[0].mxu0
      %v3563 = vpop.f32.mrb[0].mxu0
      %v3564 = vadd.f32 0.0, %v3563
      %v3565 = vpop.f32.mrb[0].mxu0
      %3566 = vdwg.mxu0
      %v3567 = vadd.f32 %v3357, %v3537
      %v3568 = vadd.f32 %v3358, %v3540
      %v3569 = vadd.f32 %v3359, %v3545
      %v3570 = vadd.f32 %v3360, %v3548
      %v3571 = vadd.f32 %v3361, %v3553
      %v3572 = vadd.f32 %v3362, %v3556
      %v3573 = vadd.f32 %v3363, %v3561
      %v3574 = vadd.f32 %v3364, %v3564
      %v3575 = vld [vmem:[%s5] sm:$0x1]
      %v3577 = vlaneseq
      %v3578 = vshrl.u32 %v3577, 7
      %v3579 = vsub.s32 0, %v3578
      %v3580 = vrot.slane %v3575, %v3579
      %v3582 = vmul.f32 %v3567, %v3580
      %v3583 = vmul.f32 %v3568, %v3580
      %v3584 = vmul.f32 %v3569, %v3580
      %v3585 = vmul.f32 %v3570, %v3580
      %v3586 = vmul.f32 %v3571, %v3580
      %v3587 = vmul.f32 %v3572, %v3580
      %v3588 = vmul.f32 %v3573, %v3580
      %v3589 = vmul.f32 %v3574, %v3580
      %v3590 = vld [vmem:[%s6] sm:$0x1]
      %v3592 = vlaneseq
      %v3593 = vshrl.u32 %v3592, 7
      %v3594 = vsub.s32 0, %v3593
      %v3595 = vrot.slane %v3590, %v3594
      %v3597 = vadd.f32 %v3582, %v3595
      %v3598 = vadd.f32 %v3583, %v3595
      %v3599 = vadd.f32 %v3584, %v3595
      %v3600 = vadd.f32 %v3585, %v3595
      %v3601 = vadd.f32 %v3586, %v3595
      %v3602 = vadd.f32 %v3587, %v3595
      %v3603 = vadd.f32 %v3588, %v3595
      %v3604 = vadd.f32 %v3589, %v3595
      %v3605 = vld [vmem:[%s809] sm:$0xff]
      %v3606 = vld [vmem:[%s809 + $0x10] sm:$0xff]
      %v3607 = vld [vmem:[%s809 + $0x20] sm:$0xff]
      %v3608 = vld [vmem:[%s809 + $0x30] sm:$0xff]
      %v3609 = vld [vmem:[%s809 + $0x40] sm:$0xff]
      %v3610 = vld [vmem:[%s809 + $0x50] sm:$0xff]
      %v3611 = vld [vmem:[%s809 + $0x60] sm:$0xff]
      %v3612 = vld [vmem:[%s809 + $0x70] sm:$0xff]
      %v3613 = vpack.c.bf16 %v3606, %v3605
      %v3614 = vpack.c.bf16 %v3608, %v3607
      %v3615 = vpack.c.bf16 %v3610, %v3609
      %v3616 = vpack.c.bf16 %v3612, %v3611
      %v3617 = vld [vmem:[%s7] sm:$0xf]
      %v3618 = vld [vmem:[%s7 + $0x4] sm:$0xf]
      %v3619 = vld [vmem:[%s7 + $0x8] sm:$0xf]
      %v3620 = vld [vmem:[%s7 + $0xc] sm:$0xf]
      %v3625 = vunpack.c.l.b16 %v3617
      %v3626 = vunpack.c.l.b16 %v3618
      %v3627 = vunpack.c.l.b16 %v3619
      %v3628 = vunpack.c.l.b16 %v3620
      %v3629 = vpack.c.b16 %v3626, %v3625
      %v3630 = vpack.c.b16 %v3628, %v3627
      %v3634 = vsel %vm413, %v3613, 0
      %v3637 = vsel %vm413, %v3614, 0
      %v3640 = vsel %vm413, %v3615, 0
      %v3643 = vsel %vm413, %v3616, 0
      %3645 = vmatprep.subr.bf16.mxu0 0
      %3646 = vmatpush1.bf16.msra.mxu0 %v3629
      %3647 = vmatprep.subr.bf16.mxu0 0
      %3648 = vmatpush1.bf16.msra.mxu0 %v3630
      %3649 = vmatprep.subr.bf16.mxu0 0
      %3650 = vmatpush1.bf16.msra.mxu0 0
      %3651 = vmatprep.subr.bf16.mxu0 0
      %3652 = vmatpush1.bf16.msra.mxu0 0
      %3653 = vmatprep.subr.bf16.mxu0 0
      %3654 = vmatpush1.bf16.msra.mxu0 0
      %3655 = vmatprep.subr.bf16.mxu0 0
      %3656 = vmatpush1.bf16.msra.mxu0 0
      %3657 = vmatprep.subr.bf16.mxu0 0
      %3658 = vmatpush1.bf16.msra.mxu0 0
      %3659 = vmatprep.subr.bf16.mxu0 0
      %3660 = vmatpush1.bf16.msra.mxu0 0
      %3661 = vmatprep.subr.bf16.mxu0 0
      %3662 = vmatpush1.bf16.msra.mxu0 0
      %3663 = vmatprep.subr.bf16.mxu0 0
      %3664 = vmatpush1.bf16.msra.mxu0 0
      %3665 = vmatprep.subr.bf16.mxu0 0
      %3666 = vmatpush1.bf16.msra.mxu0 0
      %3667 = vmatprep.subr.bf16.mxu0 0
      %3668 = vmatpush1.bf16.msra.mxu0 0
      %3669 = vmatprep.subr.bf16.mxu0 0
      %3670 = vmatpush1.bf16.msra.mxu0 0
      %3671 = vmatprep.subr.bf16.mxu0 0
      %3672 = vmatpush1.bf16.msra.mxu0 0
      %3673 = vmatprep.subr.bf16.mxu0 0
      %3674 = vmatpush1.bf16.msra.mxu0 0
      %3675 = vmatprep.subr.bf16.mxu0 0
      %3676 = vmatpush1.bf16.msra.mxu0 0
      %3677 = vmatprep.mubr.bf16.mxu0 0
      %3678 = vmatmul.mubr.bf16.gmra.mrb[0].mxu0 %v3634
      %v3679 = vpop.f32.mrb[0].mxu0
      %v3680 = vadd.f32 0.0, %v3679
      %v3681 = vpop.f32.mrb[0].mxu0
      %v3682 = vpop.f32.mrb[0].mxu0
      %v3683 = vadd.f32 0.0, %v3682
      %v3684 = vpop.f32.mrb[0].mxu0
      %3685 = vmatprep.mubr.bf16.mxu0 0
      %3686 = vmatmul.mubr.bf16.gmra.mrb[0].mxu0 %v3637
      %v3687 = vpop.f32.mrb[0].mxu0
      %v3688 = vadd.f32 0.0, %v3687
      %v3689 = vpop.f32.mrb[0].mxu0
      %v3690 = vpop.f32.mrb[0].mxu0
      %v3691 = vadd.f32 0.0, %v3690
      %v3692 = vpop.f32.mrb[0].mxu0
      %3693 = vmatprep.mubr.bf16.mxu0 0
      %3694 = vmatmul.mubr.bf16.gmra.mrb[0].mxu0 %v3640
      %v3695 = vpop.f32.mrb[0].mxu0
      %v3696 = vadd.f32 0.0, %v3695
      %v3697 = vpop.f32.mrb[0].mxu0
      %v3698 = vpop.f32.mrb[0].mxu0
      %v3699 = vadd.f32 0.0, %v3698
      %v3700 = vpop.f32.mrb[0].mxu0
      %3701 = vmatprep.mubr.bf16.mxu0 0
      %3702 = vmatmul.mubr.bf16.gmra.mrb[0].mxu0 %v3643
      %v3703 = vpop.f32.mrb[0].mxu0
      %v3704 = vadd.f32 0.0, %v3703
      %v3705 = vpop.f32.mrb[0].mxu0
      %v3706 = vpop.f32.mrb[0].mxu0
      %v3707 = vadd.f32 0.0, %v3706
      %v3708 = vpop.f32.mrb[0].mxu0
      %3709 = vdwg.mxu0
      %v3710 = vld [vmem:[%s8] sm:$0x1]
      %v3712 = vlaneseq
      %v3713 = vshrl.u32 %v3712, 7
      %v3714 = vsub.s32 0, %v3713
      %v3715 = vrot.slane %v3710, %v3714
      %v3717 = vmul.f32 %v3680, %v3715
      %v3718 = vmul.f32 %v3683, %v3715
      %v3719 = vmul.f32 %v3688, %v3715
      %v3720 = vmul.f32 %v3691, %v3715
      %v3721 = vmul.f32 %v3696, %v3715
      %v3722 = vmul.f32 %v3699, %v3715
      %v3723 = vmul.f32 %v3704, %v3715
      %v3724 = vmul.f32 %v3707, %v3715
      %v3725 = vld [vmem:[%s9] sm:$0x1]
      %v3727 = vlaneseq
      %v3728 = vshrl.u32 %v3727, 7
      %v3729 = vsub.s32 0, %v3728
      %v3730 = vrot.slane %v3725, %v3729
      %v3732 = vadd.f32 %v3717, %v3730
      %v3733 = vadd.f32 %v3718, %v3730
      %v3734 = vadd.f32 %v3719, %v3730
      %v3735 = vadd.f32 %v3720, %v3730
      %v3736 = vadd.f32 %v3721, %v3730
      %v3737 = vadd.f32 %v3722, %v3730
      %v3738 = vadd.f32 %v3723, %v3730
      %v3739 = vadd.f32 %v3724, %v3730
      %v3740 = vadd.f32 %v3597, %v3732
      %v3741 = vadd.f32 %v3598, %v3733
      %v3742 = vadd.f32 %v3599, %v3734
      %v3743 = vadd.f32 %v3600, %v3735
      %v3744 = vadd.f32 %v3601, %v3736
      %v3745 = vadd.f32 %v3602, %v3737
      %v3746 = vadd.f32 %v3603, %v3738
      %v3747 = vadd.f32 %v3604, %v3739
      %v3748 = vmax.f32 %v3740, 0.0
      %v3749 = vmax.f32 %v3741, 0.0
      %v3750 = vmax.f32 %v3742, 0.0
      %v3751 = vmax.f32 %v3743, 0.0
      %v3752 = vmax.f32 %v3744, 0.0
      %v3753 = vmax.f32 %v3745, 0.0
      %v3754 = vmax.f32 %v3746, 0.0
      %v3755 = vmax.f32 %v3747, 0.0
      %3756 = vst [vmem:[%s364] sm:$0xff] %v3748
      %3757 = vst [vmem:[%s364 + $0x8] sm:$0xff] %v3749
      %3758 = vst [vmem:[%s364 + $0x10] sm:$0xff] %v3750
      %3759 = vst [vmem:[%s364 + $0x18] sm:$0xff] %v3751
      %3760 = vst [vmem:[%s364 + $0x20] sm:$0xff] %v3752
      %3761 = vst [vmem:[%s364 + $0x28] sm:$0xff] %v3753
      %3762 = vst [vmem:[%s364 + $0x30] sm:$0xff] %v3754
      %3763 = vst [vmem:[%s364 + $0x38] sm:$0xff] %v3755
      %s3764 = smul.u32 8, %s21
      %p3765 = scmp.lt.s32.totalorder %s3764, 15
      %s3766 = scalar_select %p3765, %s3764, 15
      %s3767 = smul.addr %s3766, 8
      %s3768 = scalar_lea.vmem %s10, %s3767
      // Predicated region
      $region61: #{fwd.2} parent=59 // pred_check
        %p3769 = pneg %p254
      $region62: #{fwd.2} parent=59 // pred_check_branch
        %3771 = sbr.rel (%p3769) target = $region64
      $region63: #{fwd.2} parent=59 // pred_region
        %s3772 = smul.u32 8, %s21
      $region64: #{fwd.2} parent=59 // pred_fallthru
        _
    $region60: #{fwd.2} parent=5 // pred_fallthru
      _
    %p3773 = scmp.le.s32.totalorder 2, %s16
    // Predicated region
    $region65: #{fwd.2} parent=5 // pred_check
      %p3774 = pneg %p3773
    $region66: #{fwd.2} parent=5 // pred_check_branch
      %3776 = sbr.rel (%p3774) target = $region68
    $region67: #{fwd.2} parent=5 // pred_region
      %s3777 = ssub.s32 %s16, 2
      // Predicated region
      $region69: #{fwd.2} parent=67 // pred_check
        %p3778 = pneg %p260
      $region70: #{fwd.2} parent=67 // pred_check_branch
        %3780 = sbr.rel (%p3778) target = $region72
      $region71: #{fwd.2} parent=67 // pred_region
        %s3781 = smul.u32 8, %s22
        %p3782 = scmp.lt.s32.totalorder %s3781, 15
        %s3783 = scalar_select %p3782, %s3781, 15
        %s3784 = smul.addr %s3783, 8
        %s3785 = scalar_lea.vmem %s10, %s3784
      $region72: #{fwd.2} parent=67 // pred_fallthru
        _
    $region68: #{fwd.2} parent=5 // pred_fallthru
      _
  $region6: #{fwd.2} parent=0 // loop_footer
    %s20 = sadd.s32 1, %s16
  $region7: #{fwd.2} parent=0 // loop_footer_branch
    %15 = sbr.rel target = $region3
  $region8: #{fwd.2} parent=0 // loop_exit
    _

// kernel: fwd.3
$region0: #{fwd.3}
  #allocation0 [shape = 'u32[]', space=smem, size = 0x4, offset = 0x4, fixed_abs, tag = 'smem constant byte address 0x4 - core index']
  #allocation1 [shape = 'u32[144,128]{1,0:T(1,128)}', space=vmem, size = 0x12000, scoped, tag = 'internal scratch']
  #allocation2 [shape = 'bf16[10,10,128]{2,1,0:T(8,128)(2,1)}', space=vmem, size = 0xa000, scoped, tag = 'scratch operand']
  %s0 = inlined_call_operand.vmem [shape: f32[2,10,10,128], index: 0, kind: input, shape index: {}]
  %s1 = inlined_call_operand.vmem [shape: bf16[9,128,128], index: 1, kind: input, shape index: {}]
  %s2 = inlined_call_operand.vmem [shape: f32[1,128], index: 2, kind: input, shape index: {}]
  %s3 = inlined_call_operand.vmem [shape: f32[1,128], index: 3, kind: input, shape index: {}]
  %s4 = inlined_call_operand.vmem [shape: bf16[9,128,128], index: 4, kind: input, shape index: {}]
  %s5 = inlined_call_operand.vmem [shape: f32[1,128], index: 5, kind: input, shape index: {}]
  %s6 = inlined_call_operand.vmem [shape: f32[1,128], index: 6, kind: input, shape index: {}]
  %s7 = inlined_call_operand.vmem [shape: f32[128,128], index: 7, kind: output, shape index: {}]
  %s8 = sld [smem:[#allocation0]]
  $region61: #{fwd.3} parent=0
    _
  %s10 = ssub.s32 1, %s8
  %s11 = scalar_select 0, %s10, %s8
  loop: start=0, step=1, limit=4
  $region2: #{fwd.3} parent=0 // loop_pre_header
    _
  $region3: #{fwd.3} parent=0 // loop_header
    %s13 = sphi 0, %s17
    %p14 = scmp.ge.s32.totalorder %s13, 4
    %s23 = sphi 0, %s25
    %s26 = sphi 0, %s23
    %s27 = sphi 0, %s26
    %s43 = sphi 0, %s27
    %s47 = sphi 0, %s47
    %s49 = sphi 0, %s47
    %s50 = sphi 0, %s49
    %s64 = sphi 0, %s50
    %s68 = sphi 0, %s68
    %s70 = sphi 0, %s68
    %s71 = sphi 0, %s70
    %s85 = sphi 0, %s71
    %s89 = sphi 0, %s89
    %s91 = sphi 0, %s89
    %s92 = sphi 0, %s91
    %s106 = sphi 0, %s92
    %s110 = sphi 0, %s110
    %s112 = sphi 0, %s110
    %s113 = sphi 0, %s112
    %s127 = sphi 0, %s113
    %s131 = sphi 0, %s131
    %s133 = sphi 0, %s131
    %s134 = sphi 0, %s133
    %s148 = sphi 0, %s134
    %s152 = sphi 0, %s152
    %s154 = sphi 0, %s152
    %s155 = sphi 0, %s154
    %s169 = sphi 0, %s155
    %s175 = sphi 0, %s177
    %s178 = sphi 0, %s175
    %s179 = sphi 0, %s178
    %s195 = sphi 0, %s179
  $region4: #{fwd.3} parent=0 // loop_header_branch
    %16 = sbr.rel (%p14) target = $region8
  $region5: #{fwd.3} parent=0 // loop_body
    %s18 = ssub.s32 %s13, 1
    %s19 = ssub.s32 %s13, 2
    %s20 = sadd.s32 %s13, 1
    %s21 = ssub.s32 %s13, %s20
    %p22 = scmp.eq.s32.totalorder %s21, 0
    %s24 = sadd.s32 %s23, 1
    %s25 = scalar_select %p22, %s23, %s24
    %p28 = pneg %p22
    %p29 = scmp.eq.s32.totalorder %s13, 1
    %p30 = por %p28, %p29
    %p31 = scmp.ne.s32.totalorder %s23, %s26
    %p32 = scmp.eq.s32.totalorder %s13, 0
    %p33 = por %p31, %p32
    %p34 = scmp.ne.s32.totalorder %s23, %s26
    %p35 = scmp.eq.s32.totalorder %s18, 1
    %p36 = por %p34, %p35
    %p37 = scmp.ne.s32.totalorder %s26, %s27
    %p38 = scmp.eq.s32.totalorder %s18, 0
    %p39 = por %p37, %p38
    %p40 = scmp.ne.s32.totalorder %s26, %s27
    %p41 = scmp.eq.s32.totalorder %s19, 1
    %p42 = por %p40, %p41
    %p44 = scmp.ne.s32.totalorder %s27, %s43
    %p45 = scmp.eq.s32.totalorder %s19, 0
    %p46 = por %p44, %p45
    %s48 = sadd.s32 %s47, 1
    %p51 = scmp.eq.s32.totalorder %s13, 1
    %p52 = scmp.ne.s32.totalorder %s47, %s49
    %p53 = scmp.eq.s32.totalorder %s13, 0
    %p54 = por %p52, %p53
    %p55 = scmp.ne.s32.totalorder %s47, %s49
    %p56 = scmp.eq.s32.totalorder %s18, 1
    %p57 = por %p55, %p56
    %p58 = scmp.ne.s32.totalorder %s49, %s50
    %p59 = scmp.eq.s32.totalorder %s18, 0
    %p60 = por %p58, %p59
    %p61 = scmp.ne.s32.totalorder %s49, %s50
    %p62 = scmp.eq.s32.totalorder %s19, 1
    %p63 = por %p61, %p62
    %p65 = scmp.ne.s32.totalorder %s50, %s64
    %p66 = scmp.eq.s32.totalorder %s19, 0
    %p67 = por %p65, %p66
    %s69 = sadd.s32 %s68, 1
    %p72 = scmp.eq.s32.totalorder %s13, 1
    %p73 = scmp.ne.s32.totalorder %s68, %s70
    %p74 = scmp.eq.s32.totalorder %s13, 0
    %p75 = por %p73, %p74
    %p76 = scmp.ne.s32.totalorder %s68, %s70
    %p77 = scmp.eq.s32.totalorder %s18, 1
    %p78 = por %p76, %p77
    %p79 = scmp.ne.s32.totalorder %s70, %s71
    %p80 = scmp.eq.s32.totalorder %s18, 0
    %p81 = por %p79, %p80
    %p82 = scmp.ne.s32.totalorder %s70, %s71
    %p83 = scmp.eq.s32.totalorder %s19, 1
    %p84 = por %p82, %p83
    %p86 = scmp.ne.s32.totalorder %s71, %s85
    %p87 = scmp.eq.s32.totalorder %s19, 0
    %p88 = por %p86, %p87
    %s90 = sadd.s32 %s89, 1
    %p93 = scmp.eq.s32.totalorder %s13, 1
    %p94 = scmp.ne.s32.totalorder %s89, %s91
    %p95 = scmp.eq.s32.totalorder %s13, 0
    %p96 = por %p94, %p95
    %p97 = scmp.ne.s32.totalorder %s89, %s91
    %p98 = scmp.eq.s32.totalorder %s18, 1
    %p99 = por %p97, %p98
    %p100 = scmp.ne.s32.totalorder %s91, %s92
    %p101 = scmp.eq.s32.totalorder %s18, 0
    %p102 = por %p100, %p101
    %p103 = scmp.ne.s32.totalorder %s91, %s92
    %p104 = scmp.eq.s32.totalorder %s19, 1
    %p105 = por %p103, %p104
    %p107 = scmp.ne.s32.totalorder %s92, %s106
    %p108 = scmp.eq.s32.totalorder %s19, 0
    %p109 = por %p107, %p108
    %s111 = sadd.s32 %s110, 1
    %p114 = scmp.eq.s32.totalorder %s13, 1
    %p115 = scmp.ne.s32.totalorder %s110, %s112
    %p116 = scmp.eq.s32.totalorder %s13, 0
    %p117 = por %p115, %p116
    %p118 = scmp.ne.s32.totalorder %s110, %s112
    %p119 = scmp.eq.s32.totalorder %s18, 1
    %p120 = por %p118, %p119
    %p121 = scmp.ne.s32.totalorder %s112, %s113
    %p122 = scmp.eq.s32.totalorder %s18, 0
    %p123 = por %p121, %p122
    %p124 = scmp.ne.s32.totalorder %s112, %s113
    %p125 = scmp.eq.s32.totalorder %s19, 1
    %p126 = por %p124, %p125
    %p128 = scmp.ne.s32.totalorder %s113, %s127
    %p129 = scmp.eq.s32.totalorder %s19, 0
    %p130 = por %p128, %p129
    %s132 = sadd.s32 %s131, 1
    %p135 = scmp.eq.s32.totalorder %s13, 1
    %p136 = scmp.ne.s32.totalorder %s131, %s133
    %p137 = scmp.eq.s32.totalorder %s13, 0
    %p138 = por %p136, %p137
    %p139 = scmp.ne.s32.totalorder %s131, %s133
    %p140 = scmp.eq.s32.totalorder %s18, 1
    %p141 = por %p139, %p140
    %p142 = scmp.ne.s32.totalorder %s133, %s134
    %p143 = scmp.eq.s32.totalorder %s18, 0
    %p144 = por %p142, %p143
    %p145 = scmp.ne.s32.totalorder %s133, %s134
    %p146 = scmp.eq.s32.totalorder %s19, 1
    %p147 = por %p145, %p146
    %p149 = scmp.ne.s32.totalorder %s134, %s148
    %p150 = scmp.eq.s32.totalorder %s19, 0
    %p151 = por %p149, %p150
    %s153 = sadd.s32 %s152, 1
    %p156 = scmp.eq.s32.totalorder %s13, 1
    %p157 = scmp.ne.s32.totalorder %s152, %s154
    %p158 = scmp.eq.s32.totalorder %s13, 0
    %p159 = por %p157, %p158
    %p160 = scmp.ne.s32.totalorder %s152, %s154
    %p161 = scmp.eq.s32.totalorder %s18, 1
    %p162 = por %p160, %p161
    %p163 = scmp.ne.s32.totalorder %s154, %s155
    %p164 = scmp.eq.s32.totalorder %s18, 0
    %p165 = por %p163, %p164
    %p166 = scmp.ne.s32.totalorder %s154, %s155
    %p167 = scmp.eq.s32.totalorder %s19, 1
    %p168 = por %p166, %p167
    %p170 = scmp.ne.s32.totalorder %s155, %s169
    %p171 = scmp.eq.s32.totalorder %s19, 0
    %p172 = por %p170, %p171
    %s173 = ssub.s32 %s13, %s20
    %p174 = scmp.eq.s32.totalorder %s173, 0
    %s176 = sadd.s32 %s175, 1
    %s177 = scalar_select %p174, %s175, %s176
    %p180 = pneg %p174
    %p181 = scmp.eq.s32.totalorder %s13, 1
    %p182 = por %p180, %p181
    %p183 = scmp.ne.s32.totalorder %s175, %s178
    %p184 = scmp.eq.s32.totalorder %s13, 0
    %p185 = por %p183, %p184
    %p186 = scmp.ne.s32.totalorder %s175, %s178
    %p187 = scmp.eq.s32.totalorder %s18, 1
    %p188 = por %p186, %p187
    %p189 = scmp.ne.s32.totalorder %s178, %s179
    %p190 = scmp.eq.s32.totalorder %s18, 0
    %p191 = por %p189, %p190
    %p192 = scmp.ne.s32.totalorder %s178, %s179
    %p193 = scmp.eq.s32.totalorder %s19, 1
    %p194 = por %p192, %p193
    %p196 = scmp.ne.s32.totalorder %s179, %s195
    %p197 = scmp.eq.s32.totalorder %s19, 0
    %p198 = por %p196, %p197
    %p199 = scmp.le.s32.totalorder 1, %s13
    %p200 = scmp.lt.s32.totalorder %s13, 3
    %p201 = pnand %p199, %p200
    %p202 = pneg %p201
    // Predicated region
    $region9: #{fwd.3} parent=5 // pred_check
      _
    $region10: #{fwd.3} parent=5 // pred_check_branch
      %204 = sbr.rel (%p201) target = $region12
    $region11: #{fwd.3} parent=5 // pred_region
      %s205 = ssub.s32 %s13, 1
      // Predicated region
      $region13: #{fwd.3} parent=11 // pred_check
        %p206 = pneg %p60
      $region14: #{fwd.3} parent=11 // pred_check_branch
        %208 = sbr.rel (%p206) target = $region16
      $region15: #{fwd.3} parent=11 // pred_region
        _
      $region16: #{fwd.3} parent=11 // pred_fallthru
        _
      // Predicated region
      $region17: #{fwd.3} parent=11 // pred_check
        %p209 = pneg %p81
      $region18: #{fwd.3} parent=11 // pred_check_branch
        %211 = sbr.rel (%p209) target = $region20
      $region19: #{fwd.3} parent=11 // pred_region
        _
      $region20: #{fwd.3} parent=11 // pred_fallthru
        _
      // Predicated region
      $region21: #{fwd.3} parent=11 // pred_check
        %p212 = pneg %p102
      $region22: #{fwd.3} parent=11 // pred_check_branch
        %214 = sbr.rel (%p212) target = $region24
      $region23: #{fwd.3} parent=11 // pred_region
        _
      $region24: #{fwd.3} parent=11 // pred_fallthru
        _
      // Predicated region
      $region25: #{fwd.3} parent=11 // pred_check
        %p215 = pneg %p123
      $region26: #{fwd.3} parent=11 // pred_check_branch
        %217 = sbr.rel (%p215) target = $region28
      $region27: #{fwd.3} parent=11 // pred_region
        _
      $region28: #{fwd.3} parent=11 // pred_fallthru
        _
      // Predicated region
      $region29: #{fwd.3} parent=11 // pred_check
        %p218 = pneg %p144
      $region30: #{fwd.3} parent=11 // pred_check_branch
        %220 = sbr.rel (%p218) target = $region32
      $region31: #{fwd.3} parent=11 // pred_region
        _
      $region32: #{fwd.3} parent=11 // pred_fallthru
        _
      // Predicated region
      $region33: #{fwd.3} parent=11 // pred_check
        %p221 = pneg %p165
      $region34: #{fwd.3} parent=11 // pred_check_branch
        %223 = sbr.rel (%p221) target = $region36
      $region35: #{fwd.3} parent=11 // pred_region
        _
      $region36: #{fwd.3} parent=11 // pred_fallthru
        _
    $region12: #{fwd.3} parent=5 // pred_fallthru
      _
    %p224 = scmp.lt.s32.totalorder %s13, 2
    // Predicated region
    $region37: #{fwd.3} parent=5 // pred_check
      %p225 = pneg %p224
    $region38: #{fwd.3} parent=5 // pred_check_branch
      %227 = sbr.rel (%p225) target = $region40
    $region39: #{fwd.3} parent=5 // pred_region
      // Predicated region
      $region41: #{fwd.3} parent=39 // pred_check
        %p228 = pneg %p33
      $region42: #{fwd.3} parent=39 // pred_check_branch
        %230 = sbr.rel (%p228) target = $region44
      $region43: #{fwd.3} parent=39 // pred_region
        %p231 = scmp.lt.s32.totalorder %s13, 1
        %s232 = scalar_select %p231, %s13, 1
        %s233 = smul.addr %s232, 20
        %s234 = smul.addr %s233, 8
        %s235 = scalar_lea.vmem %s0, %s234
      $region44: #{fwd.3} parent=39 // pred_fallthru
        _
    $region40: #{fwd.3} parent=5 // pred_fallthru
      _
    %p236 = scmp.le.s32.totalorder 1, %s13
    %p237 = scmp.lt.s32.totalorder %s13, 3
    %p238 = pnand %p236, %p237
    %p239 = pneg %p238
    // Predicated region
    $region45: #{fwd.3} parent=5 // pred_check
      _
    $region46: #{fwd.3} parent=5 // pred_check_branch
      %241 = sbr.rel (%p238) target = $region48
    $region47: #{fwd.3} parent=5 // pred_region
      %s242 = ssub.s32 %s13, 1
      %p243 = scmp.lt.s32.totalorder %s18, 1
      %s244 = scalar_select %p243, %s18, 1
      %s245 = smul.addr %s244, 20
      %s246 = smul.addr %s245, 8
      %s247 = scalar_lea.vmem %s0, %s246
      %p248 = pneg %p39
      %p249 = pneg %p36
      %p250 = pneg %p60
      %p251 = pneg %p57
      %p252 = pneg %p81
      %p253 = pneg %p78
      %p254 = pneg %p102
      %p255 = pneg %p99
      %p256 = pneg %p123
      %p257 = pneg %p120
      %p258 = pneg %p144
      %p259 = pneg %p141
      %p260 = pneg %p165
      %p261 = pneg %p162
      %p262 = pneg %p191
      %p263 = pneg %p188
      %s264 = smul.u32 8, %s18
      %p265 = scmp.lt.s32.totalorder %s264, 15
      %s266 = scalar_select %p265, %s264, 15
      %s267 = smul.addr %s266, 8
      %s268 = scalar_lea.vmem %s7, %s267
      %p269 = scmp.lt.s32.totalorder %s18, 1
      %s270 = scalar_select %p269, %s18, 1
      %s271 = smul.addr %s270, 20
      %s272 = smul.addr %s271, 8
      %s273 = scalar_lea.vmem %s0, %s272
      %s274 = smul.u32 8, %s18
      %p275 = scmp.lt.s32.totalorder %s274, 15
      %s276 = scalar_select %p275, %s274, 15
      %s277 = smul.addr %s276, 8
      %s278 = scalar_lea.vmem %s7, %s277
      %s279 = smul.u32 8, %s18
      %v281 = vld [vmem:[%s273] sm:$0xff]
      %v282 = vld [vmem:[%s273 + $0x10] sm:$0xff]
      %v283 = vld [vmem:[%s273 + $0x20] sm:$0xff]
      %v284 = vld [vmem:[%s273 + $0x30] sm:$0xff]
      %v285 = vld [vmem:[%s273 + $0x40] sm:$0xff]
      %v286 = vld [vmem:[%s273 + $0x50] sm:$0xff]
      %v287 = vld [vmem:[%s273 + $0x60] sm:$0xff]
      %v288 = vld [vmem:[%s273 + $0x70] sm:$0xff]
      %v289 = vpack.c.bf16 %v282, %v281
      %v290 = vpack.c.bf16 %v284, %v283
      %v291 = vpack.c.bf16 %v286, %v285
      %v292 = vpack.c.bf16 %v288, %v287
      %v293 = vld [vmem:[%s1] sm:$0xf]
      %v294 = vld [vmem:[%s1 + $0x4] sm:$0xf]
      %v295 = vld [vmem:[%s1 + $0x8] sm:$0xf]
      %v296 = vld [vmem:[%s1 + $0xc] sm:$0xf]
      %v297 = vld [vmem:[%s1 + $0x10] sm:$0xf]
      %v298 = vld [vmem:[%s1 + $0x14] sm:$0xf]
      %v299 = vld [vmem:[%s1 + $0x18] sm:$0xf]
      %v300 = vld [vmem:[%s1 + $0x1c] sm:$0xf]
      %v301 = vld [vmem:[%s1 + $0x20] sm:$0xf]
      %v302 = vld [vmem:[%s1 + $0x24] sm:$0xf]
      %v303 = vld [vmem:[%s1 + $0x28] sm:$0xf]
      %v304 = vld [vmem:[%s1 + $0x2c] sm:$0xf]
      %v305 = vld [vmem:[%s1 + $0x30] sm:$0xf]
      %v306 = vld [vmem:[%s1 + $0x34] sm:$0xf]
      %v307 = vld [vmem:[%s1 + $0x38] sm:$0xf]
      %v308 = vld [vmem:[%s1 + $0x3c] sm:$0xf]
      %v309 = vld [vmem:[%s273 + $0x1] sm:$0xff]
      %v310 = vld [vmem:[%s273 + $0x11] sm:$0xff]
      %v311 = vld [vmem:[%s273 + $0x21] sm:$0xff]
      %v312 = vld [vmem:[%s273 + $0x31] sm:$0xff]
      %v313 = vld [vmem:[%s273 + $0x41] sm:$0xff]
      %v314 = vld [vmem:[%s273 + $0x51] sm:$0xff]
      %v315 = vld [vmem:[%s273 + $0x61] sm:$0xff]
      %v316 = vld [vmem:[%s273 + $0x71] sm:$0xff]
      %v317 = vpack.c.bf16 %v310, %v309
      %v318 = vpack.c.bf16 %v312, %v311
      %v319 = vpack.c.bf16 %v314, %v313
      %v320 = vpack.c.bf16 %v316, %v315
      %s321 = scalar_lea.vmem %s1, 64
      %v322 = vld [vmem:[%s321] sm:$0xf]
      %v323 = vld [vmem:[%s321 + $0x4] sm:$0xf]
      %v324 = vld [vmem:[%s321 + $0x8] sm:$0xf]
      %v325 = vld [vmem:[%s321 + $0xc] sm:$0xf]
      %v326 = vld [vmem:[%s321 + $0x10] sm:$0xf]
      %v327 = vld [vmem:[%s321 + $0x14] sm:$0xf]
      %v328 = vld [vmem:[%s321 + $0x18] sm:$0xf]
      %v329 = vld [vmem:[%s321 + $0x1c] sm:$0xf]
      %v330 = vld [vmem:[%s321 + $0x20] sm:$0xf]
      %v331 = vld [vmem:[%s321 + $0x24] sm:$0xf]
      %v332 = vld [vmem:[%s321 + $0x28] sm:$0xf]
      %v333 = vld [vmem:[%s321 + $0x2c] sm:$0xf]
      %v334 = vld [vmem:[%s321 + $0x30] sm:$0xf]
      %v335 = vld [vmem:[%s321 + $0x34] sm:$0xf]
      %v336 = vld [vmem:[%s321 + $0x38] sm:$0xf]
      %v337 = vld [vmem:[%s321 + $0x3c] sm:$0xf]
      %v354 = vunpack.c.l.b16 %v322
      %v355 = vunpack.c.l.b16 %v323
      %v356 = vunpack.c.l.b16 %v324
      %v357 = vunpack.c.l.b16 %v325
      %v358 = vunpack.c.l.b16 %v326
      %v359 = vunpack.c.l.b16 %v327
      %v360 = vunpack.c.l.b16 %v328
      %v361 = vunpack.c.l.b16 %v329
      %v362 = vunpack.c.l.b16 %v330
      %v363 = vunpack.c.l.b16 %v331
      %v364 = vunpack.c.l.b16 %v332
      %v365 = vunpack.c.l.b16 %v333
      %v366 = vunpack.c.l.b16 %v334
      %v367 = vunpack.c.l.b16 %v335
      %v368 = vunpack.c.l.b16 %v336
      %v369 = vunpack.c.l.b16 %v337
      %v370 = vpack.c.b16 %v355, %v354
      %v371 = vpack.c.b16 %v357, %v356
      %v372 = vpack.c.b16 %v359, %v358
      %v373 = vpack.c.b16 %v361, %v360
      %v374 = vpack.c.b16 %v363, %v362
      %v375 = vpack.c.b16 %v365, %v364
      %v376 = vpack.c.b16 %v367, %v366
      %v377 = vpack.c.b16 %v369, %v368
      %386 = vmatprep.subr.bf16.mxu0 0
      %387 = vmatpush1.bf16.msra.mxu0 %v370
      %388 = vmatprep.subr.bf16.mxu0 0
      %389 = vmatpush1.bf16.msra.mxu0 %v371
      %390 = vmatprep.subr.bf16.mxu0 0
      %391 = vmatpush1.bf16.msra.mxu0 %v372
      %392 = vmatprep.subr.bf16.mxu0 0
      %393 = vmatpush1.bf16.msra.mxu0 %v373
      %394 = vmatprep.subr.bf16.mxu0 0
      %395 = vmatpush1.bf16.msra.mxu0 %v374
      %396 = vmatprep.subr.bf16.mxu0 0
      %397 = vmatpush1.bf16.msra.mxu0 %v375
      %398 = vmatprep.subr.bf16.mxu0 0
      %399 = vmatpush1.bf16.msra.mxu0 %v376
      %400 = vmatprep.subr.bf16.mxu0 0
      %401 = vmatpush1.bf16.msra.mxu0 %v377
      %402 = vmatprep.subr.bf16.mxu0 0
      %403 = vmatpush1.bf16.msra.mxu0 0
      %404 = vmatprep.subr.bf16.mxu0 0
      %405 = vmatpush1.bf16.msra.mxu0 0
      %406 = vmatprep.subr.bf16.mxu0 0
      %407 = vmatpush1.bf16.msra.mxu0 0
      %408 = vmatprep.subr.bf16.mxu0 0
      %409 = vmatpush1.bf16.msra.mxu0 0
      %410 = vmatprep.subr.bf16.mxu0 0
      %411 = vmatpush1.bf16.msra.mxu0 0
      %412 = vmatprep.subr.bf16.mxu0 0
      %413 = vmatpush1.bf16.msra.mxu0 0
      %414 = vmatprep.subr.bf16.mxu0 0
      %415 = vmatpush1.bf16.msra.mxu0 0
      %416 = vmatprep.subr.bf16.mxu0 0
      %417 = vmatpush1.bf16.msra.mxu0 0
      %418 = vmatprep.mubr.bf16.mxu0 0
      %419 = vmatmul.mubr.bf16.gmra.mrb[0].mxu0 %v317
      %v420 = vpop.f32.mrb[0].mxu0
      %v421 = vadd.f32 0.0, %v420
      %v422 = vpop.f32.mrb[0].mxu0
      %v423 = vpop.f32.mrb[0].mxu0
      %v424 = vadd.f32 0.0, %v423
      %v425 = vpop.f32.mrb[0].mxu0
      %426 = vmatprep.mubr.bf16.mxu0 0
      %427 = vmatmul.mubr.bf16.gmra.mrb[0].mxu0 %v318
      %v428 = vpop.f32.mrb[0].mxu0
      %v429 = vadd.f32 0.0, %v428
      %v430 = vpop.f32.mrb[0].mxu0
      %v431 = vpop.f32.mrb[0].mxu0
      %v432 = vadd.f32 0.0, %v431
      %v433 = vpop.f32.mrb[0].mxu0
      %434 = vmatprep.mubr.bf16.mxu0 0
      %435 = vmatmul.mubr.bf16.gmra.mrb[0].mxu0 %v319
      %v436 = vpop.f32.mrb[0].mxu0
      %v437 = vadd.f32 0.0, %v436
      %v438 = vpop.f32.mrb[0].mxu0
      %v439 = vpop.f32.mrb[0].mxu0
      %v440 = vadd.f32 0.0, %v439
      %v441 = vpop.f32.mrb[0].mxu0
      %442 = vmatprep.mubr.bf16.mxu0 0
      %443 = vmatmul.mubr.bf16.gmra.mrb[0].mxu0 %v320
      %v444 = vpop.f32.mrb[0].mxu0
      %v445 = vadd.f32 0.0, %v444
      %v446 = vpop.f32.mrb[0].mxu0
      %v447 = vpop.f32.mrb[0].mxu0
      %v448 = vadd.f32 0.0, %v447
      %v449 = vpop.f32.mrb[0].mxu0
      %450 = vdwg.mxu0
      %v467 = vunpack.c.l.b16 %v293
      %v468 = vunpack.c.l.b16 %v294
      %v469 = vunpack.c.l.b16 %v295
      %v470 = vunpack.c.l.b16 %v296
      %v471 = vunpack.c.l.b16 %v297
      %v472 = vunpack.c.l.b16 %v298
      %v473 = vunpack.c.l.b16 %v299
      %v474 = vunpack.c.l.b16 %v300
      %v475 = vunpack.c.l.b16 %v301
      %v476 = vunpack.c.l.b16 %v302
      %v477 = vunpack.c.l.b16 %v303
      %v478 = vunpack.c.l.b16 %v304
      %v479 = vunpack.c.l.b16 %v305
      %v480 = vunpack.c.l.b16 %v306
      %v481 = vunpack.c.l.b16 %v307
      %v482 = vunpack.c.l.b16 %v308
      %v483 = vpack.c.b16 %v468, %v467
      %v484 = vpack.c.b16 %v470, %v469
      %v485 = vpack.c.b16 %v472, %v471
      %v486 = vpack.c.b16 %v474, %v473
      %v487 = vpack.c.b16 %v476, %v475
      %v488 = vpack.c.b16 %v478, %v477
      %v489 = vpack.c.b16 %v480, %v479
      %v490 = vpack.c.b16 %v482, %v481
      %499 = vmatprep.subr.bf16.mxu0 0
      %500 = vmatpush1.bf16.msra.mxu0 %v483
      %501 = vmatprep.subr.bf16.mxu0 0
      %502 = vmatpush1.bf16.msra.mxu0 %v484
      %503 = vmatprep.subr.bf16.mxu0 0
      %504 = vmatpush1.bf16.msra.mxu0 %v485
      %505 = vmatprep.subr.bf16.mxu0 0
      %506 = vmatpush1.bf16.msra.mxu0 %v486
      %507 = vmatprep.subr.bf16.mxu0 0
      %508 = vmatpush1.bf16.msra.mxu0 %v487
      %509 = vmatprep.subr.bf16.mxu0 0
      %510 = vmatpush1.bf16.msra.mxu0 %v488
      %511 = vmatprep.subr.bf16.mxu0 0
      %512 = vmatpush1.bf16.msra.mxu0 %v489
      %513 = vmatprep.subr.bf16.mxu0 0
      %514 = vmatpush1.bf16.msra.mxu0 %v490
      %515 = vmatprep.subr.bf16.mxu0 0
      %516 = vmatpush1.bf16.msra.mxu0 0
      %517 = vmatprep.subr.bf16.mxu0 0
      %518 = vmatpush1.bf16.msra.mxu0 0
      %519 = vmatprep.subr.bf16.mxu0 0
      %520 = vmatpush1.bf16.msra.mxu0 0
      %521 = vmatprep.subr.bf16.mxu0 0
      %522 = vmatpush1.bf16.msra.mxu0 0
      %523 = vmatprep.subr.bf16.mxu0 0
      %524 = vmatpush1.bf16.msra.mxu0 0
      %525 = vmatprep.subr.bf16.mxu0 0
      %526 = vmatpush1.bf16.msra.mxu0 0
      %527 = vmatprep.subr.bf16.mxu0 0
      %528 = vmatpush1.bf16.msra.mxu0 0
      %529 = vmatprep.subr.bf16.mxu0 0
      %530 = vmatpush1.bf16.msra.mxu0 0
      %531 = vmatprep.mubr.bf16.mxu0 0
      %532 = vmatmul.mubr.bf16.gmra.mrb[0].mxu0 %v289
      %v533 = vpop.f32.mrb[0].mxu0
      %v534 = vadd.f32 %v421, %v533
      %v535 = vpop.f32.mrb[0].mxu0
      %v536 = vpop.f32.mrb[0].mxu0
      %v537 = vadd.f32 %v424, %v536
      %v538 = vpop.f32.mrb[0].mxu0
      %539 = vmatprep.mubr.bf16.mxu0 0
      %540 = vmatmul.mubr.bf16.gmra.mrb[0].mxu0 %v290
      %v541 = vpop.f32.mrb[0].mxu0
      %v542 = vadd.f32 %v429, %v541
      %v543 = vpop.f32.mrb[0].mxu0
      %v544 = vpop.f32.mrb[0].mxu0
      %v545 = vadd.f32 %v432, %v544
      %v546 = vpop.f32.mrb[0].mxu0
      %547 = vmatprep.mubr.bf16.mxu0 0
      %548 = vmatmul.mubr.bf16.gmra.mrb[0].mxu0 %v291
      %v549 = vpop.f32.mrb[0].mxu0
      %v550 = vadd.f32 %v437, %v549
      %v551 = vpop.f32.mrb[0].mxu0
      %v552 = vpop.f32.mrb[0].mxu0
      %v553 = vadd.f32 %v440, %v552
      %v554 = vpop.f32.mrb[0].mxu0
      %555 = vmatprep.mubr.bf16.mxu0 0
      %556 = vmatmul.mubr.bf16.gmra.mrb[0].mxu0 %v292
      %v557 = vpop.f32.mrb[0].mxu0
      %v558 = vadd.f32 %v445, %v557
      %v559 = vpop.f32.mrb[0].mxu0
      %v560 = vpop.f32.mrb[0].mxu0
      %v561 = vadd.f32 %v448, %v560
      %v562 = vpop.f32.mrb[0].mxu0
      %563 = vdwg.mxu0
      %v564 = vld [vmem:[%s273 + $0x2] sm:$0xff]
      %v565 = vld [vmem:[%s273 + $0x12] sm:$0xff]
      %v566 = vld [vmem:[%s273 + $0x22] sm:$0xff]
      %v567 = vld [vmem:[%s273 + $0x32] sm:$0xff]
      %v568 = vld [vmem:[%s273 + $0x42] sm:$0xff]
      %v569 = vld [vmem:[%s273 + $0x52] sm:$0xff]
      %v570 = vld [vmem:[%s273 + $0x62] sm:$0xff]
      %v571 = vld [vmem:[%s273 + $0x72] sm:$0xff]
      %v572 = vpack.c.bf16 %v565, %v564
      %v573 = vpack.c.bf16 %v567, %v566
      %v574 = vpack.c.bf16 %v569, %v568
      %v575 = vpack.c.bf16 %v571, %v570
      %s576 = scalar_lea.vmem %s1, 128
      %v577 = vld [vmem:[%s576] sm:$0xf]
      %v578 = vld [vmem:[%s576 + $0x4] sm:$0xf]
      %v579 = vld [vmem:[%s576 + $0x8] sm:$0xf]
      %v580 = vld [vmem:[%s576 + $0xc] sm:$0xf]
      %v581 = vld [vmem:[%s576 + $0x10] sm:$0xf]
      %v582 = vld [vmem:[%s576 + $0x14] sm:$0xf]
      %v583 = vld [vmem:[%s576 + $0x18] sm:$0xf]
      %v584 = vld [vmem:[%s576 + $0x1c] sm:$0xf]
      %v585 = vld [vmem:[%s576 + $0x20] sm:$0xf]
      %v586 = vld [vmem:[%s576 + $0x24] sm:$0xf]
      %v587 = vld [vmem:[%s576 + $0x28] sm:$0xf]
      %v588 = vld [vmem:[%s576 + $0x2c] sm:$0xf]
      %v589 = vld [vmem:[%s576 + $0x30] sm:$0xf]
      %v590 = vld [vmem:[%s576 + $0x34] sm:$0xf]
      %v591 = vld [vmem:[%s576 + $0x38] sm:$0xf]
      %v592 = vld [vmem:[%s576 + $0x3c] sm:$0xf]
      %v609 = vunpack.c.l.b16 %v577
      %v610 = vunpack.c.l.b16 %v578
      %v611 = vunpack.c.l.b16 %v579
      %v612 = vunpack.c.l.b16 %v580
      %v613 = vunpack.c.l.b16 %v581
      %v614 = vunpack.c.l.b16 %v582
      %v615 = vunpack.c.l.b16 %v583
      %v616 = vunpack.c.l.b16 %v584
      %v617 = vunpack.c.l.b16 %v585
      %v618 = vunpack.c.l.b16 %v586
      %v619 = vunpack.c.l.b16 %v587
      %v620 = vunpack.c.l.b16 %v588
      %v621 = vunpack.c.l.b16 %v589
      %v622 = vunpack.c.l.b16 %v590
      %v623 = vunpack.c.l.b16 %v591
      %v624 = vunpack.c.l.b16 %v592
      %v625 = vpack.c.b16 %v610, %v609
      %v626 = vpack.c.b16 %v612, %v611
      %v627 = vpack.c.b16 %v614, %v613
      %v628 = vpack.c.b16 %v616, %v615
      %v629 = vpack.c.b16 %v618, %v617
      %v630 = vpack.c.b16 %v620, %v619
      %v631 = vpack.c.b16 %v622, %v621
      %v632 = vpack.c.b16 %v624, %v623
      %641 = vmatprep.subr.bf16.mxu0 0
      %642 = vmatpush1.bf16.msra.mxu0 %v625
      %643 = vmatprep.subr.bf16.mxu0 0
      %644 = vmatpush1.bf16.msra.mxu0 %v626
      %645 = vmatprep.subr.bf16.mxu0 0
      %646 = vmatpush1.bf16.msra.mxu0 %v627
      %647 = vmatprep.subr.bf16.mxu0 0
      %648 = vmatpush1.bf16.msra.mxu0 %v628
      %649 = vmatprep.subr.bf16.mxu0 0
      %650 = vmatpush1.bf16.msra.mxu0 %v629
      %651 = vmatprep.subr.bf16.mxu0 0
      %652 = vmatpush1.bf16.msra.mxu0 %v630
      %653 = vmatprep.subr.bf16.mxu0 0
      %654 = vmatpush1.bf16.msra.mxu0 %v631
      %655 = vmatprep.subr.bf16.mxu0 0
      %656 = vmatpush1.bf16.msra.mxu0 %v632
      %657 = vmatprep.subr.bf16.mxu0 0
      %658 = vmatpush1.bf16.msra.mxu0 0
      %659 = vmatprep.subr.bf16.mxu0 0
      %660 = vmatpush1.bf16.msra.mxu0 0
      %661 = vmatprep.subr.bf16.mxu0 0
      %662 = vmatpush1.bf16.msra.mxu0 0
      %663 = vmatprep.subr.bf16.mxu0 0
      %664 = vmatpush1.bf16.msra.mxu0 0
      %665 = vmatprep.subr.bf16.mxu0 0
      %666 = vmatpush1.bf16.msra.mxu0 0
      %667 = vmatprep.subr.bf16.mxu0 0
      %668 = vmatpush1.bf16.msra.mxu0 0
      %669 = vmatprep.subr.bf16.mxu0 0
      %670 = vmatpush1.bf16.msra.mxu0 0
      %671 = vmatprep.subr.bf16.mxu0 0
      %672 = vmatpush1.bf16.msra.mxu0 0
      %673 = vmatprep.mubr.bf16.mxu0 0
      %674 = vmatmul.mubr.bf16.gmra.mrb[0].mxu0 %v572
      %v675 = vpop.f32.mrb[0].mxu0
      %v676 = vadd.f32 0.0, %v675
      %v677 = vpop.f32.mrb[0].mxu0
      %v678 = vpop.f32.mrb[0].mxu0
      %v679 = vadd.f32 0.0, %v678
      %v680 = vpop.f32.mrb[0].mxu0
      %681 = vmatprep.mubr.bf16.mxu0 0
      %682 = vmatmul.mubr.bf16.gmra.mrb[0].mxu0 %v573
      %v683 = vpop.f32.mrb[0].mxu0
      %v684 = vadd.f32 0.0, %v683
      %v685 = vpop.f32.mrb[0].mxu0
      %v686 = vpop.f32.mrb[0].mxu0
      %v687 = vadd.f32 0.0, %v686
      %v688 = vpop.f32.mrb[0].mxu0
      %689 = vmatprep.mubr.bf16.mxu0 0
      %690 = vmatmul.mubr.bf16.gmra.mrb[0].mxu0 %v574
      %v691 = vpop.f32.mrb[0].mxu0
      %v692 = vadd.f32 0.0, %v691
      %v693 = vpop.f32.mrb[0].mxu0
      %v694 = vpop.f32.mrb[0].mxu0
      %v695 = vadd.f32 0.0, %v694
      %v696 = vpop.f32.mrb[0].mxu0
      %697 = vmatprep.mubr.bf16.mxu0 0
      %698 = vmatmul.mubr.bf16.gmra.mrb[0].mxu0 %v575
      %v699 = vpop.f32.mrb[0].mxu0
      %v700 = vadd.f32 0.0, %v699
      %v701 = vpop.f32.mrb[0].mxu0
      %v702 = vpop.f32.mrb[0].mxu0
      %v703 = vadd.f32 0.0, %v702
      %v704 = vpop.f32.mrb[0].mxu0
      %705 = vdwg.mxu0
      %v706 = vadd.f32 %v534, %v676
      %v707 = vadd.f32 %v537, %v679
      %v708 = vadd.f32 %v542, %v684
      %v709 = vadd.f32 %v545, %v687
      %v710 = vadd.f32 %v550, %v692
      %v711 = vadd.f32 %v553, %v695
      %v712 = vadd.f32 %v558, %v700
      %v713 = vadd.f32 %v561, %v703
      %s714 = scalar_lea.vmem %s273, 16
      %v715 = vld [vmem:[%s714] sm:$0xff]
      %v716 = vld [vmem:[%s714 + $0x10] sm:$0xff]
      %v717 = vld [vmem:[%s714 + $0x20] sm:$0xff]
      %v718 = vld [vmem:[%s714 + $0x30] sm:$0xff]
      %v719 = vld [vmem:[%s714 + $0x40] sm:$0xff]
      %v720 = vld [vmem:[%s714 + $0x50] sm:$0xff]
      %v721 = vld [vmem:[%s714 + $0x60] sm:$0xff]
      %v722 = vld [vmem:[%s714 + $0x70] sm:$0xff]
      %v723 = vpack.c.bf16 %v716, %v715
      %v724 = vpack.c.bf16 %v718, %v717
      %v725 = vpack.c.bf16 %v720, %v719
      %v726 = vpack.c.bf16 %v722, %v721
      %s727 = scalar_lea.vmem %s1, 192
      %v728 = vld [vmem:[%s727] sm:$0xf]
      %v729 = vld [vmem:[%s727 + $0x4] sm:$0xf]
      %v730 = vld [vmem:[%s727 + $0x8] sm:$0xf]
      %v731 = vld [vmem:[%s727 + $0xc] sm:$0xf]
      %v732 = vld [vmem:[%s727 + $0x10] sm:$0xf]
      %v733 = vld [vmem:[%s727 + $0x14] sm:$0xf]
      %v734 = vld [vmem:[%s727 + $0x18] sm:$0xf]
      %v735 = vld [vmem:[%s727 + $0x1c] sm:$0xf]
      %v736 = vld [vmem:[%s727 + $0x20] sm:$0xf]
      %v737 = vld [vmem:[%s727 + $0x24] sm:$0xf]
      %v738 = vld [vmem:[%s727 + $0x28] sm:$0xf]
      %v739 = vld [vmem:[%s727 + $0x2c] sm:$0xf]
      %v740 = vld [vmem:[%s727 + $0x30] sm:$0xf]
      %v741 = vld [vmem:[%s727 + $0x34] sm:$0xf]
      %v742 = vld [vmem:[%s727 + $0x38] sm:$0xf]
      %v743 = vld [vmem:[%s727 + $0x3c] sm:$0xf]
      %v760 = vunpack.c.l.b16 %v728
      %v761 = vunpack.c.l.b16 %v729
      %v762 = vunpack.c.l.b16 %v730
      %v763 = vunpack.c.l.b16 %v731
      %v764 = vunpack.c.l.b16 %v732
      %v765 = vunpack.c.l.b16 %v733
      %v766 = vunpack.c.l.b16 %v734
      %v767 = vunpack.c.l.b16 %v735
      %v768 = vunpack.c.l.b16 %v736
      %v769 = vunpack.c.l.b16 %v737
      %v770 = vunpack.c.l.b16 %v738
      %v771 = vunpack.c.l.b16 %v739
      %v772 = vunpack.c.l.b16 %v740
      %v773 = vunpack.c.l.b16 %v741
      %v774 = vunpack.c.l.b16 %v742
      %v775 = vunpack.c.l.b16 %v743
      %v776 = vpack.c.b16 %v761, %v760
      %v777 = vpack.c.b16 %v763, %v762
      %v778 = vpack.c.b16 %v765, %v764
      %v779 = vpack.c.b16 %v767, %v766
      %v780 = vpack.c.b16 %v769, %v768
      %v781 = vpack.c.b16 %v771, %v770
      %v782 = vpack.c.b16 %v773, %v772
      %v783 = vpack.c.b16 %v775, %v774
      %792 = vmatprep.subr.bf16.mxu0 0
      %793 = vmatpush1.bf16.msra.mxu0 %v776
      %794 = vmatprep.subr.bf16.mxu0 0
      %795 = vmatpush1.bf16.msra.mxu0 %v777
      %796 = vmatprep.subr.bf16.mxu0 0
      %797 = vmatpush1.bf16.msra.mxu0 %v778
      %798 = vmatprep.subr.bf16.mxu0 0
      %799 = vmatpush1.bf16.msra.mxu0 %v779
      %800 = vmatprep.subr.bf16.mxu0 0
      %801 = vmatpush1.bf16.msra.mxu0 %v780
      %802 = vmatprep.subr.bf16.mxu0 0
      %803 = vmatpush1.bf16.msra.mxu0 %v781
      %804 = vmatprep.subr.bf16.mxu0 0
      %805 = vmatpush1.bf16.msra.mxu0 %v782
      %806 = vmatprep.subr.bf16.mxu0 0
      %807 = vmatpush1.bf16.msra.mxu0 %v783
      %808 = vmatprep.subr.bf16.mxu0 0
      %809 = vmatpush1.bf16.msra.mxu0 0
      %810 = vmatprep.subr.bf16.mxu0 0
      %811 = vmatpush1.bf16.msra.mxu0 0
      %812 = vmatprep.subr.bf16.mxu0 0
      %813 = vmatpush1.bf16.msra.mxu0 0
      %814 = vmatprep.subr.bf16.mxu0 0
      %815 = vmatpush1.bf16.msra.mxu0 0
      %816 = vmatprep.subr.bf16.mxu0 0
      %817 = vmatpush1.bf16.msra.mxu0 0
      %818 = vmatprep.subr.bf16.mxu0 0
      %819 = vmatpush1.bf16.msra.mxu0 0
      %820 = vmatprep.subr.bf16.mxu0 0
      %821 = vmatpush1.bf16.msra.mxu0 0
      %822 = vmatprep.subr.bf16.mxu0 0
      %823 = vmatpush1.bf16.msra.mxu0 0
      %824 = vmatprep.mubr.bf16.mxu0 0
      %825 = vmatmul.mubr.bf16.gmra.mrb[0].mxu0 %v723
      %v826 = vpop.f32.mrb[0].mxu0
      %v827 = vadd.f32 0.0, %v826
      %v828 = vpop.f32.mrb[0].mxu0
      %v829 = vpop.f32.mrb[0].mxu0
      %v830 = vadd.f32 0.0, %v829
      %v831 = vpop.f32.mrb[0].mxu0
      %832 = vmatprep.mubr.bf16.mxu0 0
      %833 = vmatmul.mubr.bf16.gmra.mrb[0].mxu0 %v724
      %v834 = vpop.f32.mrb[0].mxu0
      %v835 = vadd.f32 0.0, %v834
      %v836 = vpop.f32.mrb[0].mxu0
      %v837 = vpop.f32.mrb[0].mxu0
      %v838 = vadd.f32 0.0, %v837
      %v839 = vpop.f32.mrb[0].mxu0
      %840 = vmatprep.mubr.bf16.mxu0 0
      %841 = vmatmul.mubr.bf16.gmra.mrb[0].mxu0 %v725
      %v842 = vpop.f32.mrb[0].mxu0
      %v843 = vadd.f32 0.0, %v842
      %v844 = vpop.f32.mrb[0].mxu0
      %v845 = vpop.f32.mrb[0].mxu0
      %v846 = vadd.f32 0.0, %v845
      %v847 = vpop.f32.mrb[0].mxu0
      %848 = vmatprep.mubr.bf16.mxu0 0
      %849 = vmatmul.mubr.bf16.gmra.mrb[0].mxu0 %v726
      %v850 = vpop.f32.mrb[0].mxu0
      %v851 = vadd.f32 0.0, %v850
      %v852 = vpop.f32.mrb[0].mxu0
      %v853 = vpop.f32.mrb[0].mxu0
      %v854 = vadd.f32 0.0, %v853
      %v855 = vpop.f32.mrb[0].mxu0
      %856 = vdwg.mxu0
      %v857 = vadd.f32 %v706, %v827
      %v858 = vadd.f32 %v707, %v830
      %v859 = vadd.f32 %v708, %v835
      %v860 = vadd.f32 %v709, %v838
      %v861 = vadd.f32 %v710, %v843
      %v862 = vadd.f32 %v711, %v846
      %v863 = vadd.f32 %v712, %v851
      %v864 = vadd.f32 %v713, %v854
      %v865 = vld [vmem:[%s714 + $0x1] sm:$0xff]
      %v866 = vld [vmem:[%s714 + $0x11] sm:$0xff]
      %v867 = vld [vmem:[%s714 + $0x21] sm:$0xff]
      %v868 = vld [vmem:[%s714 + $0x31] sm:$0xff]
      %v869 = vld [vmem:[%s714 + $0x41] sm:$0xff]
      %v870 = vld [vmem:[%s714 + $0x51] sm:$0xff]
      %v871 = vld [vmem:[%s714 + $0x61] sm:$0xff]
      %v872 = vld [vmem:[%s714 + $0x71] sm:$0xff]
      %v873 = vpack.c.bf16 %v866, %v865
      %v874 = vpack.c.bf16 %v868, %v867
      %v875 = vpack.c.bf16 %v870, %v869
      %v876 = vpack.c.bf16 %v872, %v871
      %s877 = scalar_lea.vmem %s1, 256
      %v878 = vld [vmem:[%s877] sm:$0xf]
      %v879 = vld [vmem:[%s877 + $0x4] sm:$0xf]
      %v880 = vld [vmem:[%s877 + $0x8] sm:$0xf]
      %v881 = vld [vmem:[%s877 + $0xc] sm:$0xf]
      %v882 = vld [vmem:[%s877 + $0x10] sm:$0xf]
      %v883 = vld [vmem:[%s877 + $0x14] sm:$0xf]
      %v884 = vld [vmem:[%s877 + $0x18] sm:$0xf]
      %v885 = vld [vmem:[%s877 + $0x1c] sm:$0xf]
      %v886 = vld [vmem:[%s877 + $0x20] sm:$0xf]
      %v887 = vld [vmem:[%s877 + $0x24] sm:$0xf]
      %v888 = vld [vmem:[%s877 + $0x28] sm:$0xf]
      %v889 = vld [vmem:[%s877 + $0x2c] sm:$0xf]
      %v890 = vld [vmem:[%s877 + $0x30] sm:$0xf]
      %v891 = vld [vmem:[%s877 + $0x34] sm:$0xf]
      %v892 = vld [vmem:[%s877 + $0x38] sm:$0xf]
      %v893 = vld [vmem:[%s877 + $0x3c] sm:$0xf]
      %v910 = vunpack.c.l.b16 %v878
      %v911 = vunpack.c.l.b16 %v879
      %v912 = vunpack.c.l.b16 %v880
      %v913 = vunpack.c.l.b16 %v881
      %v914 = vunpack.c.l.b16 %v882
      %v915 = vunpack.c.l.b16 %v883
      %v916 = vunpack.c.l.b16 %v884
      %v917 = vunpack.c.l.b16 %v885
      %v918 = vunpack.c.l.b16 %v886
      %v919 = vunpack.c.l.b16 %v887
      %v920 = vunpack.c.l.b16 %v888
      %v921 = vunpack.c.l.b16 %v889
      %v922 = vunpack.c.l.b16 %v890
      %v923 = vunpack.c.l.b16 %v891
      %v924 = vunpack.c.l.b16 %v892
      %v925 = vunpack.c.l.b16 %v893
      %v926 = vpack.c.b16 %v911, %v910
      %v927 = vpack.c.b16 %v913, %v912
      %v928 = vpack.c.b16 %v915, %v914
      %v929 = vpack.c.b16 %v917, %v916
      %v930 = vpack.c.b16 %v919, %v918
      %v931 = vpack.c.b16 %v921, %v920
      %v932 = vpack.c.b16 %v923, %v922
      %v933 = vpack.c.b16 %v925, %v924
      %942 = vmatprep.subr.bf16.mxu0 0
      %943 = vmatpush1.bf16.msra.mxu0 %v926
      %944 = vmatprep.subr.bf16.mxu0 0
      %945 = vmatpush1.bf16.msra.mxu0 %v927
      %946 = vmatprep.subr.bf16.mxu0 0
      %947 = vmatpush1.bf16.msra.mxu0 %v928
      %948 = vmatprep.subr.bf16.mxu0 0
      %949 = vmatpush1.bf16.msra.mxu0 %v929
      %950 = vmatprep.subr.bf16.mxu0 0
      %951 = vmatpush1.bf16.msra.mxu0 %v930
      %952 = vmatprep.subr.bf16.mxu0 0
      %953 = vmatpush1.bf16.msra.mxu0 %v931
      %954 = vmatprep.subr.bf16.mxu0 0
      %955 = vmatpush1.bf16.msra.mxu0 %v932
      %956 = vmatprep.subr.bf16.mxu0 0
      %957 = vmatpush1.bf16.msra.mxu0 %v933
      %958 = vmatprep.subr.bf16.mxu0 0
      %959 = vmatpush1.bf16.msra.mxu0 0
      %960 = vmatprep.subr.bf16.mxu0 0
      %961 = vmatpush1.bf16.msra.mxu0 0
      %962 = vmatprep.subr.bf16.mxu0 0
      %963 = vmatpush1.bf16.msra.mxu0 0
      %964 = vmatprep.subr.bf16.mxu0 0
      %965 = vmatpush1.bf16.msra.mxu0 0
      %966 = vmatprep.subr.bf16.mxu0 0
      %967 = vmatpush1.bf16.msra.mxu0 0
      %968 = vmatprep.subr.bf16.mxu0 0
      %969 = vmatpush1.bf16.msra.mxu0 0
      %970 = vmatprep.subr.bf16.mxu0 0
      %971 = vmatpush1.bf16.msra.mxu0 0
      %972 = vmatprep.subr.bf16.mxu0 0
      %973 = vmatpush1.bf16.msra.mxu0 0
      %974 = vmatprep.mubr.bf16.mxu0 0
      %975 = vmatmul.mubr.bf16.gmra.mrb[0].mxu0 %v873
      %v976 = vpop.f32.mrb[0].mxu0
      %v977 = vadd.f32 0.0, %v976
      %v978 = vpop.f32.mrb[0].mxu0
      %v979 = vpop.f32.mrb[0].mxu0
      %v980 = vadd.f32 0.0, %v979
      %v981 = vpop.f32.mrb[0].mxu0
      %982 = vmatprep.mubr.bf16.mxu0 0
      %983 = vmatmul.mubr.bf16.gmra.mrb[0].mxu0 %v874
      %v984 = vpop.f32.mrb[0].mxu0
      %v985 = vadd.f32 0.0, %v984
      %v986 = vpop.f32.mrb[0].mxu0
      %v987 = vpop.f32.mrb[0].mxu0
      %v988 = vadd.f32 0.0, %v987
      %v989 = vpop.f32.mrb[0].mxu0
      %990 = vmatprep.mubr.bf16.mxu0 0
      %991 = vmatmul.mubr.bf16.gmra.mrb[0].mxu0 %v875
      %v992 = vpop.f32.mrb[0].mxu0
      %v993 = vadd.f32 0.0, %v992
      %v994 = vpop.f32.mrb[0].mxu0
      %v995 = vpop.f32.mrb[0].mxu0
      %v996 = vadd.f32 0.0, %v995
      %v997 = vpop.f32.mrb[0].mxu0
      %998 = vmatprep.mubr.bf16.mxu0 0
      %999 = vmatmul.mubr.bf16.gmra.mrb[0].mxu0 %v876
      %v1000 = vpop.f32.mrb[0].mxu0
      %v1001 = vadd.f32 0.0, %v1000
      %v1002 = vpop.f32.mrb[0].mxu0
      %v1003 = vpop.f32.mrb[0].mxu0
      %v1004 = vadd.f32 0.0, %v1003
      %v1005 = vpop.f32.mrb[0].mxu0
      %1006 = vdwg.mxu0
      %v1007 = vadd.f32 %v857, %v977
      %v1008 = vadd.f32 %v858, %v980
      %v1009 = vadd.f32 %v859, %v985
      %v1010 = vadd.f32 %v860, %v988
      %v1011 = vadd.f32 %v861, %v993
      %v1012 = vadd.f32 %v862, %v996
      %v1013 = vadd.f32 %v863, %v1001
      %v1014 = vadd.f32 %v864, %v1004
      %v1015 = vld [vmem:[%s714 + $0x2] sm:$0xff]
      %v1016 = vld [vmem:[%s714 + $0x12] sm:$0xff]
      %v1017 = vld [vmem:[%s714 + $0x22] sm:$0xff]
      %v1018 = vld [vmem:[%s714 + $0x32] sm:$0xff]
      %v1019 = vld [vmem:[%s714 + $0x42] sm:$0xff]
      %v1020 = vld [vmem:[%s714 + $0x52] sm:$0xff]
      %v1021 = vld [vmem:[%s714 + $0x62] sm:$0xff]
      %v1022 = vld [vmem:[%s714 + $0x72] sm:$0xff]
      %v1023 = vpack.c.bf16 %v1016, %v1015
      %v1024 = vpack.c.bf16 %v1018, %v1017
      %v1025 = vpack.c.bf16 %v1020, %v1019
      %v1026 = vpack.c.bf16 %v1022, %v1021
      %s1027 = scalar_lea.vmem %s1, 320
      %v1028 = vld [vmem:[%s1027] sm:$0xf]
      %v1029 = vld [vmem:[%s1027 + $0x4] sm:$0xf]
      %v1030 = vld [vmem:[%s1027 + $0x8] sm:$0xf]
      %v1031 = vld [vmem:[%s1027 + $0xc] sm:$0xf]
      %v1032 = vld [vmem:[%s1027 + $0x10] sm:$0xf]
      %v1033 = vld [vmem:[%s1027 + $0x14] sm:$0xf]
      %v1034 = vld [vmem:[%s1027 + $0x18] sm:$0xf]
      %v1035 = vld [vmem:[%s1027 + $0x1c] sm:$0xf]
      %v1036 = vld [vmem:[%s1027 + $0x20] sm:$0xf]
      %v1037 = vld [vmem:[%s1027 + $0x24] sm:$0xf]
      %v1038 = vld [vmem:[%s1027 + $0x28] sm:$0xf]
      %v1039 = vld [vmem:[%s1027 + $0x2c] sm:$0xf]
      %v1040 = vld [vmem:[%s1027 + $0x30] sm:$0xf]
      %v1041 = vld [vmem:[%s1027 + $0x34] sm:$0xf]
      %v1042 = vld [vmem:[%s1027 + $0x38] sm:$0xf]
      %v1043 = vld [vmem:[%s1027 + $0x3c] sm:$0xf]
      %v1060 = vunpack.c.l.b16 %v1028
      %v1061 = vunpack.c.l.b16 %v1029
      %v1062 = vunpack.c.l.b16 %v1030
      %v1063 = vunpack.c.l.b16 %v1031
      %v1064 = vunpack.c.l.b16 %v1032
      %v1065 = vunpack.c.l.b16 %v1033
      %v1066 = vunpack.c.l.b16 %v1034
      %v1067 = vunpack.c.l.b16 %v1035
      %v1068 = vunpack.c.l.b16 %v1036
      %v1069 = vunpack.c.l.b16 %v1037
      %v1070 = vunpack.c.l.b16 %v1038
      %v1071 = vunpack.c.l.b16 %v1039
      %v1072 = vunpack.c.l.b16 %v1040
      %v1073 = vunpack.c.l.b16 %v1041
      %v1074 = vunpack.c.l.b16 %v1042
      %v1075 = vunpack.c.l.b16 %v1043
      %v1076 = vpack.c.b16 %v1061, %v1060
      %v1077 = vpack.c.b16 %v1063, %v1062
      %v1078 = vpack.c.b16 %v1065, %v1064
      %v1079 = vpack.c.b16 %v1067, %v1066
      %v1080 = vpack.c.b16 %v1069, %v1068
      %v1081 = vpack.c.b16 %v1071, %v1070
      %v1082 = vpack.c.b16 %v1073, %v1072
      %v1083 = vpack.c.b16 %v1075, %v1074
      %1092 = vmatprep.subr.bf16.mxu0 0
      %1093 = vmatpush1.bf16.msra.mxu0 %v1076
      %1094 = vmatprep.subr.bf16.mxu0 0
      %1095 = vmatpush1.bf16.msra.mxu0 %v1077
      %1096 = vmatprep.subr.bf16.mxu0 0
      %1097 = vmatpush1.bf16.msra.mxu0 %v1078
      %1098 = vmatprep.subr.bf16.mxu0 0
      %1099 = vmatpush1.bf16.msra.mxu0 %v1079
      %1100 = vmatprep.subr.bf16.mxu0 0
      %1101 = vmatpush1.bf16.msra.mxu0 %v1080
      %1102 = vmatprep.subr.bf16.mxu0 0
      %1103 = vmatpush1.bf16.msra.mxu0 %v1081
      %1104 = vmatprep.subr.bf16.mxu0 0
      %1105 = vmatpush1.bf16.msra.mxu0 %v1082
      %1106 = vmatprep.subr.bf16.mxu0 0
      %1107 = vmatpush1.bf16.msra.mxu0 %v1083
      %1108 = vmatprep.subr.bf16.mxu0 0
      %1109 = vmatpush1.bf16.msra.mxu0 0
      %1110 = vmatprep.subr.bf16.mxu0 0
      %1111 = vmatpush1.bf16.msra.mxu0 0
      %1112 = vmatprep.subr.bf16.mxu0 0
      %1113 = vmatpush1.bf16.msra.mxu0 0
      %1114 = vmatprep.subr.bf16.mxu0 0
      %1115 = vmatpush1.bf16.msra.mxu0 0
      %1116 = vmatprep.subr.bf16.mxu0 0
      %1117 = vmatpush1.bf16.msra.mxu0 0
      %1118 = vmatprep.subr.bf16.mxu0 0
      %1119 = vmatpush1.bf16.msra.mxu0 0
      %1120 = vmatprep.subr.bf16.mxu0 0
      %1121 = vmatpush1.bf16.msra.mxu0 0
      %1122 = vmatprep.subr.bf16.mxu0 0
      %1123 = vmatpush1.bf16.msra.mxu0 0
      %1124 = vmatprep.mubr.bf16.mxu0 0
      %1125 = vmatmul.mubr.bf16.gmra.mrb[0].mxu0 %v1023
      %v1126 = vpop.f32.mrb[0].mxu0
      %v1127 = vadd.f32 0.0, %v1126
      %v1128 = vpop.f32.mrb[0].mxu0
      %v1129 = vpop.f32.mrb[0].mxu0
      %v1130 = vadd.f32 0.0, %v1129
      %v1131 = vpop.f32.mrb[0].mxu0
      %1132 = vmatprep.mubr.bf16.mxu0 0
      %1133 = vmatmul.mubr.bf16.gmra.mrb[0].mxu0 %v1024
      %v1134 = vpop.f32.mrb[0].mxu0
      %v1135 = vadd.f32 0.0, %v1134
      %v1136 = vpop.f32.mrb[0].mxu0
      %v1137 = vpop.f32.mrb[0].mxu0
      %v1138 = vadd.f32 0.0, %v1137
      %v1139 = vpop.f32.mrb[0].mxu0
      %1140 = vmatprep.mubr.bf16.mxu0 0
      %1141 = vmatmul.mubr.bf16.gmra.mrb[0].mxu0 %v1025
      %v1142 = vpop.f32.mrb[0].mxu0
      %v1143 = vadd.f32 0.0, %v1142
      %v1144 = vpop.f32.mrb[0].mxu0
      %v1145 = vpop.f32.mrb[0].mxu0
      %v1146 = vadd.f32 0.0, %v1145
      %v1147 = vpop.f32.mrb[0].mxu0
      %1148 = vmatprep.mubr.bf16.mxu0 0
      %1149 = vmatmul.mubr.bf16.gmra.mrb[0].mxu0 %v1026
      %v1150 = vpop.f32.mrb[0].mxu0
      %v1151 = vadd.f32 0.0, %v1150
      %v1152 = vpop.f32.mrb[0].mxu0
      %v1153 = vpop.f32.mrb[0].mxu0
      %v1154 = vadd.f32 0.0, %v1153
      %v1155 = vpop.f32.mrb[0].mxu0
      %1156 = vdwg.mxu0
      %v1157 = vadd.f32 %v1007, %v1127
      %v1158 = vadd.f32 %v1008, %v1130
      %v1159 = vadd.f32 %v1009, %v1135
      %v1160 = vadd.f32 %v1010, %v1138
      %v1161 = vadd.f32 %v1011, %v1143
      %v1162 = vadd.f32 %v1012, %v1146
      %v1163 = vadd.f32 %v1013, %v1151
      %v1164 = vadd.f32 %v1014, %v1154
      %s1165 = scalar_lea.vmem %s273, 32
      %v1166 = vld [vmem:[%s1165] sm:$0xff]
      %v1167 = vld [vmem:[%s1165 + $0x10] sm:$0xff]
      %v1168 = vld [vmem:[%s1165 + $0x20] sm:$0xff]
      %v1169 = vld [vmem:[%s1165 + $0x30] sm:$0xff]
      %v1170 = vld [vmem:[%s1165 + $0x40] sm:$0xff]
      %v1171 = vld [vmem:[%s1165 + $0x50] sm:$0xff]
      %v1172 = vld [vmem:[%s1165 + $0x60] sm:$0xff]
      %v1173 = vld [vmem:[%s1165 + $0x70] sm:$0xff]
      %v1174 = vpack.c.bf16 %v1167, %v1166
      %v1175 = vpack.c.bf16 %v1169, %v1168
      %v1176 = vpack.c.bf16 %v1171, %v1170
      %v1177 = vpack.c.bf16 %v1173, %v1172
      %s1178 = scalar_lea.vmem %s1, 384
      %v1179 = vld [vmem:[%s1178] sm:$0xf]
      %v1180 = vld [vmem:[%s1178 + $0x4] sm:$0xf]
      %v1181 = vld [vmem:[%s1178 + $0x8] sm:$0xf]
      %v1182 = vld [vmem:[%s1178 + $0xc] sm:$0xf]
      %v1183 = vld [vmem:[%s1178 + $0x10] sm:$0xf]
      %v1184 = vld [vmem:[%s1178 + $0x14] sm:$0xf]
      %v1185 = vld [vmem:[%s1178 + $0x18] sm:$0xf]
      %v1186 = vld [vmem:[%s1178 + $0x1c] sm:$0xf]
      %v1187 = vld [vmem:[%s1178 + $0x20] sm:$0xf]
      %v1188 = vld [vmem:[%s1178 + $0x24] sm:$0xf]
      %v1189 = vld [vmem:[%s1178 + $0x28] sm:$0xf]
      %v1190 = vld [vmem:[%s1178 + $0x2c] sm:$0xf]
      %v1191 = vld [vmem:[%s1178 + $0x30] sm:$0xf]
      %v1192 = vld [vmem:[%s1178 + $0x34] sm:$0xf]
      %v1193 = vld [vmem:[%s1178 + $0x38] sm:$0xf]
      %v1194 = vld [vmem:[%s1178 + $0x3c] sm:$0xf]
      %v1211 = vunpack.c.l.b16 %v1179
      %v1212 = vunpack.c.l.b16 %v1180
      %v1213 = vunpack.c.l.b16 %v1181
      %v1214 = vunpack.c.l.b16 %v1182
      %v1215 = vunpack.c.l.b16 %v1183
      %v1216 = vunpack.c.l.b16 %v1184
      %v1217 = vunpack.c.l.b16 %v1185
      %v1218 = vunpack.c.l.b16 %v1186
      %v1219 = vunpack.c.l.b16 %v1187
      %v1220 = vunpack.c.l.b16 %v1188
      %v1221 = vunpack.c.l.b16 %v1189
      %v1222 = vunpack.c.l.b16 %v1190
      %v1223 = vunpack.c.l.b16 %v1191
      %v1224 = vunpack.c.l.b16 %v1192
      %v1225 = vunpack.c.l.b16 %v1193
      %v1226 = vunpack.c.l.b16 %v1194
      %v1227 = vpack.c.b16 %v1212, %v1211
      %v1228 = vpack.c.b16 %v1214, %v1213
      %v1229 = vpack.c.b16 %v1216, %v1215
      %v1230 = vpack.c.b16 %v1218, %v1217
      %v1231 = vpack.c.b16 %v1220, %v1219
      %v1232 = vpack.c.b16 %v1222, %v1221
      %v1233 = vpack.c.b16 %v1224, %v1223
      %v1234 = vpack.c.b16 %v1226, %v1225
      %1243 = vmatprep.subr.bf16.mxu0 0
      %1244 = vmatpush1.bf16.msra.mxu0 %v1227
      %1245 = vmatprep.subr.bf16.mxu0 0
      %1246 = vmatpush1.bf16.msra.mxu0 %v1228
      %1247 = vmatprep.subr.bf16.mxu0 0
      %1248 = vmatpush1.bf16.msra.mxu0 %v1229
      %1249 = vmatprep.subr.bf16.mxu0 0
      %1250 = vmatpush1.bf16.msra.mxu0 %v1230
      %1251 = vmatprep.subr.bf16.mxu0 0
      %1252 = vmatpush1.bf16.msra.mxu0 %v1231
      %1253 = vmatprep.subr.bf16.mxu0 0
      %1254 = vmatpush1.bf16.msra.mxu0 %v1232
      %1255 = vmatprep.subr.bf16.mxu0 0
      %1256 = vmatpush1.bf16.msra.mxu0 %v1233
      %1257 = vmatprep.subr.bf16.mxu0 0
      %1258 = vmatpush1.bf16.msra.mxu0 %v1234
      %1259 = vmatprep.subr.bf16.mxu0 0
      %1260 = vmatpush1.bf16.msra.mxu0 0
      %1261 = vmatprep.subr.bf16.mxu0 0
      %1262 = vmatpush1.bf16.msra.mxu0 0
      %1263 = vmatprep.subr.bf16.mxu0 0
      %1264 = vmatpush1.bf16.msra.mxu0 0
      %1265 = vmatprep.subr.bf16.mxu0 0
      %1266 = vmatpush1.bf16.msra.mxu0 0
      %1267 = vmatprep.subr.bf16.mxu0 0
      %1268 = vmatpush1.bf16.msra.mxu0 0
      %1269 = vmatprep.subr.bf16.mxu0 0
      %1270 = vmatpush1.bf16.msra.mxu0 0
      %1271 = vmatprep.subr.bf16.mxu0 0
      %1272 = vmatpush1.bf16.msra.mxu0 0
      %1273 = vmatprep.subr.bf16.mxu0 0
      %1274 = vmatpush1.bf16.msra.mxu0 0
      %1275 = vmatprep.mubr.bf16.mxu0 0
      %1276 = vmatmul.mubr.bf16.gmra.mrb[0].mxu0 %v1174
      %v1277 = vpop.f32.mrb[0].mxu0
      %v1278 = vadd.f32 0.0, %v1277
      %v1279 = vpop.f32.mrb[0].mxu0
      %v1280 = vpop.f32.mrb[0].mxu0
      %v1281 = vadd.f32 0.0, %v1280
      %v1282 = vpop.f32.mrb[0].mxu0
      %1283 = vmatprep.mubr.bf16.mxu0 0
      %1284 = vmatmul.mubr.bf16.gmra.mrb[0].mxu0 %v1175
      %v1285 = vpop.f32.mrb[0].mxu0
      %v1286 = vadd.f32 0.0, %v1285
      %v1287 = vpop.f32.mrb[0].mxu0
      %v1288 = vpop.f32.mrb[0].mxu0
      %v1289 = vadd.f32 0.0, %v1288
      %v1290 = vpop.f32.mrb[0].mxu0
      %1291 = vmatprep.mubr.bf16.mxu0 0
      %1292 = vmatmul.mubr.bf16.gmra.mrb[0].mxu0 %v1176
      %v1293 = vpop.f32.mrb[0].mxu0
      %v1294 = vadd.f32 0.0, %v1293
      %v1295 = vpop.f32.mrb[0].mxu0
      %v1296 = vpop.f32.mrb[0].mxu0
      %v1297 = vadd.f32 0.0, %v1296
      %v1298 = vpop.f32.mrb[0].mxu0
      %1299 = vmatprep.mubr.bf16.mxu0 0
      %1300 = vmatmul.mubr.bf16.gmra.mrb[0].mxu0 %v1177
      %v1301 = vpop.f32.mrb[0].mxu0
      %v1302 = vadd.f32 0.0, %v1301
      %v1303 = vpop.f32.mrb[0].mxu0
      %v1304 = vpop.f32.mrb[0].mxu0
      %v1305 = vadd.f32 0.0, %v1304
      %v1306 = vpop.f32.mrb[0].mxu0
      %1307 = vdwg.mxu0
      %v1308 = vadd.f32 %v1157, %v1278
      %v1309 = vadd.f32 %v1158, %v1281
      %v1310 = vadd.f32 %v1159, %v1286
      %v1311 = vadd.f32 %v1160, %v1289
      %v1312 = vadd.f32 %v1161, %v1294
      %v1313 = vadd.f32 %v1162, %v1297
      %v1314 = vadd.f32 %v1163, %v1302
      %v1315 = vadd.f32 %v1164, %v1305
      %v1316 = vld [vmem:[%s1165 + $0x1] sm:$0xff]
      %v1317 = vld [vmem:[%s1165 + $0x11] sm:$0xff]
      %v1318 = vld [vmem:[%s1165 + $0x21] sm:$0xff]
      %v1319 = vld [vmem:[%s1165 + $0x31] sm:$0xff]
      %v1320 = vld [vmem:[%s1165 + $0x41] sm:$0xff]
      %v1321 = vld [vmem:[%s1165 + $0x51] sm:$0xff]
      %v1322 = vld [vmem:[%s1165 + $0x61] sm:$0xff]
      %v1323 = vld [vmem:[%s1165 + $0x71] sm:$0xff]
      %v1324 = vpack.c.bf16 %v1317, %v1316
      %v1325 = vpack.c.bf16 %v1319, %v1318
      %v1326 = vpack.c.bf16 %v1321, %v1320
      %v1327 = vpack.c.bf16 %v1323, %v1322
      %s1328 = scalar_lea.vmem %s1, 448
      %v1329 = vld [vmem:[%s1328] sm:$0xf]
      %v1330 = vld [vmem:[%s1328 + $0x4] sm:$0xf]
      %v1331 = vld [vmem:[%s1328 + $0x8] sm:$0xf]
      %v1332 = vld [vmem:[%s1328 + $0xc] sm:$0xf]
      %v1333 = vld [vmem:[%s1328 + $0x10] sm:$0xf]
      %v1334 = vld [vmem:[%s1328 + $0x14] sm:$0xf]
      %v1335 = vld [vmem:[%s1328 + $0x18] sm:$0xf]
      %v1336 = vld [vmem:[%s1328 + $0x1c] sm:$0xf]
      %v1337 = vld [vmem:[%s1328 + $0x20] sm:$0xf]
      %v1338 = vld [vmem:[%s1328 + $0x24] sm:$0xf]
      %v1339 = vld [vmem:[%s1328 + $0x28] sm:$0xf]
      %v1340 = vld [vmem:[%s1328 + $0x2c] sm:$0xf]
      %v1341 = vld [vmem:[%s1328 + $0x30] sm:$0xf]
      %v1342 = vld [vmem:[%s1328 + $0x34] sm:$0xf]
      %v1343 = vld [vmem:[%s1328 + $0x38] sm:$0xf]
      %v1344 = vld [vmem:[%s1328 + $0x3c] sm:$0xf]
      %v1361 = vunpack.c.l.b16 %v1329
      %v1362 = vunpack.c.l.b16 %v1330
      %v1363 = vunpack.c.l.b16 %v1331
      %v1364 = vunpack.c.l.b16 %v1332
      %v1365 = vunpack.c.l.b16 %v1333
      %v1366 = vunpack.c.l.b16 %v1334
      %v1367 = vunpack.c.l.b16 %v1335
      %v1368 = vunpack.c.l.b16 %v1336
      %v1369 = vunpack.c.l.b16 %v1337
      %v1370 = vunpack.c.l.b16 %v1338
      %v1371 = vunpack.c.l.b16 %v1339
      %v1372 = vunpack.c.l.b16 %v1340
      %v1373 = vunpack.c.l.b16 %v1341
      %v1374 = vunpack.c.l.b16 %v1342
      %v1375 = vunpack.c.l.b16 %v1343
      %v1376 = vunpack.c.l.b16 %v1344
      %v1377 = vpack.c.b16 %v1362, %v1361
      %v1378 = vpack.c.b16 %v1364, %v1363
      %v1379 = vpack.c.b16 %v1366, %v1365
      %v1380 = vpack.c.b16 %v1368, %v1367
      %v1381 = vpack.c.b16 %v1370, %v1369
      %v1382 = vpack.c.b16 %v1372, %v1371
      %v1383 = vpack.c.b16 %v1374, %v1373
      %v1384 = vpack.c.b16 %v1376, %v1375
      %1393 = vmatprep.subr.bf16.mxu0 0
      %1394 = vmatpush1.bf16.msra.mxu0 %v1377
      %1395 = vmatprep.subr.bf16.mxu0 0
      %1396 = vmatpush1.bf16.msra.mxu0 %v1378
      %1397 = vmatprep.subr.bf16.mxu0 0
      %1398 = vmatpush1.bf16.msra.mxu0 %v1379
      %1399 = vmatprep.subr.bf16.mxu0 0
      %1400 = vmatpush1.bf16.msra.mxu0 %v1380
      %1401 = vmatprep.subr.bf16.mxu0 0
      %1402 = vmatpush1.bf16.msra.mxu0 %v1381
      %1403 = vmatprep.subr.bf16.mxu0 0
      %1404 = vmatpush1.bf16.msra.mxu0 %v1382
      %1405 = vmatprep.subr.bf16.mxu0 0
      %1406 = vmatpush1.bf16.msra.mxu0 %v1383
      %1407 = vmatprep.subr.bf16.mxu0 0
      %1408 = vmatpush1.bf16.msra.mxu0 %v1384
      %1409 = vmatprep.subr.bf16.mxu0 0
      %1410 = vmatpush1.bf16.msra.mxu0 0
      %1411 = vmatprep.subr.bf16.mxu0 0
      %1412 = vmatpush1.bf16.msra.mxu0 0
      %1413 = vmatprep.subr.bf16.mxu0 0
      %1414 = vmatpush1.bf16.msra.mxu0 0
      %1415 = vmatprep.subr.bf16.mxu0 0
      %1416 = vmatpush1.bf16.msra.mxu0 0
      %1417 = vmatprep.subr.bf16.mxu0 0
      %1418 = vmatpush1.bf16.msra.mxu0 0
      %1419 = vmatprep.subr.bf16.mxu0 0
      %1420 = vmatpush1.bf16.msra.mxu0 0
      %1421 = vmatprep.subr.bf16.mxu0 0
      %1422 = vmatpush1.bf16.msra.mxu0 0
      %1423 = vmatprep.subr.bf16.mxu0 0
      %1424 = vmatpush1.bf16.msra.mxu0 0
      %1425 = vmatprep.mubr.bf16.mxu0 0
      %1426 = vmatmul.mubr.bf16.gmra.mrb[0].mxu0 %v1324
      %v1427 = vpop.f32.mrb[0].mxu0
      %v1428 = vadd.f32 0.0, %v1427
      %v1429 = vpop.f32.mrb[0].mxu0
      %v1430 = vpop.f32.mrb[0].mxu0
      %v1431 = vadd.f32 0.0, %v1430
      %v1432 = vpop.f32.mrb[0].mxu0
      %1433 = vmatprep.mubr.bf16.mxu0 0
      %1434 = vmatmul.mubr.bf16.gmra.mrb[0].mxu0 %v1325
      %v1435 = vpop.f32.mrb[0].mxu0
      %v1436 = vadd.f32 0.0, %v1435
      %v1437 = vpop.f32.mrb[0].mxu0
      %v1438 = vpop.f32.mrb[0].mxu0
      %v1439 = vadd.f32 0.0, %v1438
      %v1440 = vpop.f32.mrb[0].mxu0
      %1441 = vmatprep.mubr.bf16.mxu0 0
      %1442 = vmatmul.mubr.bf16.gmra.mrb[0].mxu0 %v1326
      %v1443 = vpop.f32.mrb[0].mxu0
      %v1444 = vadd.f32 0.0, %v1443
      %v1445 = vpop.f32.mrb[0].mxu0
      %v1446 = vpop.f32.mrb[0].mxu0
      %v1447 = vadd.f32 0.0, %v1446
      %v1448 = vpop.f32.mrb[0].mxu0
      %1449 = vmatprep.mubr.bf16.mxu0 0
      %1450 = vmatmul.mubr.bf16.gmra.mrb[0].mxu0 %v1327
      %v1451 = vpop.f32.mrb[0].mxu0
      %v1452 = vadd.f32 0.0, %v1451
      %v1453 = vpop.f32.mrb[0].mxu0
      %v1454 = vpop.f32.mrb[0].mxu0
      %v1455 = vadd.f32 0.0, %v1454
      %v1456 = vpop.f32.mrb[0].mxu0
      %1457 = vdwg.mxu0
      %v1458 = vadd.f32 %v1308, %v1428
      %v1459 = vadd.f32 %v1309, %v1431
      %v1460 = vadd.f32 %v1310, %v1436
      %v1461 = vadd.f32 %v1311, %v1439
      %v1462 = vadd.f32 %v1312, %v1444
      %v1463 = vadd.f32 %v1313, %v1447
      %v1464 = vadd.f32 %v1314, %v1452
      %v1465 = vadd.f32 %v1315, %v1455
      %v1466 = vld [vmem:[%s1165 + $0x2] sm:$0xff]
      %v1467 = vld [vmem:[%s1165 + $0x12] sm:$0xff]
      %v1468 = vld [vmem:[%s1165 + $0x22] sm:$0xff]
      %v1469 = vld [vmem:[%s1165 + $0x32] sm:$0xff]
      %v1470 = vld [vmem:[%s1165 + $0x42] sm:$0xff]
      %v1471 = vld [vmem:[%s1165 + $0x52] sm:$0xff]
      %v1472 = vld [vmem:[%s1165 + $0x62] sm:$0xff]
      %v1473 = vld [vmem:[%s1165 + $0x72] sm:$0xff]
      %v1474 = vpack.c.bf16 %v1467, %v1466
      %v1475 = vpack.c.bf16 %v1469, %v1468
      %v1476 = vpack.c.bf16 %v1471, %v1470
      %v1477 = vpack.c.bf16 %v1473, %v1472
      %s1478 = scalar_lea.vmem %s1, 512
      %v1479 = vld [vmem:[%s1478] sm:$0xf]
      %v1480 = vld [vmem:[%s1478 + $0x4] sm:$0xf]
      %v1481 = vld [vmem:[%s1478 + $0x8] sm:$0xf]
      %v1482 = vld [vmem:[%s1478 + $0xc] sm:$0xf]
      %v1483 = vld [vmem:[%s1478 + $0x10] sm:$0xf]
      %v1484 = vld [vmem:[%s1478 + $0x14] sm:$0xf]
      %v1485 = vld [vmem:[%s1478 + $0x18] sm:$0xf]
      %v1486 = vld [vmem:[%s1478 + $0x1c] sm:$0xf]
      %v1487 = vld [vmem:[%s1478 + $0x20] sm:$0xf]
      %v1488 = vld [vmem:[%s1478 + $0x24] sm:$0xf]
      %v1489 = vld [vmem:[%s1478 + $0x28] sm:$0xf]
      %v1490 = vld [vmem:[%s1478 + $0x2c] sm:$0xf]
      %v1491 = vld [vmem:[%s1478 + $0x30] sm:$0xf]
      %v1492 = vld [vmem:[%s1478 + $0x34] sm:$0xf]
      %v1493 = vld [vmem:[%s1478 + $0x38] sm:$0xf]
      %v1494 = vld [vmem:[%s1478 + $0x3c] sm:$0xf]
      %v1511 = vunpack.c.l.b16 %v1479
      %v1512 = vunpack.c.l.b16 %v1480
      %v1513 = vunpack.c.l.b16 %v1481
      %v1514 = vunpack.c.l.b16 %v1482
      %v1515 = vunpack.c.l.b16 %v1483
      %v1516 = vunpack.c.l.b16 %v1484
      %v1517 = vunpack.c.l.b16 %v1485
      %v1518 = vunpack.c.l.b16 %v1486
      %v1519 = vunpack.c.l.b16 %v1487
      %v1520 = vunpack.c.l.b16 %v1488
      %v1521 = vunpack.c.l.b16 %v1489
      %v1522 = vunpack.c.l.b16 %v1490
      %v1523 = vunpack.c.l.b16 %v1491
      %v1524 = vunpack.c.l.b16 %v1492
      %v1525 = vunpack.c.l.b16 %v1493
      %v1526 = vunpack.c.l.b16 %v1494
      %v1527 = vpack.c.b16 %v1512, %v1511
      %v1528 = vpack.c.b16 %v1514, %v1513
      %v1529 = vpack.c.b16 %v1516, %v1515
      %v1530 = vpack.c.b16 %v1518, %v1517
      %v1531 = vpack.c.b16 %v1520, %v1519
      %v1532 = vpack.c.b16 %v1522, %v1521
      %v1533 = vpack.c.b16 %v1524, %v1523
      %v1534 = vpack.c.b16 %v1526, %v1525
      %1543 = vmatprep.subr.bf16.mxu0 0
      %1544 = vmatpush1.bf16.msra.mxu0 %v1527
      %1545 = vmatprep.subr.bf16.mxu0 0
      %1546 = vmatpush1.bf16.msra.mxu0 %v1528
      %1547 = vmatprep.subr.bf16.mxu0 0
      %1548 = vmatpush1.bf16.msra.mxu0 %v1529
      %1549 = vmatprep.subr.bf16.mxu0 0
      %1550 = vmatpush1.bf16.msra.mxu0 %v1530
      %1551 = vmatprep.subr.bf16.mxu0 0
      %1552 = vmatpush1.bf16.msra.mxu0 %v1531
      %1553 = vmatprep.subr.bf16.mxu0 0
      %1554 = vmatpush1.bf16.msra.mxu0 %v1532
      %1555 = vmatprep.subr.bf16.mxu0 0
      %1556 = vmatpush1.bf16.msra.mxu0 %v1533
      %1557 = vmatprep.subr.bf16.mxu0 0
      %1558 = vmatpush1.bf16.msra.mxu0 %v1534
      %1559 = vmatprep.subr.bf16.mxu0 0
      %1560 = vmatpush1.bf16.msra.mxu0 0
      %1561 = vmatprep.subr.bf16.mxu0 0
      %1562 = vmatpush1.bf16.msra.mxu0 0
      %1563 = vmatprep.subr.bf16.mxu0 0
      %1564 = vmatpush1.bf16.msra.mxu0 0
      %1565 = vmatprep.subr.bf16.mxu0 0
      %1566 = vmatpush1.bf16.msra.mxu0 0
      %1567 = vmatprep.subr.bf16.mxu0 0
      %1568 = vmatpush1.bf16.msra.mxu0 0
      %1569 = vmatprep.subr.bf16.mxu0 0
      %1570 = vmatpush1.bf16.msra.mxu0 0
      %1571 = vmatprep.subr.bf16.mxu0 0
      %1572 = vmatpush1.bf16.msra.mxu0 0
      %1573 = vmatprep.subr.bf16.mxu0 0
      %1574 = vmatpush1.bf16.msra.mxu0 0
      %1575 = vmatprep.mubr.bf16.mxu0 0
      %1576 = vmatmul.mubr.bf16.gmra.mrb[0].mxu0 %v1474
      %v1577 = vpop.f32.mrb[0].mxu0
      %v1578 = vadd.f32 0.0, %v1577
      %v1579 = vpop.f32.mrb[0].mxu0
      %v1580 = vpop.f32.mrb[0].mxu0
      %v1581 = vadd.f32 0.0, %v1580
      %v1582 = vpop.f32.mrb[0].mxu0
      %1583 = vmatprep.mubr.bf16.mxu0 0
      %1584 = vmatmul.mubr.bf16.gmra.mrb[0].mxu0 %v1475
      %v1585 = vpop.f32.mrb[0].mxu0
      %v1586 = vadd.f32 0.0, %v1585
      %v1587 = vpop.f32.mrb[0].mxu0
      %v1588 = vpop.f32.mrb[0].mxu0
      %v1589 = vadd.f32 0.0, %v1588
      %v1590 = vpop.f32.mrb[0].mxu0
      %1591 = vmatprep.mubr.bf16.mxu0 0
      %1592 = vmatmul.mubr.bf16.gmra.mrb[0].mxu0 %v1476
      %v1593 = vpop.f32.mrb[0].mxu0
      %v1594 = vadd.f32 0.0, %v1593
      %v1595 = vpop.f32.mrb[0].mxu0
      %v1596 = vpop.f32.mrb[0].mxu0
      %v1597 = vadd.f32 0.0, %v1596
      %v1598 = vpop.f32.mrb[0].mxu0
      %1599 = vmatprep.mubr.bf16.mxu0 0
      %1600 = vmatmul.mubr.bf16.gmra.mrb[0].mxu0 %v1477
      %v1601 = vpop.f32.mrb[0].mxu0
      %v1602 = vadd.f32 0.0, %v1601
      %v1603 = vpop.f32.mrb[0].mxu0
      %v1604 = vpop.f32.mrb[0].mxu0
      %v1605 = vadd.f32 0.0, %v1604
      %v1606 = vpop.f32.mrb[0].mxu0
      %1607 = vdwg.mxu0
      %v1608 = vadd.f32 %v1458, %v1578
      %v1609 = vadd.f32 %v1459, %v1581
      %v1610 = vadd.f32 %v1460, %v1586
      %v1611 = vadd.f32 %v1461, %v1589
      %v1612 = vadd.f32 %v1462, %v1594
      %v1613 = vadd.f32 %v1463, %v1597
      %v1614 = vadd.f32 %v1464, %v1602
      %v1615 = vadd.f32 %v1465, %v1605
      %v1616 = vld [vmem:[%s2] sm:$0x1]
      %v1618 = vlaneseq
      %v1619 = vshrl.u32 %v1618, 7
      %v1620 = vsub.s32 0, %v1619
      %v1621 = vrot.slane %v1616, %v1620
      %v1623 = vmul.f32 %v1608, %v1621
      %v1624 = vmul.f32 %v1609, %v1621
      %v1625 = vmul.f32 %v1610, %v1621
      %v1626 = vmul.f32 %v1611, %v1621
      %v1627 = vmul.f32 %v1612, %v1621
      %v1628 = vmul.f32 %v1613, %v1621
      %v1629 = vmul.f32 %v1614, %v1621
      %v1630 = vmul.f32 %v1615, %v1621
      %v1631 = vld [vmem:[%s3] sm:$0x1]
      %v1633 = vlaneseq
      %v1634 = vshrl.u32 %v1633, 7
      %v1635 = vsub.s32 0, %v1634
      %v1636 = vrot.slane %v1631, %v1635
      %v1638 = vadd.f32 %v1623, %v1636
      %v1639 = vadd.f32 %v1624, %v1636
      %v1640 = vadd.f32 %v1625, %v1636
      %v1641 = vadd.f32 %v1626, %v1636
      %v1642 = vadd.f32 %v1627, %v1636
      %v1643 = vadd.f32 %v1628, %v1636
      %v1644 = vadd.f32 %v1629, %v1636
      %v1645 = vadd.f32 %v1630, %v1636
      %v1646 = vmax.f32 %v1638, 0.0
      %v1647 = vmax.f32 %v1639, 0.0
      %v1648 = vmax.f32 %v1640, 0.0
      %v1649 = vmax.f32 %v1641, 0.0
      %v1650 = vmax.f32 %v1642, 0.0
      %v1651 = vmax.f32 %v1643, 0.0
      %v1652 = vmax.f32 %v1644, 0.0
      %v1653 = vmax.f32 %v1645, 0.0
      %1654 = vst [vmem:[#allocation2] sm:$0xf] 0
      %1655 = vst [vmem:[#allocation2 + $0x4] sm:$0x1] 0
      %1656 = vst [vmem:[#allocation2 + $0x8] sm:$0xf] 0
      %1657 = vst [vmem:[#allocation2 + $0xc] sm:$0x1] 0
      %1658 = vst [vmem:[#allocation2 + $0x10] sm:$0xf] 0
      %1659 = vst [vmem:[#allocation2 + $0x14] sm:$0x1] 0
      %1660 = vst [vmem:[#allocation2 + $0x18] sm:$0xf] 0
      %1661 = vst [vmem:[#allocation2 + $0x1c] sm:$0x1] 0
      %1662 = vst [vmem:[#allocation2 + $0x20] sm:$0xf] 0
      %1663 = vst [vmem:[#allocation2 + $0x24] sm:$0x1] 0
      %1664 = vst [vmem:[#allocation2 + $0x28] sm:$0xf] 0
      %1665 = vst [vmem:[#allocation2 + $0x2c] sm:$0x1] 0
      %1666 = vst [vmem:[#allocation2 + $0x30] sm:$0xf] 0
      %1667 = vst [vmem:[#allocation2 + $0x34] sm:$0x1] 0
      %1668 = vst [vmem:[#allocation2 + $0x38] sm:$0xf] 0
      %1669 = vst [vmem:[#allocation2 + $0x3c] sm:$0x1] 0
      %1670 = vst [vmem:[#allocation2 + $0x40] sm:$0xf] 0
      %1671 = vst [vmem:[#allocation2 + $0x44] sm:$0x1] 0
      %1672 = vst [vmem:[#allocation2 + $0x48] sm:$0xf] 0
      %1673 = vst [vmem:[#allocation2 + $0x4c] sm:$0x1] 0
      %v1674 = vpack.c.bf16 %v1646, %v1646
      %v1675 = vpack.c.bf16 %v1647, %v1647
      %v1676 = vpack.c.bf16 %v1648, %v1648
      %v1677 = vpack.c.bf16 %v1649, %v1649
      %v1678 = vpack.c.bf16 %v1650, %v1650
      %v1679 = vpack.c.bf16 %v1651, %v1651
      %v1680 = vpack.c.bf16 %v1652, %v1652
      %v1681 = vpack.c.bf16 %v1653, %v1653
      %v1690 = vunpack.c.l.b16 %v1674
      %v1691 = vunpack.c.l.b16 %v1675
      %v1692 = vunpack.c.l.b16 %v1676
      %v1693 = vunpack.c.l.b16 %v1677
      %v1694 = vunpack.c.l.b16 %v1678
      %v1695 = vunpack.c.l.b16 %v1679
      %v1696 = vunpack.c.l.b16 %v1680
      %v1697 = vunpack.c.l.b16 %v1681
      %v1698 = vpack.c.b16 %v1690, %v1690
      %v1699 = vpack.c.b16 %v1691, %v1691
      %v1700 = vpack.c.b16 %v1692, %v1692
      %v1701 = vpack.c.b16 %v1693, %v1693
      %v1702 = vpack.c.b16 %v1694, %v1694
      %v1703 = vpack.c.b16 %v1695, %v1695
      %v1704 = vpack.c.b16 %v1696, %v1696
      %v1705 = vpack.c.b16 %v1697, %v1697
      %v1707 = vshrl.u32 %v1698, 16
      %v1709 = vrot.slane %v1707, 7
      %v1710 = vshll.u32 %v1698, 16
      %v1712 = vor.u32 %v1709, %v1710
      %v1713 = vrot.slane %v1709, 4
      %v1715 = vshrl.u32 %v1699, 16
      %v1717 = vrot.slane %v1715, 7
      %v1718 = vshll.u32 %v1699, 16
      %v1720 = vor.u32 %v1717, %v1718
      %v1721 = vrot.slane %v1717, 4
      %v1723 = vshrl.u32 %v1700, 16
      %v1725 = vrot.slane %v1723, 7
      %v1726 = vshll.u32 %v1700, 16
      %v1728 = vor.u32 %v1725, %v1726
      %v1729 = vrot.slane %v1725, 4
      %v1731 = vshrl.u32 %v1701, 16
      %v1733 = vrot.slane %v1731, 7
      %v1734 = vshll.u32 %v1701, 16
      %v1736 = vor.u32 %v1733, %v1734
      %v1737 = vrot.slane %v1733, 4
      %v1739 = vshrl.u32 %v1702, 16
      %v1741 = vrot.slane %v1739, 7
      %v1742 = vshll.u32 %v1702, 16
      %v1744 = vor.u32 %v1741, %v1742
      %v1745 = vrot.slane %v1741, 4
      %v1747 = vshrl.u32 %v1703, 16
      %v1749 = vrot.slane %v1747, 7
      %v1750 = vshll.u32 %v1703, 16
      %v1752 = vor.u32 %v1749, %v1750
      %v1753 = vrot.slane %v1749, 4
      %v1755 = vshrl.u32 %v1704, 16
      %v1757 = vrot.slane %v1755, 7
      %v1758 = vshll.u32 %v1704, 16
      %v1760 = vor.u32 %v1757, %v1758
      %v1761 = vrot.slane %v1757, 4
      %v1763 = vshrl.u32 %v1705, 16
      %v1765 = vrot.slane %v1763, 7
      %v1766 = vshll.u32 %v1705, 16
      %v1768 = vor.u32 %v1765, %v1766
      %v1769 = vrot.slane %v1765, 4
      %s1786 = scalar_lea.vmem [#allocation2], 8
      %vm1787 = vcmask 1043456
      %vm1788 = vsmask.f32 7938
      %vm1789 = vmand %vm1787, %vm1788
      %v1790 = vld [vmem:[%s1786] sm:$0xf]
      %v1791 = vsel %vm1789, %v1712, %v1790
      %1792 = vst [vmem:[%s1786] sm:$0xf] %v1791
      %vm1793 = vcmask 1040384
      %vm1794 = vsmask.f32 256
      %vm1795 = vmand %vm1793, %vm1794
      %v1796 = vld [vmem:[%s1786 + $0x4] sm:$0x1]
      %v1797 = vsel %vm1795, %v1713, %v1796
      %1798 = vst [vmem:[%s1786 + $0x4] sm:$0x1] %v1797
      %v1799 = vld [vmem:[%s1786 + $0x8] sm:$0xf]
      %v1800 = vsel %vm1789, %v1720, %v1799
      %1801 = vst [vmem:[%s1786 + $0x8] sm:$0xf] %v1800
      %v1802 = vld [vmem:[%s1786 + $0xc] sm:$0x1]
      %v1803 = vsel %vm1795, %v1721, %v1802
      %1804 = vst [vmem:[%s1786 + $0xc] sm:$0x1] %v1803
      %v1805 = vld [vmem:[%s1786 + $0x10] sm:$0xf]
      %v1806 = vsel %vm1789, %v1728, %v1805
      %1807 = vst [vmem:[%s1786 + $0x10] sm:$0xf] %v1806
      %v1808 = vld [vmem:[%s1786 + $0x14] sm:$0x1]
      %v1809 = vsel %vm1795, %v1729, %v1808
      %1810 = vst [vmem:[%s1786 + $0x14] sm:$0x1] %v1809
      %v1811 = vld [vmem:[%s1786 + $0x18] sm:$0xf]
      %v1812 = vsel %vm1789, %v1736, %v1811
      %1813 = vst [vmem:[%s1786 + $0x18] sm:$0xf] %v1812
      %v1814 = vld [vmem:[%s1786 + $0x1c] sm:$0x1]
      %v1815 = vsel %vm1795, %v1737, %v1814
      %1816 = vst [vmem:[%s1786 + $0x1c] sm:$0x1] %v1815
      %v1817 = vld [vmem:[%s1786 + $0x20] sm:$0xf]
      %v1818 = vsel %vm1789, %v1744, %v1817
      %1819 = vst [vmem:[%s1786 + $0x20] sm:$0xf] %v1818
      %v1820 = vld [vmem:[%s1786 + $0x24] sm:$0x1]
      %v1821 = vsel %vm1795, %v1745, %v1820
      %1822 = vst [vmem:[%s1786 + $0x24] sm:$0x1] %v1821
      %v1823 = vld [vmem:[%s1786 + $0x28] sm:$0xf]
      %v1824 = vsel %vm1789, %v1752, %v1823
      %1825 = vst [vmem:[%s1786 + $0x28] sm:$0xf] %v1824
      %v1826 = vld [vmem:[%s1786 + $0x2c] sm:$0x1]
      %v1827 = vsel %vm1795, %v1753, %v1826
      %1828 = vst [vmem:[%s1786 + $0x2c] sm:$0x1] %v1827
      %v1829 = vld [vmem:[%s1786 + $0x30] sm:$0xf]
      %v1830 = vsel %vm1789, %v1760, %v1829
      %1831 = vst [vmem:[%s1786 + $0x30] sm:$0xf] %v1830
      %v1832 = vld [vmem:[%s1786 + $0x34] sm:$0x1]
      %v1833 = vsel %vm1795, %v1761, %v1832
      %1834 = vst [vmem:[%s1786 + $0x34] sm:$0x1] %v1833
      %v1835 = vld [vmem:[%s1786 + $0x38] sm:$0xf]
      %v1836 = vsel %vm1789, %v1768, %v1835
      %1837 = vst [vmem:[%s1786 + $0x38] sm:$0xf] %v1836
      %v1838 = vld [vmem:[%s1786 + $0x3c] sm:$0x1]
      %v1839 = vsel %vm1795, %v1769, %v1838
      %1840 = vst [vmem:[%s1786 + $0x3c] sm:$0x1] %v1839
      %v1841 = vld [vmem:[#allocation2] sm:$0xf]
      %v1842 = vld [vmem:[#allocation2 + $0x8] sm:$0xf]
      %v1843 = vld [vmem:[#allocation2 + $0x10] sm:$0xf]
      %v1844 = vld [vmem:[#allocation2 + $0x18] sm:$0xf]
      %v1845 = vld [vmem:[#allocation2 + $0x20] sm:$0xf]
      %v1846 = vld [vmem:[#allocation2 + $0x28] sm:$0xf]
      %v1847 = vld [vmem:[#allocation2 + $0x30] sm:$0xf]
      %v1848 = vld [vmem:[#allocation2 + $0x38] sm:$0xf]
      %v1849 = vld [vmem:[%s4] sm:$0xf]
      %v1850 = vld [vmem:[%s4 + $0x4] sm:$0xf]
      %v1851 = vld [vmem:[%s4 + $0x8] sm:$0xf]
      %v1852 = vld [vmem:[%s4 + $0xc] sm:$0xf]
      %v1853 = vld [vmem:[%s4 + $0x10] sm:$0xf]
      %v1854 = vld [vmem:[%s4 + $0x14] sm:$0xf]
      %v1855 = vld [vmem:[%s4 + $0x18] sm:$0xf]
      %v1856 = vld [vmem:[%s4 + $0x1c] sm:$0xf]
      %v1857 = vld [vmem:[%s4 + $0x20] sm:$0xf]
      %v1858 = vld [vmem:[%s4 + $0x24] sm:$0xf]
      %v1859 = vld [vmem:[%s4 + $0x28] sm:$0xf]
      %v1860 = vld [vmem:[%s4 + $0x2c] sm:$0xf]
      %v1861 = vld [vmem:[%s4 + $0x30] sm:$0xf]
      %v1862 = vld [vmem:[%s4 + $0x34] sm:$0xf]
      %v1863 = vld [vmem:[%s4 + $0x38] sm:$0xf]
      %v1864 = vld [vmem:[%s4 + $0x3c] sm:$0xf]
      %v1865 = vld [vmem:[#allocation2 + $0x4] sm:$0x1]
      %v1866 = vld [vmem:[#allocation2 + $0xc] sm:$0x1]
      %v1867 = vld [vmem:[#allocation2 + $0x14] sm:$0x1]
      %v1868 = vld [vmem:[#allocation2 + $0x1c] sm:$0x1]
      %v1869 = vld [vmem:[#allocation2 + $0x24] sm:$0x1]
      %v1870 = vld [vmem:[#allocation2 + $0x2c] sm:$0x1]
      %v1871 = vld [vmem:[#allocation2 + $0x34] sm:$0x1]
      %v1872 = vld [vmem:[#allocation2 + $0x3c] sm:$0x1]
      %vm1873 = vsmask.f32 3328
      %vm1874 = vsmask.f32 7440
      %vm1875 = vmor %vm1873, %vm1874
      %v1877 = vshrl.u32 %v1841, 16
      %v1879 = vrot.slane %v1877, 4
      %v1880 = vshll.u32 %v1841, 16
      %v1882 = vrot.slane %v1880, 5
      %v1883 = vor.u32 %v1879, %v1882
      %v1884 = vrot.slane %v1883, 4
      %v1886 = vshll.u32 %v1865, 16
      %v1888 = vrot.slane %v1886, 5
      %v1889 = vsel %vm1875, %v1884, %v1888
      %v1891 = vshrl.u32 %v1842, 16
      %v1893 = vrot.slane %v1891, 4
      %v1894 = vshll.u32 %v1842, 16
      %v1896 = vrot.slane %v1894, 5
      %v1897 = vor.u32 %v1893, %v1896
      %v1898 = vrot.slane %v1897, 4
      %v1900 = vshll.u32 %v1866, 16
      %v1902 = vrot.slane %v1900, 5
      %v1903 = vsel %vm1875, %v1898, %v1902
      %v1905 = vshrl.u32 %v1843, 16
      %v1907 = vrot.slane %v1905, 4
      %v1908 = vshll.u32 %v1843, 16
      %v1910 = vrot.slane %v1908, 5
      %v1911 = vor.u32 %v1907, %v1910
      %v1912 = vrot.slane %v1911, 4
      %v1914 = vshll.u32 %v1867, 16
      %v1916 = vrot.slane %v1914, 5
      %v1917 = vsel %vm1875, %v1912, %v1916
      %v1919 = vshrl.u32 %v1844, 16
      %v1921 = vrot.slane %v1919, 4
      %v1922 = vshll.u32 %v1844, 16
      %v1924 = vrot.slane %v1922, 5
      %v1925 = vor.u32 %v1921, %v1924
      %v1926 = vrot.slane %v1925, 4
      %v1928 = vshll.u32 %v1868, 16
      %v1930 = vrot.slane %v1928, 5
      %v1931 = vsel %vm1875, %v1926, %v1930
      %v1933 = vshrl.u32 %v1845, 16
      %v1935 = vrot.slane %v1933, 4
      %v1936 = vshll.u32 %v1845, 16
      %v1938 = vrot.slane %v1936, 5
      %v1939 = vor.u32 %v1935, %v1938
      %v1940 = vrot.slane %v1939, 4
      %v1942 = vshll.u32 %v1869, 16
      %v1944 = vrot.slane %v1942, 5
      %v1945 = vsel %vm1875, %v1940, %v1944
      %v1947 = vshrl.u32 %v1846, 16
      %v1949 = vrot.slane %v1947, 4
      %v1950 = vshll.u32 %v1846, 16
      %v1952 = vrot.slane %v1950, 5
      %v1953 = vor.u32 %v1949, %v1952
      %v1954 = vrot.slane %v1953, 4
      %v1956 = vshll.u32 %v1870, 16
      %v1958 = vrot.slane %v1956, 5
      %v1959 = vsel %vm1875, %v1954, %v1958
      %v1961 = vshrl.u32 %v1847, 16
      %v1963 = vrot.slane %v1961, 4
      %v1964 = vshll.u32 %v1847, 16
      %v1966 = vrot.slane %v1964, 5
      %v1967 = vor.u32 %v1963, %v1966
      %v1968 = vrot.slane %v1967, 4
      %v1970 = vshll.u32 %v1871, 16
      %v1972 = vrot.slane %v1970, 5
      %v1973 = vsel %vm1875, %v1968, %v1972
      %v1975 = vshrl.u32 %v1848, 16
      %v1977 = vrot.slane %v1975, 4
      %v1978 = vshll.u32 %v1848, 16
      %v1980 = vrot.slane %v1978, 5
      %v1981 = vor.u32 %v1977, %v1980
      %v1982 = vrot.slane %v1981, 4
      %v1984 = vshll.u32 %v1872, 16
      %v1986 = vrot.slane %v1984, 5
      %v1987 = vsel %vm1875, %v1982, %v1986
      %s1988 = scalar_lea.vmem %s4, 64
      %v1989 = vld [vmem:[%s1988] sm:$0xf]
      %v1990 = vld [vmem:[%s1988 + $0x4] sm:$0xf]
      %v1991 = vld [vmem:[%s1988 + $0x8] sm:$0xf]
      %v1992 = vld [vmem:[%s1988 + $0xc] sm:$0xf]
      %v1993 = vld [vmem:[%s1988 + $0x10] sm:$0xf]
      %v1994 = vld [vmem:[%s1988 + $0x14] sm:$0xf]
      %v1995 = vld [vmem:[%s1988 + $0x18] sm:$0xf]
      %v1996 = vld [vmem:[%s1988 + $0x1c] sm:$0xf]
      %v1997 = vld [vmem:[%s1988 + $0x20] sm:$0xf]
      %v1998 = vld [vmem:[%s1988 + $0x24] sm:$0xf]
      %v1999 = vld [vmem:[%s1988 + $0x28] sm:$0xf]
      %v2000 = vld [vmem:[%s1988 + $0x2c] sm:$0xf]
      %v2001 = vld [vmem:[%s1988 + $0x30] sm:$0xf]
      %v2002 = vld [vmem:[%s1988 + $0x34] sm:$0xf]
      %v2003 = vld [vmem:[%s1988 + $0x38] sm:$0xf]
      %v2004 = vld [vmem:[%s1988 + $0x3c] sm:$0xf]
      %v2005 = vunpack.c.l.b16 %v1889
      %v2006 = vunpack.c.l.b16 %v1903
      %v2007 = vunpack.c.l.b16 %v1917
      %v2008 = vunpack.c.l.b16 %v1931
      %v2009 = vunpack.c.l.b16 %v1945
      %v2010 = vunpack.c.l.b16 %v1959
      %v2011 = vunpack.c.l.b16 %v1973
      %v2012 = vunpack.c.l.b16 %v1987
      %v2013 = vpack.c.b16 %v2006, %v2005
      %v2014 = vpack.c.b16 %v2008, %v2007
      %v2015 = vpack.c.b16 %v2010, %v2009
      %v2016 = vpack.c.b16 %v2012, %v2011
      %v2037 = vunpack.c.l.b16 %v1989
      %v2038 = vunpack.c.l.b16 %v1990
      %v2039 = vunpack.c.l.b16 %v1991
      %v2040 = vunpack.c.l.b16 %v1992
      %v2041 = vunpack.c.l.b16 %v1993
      %v2042 = vunpack.c.l.b16 %v1994
      %v2043 = vunpack.c.l.b16 %v1995
      %v2044 = vunpack.c.l.b16 %v1996
      %v2045 = vunpack.c.l.b16 %v1997
      %v2046 = vunpack.c.l.b16 %v1998
      %v2047 = vunpack.c.l.b16 %v1999
      %v2048 = vunpack.c.l.b16 %v2000
      %v2049 = vunpack.c.l.b16 %v2001
      %v2050 = vunpack.c.l.b16 %v2002
      %v2051 = vunpack.c.l.b16 %v2003
      %v2052 = vunpack.c.l.b16 %v2004
      %v2053 = vpack.c.b16 %v2038, %v2037
      %v2054 = vpack.c.b16 %v2040, %v2039
      %v2055 = vpack.c.b16 %v2042, %v2041
      %v2056 = vpack.c.b16 %v2044, %v2043
      %v2057 = vpack.c.b16 %v2046, %v2045
      %v2058 = vpack.c.b16 %v2048, %v2047
      %v2059 = vpack.c.b16 %v2050, %v2049
      %v2060 = vpack.c.b16 %v2052, %v2051
      %2069 = vmatprep.subr.bf16.mxu0 0
      %2070 = vmatpush1.bf16.msra.mxu0 %v2053
      %2071 = vmatprep.subr.bf16.mxu0 0
      %2072 = vmatpush1.bf16.msra.mxu0 %v2054
      %2073 = vmatprep.subr.bf16.mxu0 0
      %2074 = vmatpush1.bf16.msra.mxu0 %v2055
      %2075 = vmatprep.subr.bf16.mxu0 0
      %2076 = vmatpush1.bf16.msra.mxu0 %v2056
      %2077 = vmatprep.subr.bf16.mxu0 0
      %2078 = vmatpush1.bf16.msra.mxu0 %v2057
      %2079 = vmatprep.subr.bf16.mxu0 0
      %2080 = vmatpush1.bf16.msra.mxu0 %v2058
      %2081 = vmatprep.subr.bf16.mxu0 0
      %2082 = vmatpush1.bf16.msra.mxu0 %v2059
      %2083 = vmatprep.subr.bf16.mxu0 0
      %2084 = vmatpush1.bf16.msra.mxu0 %v2060
      %2085 = vmatprep.subr.bf16.mxu0 0
      %2086 = vmatpush1.bf16.msra.mxu0 0
      %2087 = vmatprep.subr.bf16.mxu0 0
      %2088 = vmatpush1.bf16.msra.mxu0 0
      %2089 = vmatprep.subr.bf16.mxu0 0
      %2090 = vmatpush1.bf16.msra.mxu0 0
      %2091 = vmatprep.subr.bf16.mxu0 0
      %2092 = vmatpush1.bf16.msra.mxu0 0
      %2093 = vmatprep.subr.bf16.mxu0 0
      %2094 = vmatpush1.bf16.msra.mxu0 0
      %2095 = vmatprep.subr.bf16.mxu0 0
      %2096 = vmatpush1.bf16.msra.mxu0 0
      %2097 = vmatprep.subr.bf16.mxu0 0
      %2098 = vmatpush1.bf16.msra.mxu0 0
      %2099 = vmatprep.subr.bf16.mxu0 0
      %2100 = vmatpush1.bf16.msra.mxu0 0
      %2101 = vmatprep.mubr.bf16.mxu0 0
      %2102 = vmatmul.mubr.bf16.gmra.mrb[0].mxu0 %v2013
      %v2103 = vpop.f32.mrb[0].mxu0
      %v2104 = vadd.f32 0.0, %v2103
      %v2105 = vpop.f32.mrb[0].mxu0
      %v2106 = vpop.f32.mrb[0].mxu0
      %v2107 = vadd.f32 0.0, %v2106
      %v2108 = vpop.f32.mrb[0].mxu0
      %2109 = vmatprep.mubr.bf16.mxu0 0
      %2110 = vmatmul.mubr.bf16.gmra.mrb[0].mxu0 %v2014
      %v2111 = vpop.f32.mrb[0].mxu0
      %v2112 = vadd.f32 0.0, %v2111
      %v2113 = vpop.f32.mrb[0].mxu0
      %v2114 = vpop.f32.mrb[0].mxu0
      %v2115 = vadd.f32 0.0, %v2114
      %v2116 = vpop.f32.mrb[0].mxu0
      %2117 = vmatprep.mubr.bf16.mxu0 0
      %2118 = vmatmul.mubr.bf16.gmra.mrb[0].mxu0 %v2015
      %v2119 = vpop.f32.mrb[0].mxu0
      %v2120 = vadd.f32 0.0, %v2119
      %v2121 = vpop.f32.mrb[0].mxu0
      %v2122 = vpop.f32.mrb[0].mxu0
      %v2123 = vadd.f32 0.0, %v2122
      %v2124 = vpop.f32.mrb[0].mxu0
      %2125 = vmatprep.mubr.bf16.mxu0 0
      %2126 = vmatmul.mubr.bf16.gmra.mrb[0].mxu0 %v2016
      %v2127 = vpop.f32.mrb[0].mxu0
      %v2128 = vadd.f32 0.0, %v2127
      %v2129 = vpop.f32.mrb[0].mxu0
      %v2130 = vpop.f32.mrb[0].mxu0
      %v2131 = vadd.f32 0.0, %v2130
      %v2132 = vpop.f32.mrb[0].mxu0
      %2133 = vdwg.mxu0
      %v2142 = vunpack.c.l.b16 %v1841
      %v2143 = vunpack.c.l.b16 %v1842
      %v2144 = vunpack.c.l.b16 %v1843
      %v2145 = vunpack.c.l.b16 %v1844
      %v2146 = vunpack.c.l.b16 %v1845
      %v2147 = vunpack.c.l.b16 %v1846
      %v2148 = vunpack.c.l.b16 %v1847
      %v2149 = vunpack.c.l.b16 %v1848
      %v2150 = vpack.c.b16 %v2143, %v2142
      %v2151 = vpack.c.b16 %v2145, %v2144
      %v2152 = vpack.c.b16 %v2147, %v2146
      %v2153 = vpack.c.b16 %v2149, %v2148
      %v2174 = vunpack.c.l.b16 %v1849
      %v2175 = vunpack.c.l.b16 %v1850
      %v2176 = vunpack.c.l.b16 %v1851
      %v2177 = vunpack.c.l.b16 %v1852
      %v2178 = vunpack.c.l.b16 %v1853
      %v2179 = vunpack.c.l.b16 %v1854
      %v2180 = vunpack.c.l.b16 %v1855
      %v2181 = vunpack.c.l.b16 %v1856
      %v2182 = vunpack.c.l.b16 %v1857
      %v2183 = vunpack.c.l.b16 %v1858
      %v2184 = vunpack.c.l.b16 %v1859
      %v2185 = vunpack.c.l.b16 %v1860
      %v2186 = vunpack.c.l.b16 %v1861
      %v2187 = vunpack.c.l.b16 %v1862
      %v2188 = vunpack.c.l.b16 %v1863
      %v2189 = vunpack.c.l.b16 %v1864
      %v2190 = vpack.c.b16 %v2175, %v2174
      %v2191 = vpack.c.b16 %v2177, %v2176
      %v2192 = vpack.c.b16 %v2179, %v2178
      %v2193 = vpack.c.b16 %v2181, %v2180
      %v2194 = vpack.c.b16 %v2183, %v2182
      %v2195 = vpack.c.b16 %v2185, %v2184
      %v2196 = vpack.c.b16 %v2187, %v2186
      %v2197 = vpack.c.b16 %v2189, %v2188
      %2206 = vmatprep.subr.bf16.mxu0 0
      %2207 = vmatpush1.bf16.msra.mxu0 %v2190
      %2208 = vmatprep.subr.bf16.mxu0 0
      %2209 = vmatpush1.bf16.msra.mxu0 %v2191
      %2210 = vmatprep.subr.bf16.mxu0 0
      %2211 = vmatpush1.bf16.msra.mxu0 %v2192
      %2212 = vmatprep.subr.bf16.mxu0 0
      %2213 = vmatpush1.bf16.msra.mxu0 %v2193
      %2214 = vmatprep.subr.bf16.mxu0 0
      %2215 = vmatpush1.bf16.msra.mxu0 %v2194
      %2216 = vmatprep.subr.bf16.mxu0 0
      %2217 = vmatpush1.bf16.msra.mxu0 %v2195
      %2218 = vmatprep.subr.bf16.mxu0 0
      %2219 = vmatpush1.bf16.msra.mxu0 %v2196
      %2220 = vmatprep.subr.bf16.mxu0 0
      %2221 = vmatpush1.bf16.msra.mxu0 %v2197
      %2222 = vmatprep.subr.bf16.mxu0 0
      %2223 = vmatpush1.bf16.msra.mxu0 0
      %2224 = vmatprep.subr.bf16.mxu0 0
      %2225 = vmatpush1.bf16.msra.mxu0 0
      %2226 = vmatprep.subr.bf16.mxu0 0
      %2227 = vmatpush1.bf16.msra.mxu0 0
      %2228 = vmatprep.subr.bf16.mxu0 0
      %2229 = vmatpush1.bf16.msra.mxu0 0
      %2230 = vmatprep.subr.bf16.mxu0 0
      %2231 = vmatpush1.bf16.msra.mxu0 0
      %2232 = vmatprep.subr.bf16.mxu0 0
      %2233 = vmatpush1.bf16.msra.mxu0 0
      %2234 = vmatprep.subr.bf16.mxu0 0
      %2235 = vmatpush1.bf16.msra.mxu0 0
      %2236 = vmatprep.subr.bf16.mxu0 0
      %2237 = vmatpush1.bf16.msra.mxu0 0
      %2238 = vmatprep.mubr.bf16.mxu0 0
      %2239 = vmatmul.mubr.bf16.gmra.mrb[0].mxu0 %v2150
      %v2240 = vpop.f32.mrb[0].mxu0
      %v2241 = vadd.f32 %v2104, %v2240
      %v2242 = vpop.f32.mrb[0].mxu0
      %v2243 = vpop.f32.mrb[0].mxu0
      %v2244 = vadd.f32 %v2107, %v2243
      %v2245 = vpop.f32.mrb[0].mxu0
      %2246 = vmatprep.mubr.bf16.mxu0 0
      %2247 = vmatmul.mubr.bf16.gmra.mrb[0].mxu0 %v2151
      %v2248 = vpop.f32.mrb[0].mxu0
      %v2249 = vadd.f32 %v2112, %v2248
      %v2250 = vpop.f32.mrb[0].mxu0
      %v2251 = vpop.f32.mrb[0].mxu0
      %v2252 = vadd.f32 %v2115, %v2251
      %v2253 = vpop.f32.mrb[0].mxu0
      %2254 = vmatprep.mubr.bf16.mxu0 0
      %2255 = vmatmul.mubr.bf16.gmra.mrb[0].mxu0 %v2152
      %v2256 = vpop.f32.mrb[0].mxu0
      %v2257 = vadd.f32 %v2120, %v2256
      %v2258 = vpop.f32.mrb[0].mxu0
      %v2259 = vpop.f32.mrb[0].mxu0
      %v2260 = vadd.f32 %v2123, %v2259
      %v2261 = vpop.f32.mrb[0].mxu0
      %2262 = vmatprep.mubr.bf16.mxu0 0
      %2263 = vmatmul.mubr.bf16.gmra.mrb[0].mxu0 %v2153
      %v2264 = vpop.f32.mrb[0].mxu0
      %v2265 = vadd.f32 %v2128, %v2264
      %v2266 = vpop.f32.mrb[0].mxu0
      %v2267 = vpop.f32.mrb[0].mxu0
      %v2268 = vadd.f32 %v2131, %v2267
      %v2269 = vpop.f32.mrb[0].mxu0
      %2270 = vdwg.mxu0
      %v2271 = vld [vmem:[#allocation2] sm:$0xe]
      %v2272 = vld [vmem:[#allocation2 + $0x8] sm:$0xe]
      %v2273 = vld [vmem:[#allocation2 + $0x10] sm:$0xe]
      %v2274 = vld [vmem:[#allocation2 + $0x18] sm:$0xe]
      %v2275 = vld [vmem:[#allocation2 + $0x20] sm:$0xe]
      %v2276 = vld [vmem:[#allocation2 + $0x28] sm:$0xe]
      %v2277 = vld [vmem:[#allocation2 + $0x30] sm:$0xe]
      %v2278 = vld [vmem:[#allocation2 + $0x38] sm:$0xe]
      %vm2295 = vcmask 1042432
      %vm2296 = vcmask 1046532
      %vm2297 = vmor %vm2295, %vm2296
      %v2298 = vrot.slane %v2271, 5
      %v2299 = vrot.slane %v2298, 4
      %v2300 = vrot.slane %v1865, 5
      %v2301 = vsel %vm2297, %v2299, %v2300
      %v2302 = vrot.slane %v2272, 5
      %v2303 = vrot.slane %v2302, 4
      %v2304 = vrot.slane %v1866, 5
      %v2305 = vsel %vm2297, %v2303, %v2304
      %v2306 = vrot.slane %v2273, 5
      %v2307 = vrot.slane %v2306, 4
      %v2308 = vrot.slane %v1867, 5
      %v2309 = vsel %vm2297, %v2307, %v2308
      %v2310 = vrot.slane %v2274, 5
      %v2311 = vrot.slane %v2310, 4
      %v2312 = vrot.slane %v1868, 5
      %v2313 = vsel %vm2297, %v2311, %v2312
      %v2314 = vrot.slane %v2275, 5
      %v2315 = vrot.slane %v2314, 4
      %v2316 = vrot.slane %v1869, 5
      %v2317 = vsel %vm2297, %v2315, %v2316
      %v2318 = vrot.slane %v2276, 5
      %v2319 = vrot.slane %v2318, 4
      %v2320 = vrot.slane %v1870, 5
      %v2321 = vsel %vm2297, %v2319, %v2320
      %v2322 = vrot.slane %v2277, 5
      %v2323 = vrot.slane %v2322, 4
      %v2324 = vrot.slane %v1871, 5
      %v2325 = vsel %vm2297, %v2323, %v2324
      %v2326 = vrot.slane %v2278, 5
      %v2327 = vrot.slane %v2326, 4
      %v2328 = vrot.slane %v1872, 5
      %v2329 = vsel %vm2297, %v2327, %v2328
      %s2330 = scalar_lea.vmem %s4, 128
      %v2331 = vld [vmem:[%s2330] sm:$0xf]
      %v2332 = vld [vmem:[%s2330 + $0x4] sm:$0xf]
      %v2333 = vld [vmem:[%s2330 + $0x8] sm:$0xf]
      %v2334 = vld [vmem:[%s2330 + $0xc] sm:$0xf]
      %v2335 = vld [vmem:[%s2330 + $0x10] sm:$0xf]
      %v2336 = vld [vmem:[%s2330 + $0x14] sm:$0xf]
      %v2337 = vld [vmem:[%s2330 + $0x18] sm:$0xf]
      %v2338 = vld [vmem:[%s2330 + $0x1c] sm:$0xf]
      %v2339 = vld [vmem:[%s2330 + $0x20] sm:$0xf]
      %v2340 = vld [vmem:[%s2330 + $0x24] sm:$0xf]
      %v2341 = vld [vmem:[%s2330 + $0x28] sm:$0xf]
      %v2342 = vld [vmem:[%s2330 + $0x2c] sm:$0xf]
      %v2343 = vld [vmem:[%s2330 + $0x30] sm:$0xf]
      %v2344 = vld [vmem:[%s2330 + $0x34] sm:$0xf]
      %v2345 = vld [vmem:[%s2330 + $0x38] sm:$0xf]
      %v2346 = vld [vmem:[%s2330 + $0x3c] sm:$0xf]
      %v2347 = vunpack.c.l.b16 %v2301
      %v2348 = vunpack.c.l.b16 %v2305
      %v2349 = vunpack.c.l.b16 %v2309
      %v2350 = vunpack.c.l.b16 %v2313
      %v2351 = vunpack.c.l.b16 %v2317
      %v2352 = vunpack.c.l.b16 %v2321
      %v2353 = vunpack.c.l.b16 %v2325
      %v2354 = vunpack.c.l.b16 %v2329
      %v2355 = vpack.c.b16 %v2348, %v2347
      %v2356 = vpack.c.b16 %v2350, %v2349
      %v2357 = vpack.c.b16 %v2352, %v2351
      %v2358 = vpack.c.b16 %v2354, %v2353
      %v2379 = vunpack.c.l.b16 %v2331
      %v2380 = vunpack.c.l.b16 %v2332
      %v2381 = vunpack.c.l.b16 %v2333
      %v2382 = vunpack.c.l.b16 %v2334
      %v2383 = vunpack.c.l.b16 %v2335
      %v2384 = vunpack.c.l.b16 %v2336
      %v2385 = vunpack.c.l.b16 %v2337
      %v2386 = vunpack.c.l.b16 %v2338
      %v2387 = vunpack.c.l.b16 %v2339
      %v2388 = vunpack.c.l.b16 %v2340
      %v2389 = vunpack.c.l.b16 %v2341
      %v2390 = vunpack.c.l.b16 %v2342
      %v2391 = vunpack.c.l.b16 %v2343
      %v2392 = vunpack.c.l.b16 %v2344
      %v2393 = vunpack.c.l.b16 %v2345
      %v2394 = vunpack.c.l.b16 %v2346
      %v2395 = vpack.c.b16 %v2380, %v2379
      %v2396 = vpack.c.b16 %v2382, %v2381
      %v2397 = vpack.c.b16 %v2384, %v2383
      %v2398 = vpack.c.b16 %v2386, %v2385
      %v2399 = vpack.c.b16 %v2388, %v2387
      %v2400 = vpack.c.b16 %v2390, %v2389
      %v2401 = vpack.c.b16 %v2392, %v2391
      %v2402 = vpack.c.b16 %v2394, %v2393
      %2411 = vmatprep.subr.bf16.mxu0 0
      %2412 = vmatpush1.bf16.msra.mxu0 %v2395
      %2413 = vmatprep.subr.bf16.mxu0 0
      %2414 = vmatpush1.bf16.msra.mxu0 %v2396
      %2415 = vmatprep.subr.bf16.mxu0 0
      %2416 = vmatpush1.bf16.msra.mxu0 %v2397
      %2417 = vmatprep.subr.bf16.mxu0 0
      %2418 = vmatpush1.bf16.msra.mxu0 %v2398
      %2419 = vmatprep.subr.bf16.mxu0 0
      %2420 = vmatpush1.bf16.msra.mxu0 %v2399
      %2421 = vmatprep.subr.bf16.mxu0 0
      %2422 = vmatpush1.bf16.msra.mxu0 %v2400
      %2423 = vmatprep.subr.bf16.mxu0 0
      %2424 = vmatpush1.bf16.msra.mxu0 %v2401
      %2425 = vmatprep.subr.bf16.mxu0 0
      %2426 = vmatpush1.bf16.msra.mxu0 %v2402
      %2427 = vmatprep.subr.bf16.mxu0 0
      %2428 = vmatpush1.bf16.msra.mxu0 0
      %2429 = vmatprep.subr.bf16.mxu0 0
      %2430 = vmatpush1.bf16.msra.mxu0 0
      %2431 = vmatprep.subr.bf16.mxu0 0
      %2432 = vmatpush1.bf16.msra.mxu0 0
      %2433 = vmatprep.subr.bf16.mxu0 0
      %2434 = vmatpush1.bf16.msra.mxu0 0
      %2435 = vmatprep.subr.bf16.mxu0 0
      %2436 = vmatpush1.bf16.msra.mxu0 0
      %2437 = vmatprep.subr.bf16.mxu0 0
      %2438 = vmatpush1.bf16.msra.mxu0 0
      %2439 = vmatprep.subr.bf16.mxu0 0
      %2440 = vmatpush1.bf16.msra.mxu0 0
      %2441 = vmatprep.subr.bf16.mxu0 0
      %2442 = vmatpush1.bf16.msra.mxu0 0
      %2443 = vmatprep.mubr.bf16.mxu0 0
      %2444 = vmatmul.mubr.bf16.gmra.mrb[0].mxu0 %v2355
      %v2445 = vpop.f32.mrb[0].mxu0
      %v2446 = vadd.f32 0.0, %v2445
      %v2447 = vpop.f32.mrb[0].mxu0
      %v2448 = vpop.f32.mrb[0].mxu0
      %v2449 = vadd.f32 0.0, %v2448
      %v2450 = vpop.f32.mrb[0].mxu0
      %2451 = vmatprep.mubr.bf16.mxu0 0
      %2452 = vmatmul.mubr.bf16.gmra.mrb[0].mxu0 %v2356
      %v2453 = vpop.f32.mrb[0].mxu0
      %v2454 = vadd.f32 0.0, %v2453
      %v2455 = vpop.f32.mrb[0].mxu0
      %v2456 = vpop.f32.mrb[0].mxu0
      %v2457 = vadd.f32 0.0, %v2456
      %v2458 = vpop.f32.mrb[0].mxu0
      %2459 = vmatprep.mubr.bf16.mxu0 0
      %2460 = vmatmul.mubr.bf16.gmra.mrb[0].mxu0 %v2357
      %v2461 = vpop.f32.mrb[0].mxu0
      %v2462 = vadd.f32 0.0, %v2461
      %v2463 = vpop.f32.mrb[0].mxu0
      %v2464 = vpop.f32.mrb[0].mxu0
      %v2465 = vadd.f32 0.0, %v2464
      %v2466 = vpop.f32.mrb[0].mxu0
      %2467 = vmatprep.mubr.bf16.mxu0 0
      %2468 = vmatmul.mubr.bf16.gmra.mrb[0].mxu0 %v2358
      %v2469 = vpop.f32.mrb[0].mxu0
      %v2470 = vadd.f32 0.0, %v2469
      %v2471 = vpop.f32.mrb[0].mxu0
      %v2472 = vpop.f32.mrb[0].mxu0
      %v2473 = vadd.f32 0.0, %v2472
      %v2474 = vpop.f32.mrb[0].mxu0
      %2475 = vdwg.mxu0
      %v2476 = vadd.f32 %v2241, %v2446
      %v2477 = vadd.f32 %v2244, %v2449
      %v2478 = vadd.f32 %v2249, %v2454
      %v2479 = vadd.f32 %v2252, %v2457
      %v2480 = vadd.f32 %v2257, %v2462
      %v2481 = vadd.f32 %v2260, %v2465
      %v2482 = vadd.f32 %v2265, %v2470
      %v2483 = vadd.f32 %v2268, %v2473
      %v2484 = vld [vmem:[%s1786] sm:$0xf]
      %v2485 = vld [vmem:[%s1786 + $0x8] sm:$0xf]
      %v2486 = vld [vmem:[%s1786 + $0x10] sm:$0xf]
      %v2487 = vld [vmem:[%s1786 + $0x18] sm:$0xf]
      %v2488 = vld [vmem:[%s1786 + $0x20] sm:$0xf]
      %v2489 = vld [vmem:[%s1786 + $0x28] sm:$0xf]
      %v2490 = vld [vmem:[%s1786 + $0x30] sm:$0xf]
      %v2491 = vld [vmem:[%s1786 + $0x38] sm:$0xf]
      %s2492 = scalar_lea.vmem %s4, 192
      %v2493 = vld [vmem:[%s2492] sm:$0xf]
      %v2494 = vld [vmem:[%s2492 + $0x4] sm:$0xf]
      %v2495 = vld [vmem:[%s2492 + $0x8] sm:$0xf]
      %v2496 = vld [vmem:[%s2492 + $0xc] sm:$0xf]
      %v2497 = vld [vmem:[%s2492 + $0x10] sm:$0xf]
      %v2498 = vld [vmem:[%s2492 + $0x14] sm:$0xf]
      %v2499 = vld [vmem:[%s2492 + $0x18] sm:$0xf]
      %v2500 = vld [vmem:[%s2492 + $0x1c] sm:$0xf]
      %v2501 = vld [vmem:[%s2492 + $0x20] sm:$0xf]
      %v2502 = vld [vmem:[%s2492 + $0x24] sm:$0xf]
      %v2503 = vld [vmem:[%s2492 + $0x28] sm:$0xf]
      %v2504 = vld [vmem:[%s2492 + $0x2c] sm:$0xf]
      %v2505 = vld [vmem:[%s2492 + $0x30] sm:$0xf]
      %v2506 = vld [vmem:[%s2492 + $0x34] sm:$0xf]
      %v2507 = vld [vmem:[%s2492 + $0x38] sm:$0xf]
      %v2508 = vld [vmem:[%s2492 + $0x3c] sm:$0xf]
      %v2517 = vunpack.c.l.b16 %v2484
      %v2518 = vunpack.c.l.b16 %v2485
      %v2519 = vunpack.c.l.b16 %v2486
      %v2520 = vunpack.c.l.b16 %v2487
      %v2521 = vunpack.c.l.b16 %v2488
      %v2522 = vunpack.c.l.b16 %v2489
      %v2523 = vunpack.c.l.b16 %v2490
      %v2524 = vunpack.c.l.b16 %v2491
      %v2525 = vpack.c.b16 %v2518, %v2517
      %v2526 = vpack.c.b16 %v2520, %v2519
      %v2527 = vpack.c.b16 %v2522, %v2521
      %v2528 = vpack.c.b16 %v2524, %v2523
      %v2549 = vunpack.c.l.b16 %v2493
      %v2550 = vunpack.c.l.b16 %v2494
      %v2551 = vunpack.c.l.b16 %v2495
      %v2552 = vunpack.c.l.b16 %v2496
      %v2553 = vunpack.c.l.b16 %v2497
      %v2554 = vunpack.c.l.b16 %v2498
      %v2555 = vunpack.c.l.b16 %v2499
      %v2556 = vunpack.c.l.b16 %v2500
      %v2557 = vunpack.c.l.b16 %v2501
      %v2558 = vunpack.c.l.b16 %v2502
      %v2559 = vunpack.c.l.b16 %v2503
      %v2560 = vunpack.c.l.b16 %v2504
      %v2561 = vunpack.c.l.b16 %v2505
      %v2562 = vunpack.c.l.b16 %v2506
      %v2563 = vunpack.c.l.b16 %v2507
      %v2564 = vunpack.c.l.b16 %v2508
      %v2565 = vpack.c.b16 %v2550, %v2549
      %v2566 = vpack.c.b16 %v2552, %v2551
      %v2567 = vpack.c.b16 %v2554, %v2553
      %v2568 = vpack.c.b16 %v2556, %v2555
      %v2569 = vpack.c.b16 %v2558, %v2557
      %v2570 = vpack.c.b16 %v2560, %v2559
      %v2571 = vpack.c.b16 %v2562, %v2561
      %v2572 = vpack.c.b16 %v2564, %v2563
      %2581 = vmatprep.subr.bf16.mxu0 0
      %2582 = vmatpush1.bf16.msra.mxu0 %v2565
      %2583 = vmatprep.subr.bf16.mxu0 0
      %2584 = vmatpush1.bf16.msra.mxu0 %v2566
      %2585 = vmatprep.subr.bf16.mxu0 0
      %2586 = vmatpush1.bf16.msra.mxu0 %v2567
      %2587 = vmatprep.subr.bf16.mxu0 0
      %2588 = vmatpush1.bf16.msra.mxu0 %v2568
      %2589 = vmatprep.subr.bf16.mxu0 0
      %2590 = vmatpush1.bf16.msra.mxu0 %v2569
      %2591 = vmatprep.subr.bf16.mxu0 0
      %2592 = vmatpush1.bf16.msra.mxu0 %v2570
      %2593 = vmatprep.subr.bf16.mxu0 0
      %2594 = vmatpush1.bf16.msra.mxu0 %v2571
      %2595 = vmatprep.subr.bf16.mxu0 0
      %2596 = vmatpush1.bf16.msra.mxu0 %v2572
      %2597 = vmatprep.subr.bf16.mxu0 0
      %2598 = vmatpush1.bf16.msra.mxu0 0
      %2599 = vmatprep.subr.bf16.mxu0 0
      %2600 = vmatpush1.bf16.msra.mxu0 0
      %2601 = vmatprep.subr.bf16.mxu0 0
      %2602 = vmatpush1.bf16.msra.mxu0 0
      %2603 = vmatprep.subr.bf16.mxu0 0
      %2604 = vmatpush1.bf16.msra.mxu0 0
      %2605 = vmatprep.subr.bf16.mxu0 0
      %2606 = vmatpush1.bf16.msra.mxu0 0
      %2607 = vmatprep.subr.bf16.mxu0 0
      %2608 = vmatpush1.bf16.msra.mxu0 0
      %2609 = vmatprep.subr.bf16.mxu0 0
      %2610 = vmatpush1.bf16.msra.mxu0 0
      %2611 = vmatprep.subr.bf16.mxu0 0
      %2612 = vmatpush1.bf16.msra.mxu0 0
      %2613 = vmatprep.mubr.bf16.mxu0 0
      %2614 = vmatmul.mubr.bf16.gmra.mrb[0].mxu0 %v2525
      %v2615 = vpop.f32.mrb[0].mxu0
      %v2616 = vadd.f32 0.0, %v2615
      %v2617 = vpop.f32.mrb[0].mxu0
      %v2618 = vpop.f32.mrb[0].mxu0
      %v2619 = vadd.f32 0.0, %v2618
      %v2620 = vpop.f32.mrb[0].mxu0
      %2621 = vmatprep.mubr.bf16.mxu0 0
      %2622 = vmatmul.mubr.bf16.gmra.mrb[0].mxu0 %v2526
      %v2623 = vpop.f32.mrb[0].mxu0
      %v2624 = vadd.f32 0.0, %v2623
      %v2625 = vpop.f32.mrb[0].mxu0
      %v2626 = vpop.f32.mrb[0].mxu0
      %v2627 = vadd.f32 0.0, %v2626
      %v2628 = vpop.f32.mrb[0].mxu0
      %2629 = vmatprep.mubr.bf16.mxu0 0
      %2630 = vmatmul.mubr.bf16.gmra.mrb[0].mxu0 %v2527
      %v2631 = vpop.f32.mrb[0].mxu0
      %v2632 = vadd.f32 0.0, %v2631
      %v2633 = vpop.f32.mrb[0].mxu0
      %v2634 = vpop.f32.mrb[0].mxu0
      %v2635 = vadd.f32 0.0, %v2634
      %v2636 = vpop.f32.mrb[0].mxu0
      %2637 = vmatprep.mubr.bf16.mxu0 0
      %2638 = vmatmul.mubr.bf16.gmra.mrb[0].mxu0 %v2528
      %v2639 = vpop.f32.mrb[0].mxu0
      %v2640 = vadd.f32 0.0, %v2639
      %v2641 = vpop.f32.mrb[0].mxu0
      %v2642 = vpop.f32.mrb[0].mxu0
      %v2643 = vadd.f32 0.0, %v2642
      %v2644 = vpop.f32.mrb[0].mxu0
      %2645 = vdwg.mxu0
      %v2646 = vadd.f32 %v2476, %v2616
      %v2647 = vadd.f32 %v2477, %v2619
      %v2648 = vadd.f32 %v2478, %v2624
      %v2649 = vadd.f32 %v2479, %v2627
      %v2650 = vadd.f32 %v2480, %v2632
      %v2651 = vadd.f32 %v2481, %v2635
      %v2652 = vadd.f32 %v2482, %v2640
      %v2653 = vadd.f32 %v2483, %v2643
      %v2654 = vld [vmem:[%s1786] sm:$0xf]
      %v2655 = vld [vmem:[%s1786 + $0x4] sm:$0x1]
      %v2656 = vld [vmem:[%s1786 + $0x8] sm:$0xf]
      %v2657 = vld [vmem:[%s1786 + $0xc] sm:$0x1]
      %v2658 = vld [vmem:[%s1786 + $0x10] sm:$0xf]
      %v2659 = vld [vmem:[%s1786 + $0x14] sm:$0x1]
      %v2660 = vld [vmem:[%s1786 + $0x18] sm:$0xf]
      %v2661 = vld [vmem:[%s1786 + $0x1c] sm:$0x1]
      %v2662 = vld [vmem:[%s1786 + $0x20] sm:$0xf]
      %v2663 = vld [vmem:[%s1786 + $0x24] sm:$0x1]
      %v2664 = vld [vmem:[%s1786 + $0x28] sm:$0xf]
      %v2665 = vld [vmem:[%s1786 + $0x2c] sm:$0x1]
      %v2666 = vld [vmem:[%s1786 + $0x30] sm:$0xf]
      %v2667 = vld [vmem:[%s1786 + $0x34] sm:$0x1]
      %v2668 = vld [vmem:[%s1786 + $0x38] sm:$0xf]
      %v2669 = vld [vmem:[%s1786 + $0x3c] sm:$0x1]
      %v2671 = vshrl.u32 %v2654, 16
      %v2673 = vrot.slane %v2671, 4
      %v2674 = vshll.u32 %v2654, 16
      %v2676 = vrot.slane %v2674, 5
      %v2677 = vor.u32 %v2673, %v2676
      %v2678 = vrot.slane %v2677, 4
      %v2680 = vshll.u32 %v2655, 16
      %v2682 = vrot.slane %v2680, 5
      %v2683 = vsel %vm1875, %v2678, %v2682
      %v2685 = vshrl.u32 %v2656, 16
      %v2687 = vrot.slane %v2685, 4
      %v2688 = vshll.u32 %v2656, 16
      %v2690 = vrot.slane %v2688, 5
      %v2691 = vor.u32 %v2687, %v2690
      %v2692 = vrot.slane %v2691, 4
      %v2694 = vshll.u32 %v2657, 16
      %v2696 = vrot.slane %v2694, 5
      %v2697 = vsel %vm1875, %v2692, %v2696
      %v2699 = vshrl.u32 %v2658, 16
      %v2701 = vrot.slane %v2699, 4
      %v2702 = vshll.u32 %v2658, 16
      %v2704 = vrot.slane %v2702, 5
      %v2705 = vor.u32 %v2701, %v2704
      %v2706 = vrot.slane %v2705, 4
      %v2708 = vshll.u32 %v2659, 16
      %v2710 = vrot.slane %v2708, 5
      %v2711 = vsel %vm1875, %v2706, %v2710
      %v2713 = vshrl.u32 %v2660, 16
      %v2715 = vrot.slane %v2713, 4
      %v2716 = vshll.u32 %v2660, 16
      %v2718 = vrot.slane %v2716, 5
      %v2719 = vor.u32 %v2715, %v2718
      %v2720 = vrot.slane %v2719, 4
      %v2722 = vshll.u32 %v2661, 16
      %v2724 = vrot.slane %v2722, 5
      %v2725 = vsel %vm1875, %v2720, %v2724
      %v2727 = vshrl.u32 %v2662, 16
      %v2729 = vrot.slane %v2727, 4
      %v2730 = vshll.u32 %v2662, 16
      %v2732 = vrot.slane %v2730, 5
      %v2733 = vor.u32 %v2729, %v2732
      %v2734 = vrot.slane %v2733, 4
      %v2736 = vshll.u32 %v2663, 16
      %v2738 = vrot.slane %v2736, 5
      %v2739 = vsel %vm1875, %v2734, %v2738
      %v2741 = vshrl.u32 %v2664, 16
      %v2743 = vrot.slane %v2741, 4
      %v2744 = vshll.u32 %v2664, 16
      %v2746 = vrot.slane %v2744, 5
      %v2747 = vor.u32 %v2743, %v2746
      %v2748 = vrot.slane %v2747, 4
      %v2750 = vshll.u32 %v2665, 16
      %v2752 = vrot.slane %v2750, 5
      %v2753 = vsel %vm1875, %v2748, %v2752
      %v2755 = vshrl.u32 %v2666, 16
      %v2757 = vrot.slane %v2755, 4
      %v2758 = vshll.u32 %v2666, 16
      %v2760 = vrot.slane %v2758, 5
      %v2761 = vor.u32 %v2757, %v2760
      %v2762 = vrot.slane %v2761, 4
      %v2764 = vshll.u32 %v2667, 16
      %v2766 = vrot.slane %v2764, 5
      %v2767 = vsel %vm1875, %v2762, %v2766
      %v2769 = vshrl.u32 %v2668, 16
      %v2771 = vrot.slane %v2769, 4
      %v2772 = vshll.u32 %v2668, 16
      %v2774 = vrot.slane %v2772, 5
      %v2775 = vor.u32 %v2771, %v2774
      %v2776 = vrot.slane %v2775, 4
      %v2778 = vshll.u32 %v2669, 16
      %v2780 = vrot.slane %v2778, 5
      %v2781 = vsel %vm1875, %v2776, %v2780
      %s2782 = scalar_lea.vmem %s4, 256
      %v2783 = vld [vmem:[%s2782] sm:$0xf]
      %v2784 = vld [vmem:[%s2782 + $0x4] sm:$0xf]
      %v2785 = vld [vmem:[%s2782 + $0x8] sm:$0xf]
      %v2786 = vld [vmem:[%s2782 + $0xc] sm:$0xf]
      %v2787 = vld [vmem:[%s2782 + $0x10] sm:$0xf]
      %v2788 = vld [vmem:[%s2782 + $0x14] sm:$0xf]
      %v2789 = vld [vmem:[%s2782 + $0x18] sm:$0xf]
      %v2790 = vld [vmem:[%s2782 + $0x1c] sm:$0xf]
      %v2791 = vld [vmem:[%s2782 + $0x20] sm:$0xf]
      %v2792 = vld [vmem:[%s2782 + $0x24] sm:$0xf]
      %v2793 = vld [vmem:[%s2782 + $0x28] sm:$0xf]
      %v2794 = vld [vmem:[%s2782 + $0x2c] sm:$0xf]
      %v2795 = vld [vmem:[%s2782 + $0x30] sm:$0xf]
      %v2796 = vld [vmem:[%s2782 + $0x34] sm:$0xf]
      %v2797 = vld [vmem:[%s2782 + $0x38] sm:$0xf]
      %v2798 = vld [vmem:[%s2782 + $0x3c] sm:$0xf]
      %v2799 = vunpack.c.l.b16 %v2683
      %v2800 = vunpack.c.l.b16 %v2697
      %v2801 = vunpack.c.l.b16 %v2711
      %v2802 = vunpack.c.l.b16 %v2725
      %v2803 = vunpack.c.l.b16 %v2739
      %v2804 = vunpack.c.l.b16 %v2753
      %v2805 = vunpack.c.l.b16 %v2767
      %v2806 = vunpack.c.l.b16 %v2781
      %v2807 = vpack.c.b16 %v2800, %v2799
      %v2808 = vpack.c.b16 %v2802, %v2801
      %v2809 = vpack.c.b16 %v2804, %v2803
      %v2810 = vpack.c.b16 %v2806, %v2805
      %v2831 = vunpack.c.l.b16 %v2783
      %v2832 = vunpack.c.l.b16 %v2784
      %v2833 = vunpack.c.l.b16 %v2785
      %v2834 = vunpack.c.l.b16 %v2786
      %v2835 = vunpack.c.l.b16 %v2787
      %v2836 = vunpack.c.l.b16 %v2788
      %v2837 = vunpack.c.l.b16 %v2789
      %v2838 = vunpack.c.l.b16 %v2790
      %v2839 = vunpack.c.l.b16 %v2791
      %v2840 = vunpack.c.l.b16 %v2792
      %v2841 = vunpack.c.l.b16 %v2793
      %v2842 = vunpack.c.l.b16 %v2794
      %v2843 = vunpack.c.l.b16 %v2795
      %v2844 = vunpack.c.l.b16 %v2796
      %v2845 = vunpack.c.l.b16 %v2797
      %v2846 = vunpack.c.l.b16 %v2798
      %v2847 = vpack.c.b16 %v2832, %v2831
      %v2848 = vpack.c.b16 %v2834, %v2833
      %v2849 = vpack.c.b16 %v2836, %v2835
      %v2850 = vpack.c.b16 %v2838, %v2837
      %v2851 = vpack.c.b16 %v2840, %v2839
      %v2852 = vpack.c.b16 %v2842, %v2841
      %v2853 = vpack.c.b16 %v2844, %v2843
      %v2854 = vpack.c.b16 %v2846, %v2845
      %2863 = vmatprep.subr.bf16.mxu0 0
      %2864 = vmatpush1.bf16.msra.mxu0 %v2847
      %2865 = vmatprep.subr.bf16.mxu0 0
      %2866 = vmatpush1.bf16.msra.mxu0 %v2848
      %2867 = vmatprep.subr.bf16.mxu0 0
      %2868 = vmatpush1.bf16.msra.mxu0 %v2849
      %2869 = vmatprep.subr.bf16.mxu0 0
      %2870 = vmatpush1.bf16.msra.mxu0 %v2850
      %2871 = vmatprep.subr.bf16.mxu0 0
      %2872 = vmatpush1.bf16.msra.mxu0 %v2851
      %2873 = vmatprep.subr.bf16.mxu0 0
      %2874 = vmatpush1.bf16.msra.mxu0 %v2852
      %2875 = vmatprep.subr.bf16.mxu0 0
      %2876 = vmatpush1.bf16.msra.mxu0 %v2853
      %2877 = vmatprep.subr.bf16.mxu0 0
      %2878 = vmatpush1.bf16.msra.mxu0 %v2854
      %2879 = vmatprep.subr.bf16.mxu0 0
      %2880 = vmatpush1.bf16.msra.mxu0 0
      %2881 = vmatprep.subr.bf16.mxu0 0
      %2882 = vmatpush1.bf16.msra.mxu0 0
      %2883 = vmatprep.subr.bf16.mxu0 0
      %2884 = vmatpush1.bf16.msra.mxu0 0
      %2885 = vmatprep.subr.bf16.mxu0 0
      %2886 = vmatpush1.bf16.msra.mxu0 0
      %2887 = vmatprep.subr.bf16.mxu0 0
      %2888 = vmatpush1.bf16.msra.mxu0 0
      %2889 = vmatprep.subr.bf16.mxu0 0
      %2890 = vmatpush1.bf16.msra.mxu0 0
      %2891 = vmatprep.subr.bf16.mxu0 0
      %2892 = vmatpush1.bf16.msra.mxu0 0
      %2893 = vmatprep.subr.bf16.mxu0 0
      %2894 = vmatpush1.bf16.msra.mxu0 0
      %2895 = vmatprep.mubr.bf16.mxu0 0
      %2896 = vmatmul.mubr.bf16.gmra.mrb[0].mxu0 %v2807
      %v2897 = vpop.f32.mrb[0].mxu0
      %v2898 = vadd.f32 0.0, %v2897
      %v2899 = vpop.f32.mrb[0].mxu0
      %v2900 = vpop.f32.mrb[0].mxu0
      %v2901 = vadd.f32 0.0, %v2900
      %v2902 = vpop.f32.mrb[0].mxu0
      %2903 = vmatprep.mubr.bf16.mxu0 0
      %2904 = vmatmul.mubr.bf16.gmra.mrb[0].mxu0 %v2808
      %v2905 = vpop.f32.mrb[0].mxu0
      %v2906 = vadd.f32 0.0, %v2905
      %v2907 = vpop.f32.mrb[0].mxu0
      %v2908 = vpop.f32.mrb[0].mxu0
      %v2909 = vadd.f32 0.0, %v2908
      %v2910 = vpop.f32.mrb[0].mxu0
      %2911 = vmatprep.mubr.bf16.mxu0 0
      %2912 = vmatmul.mubr.bf16.gmra.mrb[0].mxu0 %v2809
      %v2913 = vpop.f32.mrb[0].mxu0
      %v2914 = vadd.f32 0.0, %v2913
      %v2915 = vpop.f32.mrb[0].mxu0
      %v2916 = vpop.f32.mrb[0].mxu0
      %v2917 = vadd.f32 0.0, %v2916
      %v2918 = vpop.f32.mrb[0].mxu0
      %2919 = vmatprep.mubr.bf16.mxu0 0
      %2920 = vmatmul.mubr.bf16.gmra.mrb[0].mxu0 %v2810
      %v2921 = vpop.f32.mrb[0].mxu0
      %v2922 = vadd.f32 0.0, %v2921
      %v2923 = vpop.f32.mrb[0].mxu0
      %v2924 = vpop.f32.mrb[0].mxu0
      %v2925 = vadd.f32 0.0, %v2924
      %v2926 = vpop.f32.mrb[0].mxu0
      %2927 = vdwg.mxu0
      %v2928 = vadd.f32 %v2646, %v2898
      %v2929 = vadd.f32 %v2647, %v2901
      %v2930 = vadd.f32 %v2648, %v2906
      %v2931 = vadd.f32 %v2649, %v2909
      %v2932 = vadd.f32 %v2650, %v2914
      %v2933 = vadd.f32 %v2651, %v2917
      %v2934 = vadd.f32 %v2652, %v2922
      %v2935 = vadd.f32 %v2653, %v2925
      %v2936 = vld [vmem:[%s1786] sm:$0xe]
      %v2937 = vld [vmem:[%s1786 + $0x8] sm:$0xe]
      %v2938 = vld [vmem:[%s1786 + $0x10] sm:$0xe]
      %v2939 = vld [vmem:[%s1786 + $0x18] sm:$0xe]
      %v2940 = vld [vmem:[%s1786 + $0x20] sm:$0xe]
      %v2941 = vld [vmem:[%s1786 + $0x28] sm:$0xe]
      %v2942 = vld [vmem:[%s1786 + $0x30] sm:$0xe]
      %v2943 = vld [vmem:[%s1786 + $0x38] sm:$0xe]
      %v2960 = vrot.slane %v2936, 5
      %v2961 = vrot.slane %v2960, 4
      %v2962 = vrot.slane %v2655, 5
      %v2963 = vsel %vm2297, %v2961, %v2962
      %v2964 = vrot.slane %v2937, 5
      %v2965 = vrot.slane %v2964, 4
      %v2966 = vrot.slane %v2657, 5
      %v2967 = vsel %vm2297, %v2965, %v2966
      %v2968 = vrot.slane %v2938, 5
      %v2969 = vrot.slane %v2968, 4
      %v2970 = vrot.slane %v2659, 5
      %v2971 = vsel %vm2297, %v2969, %v2970
      %v2972 = vrot.slane %v2939, 5
      %v2973 = vrot.slane %v2972, 4
      %v2974 = vrot.slane %v2661, 5
      %v2975 = vsel %vm2297, %v2973, %v2974
      %v2976 = vrot.slane %v2940, 5
      %v2977 = vrot.slane %v2976, 4
      %v2978 = vrot.slane %v2663, 5
      %v2979 = vsel %vm2297, %v2977, %v2978
      %v2980 = vrot.slane %v2941, 5
      %v2981 = vrot.slane %v2980, 4
      %v2982 = vrot.slane %v2665, 5
      %v2983 = vsel %vm2297, %v2981, %v2982
      %v2984 = vrot.slane %v2942, 5
      %v2985 = vrot.slane %v2984, 4
      %v2986 = vrot.slane %v2667, 5
      %v2987 = vsel %vm2297, %v2985, %v2986
      %v2988 = vrot.slane %v2943, 5
      %v2989 = vrot.slane %v2988, 4
      %v2990 = vrot.slane %v2669, 5
      %v2991 = vsel %vm2297, %v2989, %v2990
      %s2992 = scalar_lea.vmem %s4, 320
      %v2993 = vld [vmem:[%s2992] sm:$0xf]
      %v2994 = vld [vmem:[%s2992 + $0x4] sm:$0xf]
      %v2995 = vld [vmem:[%s2992 + $0x8] sm:$0xf]
      %v2996 = vld [vmem:[%s2992 + $0xc] sm:$0xf]
      %v2997 = vld [vmem:[%s2992 + $0x10] sm:$0xf]
      %v2998 = vld [vmem:[%s2992 + $0x14] sm:$0xf]
      %v2999 = vld [vmem:[%s2992 + $0x18] sm:$0xf]
      %v3000 = vld [vmem:[%s2992 + $0x1c] sm:$0xf]
      %v3001 = vld [vmem:[%s2992 + $0x20] sm:$0xf]
      %v3002 = vld [vmem:[%s2992 + $0x24] sm:$0xf]
      %v3003 = vld [vmem:[%s2992 + $0x28] sm:$0xf]
      %v3004 = vld [vmem:[%s2992 + $0x2c] sm:$0xf]
      %v3005 = vld [vmem:[%s2992 + $0x30] sm:$0xf]
      %v3006 = vld [vmem:[%s2992 + $0x34] sm:$0xf]
      %v3007 = vld [vmem:[%s2992 + $0x38] sm:$0xf]
      %v3008 = vld [vmem:[%s2992 + $0x3c] sm:$0xf]
      %v3009 = vunpack.c.l.b16 %v2963
      %v3010 = vunpack.c.l.b16 %v2967
      %v3011 = vunpack.c.l.b16 %v2971
      %v3012 = vunpack.c.l.b16 %v2975
      %v3013 = vunpack.c.l.b16 %v2979
      %v3014 = vunpack.c.l.b16 %v2983
      %v3015 = vunpack.c.l.b16 %v2987
      %v3016 = vunpack.c.l.b16 %v2991
      %v3017 = vpack.c.b16 %v3010, %v3009
      %v3018 = vpack.c.b16 %v3012, %v3011
      %v3019 = vpack.c.b16 %v3014, %v3013
      %v3020 = vpack.c.b16 %v3016, %v3015
      %v3041 = vunpack.c.l.b16 %v2993
      %v3042 = vunpack.c.l.b16 %v2994
      %v3043 = vunpack.c.l.b16 %v2995
      %v3044 = vunpack.c.l.b16 %v2996
      %v3045 = vunpack.c.l.b16 %v2997
      %v3046 = vunpack.c.l.b16 %v2998
      %v3047 = vunpack.c.l.b16 %v2999
      %v3048 = vunpack.c.l.b16 %v3000
      %v3049 = vunpack.c.l.b16 %v3001
      %v3050 = vunpack.c.l.b16 %v3002
      %v3051 = vunpack.c.l.b16 %v3003
      %v3052 = vunpack.c.l.b16 %v3004
      %v3053 = vunpack.c.l.b16 %v3005
      %v3054 = vunpack.c.l.b16 %v3006
      %v3055 = vunpack.c.l.b16 %v3007
      %v3056 = vunpack.c.l.b16 %v3008
      %v3057 = vpack.c.b16 %v3042, %v3041
      %v3058 = vpack.c.b16 %v3044, %v3043
      %v3059 = vpack.c.b16 %v3046, %v3045
      %v3060 = vpack.c.b16 %v3048, %v3047
      %v3061 = vpack.c.b16 %v3050, %v3049
      %v3062 = vpack.c.b16 %v3052, %v3051
      %v3063 = vpack.c.b16 %v3054, %v3053
      %v3064 = vpack.c.b16 %v3056, %v3055
      %3073 = vmatprep.subr.bf16.mxu0 0
      %3074 = vmatpush1.bf16.msra.mxu0 %v3057
      %3075 = vmatprep.subr.bf16.mxu0 0
      %3076 = vmatpush1.bf16.msra.mxu0 %v3058
      %3077 = vmatprep.subr.bf16.mxu0 0
      %3078 = vmatpush1.bf16.msra.mxu0 %v3059
      %3079 = vmatprep.subr.bf16.mxu0 0
      %3080 = vmatpush1.bf16.msra.mxu0 %v3060
      %3081 = vmatprep.subr.bf16.mxu0 0
      %3082 = vmatpush1.bf16.msra.mxu0 %v3061
      %3083 = vmatprep.subr.bf16.mxu0 0
      %3084 = vmatpush1.bf16.msra.mxu0 %v3062
      %3085 = vmatprep.subr.bf16.mxu0 0
      %3086 = vmatpush1.bf16.msra.mxu0 %v3063
      %3087 = vmatprep.subr.bf16.mxu0 0
      %3088 = vmatpush1.bf16.msra.mxu0 %v3064
      %3089 = vmatprep.subr.bf16.mxu0 0
      %3090 = vmatpush1.bf16.msra.mxu0 0
      %3091 = vmatprep.subr.bf16.mxu0 0
      %3092 = vmatpush1.bf16.msra.mxu0 0
      %3093 = vmatprep.subr.bf16.mxu0 0
      %3094 = vmatpush1.bf16.msra.mxu0 0
      %3095 = vmatprep.subr.bf16.mxu0 0
      %3096 = vmatpush1.bf16.msra.mxu0 0
      %3097 = vmatprep.subr.bf16.mxu0 0
      %3098 = vmatpush1.bf16.msra.mxu0 0
      %3099 = vmatprep.subr.bf16.mxu0 0
      %3100 = vmatpush1.bf16.msra.mxu0 0
      %3101 = vmatprep.subr.bf16.mxu0 0
      %3102 = vmatpush1.bf16.msra.mxu0 0
      %3103 = vmatprep.subr.bf16.mxu0 0
      %3104 = vmatpush1.bf16.msra.mxu0 0
      %3105 = vmatprep.mubr.bf16.mxu0 0
      %3106 = vmatmul.mubr.bf16.gmra.mrb[0].mxu0 %v3017
      %v3107 = vpop.f32.mrb[0].mxu0
      %v3108 = vadd.f32 0.0, %v3107
      %v3109 = vpop.f32.mrb[0].mxu0
      %v3110 = vpop.f32.mrb[0].mxu0
      %v3111 = vadd.f32 0.0, %v3110
      %v3112 = vpop.f32.mrb[0].mxu0
      %3113 = vmatprep.mubr.bf16.mxu0 0
      %3114 = vmatmul.mubr.bf16.gmra.mrb[0].mxu0 %v3018
      %v3115 = vpop.f32.mrb[0].mxu0
      %v3116 = vadd.f32 0.0, %v3115
      %v3117 = vpop.f32.mrb[0].mxu0
      %v3118 = vpop.f32.mrb[0].mxu0
      %v3119 = vadd.f32 0.0, %v3118
      %v3120 = vpop.f32.mrb[0].mxu0
      %3121 = vmatprep.mubr.bf16.mxu0 0
      %3122 = vmatmul.mubr.bf16.gmra.mrb[0].mxu0 %v3019
      %v3123 = vpop.f32.mrb[0].mxu0
      %v3124 = vadd.f32 0.0, %v3123
      %v3125 = vpop.f32.mrb[0].mxu0
      %v3126 = vpop.f32.mrb[0].mxu0
      %v3127 = vadd.f32 0.0, %v3126
      %v3128 = vpop.f32.mrb[0].mxu0
      %3129 = vmatprep.mubr.bf16.mxu0 0
      %3130 = vmatmul.mubr.bf16.gmra.mrb[0].mxu0 %v3020
      %v3131 = vpop.f32.mrb[0].mxu0
      %v3132 = vadd.f32 0.0, %v3131
      %v3133 = vpop.f32.mrb[0].mxu0
      %v3134 = vpop.f32.mrb[0].mxu0
      %v3135 = vadd.f32 0.0, %v3134
      %v3136 = vpop.f32.mrb[0].mxu0
      %3137 = vdwg.mxu0
      %v3138 = vadd.f32 %v2928, %v3108
      %v3139 = vadd.f32 %v2929, %v3111
      %v3140 = vadd.f32 %v2930, %v3116
      %v3141 = vadd.f32 %v2931, %v3119
      %v3142 = vadd.f32 %v2932, %v3124
      %v3143 = vadd.f32 %v2933, %v3127
      %v3144 = vadd.f32 %v2934, %v3132
      %v3145 = vadd.f32 %v2935, %v3135
      %s3146 = scalar_lea.vmem [#allocation2], 16
      %v3147 = vld [vmem:[%s3146] sm:$0xf]
      %v3148 = vld [vmem:[%s3146 + $0x8] sm:$0xf]
      %v3149 = vld [vmem:[%s3146 + $0x10] sm:$0xf]
      %v3150 = vld [vmem:[%s3146 + $0x18] sm:$0xf]
      %v3151 = vld [vmem:[%s3146 + $0x20] sm:$0xf]
      %v3152 = vld [vmem:[%s3146 + $0x28] sm:$0xf]
      %v3153 = vld [vmem:[%s3146 + $0x30] sm:$0xf]
      %v3154 = vld [vmem:[%s3146 + $0x38] sm:$0xf]
      %s3155 = scalar_lea.vmem %s4, 384
      %v3156 = vld [vmem:[%s3155] sm:$0xf]
      %v3157 = vld [vmem:[%s3155 + $0x4] sm:$0xf]
      %v3158 = vld [vmem:[%s3155 + $0x8] sm:$0xf]
      %v3159 = vld [vmem:[%s3155 + $0xc] sm:$0xf]
      %v3160 = vld [vmem:[%s3155 + $0x10] sm:$0xf]
      %v3161 = vld [vmem:[%s3155 + $0x14] sm:$0xf]
      %v3162 = vld [vmem:[%s3155 + $0x18] sm:$0xf]
      %v3163 = vld [vmem:[%s3155 + $0x1c] sm:$0xf]
      %v3164 = vld [vmem:[%s3155 + $0x20] sm:$0xf]
      %v3165 = vld [vmem:[%s3155 + $0x24] sm:$0xf]
      %v3166 = vld [vmem:[%s3155 + $0x28] sm:$0xf]
      %v3167 = vld [vmem:[%s3155 + $0x2c] sm:$0xf]
      %v3168 = vld [vmem:[%s3155 + $0x30] sm:$0xf]
      %v3169 = vld [vmem:[%s3155 + $0x34] sm:$0xf]
      %v3170 = vld [vmem:[%s3155 + $0x38] sm:$0xf]
      %v3171 = vld [vmem:[%s3155 + $0x3c] sm:$0xf]
      %v3180 = vunpack.c.l.b16 %v3147
      %v3181 = vunpack.c.l.b16 %v3148
      %v3182 = vunpack.c.l.b16 %v3149
      %v3183 = vunpack.c.l.b16 %v3150
      %v3184 = vunpack.c.l.b16 %v3151
      %v3185 = vunpack.c.l.b16 %v3152
      %v3186 = vunpack.c.l.b16 %v3153
      %v3187 = vunpack.c.l.b16 %v3154
      %v3188 = vpack.c.b16 %v3181, %v3180
      %v3189 = vpack.c.b16 %v3183, %v3182
      %v3190 = vpack.c.b16 %v3185, %v3184
      %v3191 = vpack.c.b16 %v3187, %v3186
      %v3212 = vunpack.c.l.b16 %v3156
      %v3213 = vunpack.c.l.b16 %v3157
      %v3214 = vunpack.c.l.b16 %v3158
      %v3215 = vunpack.c.l.b16 %v3159
      %v3216 = vunpack.c.l.b16 %v3160
      %v3217 = vunpack.c.l.b16 %v3161
      %v3218 = vunpack.c.l.b16 %v3162
      %v3219 = vunpack.c.l.b16 %v3163
      %v3220 = vunpack.c.l.b16 %v3164
      %v3221 = vunpack.c.l.b16 %v3165
      %v3222 = vunpack.c.l.b16 %v3166
      %v3223 = vunpack.c.l.b16 %v3167
      %v3224 = vunpack.c.l.b16 %v3168
      %v3225 = vunpack.c.l.b16 %v3169
      %v3226 = vunpack.c.l.b16 %v3170
      %v3227 = vunpack.c.l.b16 %v3171
      %v3228 = vpack.c.b16 %v3213, %v3212
      %v3229 = vpack.c.b16 %v3215, %v3214
      %v3230 = vpack.c.b16 %v3217, %v3216
      %v3231 = vpack.c.b16 %v3219, %v3218
      %v3232 = vpack.c.b16 %v3221, %v3220
      %v3233 = vpack.c.b16 %v3223, %v3222
      %v3234 = vpack.c.b16 %v3225, %v3224
      %v3235 = vpack.c.b16 %v3227, %v3226
      %3244 = vmatprep.subr.bf16.mxu0 0
      %3245 = vmatpush1.bf16.msra.mxu0 %v3228
      %3246 = vmatprep.subr.bf16.mxu0 0
      %3247 = vmatpush1.bf16.msra.mxu0 %v3229
      %3248 = vmatprep.subr.bf16.mxu0 0
      %3249 = vmatpush1.bf16.msra.mxu0 %v3230
      %3250 = vmatprep.subr.bf16.mxu0 0
      %3251 = vmatpush1.bf16.msra.mxu0 %v3231
      %3252 = vmatprep.subr.bf16.mxu0 0
      %3253 = vmatpush1.bf16.msra.mxu0 %v3232
      %3254 = vmatprep.subr.bf16.mxu0 0
      %3255 = vmatpush1.bf16.msra.mxu0 %v3233
      %3256 = vmatprep.subr.bf16.mxu0 0
      %3257 = vmatpush1.bf16.msra.mxu0 %v3234
      %3258 = vmatprep.subr.bf16.mxu0 0
      %3259 = vmatpush1.bf16.msra.mxu0 %v3235
      %3260 = vmatprep.subr.bf16.mxu0 0
      %3261 = vmatpush1.bf16.msra.mxu0 0
      %3262 = vmatprep.subr.bf16.mxu0 0
      %3263 = vmatpush1.bf16.msra.mxu0 0
      %3264 = vmatprep.subr.bf16.mxu0 0
      %3265 = vmatpush1.bf16.msra.mxu0 0
      %3266 = vmatprep.subr.bf16.mxu0 0
      %3267 = vmatpush1.bf16.msra.mxu0 0
      %3268 = vmatprep.subr.bf16.mxu0 0
      %3269 = vmatpush1.bf16.msra.mxu0 0
      %3270 = vmatprep.subr.bf16.mxu0 0
      %3271 = vmatpush1.bf16.msra.mxu0 0
      %3272 = vmatprep.subr.bf16.mxu0 0
      %3273 = vmatpush1.bf16.msra.mxu0 0
      %3274 = vmatprep.subr.bf16.mxu0 0
      %3275 = vmatpush1.bf16.msra.mxu0 0
      %3276 = vmatprep.mubr.bf16.mxu0 0
      %3277 = vmatmul.mubr.bf16.gmra.mrb[0].mxu0 %v3188
      %v3278 = vpop.f32.mrb[0].mxu0
      %v3279 = vadd.f32 0.0, %v3278
      %v3280 = vpop.f32.mrb[0].mxu0
      %v3281 = vpop.f32.mrb[0].mxu0
      %v3282 = vadd.f32 0.0, %v3281
      %v3283 = vpop.f32.mrb[0].mxu0
      %3284 = vmatprep.mubr.bf16.mxu0 0
      %3285 = vmatmul.mubr.bf16.gmra.mrb[0].mxu0 %v3189
      %v3286 = vpop.f32.mrb[0].mxu0
      %v3287 = vadd.f32 0.0, %v3286
      %v3288 = vpop.f32.mrb[0].mxu0
      %v3289 = vpop.f32.mrb[0].mxu0
      %v3290 = vadd.f32 0.0, %v3289
      %v3291 = vpop.f32.mrb[0].mxu0
      %3292 = vmatprep.mubr.bf16.mxu0 0
      %3293 = vmatmul.mubr.bf16.gmra.mrb[0].mxu0 %v3190
      %v3294 = vpop.f32.mrb[0].mxu0
      %v3295 = vadd.f32 0.0, %v3294
      %v3296 = vpop.f32.mrb[0].mxu0
      %v3297 = vpop.f32.mrb[0].mxu0
      %v3298 = vadd.f32 0.0, %v3297
      %v3299 = vpop.f32.mrb[0].mxu0
      %3300 = vmatprep.mubr.bf16.mxu0 0
      %3301 = vmatmul.mubr.bf16.gmra.mrb[0].mxu0 %v3191
      %v3302 = vpop.f32.mrb[0].mxu0
      %v3303 = vadd.f32 0.0, %v3302
      %v3304 = vpop.f32.mrb[0].mxu0
      %v3305 = vpop.f32.mrb[0].mxu0
      %v3306 = vadd.f32 0.0, %v3305
      %v3307 = vpop.f32.mrb[0].mxu0
      %3308 = vdwg.mxu0
      %v3309 = vadd.f32 %v3138, %v3279
      %v3310 = vadd.f32 %v3139, %v3282
      %v3311 = vadd.f32 %v3140, %v3287
      %v3312 = vadd.f32 %v3141, %v3290
      %v3313 = vadd.f32 %v3142, %v3295
      %v3314 = vadd.f32 %v3143, %v3298
      %v3315 = vadd.f32 %v3144, %v3303
      %v3316 = vadd.f32 %v3145, %v3306
      %v3317 = vld [vmem:[%s3146] sm:$0xf]
      %v3318 = vld [vmem:[%s3146 + $0x4] sm:$0x1]
      %v3319 = vld [vmem:[%s3146 + $0x8] sm:$0xf]
      %v3320 = vld [vmem:[%s3146 + $0xc] sm:$0x1]
      %v3321 = vld [vmem:[%s3146 + $0x10] sm:$0xf]
      %v3322 = vld [vmem:[%s3146 + $0x14] sm:$0x1]
      %v3323 = vld [vmem:[%s3146 + $0x18] sm:$0xf]
      %v3324 = vld [vmem:[%s3146 + $0x1c] sm:$0x1]
      %v3325 = vld [vmem:[%s3146 + $0x20] sm:$0xf]
      %v3326 = vld [vmem:[%s3146 + $0x24] sm:$0x1]
      %v3327 = vld [vmem:[%s3146 + $0x28] sm:$0xf]
      %v3328 = vld [vmem:[%s3146 + $0x2c] sm:$0x1]
      %v3329 = vld [vmem:[%s3146 + $0x30] sm:$0xf]
      %v3330 = vld [vmem:[%s3146 + $0x34] sm:$0x1]
      %v3331 = vld [vmem:[%s3146 + $0x38] sm:$0xf]
      %v3332 = vld [vmem:[%s3146 + $0x3c] sm:$0x1]
      %v3334 = vshrl.u32 %v3317, 16
      %v3336 = vrot.slane %v3334, 4
      %v3337 = vshll.u32 %v3317, 16
      %v3339 = vrot.slane %v3337, 5
      %v3340 = vor.u32 %v3336, %v3339
      %v3341 = vrot.slane %v3340, 4
      %v3343 = vshll.u32 %v3318, 16
      %v3345 = vrot.slane %v3343, 5
      %v3346 = vsel %vm1875, %v3341, %v3345
      %v3348 = vshrl.u32 %v3319, 16
      %v3350 = vrot.slane %v3348, 4
      %v3351 = vshll.u32 %v3319, 16
      %v3353 = vrot.slane %v3351, 5
      %v3354 = vor.u32 %v3350, %v3353
      %v3355 = vrot.slane %v3354, 4
      %v3357 = vshll.u32 %v3320, 16
      %v3359 = vrot.slane %v3357, 5
      %v3360 = vsel %vm1875, %v3355, %v3359
      %v3362 = vshrl.u32 %v3321, 16
      %v3364 = vrot.slane %v3362, 4
      %v3365 = vshll.u32 %v3321, 16
      %v3367 = vrot.slane %v3365, 5
      %v3368 = vor.u32 %v3364, %v3367
      %v3369 = vrot.slane %v3368, 4
      %v3371 = vshll.u32 %v3322, 16
      %v3373 = vrot.slane %v3371, 5
      %v3374 = vsel %vm1875, %v3369, %v3373
      %v3376 = vshrl.u32 %v3323, 16
      %v3378 = vrot.slane %v3376, 4
      %v3379 = vshll.u32 %v3323, 16
      %v3381 = vrot.slane %v3379, 5
      %v3382 = vor.u32 %v3378, %v3381
      %v3383 = vrot.slane %v3382, 4
      %v3385 = vshll.u32 %v3324, 16
      %v3387 = vrot.slane %v3385, 5
      %v3388 = vsel %vm1875, %v3383, %v3387
      %v3390 = vshrl.u32 %v3325, 16
      %v3392 = vrot.slane %v3390, 4
      %v3393 = vshll.u32 %v3325, 16
      %v3395 = vrot.slane %v3393, 5
      %v3396 = vor.u32 %v3392, %v3395
      %v3397 = vrot.slane %v3396, 4
      %v3399 = vshll.u32 %v3326, 16
      %v3401 = vrot.slane %v3399, 5
      %v3402 = vsel %vm1875, %v3397, %v3401
      %v3404 = vshrl.u32 %v3327, 16
      %v3406 = vrot.slane %v3404, 4
      %v3407 = vshll.u32 %v3327, 16
      %v3409 = vrot.slane %v3407, 5
      %v3410 = vor.u32 %v3406, %v3409
      %v3411 = vrot.slane %v3410, 4
      %v3413 = vshll.u32 %v3328, 16
      %v3415 = vrot.slane %v3413, 5
      %v3416 = vsel %vm1875, %v3411, %v3415
      %v3418 = vshrl.u32 %v3329, 16
      %v3420 = vrot.slane %v3418, 4
      %v3421 = vshll.u32 %v3329, 16
      %v3423 = vrot.slane %v3421, 5
      %v3424 = vor.u32 %v3420, %v3423
      %v3425 = vrot.slane %v3424, 4
      %v3427 = vshll.u32 %v3330, 16
      %v3429 = vrot.slane %v3427, 5
      %v3430 = vsel %vm1875, %v3425, %v3429
      %v3432 = vshrl.u32 %v3331, 16
      %v3434 = vrot.slane %v3432, 4
      %v3435 = vshll.u32 %v3331, 16
      %v3437 = vrot.slane %v3435, 5
      %v3438 = vor.u32 %v3434, %v3437
      %v3439 = vrot.slane %v3438, 4
      %v3441 = vshll.u32 %v3332, 16
      %v3443 = vrot.slane %v3441, 5
      %v3444 = vsel %vm1875, %v3439, %v3443
      %s3445 = scalar_lea.vmem %s4, 448
      %v3446 = vld [vmem:[%s3445] sm:$0xf]
      %v3447 = vld [vmem:[%s3445 + $0x4] sm:$0xf]
      %v3448 = vld [vmem:[%s3445 + $0x8] sm:$0xf]
      %v3449 = vld [vmem:[%s3445 + $0xc] sm:$0xf]
      %v3450 = vld [vmem:[%s3445 + $0x10] sm:$0xf]
      %v3451 = vld [vmem:[%s3445 + $0x14] sm:$0xf]
      %v3452 = vld [vmem:[%s3445 + $0x18] sm:$0xf]
      %v3453 = vld [vmem:[%s3445 + $0x1c] sm:$0xf]
      %v3454 = vld [vmem:[%s3445 + $0x20] sm:$0xf]
      %v3455 = vld [vmem:[%s3445 + $0x24] sm:$0xf]
      %v3456 = vld [vmem:[%s3445 + $0x28] sm:$0xf]
      %v3457 = vld [vmem:[%s3445 + $0x2c] sm:$0xf]
      %v3458 = vld [vmem:[%s3445 + $0x30] sm:$0xf]
      %v3459 = vld [vmem:[%s3445 + $0x34] sm:$0xf]
      %v3460 = vld [vmem:[%s3445 + $0x38] sm:$0xf]
      %v3461 = vld [vmem:[%s3445 + $0x3c] sm:$0xf]
      %v3462 = vunpack.c.l.b16 %v3346
      %v3463 = vunpack.c.l.b16 %v3360
      %v3464 = vunpack.c.l.b16 %v3374
      %v3465 = vunpack.c.l.b16 %v3388
      %v3466 = vunpack.c.l.b16 %v3402
      %v3467 = vunpack.c.l.b16 %v3416
      %v3468 = vunpack.c.l.b16 %v3430
      %v3469 = vunpack.c.l.b16 %v3444
      %v3470 = vpack.c.b16 %v3463, %v3462
      %v3471 = vpack.c.b16 %v3465, %v3464
      %v3472 = vpack.c.b16 %v3467, %v3466
      %v3473 = vpack.c.b16 %v3469, %v3468
      %v3494 = vunpack.c.l.b16 %v3446
      %v3495 = vunpack.c.l.b16 %v3447
      %v3496 = vunpack.c.l.b16 %v3448
      %v3497 = vunpack.c.l.b16 %v3449
      %v3498 = vunpack.c.l.b16 %v3450
      %v3499 = vunpack.c.l.b16 %v3451
      %v3500 = vunpack.c.l.b16 %v3452
      %v3501 = vunpack.c.l.b16 %v3453
      %v3502 = vunpack.c.l.b16 %v3454
      %v3503 = vunpack.c.l.b16 %v3455
      %v3504 = vunpack.c.l.b16 %v3456
      %v3505 = vunpack.c.l.b16 %v3457
      %v3506 = vunpack.c.l.b16 %v3458
      %v3507 = vunpack.c.l.b16 %v3459
      %v3508 = vunpack.c.l.b16 %v3460
      %v3509 = vunpack.c.l.b16 %v3461
      %v3510 = vpack.c.b16 %v3495, %v3494
      %v3511 = vpack.c.b16 %v3497, %v3496
      %v3512 = vpack.c.b16 %v3499, %v3498
      %v3513 = vpack.c.b16 %v3501, %v3500
      %v3514 = vpack.c.b16 %v3503, %v3502
      %v3515 = vpack.c.b16 %v3505, %v3504
      %v3516 = vpack.c.b16 %v3507, %v3506
      %v3517 = vpack.c.b16 %v3509, %v3508
      %3526 = vmatprep.subr.bf16.mxu0 0
      %3527 = vmatpush1.bf16.msra.mxu0 %v3510
      %3528 = vmatprep.subr.bf16.mxu0 0
      %3529 = vmatpush1.bf16.msra.mxu0 %v3511
      %3530 = vmatprep.subr.bf16.mxu0 0
      %3531 = vmatpush1.bf16.msra.mxu0 %v3512
      %3532 = vmatprep.subr.bf16.mxu0 0
      %3533 = vmatpush1.bf16.msra.mxu0 %v3513
      %3534 = vmatprep.subr.bf16.mxu0 0
      %3535 = vmatpush1.bf16.msra.mxu0 %v3514
      %3536 = vmatprep.subr.bf16.mxu0 0
      %3537 = vmatpush1.bf16.msra.mxu0 %v3515
      %3538 = vmatprep.subr.bf16.mxu0 0
      %3539 = vmatpush1.bf16.msra.mxu0 %v3516
      %3540 = vmatprep.subr.bf16.mxu0 0
      %3541 = vmatpush1.bf16.msra.mxu0 %v3517
      %3542 = vmatprep.subr.bf16.mxu0 0
      %3543 = vmatpush1.bf16.msra.mxu0 0
      %3544 = vmatprep.subr.bf16.mxu0 0
      %3545 = vmatpush1.bf16.msra.mxu0 0
      %3546 = vmatprep.subr.bf16.mxu0 0
      %3547 = vmatpush1.bf16.msra.mxu0 0
      %3548 = vmatprep.subr.bf16.mxu0 0
      %3549 = vmatpush1.bf16.msra.mxu0 0
      %3550 = vmatprep.subr.bf16.mxu0 0
      %3551 = vmatpush1.bf16.msra.mxu0 0
      %3552 = vmatprep.subr.bf16.mxu0 0
      %3553 = vmatpush1.bf16.msra.mxu0 0
      %3554 = vmatprep.subr.bf16.mxu0 0
      %3555 = vmatpush1.bf16.msra.mxu0 0
      %3556 = vmatprep.subr.bf16.mxu0 0
      %3557 = vmatpush1.bf16.msra.mxu0 0
      %3558 = vmatprep.mubr.bf16.mxu0 0
      %3559 = vmatmul.mubr.bf16.gmra.mrb[0].mxu0 %v3470
      %v3560 = vpop.f32.mrb[0].mxu0
      %v3561 = vadd.f32 0.0, %v3560
      %v3562 = vpop.f32.mrb[0].mxu0
      %v3563 = vpop.f32.mrb[0].mxu0
      %v3564 = vadd.f32 0.0, %v3563
      %v3565 = vpop.f32.mrb[0].mxu0
      %3566 = vmatprep.mubr.bf16.mxu0 0
      %3567 = vmatmul.mubr.bf16.gmra.mrb[0].mxu0 %v3471
      %v3568 = vpop.f32.mrb[0].mxu0
      %v3569 = vadd.f32 0.0, %v3568
      %v3570 = vpop.f32.mrb[0].mxu0
      %v3571 = vpop.f32.mrb[0].mxu0
      %v3572 = vadd.f32 0.0, %v3571
      %v3573 = vpop.f32.mrb[0].mxu0
      %3574 = vmatprep.mubr.bf16.mxu0 0
      %3575 = vmatmul.mubr.bf16.gmra.mrb[0].mxu0 %v3472
      %v3576 = vpop.f32.mrb[0].mxu0
      %v3577 = vadd.f32 0.0, %v3576
      %v3578 = vpop.f32.mrb[0].mxu0
      %v3579 = vpop.f32.mrb[0].mxu0
      %v3580 = vadd.f32 0.0, %v3579
      %v3581 = vpop.f32.mrb[0].mxu0
      %3582 = vmatprep.mubr.bf16.mxu0 0
      %3583 = vmatmul.mubr.bf16.gmra.mrb[0].mxu0 %v3473
      %v3584 = vpop.f32.mrb[0].mxu0
      %v3585 = vadd.f32 0.0, %v3584
      %v3586 = vpop.f32.mrb[0].mxu0
      %v3587 = vpop.f32.mrb[0].mxu0
      %v3588 = vadd.f32 0.0, %v3587
      %v3589 = vpop.f32.mrb[0].mxu0
      %3590 = vdwg.mxu0
      %v3591 = vadd.f32 %v3309, %v3561
      %v3592 = vadd.f32 %v3310, %v3564
      %v3593 = vadd.f32 %v3311, %v3569
      %v3594 = vadd.f32 %v3312, %v3572
      %v3595 = vadd.f32 %v3313, %v3577
      %v3596 = vadd.f32 %v3314, %v3580
      %v3597 = vadd.f32 %v3315, %v3585
      %v3598 = vadd.f32 %v3316, %v3588
      %v3599 = vld [vmem:[%s3146] sm:$0xe]
      %v3600 = vld [vmem:[%s3146 + $0x8] sm:$0xe]
      %v3601 = vld [vmem:[%s3146 + $0x10] sm:$0xe]
      %v3602 = vld [vmem:[%s3146 + $0x18] sm:$0xe]
      %v3603 = vld [vmem:[%s3146 + $0x20] sm:$0xe]
      %v3604 = vld [vmem:[%s3146 + $0x28] sm:$0xe]
      %v3605 = vld [vmem:[%s3146 + $0x30] sm:$0xe]
      %v3606 = vld [vmem:[%s3146 + $0x38] sm:$0xe]
      %v3623 = vrot.slane %v3599, 5
      %v3624 = vrot.slane %v3623, 4
      %v3625 = vrot.slane %v3318, 5
      %v3626 = vsel %vm2297, %v3624, %v3625
      %v3627 = vrot.slane %v3600, 5
      %v3628 = vrot.slane %v3627, 4
      %v3629 = vrot.slane %v3320, 5
      %v3630 = vsel %vm2297, %v3628, %v3629
      %v3631 = vrot.slane %v3601, 5
      %v3632 = vrot.slane %v3631, 4
      %v3633 = vrot.slane %v3322, 5
      %v3634 = vsel %vm2297, %v3632, %v3633
      %v3635 = vrot.slane %v3602, 5
      %v3636 = vrot.slane %v3635, 4
      %v3637 = vrot.slane %v3324, 5
      %v3638 = vsel %vm2297, %v3636, %v3637
      %v3639 = vrot.slane %v3603, 5
      %v3640 = vrot.slane %v3639, 4
      %v3641 = vrot.slane %v3326, 5
      %v3642 = vsel %vm2297, %v3640, %v3641
      %v3643 = vrot.slane %v3604, 5
      %v3644 = vrot.slane %v3643, 4
      %v3645 = vrot.slane %v3328, 5
      %v3646 = vsel %vm2297, %v3644, %v3645
      %v3647 = vrot.slane %v3605, 5
      %v3648 = vrot.slane %v3647, 4
      %v3649 = vrot.slane %v3330, 5
      %v3650 = vsel %vm2297, %v3648, %v3649
      %v3651 = vrot.slane %v3606, 5
      %v3652 = vrot.slane %v3651, 4
      %v3653 = vrot.slane %v3332, 5
      %v3654 = vsel %vm2297, %v3652, %v3653
      %s3655 = scalar_lea.vmem %s4, 512
      %v3656 = vld [vmem:[%s3655] sm:$0xf]
      %v3657 = vld [vmem:[%s3655 + $0x4] sm:$0xf]
      %v3658 = vld [vmem:[%s3655 + $0x8] sm:$0xf]
      %v3659 = vld [vmem:[%s3655 + $0xc] sm:$0xf]
      %v3660 = vld [vmem:[%s3655 + $0x10] sm:$0xf]
      %v3661 = vld [vmem:[%s3655 + $0x14] sm:$0xf]
      %v3662 = vld [vmem:[%s3655 + $0x18] sm:$0xf]
      %v3663 = vld [vmem:[%s3655 + $0x1c] sm:$0xf]
      %v3664 = vld [vmem:[%s3655 + $0x20] sm:$0xf]
      %v3665 = vld [vmem:[%s3655 + $0x24] sm:$0xf]
      %v3666 = vld [vmem:[%s3655 + $0x28] sm:$0xf]
      %v3667 = vld [vmem:[%s3655 + $0x2c] sm:$0xf]
      %v3668 = vld [vmem:[%s3655 + $0x30] sm:$0xf]
      %v3669 = vld [vmem:[%s3655 + $0x34] sm:$0xf]
      %v3670 = vld [vmem:[%s3655 + $0x38] sm:$0xf]
      %v3671 = vld [vmem:[%s3655 + $0x3c] sm:$0xf]
      %v3672 = vunpack.c.l.b16 %v3626
      %v3673 = vunpack.c.l.b16 %v3630
      %v3674 = vunpack.c.l.b16 %v3634
      %v3675 = vunpack.c.l.b16 %v3638
      %v3676 = vunpack.c.l.b16 %v3642
      %v3677 = vunpack.c.l.b16 %v3646
      %v3678 = vunpack.c.l.b16 %v3650
      %v3679 = vunpack.c.l.b16 %v3654
      %v3680 = vpack.c.b16 %v3673, %v3672
      %v3681 = vpack.c.b16 %v3675, %v3674
      %v3682 = vpack.c.b16 %v3677, %v3676
      %v3683 = vpack.c.b16 %v3679, %v3678
      %v3704 = vunpack.c.l.b16 %v3656
      %v3705 = vunpack.c.l.b16 %v3657
      %v3706 = vunpack.c.l.b16 %v3658
      %v3707 = vunpack.c.l.b16 %v3659
      %v3708 = vunpack.c.l.b16 %v3660
      %v3709 = vunpack.c.l.b16 %v3661
      %v3710 = vunpack.c.l.b16 %v3662
      %v3711 = vunpack.c.l.b16 %v3663
      %v3712 = vunpack.c.l.b16 %v3664
      %v3713 = vunpack.c.l.b16 %v3665
      %v3714 = vunpack.c.l.b16 %v3666
      %v3715 = vunpack.c.l.b16 %v3667
      %v3716 = vunpack.c.l.b16 %v3668
      %v3717 = vunpack.c.l.b16 %v3669
      %v3718 = vunpack.c.l.b16 %v3670
      %v3719 = vunpack.c.l.b16 %v3671
      %v3720 = vpack.c.b16 %v3705, %v3704
      %v3721 = vpack.c.b16 %v3707, %v3706
      %v3722 = vpack.c.b16 %v3709, %v3708
      %v3723 = vpack.c.b16 %v3711, %v3710
      %v3724 = vpack.c.b16 %v3713, %v3712
      %v3725 = vpack.c.b16 %v3715, %v3714
      %v3726 = vpack.c.b16 %v3717, %v3716
      %v3727 = vpack.c.b16 %v3719, %v3718
      %3736 = vmatprep.subr.bf16.mxu0 0
      %3737 = vmatpush1.bf16.msra.mxu0 %v3720
      %3738 = vmatprep.subr.bf16.mxu0 0
      %3739 = vmatpush1.bf16.msra.mxu0 %v3721
      %3740 = vmatprep.subr.bf16.mxu0 0
      %3741 = vmatpush1.bf16.msra.mxu0 %v3722
      %3742 = vmatprep.subr.bf16.mxu0 0
      %3743 = vmatpush1.bf16.msra.mxu0 %v3723
      %3744 = vmatprep.subr.bf16.mxu0 0
      %3745 = vmatpush1.bf16.msra.mxu0 %v3724
      %3746 = vmatprep.subr.bf16.mxu0 0
      %3747 = vmatpush1.bf16.msra.mxu0 %v3725
      %3748 = vmatprep.subr.bf16.mxu0 0
      %3749 = vmatpush1.bf16.msra.mxu0 %v3726
      %3750 = vmatprep.subr.bf16.mxu0 0
      %3751 = vmatpush1.bf16.msra.mxu0 %v3727
      %3752 = vmatprep.subr.bf16.mxu0 0
      %3753 = vmatpush1.bf16.msra.mxu0 0
      %3754 = vmatprep.subr.bf16.mxu0 0
      %3755 = vmatpush1.bf16.msra.mxu0 0
      %3756 = vmatprep.subr.bf16.mxu0 0
      %3757 = vmatpush1.bf16.msra.mxu0 0
      %3758 = vmatprep.subr.bf16.mxu0 0
      %3759 = vmatpush1.bf16.msra.mxu0 0
      %3760 = vmatprep.subr.bf16.mxu0 0
      %3761 = vmatpush1.bf16.msra.mxu0 0
      %3762 = vmatprep.subr.bf16.mxu0 0
      %3763 = vmatpush1.bf16.msra.mxu0 0
      %3764 = vmatprep.subr.bf16.mxu0 0
      %3765 = vmatpush1.bf16.msra.mxu0 0
      %3766 = vmatprep.subr.bf16.mxu0 0
      %3767 = vmatpush1.bf16.msra.mxu0 0
      %3768 = vmatprep.mubr.bf16.mxu0 0
      %3769 = vmatmul.mubr.bf16.gmra.mrb[0].mxu0 %v3680
      %v3770 = vpop.f32.mrb[0].mxu0
      %v3771 = vadd.f32 0.0, %v3770
      %v3772 = vpop.f32.mrb[0].mxu0
      %v3773 = vpop.f32.mrb[0].mxu0
      %v3774 = vadd.f32 0.0, %v3773
      %v3775 = vpop.f32.mrb[0].mxu0
      %3776 = vmatprep.mubr.bf16.mxu0 0
      %3777 = vmatmul.mubr.bf16.gmra.mrb[0].mxu0 %v3681
      %v3778 = vpop.f32.mrb[0].mxu0
      %v3779 = vadd.f32 0.0, %v3778
      %v3780 = vpop.f32.mrb[0].mxu0
      %v3781 = vpop.f32.mrb[0].mxu0
      %v3782 = vadd.f32 0.0, %v3781
      %v3783 = vpop.f32.mrb[0].mxu0
      %3784 = vmatprep.mubr.bf16.mxu0 0
      %3785 = vmatmul.mubr.bf16.gmra.mrb[0].mxu0 %v3682
      %v3786 = vpop.f32.mrb[0].mxu0
      %v3787 = vadd.f32 0.0, %v3786
      %v3788 = vpop.f32.mrb[0].mxu0
      %v3789 = vpop.f32.mrb[0].mxu0
      %v3790 = vadd.f32 0.0, %v3789
      %v3791 = vpop.f32.mrb[0].mxu0
      %3792 = vmatprep.mubr.bf16.mxu0 0
      %3793 = vmatmul.mubr.bf16.gmra.mrb[0].mxu0 %v3683
      %v3794 = vpop.f32.mrb[0].mxu0
      %v3795 = vadd.f32 0.0, %v3794
      %v3796 = vpop.f32.mrb[0].mxu0
      %v3797 = vpop.f32.mrb[0].mxu0
      %v3798 = vadd.f32 0.0, %v3797
      %v3799 = vpop.f32.mrb[0].mxu0
      %3800 = vdwg.mxu0
      %v3801 = vadd.f32 %v3591, %v3771
      %v3802 = vadd.f32 %v3592, %v3774
      %v3803 = vadd.f32 %v3593, %v3779
      %v3804 = vadd.f32 %v3594, %v3782
      %v3805 = vadd.f32 %v3595, %v3787
      %v3806 = vadd.f32 %v3596, %v3790
      %v3807 = vadd.f32 %v3597, %v3795
      %v3808 = vadd.f32 %v3598, %v3798
      %v3809 = vld [vmem:[%s5] sm:$0x1]
      %v3811 = vlaneseq
      %v3812 = vshrl.u32 %v3811, 7
      %v3813 = vsub.s32 0, %v3812
      %v3814 = vrot.slane %v3809, %v3813
      %v3816 = vmul.f32 %v3801, %v3814
      %v3817 = vmul.f32 %v3802, %v3814
      %v3818 = vmul.f32 %v3803, %v3814
      %v3819 = vmul.f32 %v3804, %v3814
      %v3820 = vmul.f32 %v3805, %v3814
      %v3821 = vmul.f32 %v3806, %v3814
      %v3822 = vmul.f32 %v3807, %v3814
      %v3823 = vmul.f32 %v3808, %v3814
      %v3824 = vld [vmem:[%s6] sm:$0x1]
      %v3826 = vlaneseq
      %v3827 = vshrl.u32 %v3826, 7
      %v3828 = vsub.s32 0, %v3827
      %v3829 = vrot.slane %v3824, %v3828
      %v3831 = vadd.f32 %v3816, %v3829
      %v3832 = vadd.f32 %v3817, %v3829
      %v3833 = vadd.f32 %v3818, %v3829
      %v3834 = vadd.f32 %v3819, %v3829
      %v3835 = vadd.f32 %v3820, %v3829
      %v3836 = vadd.f32 %v3821, %v3829
      %v3837 = vadd.f32 %v3822, %v3829
      %v3838 = vadd.f32 %v3823, %v3829
      %v3839 = vld [vmem:[%s714 + $0x1] sm:$0xff]
      %v3840 = vld [vmem:[%s714 + $0x11] sm:$0xff]
      %v3841 = vld [vmem:[%s714 + $0x21] sm:$0xff]
      %v3842 = vld [vmem:[%s714 + $0x31] sm:$0xff]
      %v3843 = vld [vmem:[%s714 + $0x41] sm:$0xff]
      %v3844 = vld [vmem:[%s714 + $0x51] sm:$0xff]
      %v3845 = vld [vmem:[%s714 + $0x61] sm:$0xff]
      %v3846 = vld [vmem:[%s714 + $0x71] sm:$0xff]
      %v3847 = vadd.f32 %v3831, %v3839
      %v3848 = vadd.f32 %v3832, %v3840
      %v3849 = vadd.f32 %v3833, %v3841
      %v3850 = vadd.f32 %v3834, %v3842
      %v3851 = vadd.f32 %v3835, %v3843
      %v3852 = vadd.f32 %v3836, %v3844
      %v3853 = vadd.f32 %v3837, %v3845
      %v3854 = vadd.f32 %v3838, %v3846
      %v3855 = vmax.f32 %v3847, 0.0
      %v3856 = vmax.f32 %v3848, 0.0
      %v3857 = vmax.f32 %v3849, 0.0
      %v3858 = vmax.f32 %v3850, 0.0
      %v3859 = vmax.f32 %v3851, 0.0
      %v3860 = vmax.f32 %v3852, 0.0
      %v3861 = vmax.f32 %v3853, 0.0
      %v3862 = vmax.f32 %v3854, 0.0
      %3863 = vst [vmem:[%s278] sm:$0xff] %v3855
      %3864 = vst [vmem:[%s278 + $0x8] sm:$0xff] %v3856
      %3865 = vst [vmem:[%s278 + $0x10] sm:$0xff] %v3857
      %3866 = vst [vmem:[%s278 + $0x18] sm:$0xff] %v3858
      %3867 = vst [vmem:[%s278 + $0x20] sm:$0xff] %v3859
      %3868 = vst [vmem:[%s278 + $0x28] sm:$0xff] %v3860
      %3869 = vst [vmem:[%s278 + $0x30] sm:$0xff] %v3861
      %3870 = vst [vmem:[%s278 + $0x38] sm:$0xff] %v3862
      %s3871 = smul.u32 8, %s18
      %p3872 = scmp.lt.s32.totalorder %s3871, 15
      %s3873 = scalar_select %p3872, %s3871, 15
      %s3874 = smul.addr %s3873, 8
      %s3875 = scalar_lea.vmem %s7, %s3874
      // Predicated region
      $region49: #{fwd.3} parent=47 // pred_check
        %p3876 = pneg %p188
      $region50: #{fwd.3} parent=47 // pred_check_branch
        %3878 = sbr.rel (%p3876) target = $region52
      $region51: #{fwd.3} parent=47 // pred_region
        %s3879 = smul.u32 8, %s18
      $region52: #{fwd.3} parent=47 // pred_fallthru
        _
    $region48: #{fwd.3} parent=5 // pred_fallthru
      _
    %p3880 = scmp.le.s32.totalorder 2, %s13
    // Predicated region
    $region53: #{fwd.3} parent=5 // pred_check
      %p3881 = pneg %p3880
    $region54: #{fwd.3} parent=5 // pred_check_branch
      %3883 = sbr.rel (%p3881) target = $region56
    $region55: #{fwd.3} parent=5 // pred_region
      %s3884 = ssub.s32 %s13, 2
      // Predicated region
      $region57: #{fwd.3} parent=55 // pred_check
        %p3885 = pneg %p194
      $region58: #{fwd.3} parent=55 // pred_check_branch
        %3887 = sbr.rel (%p3885) target = $region60
      $region59: #{fwd.3} parent=55 // pred_region
        %s3888 = smul.u32 8, %s19
        %p3889 = scmp.lt.s32.totalorder %s3888, 15
        %s3890 = scalar_select %p3889, %s3888, 15
        %s3891 = smul.addr %s3890, 8
        %s3892 = scalar_lea.vmem %s7, %s3891
      $region60: #{fwd.3} parent=55 // pred_fallthru
        _
    $region56: #{fwd.3} parent=5 // pred_fallthru
      _
  $region6: #{fwd.3} parent=0 // loop_footer
    %s17 = sadd.s32 1, %s13
  $region7: #{fwd.3} parent=0 // loop_footer_branch
    %12 = sbr.rel target = $region3
  $region8: #{fwd.3} parent=0 // loop_exit
    _

</llo_original>
